<compile_context>
chip_gen: v7x
topology: tpu7x:2x2x1
jax: 0.10.0
libtpu: 0.0.40
codegen_flags: <defaults>
</compile_context>

<pallas_src>
import functools

import jax
import jax.numpy as jnp
from jax import lax
from jax.experimental import pallas as pl
from jax.experimental.pallas import tpu as pltpu

INPUT_SIZE = 20
HIDDEN = 64
NUM_LAYERS = 2
SIGNAL_SHAPE = 100  # module default

_VMEM = pltpu.MemorySpace.VMEM

# Kernel gate-group order (sigmoid on i,f,o; tanh on g). PyTorch row blocks are (i,f,g,o).
_GATE_ORDER = ("i", "f", "o", "g")
_PT_GATE_ROW = {"i": 0, "f": 1, "g": 2, "o": 3}


# ----------------------------- Pallas kernel --------------------------------

def _decoder_kernel(T, B, x_ref, wih0_ref, b0_ref, whh0_ref,
                    wih1_ref, b1_ref, whh1_ref, wd_ref, bd_ref,
                    out_ref, xproj, hseq):
    """Fused 2-layer bidirectional LSTM + dense head, whole sequence resident in VMEM.

    Layouts (H = 64, each gate group is 2H = 128 lanes = one full vreg):
      wih*: (Din, 8H)   columns = [i_f|i_b][f_f|f_b][o_f|o_b][g_f|g_b]
      whh*: (2H, 8H)    rows 0:H (fwd h) feed only the *_f halves, rows H:2H only the *_b halves
      b*:   (1, 8H)     combined b_ih + b_hh, same column layout
      h/c:  (B, 2H)     [fwd | bwd]
      hseq: (T*B, 2H)   row slab t = [h_fwd(t) | h_bwd(t)]  (the layer output sequence)
      xproj:(T*B, 8H)   hoisted input projection for the whole sequence
    """
    H = HIDDEN
    H2, H4, H6, H8 = 2 * H, 4 * H, 6 * H, 8 * H

    # Loop-invariant lane mask: within each 2H gate group, lanes [0, H) belong to the forward
    # direction (consumes timestep t), lanes [H, 2H) to the backward direction (timestep T-1-t).
    # H is a power of two, so the bit test picks the half.
    col = lax.broadcasted_iota(jnp.int32, (B, H8), 1)
    fwd_lane = (col & H) == 0

    def run_layer(xin, wih_ref, b_ref, whh_ref):
        # Prologue: hoist the input projection (and bias) out of the recurrence — one MXU matmul
        # over all timesteps; only h @ W_hh remains on the serial per-step chain.
        xproj[...] = (jnp.dot(xin, wih_ref[...], preferred_element_type=jnp.float32)
                      + b_ref[...])

        h = jnp.zeros((B, H2), jnp.float32)
        c = jnp.zeros((B, H2), jnp.float32)
        # Fully unrolled time loop (T small & static): h/c live in vregs and the scheduler can
        # overlap step t+1's xproj loads/select with step t's MXU/EUP work.
        # TODO(synk): for long sequences switch to a T-chunked "arbitrary" grid axis with
        #             persistent h/c scratch so x/xproj/out are streamed instead of resident.
        for t in range(T):
            rf = t * B              # forward direction consumes timestep t
            rb = (T - 1 - t) * B    # backward direction consumes timestep T-1-t

            # One recurrent matmul for both directions (K = 2H = 128), bf16 in / f32 accumulate.
            # TODO(synk): weight-stationary MXU (pltpu.matmul_push_rhs once, acc/pop per step)
            #             would avoid re-streaming the loop-invariant (2H, 8H) weight each step.
            hh = jnp.dot(h.astype(jnp.bfloat16), whh_ref[...],
                         preferred_element_type=jnp.float32)                       # (B, 8H)

            gin = jnp.where(fwd_lane, xproj[rf:rf + B, :], xproj[rb:rb + B, :])
            g = gin + hh

            sig = jax.nn.sigmoid(g[:, 0:H6])     # i | f | o  (3 full vregs, both directions)
            gg = jnp.tanh(g[:, H6:H8])           # g          (1 full vreg)
            c = sig[:, H2:H4] * c + sig[:, 0:H2] * gg
            h = sig[:, H4:H6] * jnp.tanh(c)

            # Layer output writes (off the serial dependency chain).
            hseq[rf:rf + B, 0:H] = h[:, 0:H]
            hseq[rb:rb + B, H:H2] = h[:, H:H2]

    # Layer 0: raw input (f32 matmul; K=20, one-time, negligible cost).
    run_layer(x_ref[...], wih0_ref, b0_ref, whh0_ref)
    # Layer 1: input = layer-0 hidden sequence.  The prologue consumes all of hseq before the
    # layer-1 recurrence overwrites it in place.
    run_layer(hseq[...].astype(jnp.bfloat16), wih1_ref, b1_ref, whh1_ref)
    # Dense head fused in the epilogue (lane-dense padded output; sliced in the wrapper).
    out_ref[...] = (jnp.dot(hseq[...].astype(jnp.bfloat16), wd_ref[...],
                            preferred_element_type=jnp.float32) + bd_ref[...])


# ----------------------------- wrapper ---------------------------------------

def decoder_forward(x, prep):
    """x: (T, B, 20) -> (T, B, signal_shape). Matches PyTorch Decoder.forward (outputs only)."""
    T, B, Din = x.shape
    wih0, b0, whh0 = prep["l0"]
    wih1, b1, whh1 = prep["l1"]
    wd, bd = prep["dense_w"], prep["dense_b"]
    S = prep["signal_shape"]
    y = pl.pallas_call(
        functools.partial(_decoder_kernel, T, B),
        out_shape=jax.ShapeDtypeStruct((T * B, wd.shape[1]), jnp.float32),
        in_specs=[pl.BlockSpec(memory_space=_VMEM)] * 9,
        out_specs=pl.BlockSpec(memory_space=_VMEM),
        scratch_shapes=[pltpu.VMEM((T * B, 8 * HIDDEN), jnp.float32),   # xproj
                        pltpu.VMEM((T * B, 2 * HIDDEN), jnp.float32)],  # hseq
    )(x.reshape(T * B, Din), wih0, b0, whh0, wih1, b1, whh1, wd, bd)
    return y[:, :S].reshape(T, B, S)


# ----------------------- parameters (PyTorch layout) --------------------------

def init_raw_params(key, signal_shape=SIGNAL_SHAPE):
    """Raw params in PyTorch nn.LSTM / nn.Linear layout & gate order (i,f,g,o)."""
    raw = {}
    k = HIDDEN ** -0.5
    for layer in range(NUM_LAYERS):
        din = INPUT_SIZE if layer == 0 else 2 * HIDDEN
        p = {}
        for d in ("f", "b"):
            key, k1, k2, k3, k4 = jax.random.split(key, 5)
            p[f"w_ih_{d}"] = jax.random.uniform(k1, (4 * HIDDEN, din), jnp.float32, -k, k)
            p[f"w_hh_{d}"] = jax.random.uniform(k2, (4 * HIDDEN, HIDDEN), jnp.float32, -k, k)
            p[f"b_ih_{d}"] = jax.random.uniform(k3, (4 * HIDDEN,), jnp.float32, -k, k)
            p[f"b_hh_{d}"] = jax.random.uniform(k4, (4 * HIDDEN,), jnp.float32, -k, k)
        raw[f"l{layer}"] = p
    kd = (2 * HIDDEN) ** -0.5
    key, k1, k2 = jax.random.split(key, 3)
    raw["dense_w"] = jax.random.uniform(k1, (signal_shape, 2 * HIDDEN), jnp.float32, -kd, kd)
    raw["dense_b"] = jax.random.uniform(k2, (signal_shape,), jnp.float32, -kd, kd)
    return raw


def _gate_rows(w, gate):
    r = _PT_GATE_ROW[gate]
    return w[r * HIDDEN:(r + 1) * HIDDEN]


def prepare_params(raw):
    """PyTorch-layout params -> fused-kernel layout (gate-interleaved columns, bf16 MXU weights)."""
    H = HIDDEN
    prep = {}
    for layer in range(NUM_LAYERS):
        p = raw[f"l{layer}"]
        wih_cols, b_cols = [], []
        whh = jnp.zeros((2 * H, 8 * H), jnp.float32)
        for gi, gate in enumerate(_GATE_ORDER):
            wih_cols += [_gate_rows(p["w_ih_f"], gate).T, _gate_rows(p["w_ih_b"], gate).T]
            b_cols += [_gate_rows(p["b_ih_f"] + p["b_hh_f"], gate),
                       _gate_rows(p["b_ih_b"] + p["b_hh_b"], gate)]
            c0 = gi * 2 * H
            whh = whh.at[0:H, c0:c0 + H].set(_gate_rows(p["w_hh_f"], gate).T)
            whh = whh.at[H:2 * H, c0 + H:c0 + 2 * H].set(_gate_rows(p["w_hh_b"], gate).T)
        wih = jnp.concatenate(wih_cols, axis=1)          # (Din, 8H)
        b = jnp.concatenate(b_cols)[None, :]             # (1, 8H)
        # Layer-0 input projection stays f32 (K=20, off the recurrence); everything feeding the
        # MXU on/near the per-step path is bf16.
        wih = wih if layer == 0 else wih.astype(jnp.bfloat16)
        prep[f"l{layer}"] = (wih, b, whh.astype(jnp.bfloat16))
    S = raw["dense_w"].shape[0]
    S_pad = ((S + 127) // 128) * 128                     # lane-dense padded output width
    wd = jnp.zeros((2 * H, S_pad), jnp.float32).at[:, :S].set(raw["dense_w"].T)
    bd = jnp.zeros((1, S_pad), jnp.float32).at[:, :S].set(raw["dense_b"][None, :])
    prep["dense_w"] = wd.astype(jnp.bfloat16)
    prep["dense_b"] = bd
    prep["signal_shape"] = S
    return prep


# ------------------------- pure-JAX reference (check) ------------------------

def _ref_lstm_dir(x, w_ih, w_hh, b_ih, b_hh):
    T, B, _ = x.shape
    H = HIDDEN

    def step(carry, xt):
        h, c = carry
        gates = xt @ w_ih.T + h @ w_hh.T + b_ih + b_hh
        i = jax.nn.sigmoid(gates[:, 0 * H:1 * H])
        f = jax.nn.sigmoid(gates[:, 1 * H:2 * H])
        g = jnp.tanh(gates[:, 2 * H:3 * H])
        o = jax.nn.sigmoid(gates[:, 3 * H:4 * H])
        c = f * c + i * g
        h = o * jnp.tanh(c)
        return (h, c), h

    init = (jnp.zeros((B, H), jnp.float32), jnp.zeros((B, H), jnp.float32))
    _, outs = lax.scan(step, init, x)
    return outs


def ref_forward(x, raw):
    h = x
    for layer in range(NUM_LAYERS):
        p = raw[f"l{layer}"]
        out_f = _ref_lstm_dir(h, p["w_ih_f"], p["w_hh_f"], p["b_ih_f"], p["b_hh_f"])
        out_b = _ref_lstm_dir(h[::-1], p["w_ih_b"], p["w_hh_b"], p["b_ih_b"], p["b_hh_b"])[::-1]
        h = jnp.concatenate([out_f, out_b], axis=-1)
    return h @ raw["dense_w"].T + raw["dense_b"]


# --------------------------------- main ---------------------------------------

if __name__ == "__main__":
    T, B = 8, 8  # batch a multiple of 8 so per-timestep row slabs stay sublane-aligned
    key = jax.random.PRNGKey(0)
    kx, kp = jax.random.split(key)
    x = jax.random.normal(kx, (T, B, INPUT_SIZE), jnp.float32)

    raw = init_raw_params(kp)
    prep = prepare_params(raw)

    y = jax.block_until_ready(decoder_forward(x, prep))
    assert y.shape == (T, B, SIGNAL_SHAPE), y.shape

    y_ref = jax.block_until_ready(ref_forward(x, raw))
    max_err = float(jnp.max(jnp.abs(y - y_ref)))
    # bf16 MXU operands (f32 accumulation) -> looser tolerance than the all-f32 version.
    assert max_err < 5e-2, max_err

    print("KERNEL_OK")
</pallas_src>

<mosaic_0001>
module attributes {stable_mosaic.version = 11 : i64} {
  func.func @_decoder_kernel(%arg0: memref<64x20xf32, #tpu.memory_space<vmem>>, %arg1: memref<20x512xf32, #tpu.memory_space<vmem>>, %arg2: memref<1x512xf32, #tpu.memory_space<vmem>>, %arg3: memref<128x512xbf16, #tpu.memory_space<vmem>>, %arg4: memref<128x512xbf16, #tpu.memory_space<vmem>>, %arg5: memref<1x512xf32, #tpu.memory_space<vmem>>, %arg6: memref<128x512xbf16, #tpu.memory_space<vmem>>, %arg7: memref<128x128xbf16, #tpu.memory_space<vmem>>, %arg8: memref<1x128xf32, #tpu.memory_space<vmem>>, %arg9: memref<64x128xf32, #tpu.memory_space<vmem>>, %arg10: memref<64x512xf32, #tpu.memory_space<vmem>>, %arg11: memref<64x128xf32, #tpu.memory_space<vmem>>) attributes {dimension_semantics = [], scalar_prefetch = 0 : i64, scratch_operands = 2 : i64, tpu.core_type = #tpu.core_type<tc>} {
    %0 = tpu.iota {dimensions = array<i32: 1>} : vector<8x512xi32>
    %c64_i32 = arith.constant 64 : i32
    %1 = vector.broadcast %c64_i32 : i32 to vector<8x512xi32>
    %2 = arith.andi %0, %1 : vector<8x512xi32>
    %c0_i32 = arith.constant 0 : i32
    %3 = vector.broadcast %c0_i32 : i32 to vector<8x512xi32>
    %4 = arith.cmpi eq, %2, %3 : vector<8x512xi32>
    %c0 = arith.constant 0 : index
    %c0_0 = arith.constant 0 : index
    %5 = vector.load %arg0[%c0, %c0_0] : memref<64x20xf32, #tpu.memory_space<vmem>>, vector<64x20xf32>
    %c0_1 = arith.constant 0 : index
    %c0_2 = arith.constant 0 : index
    %6 = vector.load %arg1[%c0_1, %c0_2] : memref<20x512xf32, #tpu.memory_space<vmem>>, vector<20x512xf32>
    %cst = arith.constant dense<0.000000e+00> : vector<64x512xf32>
    %7 = tpu.matmul %5, %6, %cst {dimension_numbers = #tpu.dot_dimension_numbers<[1], [0], [0], [1], [0, 0, 1, 1], [], []>} : vector<64x20xf32>, vector<20x512xf32>, vector<64x512xf32> -> vector<64x512xf32>
    %c0_3 = arith.constant 0 : index
    %c0_4 = arith.constant 0 : index
    %8 = vector.load %arg2[%c0_3, %c0_4] : memref<1x512xf32, #tpu.memory_space<vmem>>, vector<1x512xf32>
    %9 = vector.broadcast %8 : vector<1x512xf32> to vector<64x512xf32>
    %10 = arith.addf %7, %9 : vector<64x512xf32>
    %c0_5 = arith.constant 0 : index
    %c0_6 = arith.constant 0 : index
    %11 = vector.load %arg10[%c0_5, %c0_6] : memref<64x512xf32, #tpu.memory_space<vmem>>, vector<64x512xf32>
    tpu.vector_store %arg10[%c0_5, %c0_6], %10 {strides = array<i32>} : memref<64x512xf32, #tpu.memory_space<vmem>>, vector<64x512xf32>,
    %cst_7 = arith.constant 0.000000e+00 : f32
    %12 = vector.broadcast %cst_7 : f32 to vector<8x128xf32>
    %cst_8 = arith.constant 0.000000e+00 : f32
    %13 = vector.broadcast %cst_8 : f32 to vector<8x128xf32>
    %14 = arith.truncf %12 : vector<8x128xf32> to vector<8x128xbf16>
    %c0_9 = arith.constant 0 : index
    %c0_10 = arith.constant 0 : index
    %15 = vector.load %arg3[%c0_9, %c0_10] : memref<128x512xbf16, #tpu.memory_space<vmem>>, vector<128x512xbf16>
    %cst_11 = arith.constant dense<0.000000e+00> : vector<8x512xf32>
    %16 = tpu.matmul %14, %15, %cst_11 {dimension_numbers = #tpu.dot_dimension_numbers<[1], [0], [0], [1], [0, 0, 1, 1], [], []>} : vector<8x128xbf16>, vector<128x512xbf16>, vector<8x512xf32> -> vector<8x512xf32>
    %c0_12 = arith.constant 0 : index
    %c0_13 = arith.constant 0 : index
    %17 = vector.load %arg10[%c0_12, %c0_13] : memref<64x512xf32, #tpu.memory_space<vmem>>, vector<8x512xf32>
    %c56 = arith.constant 56 : index
    %c0_14 = arith.constant 0 : index
    %18 = vector.load %arg10[%c56, %c0_14] : memref<64x512xf32, #tpu.memory_space<vmem>>, vector<8x512xf32>
    %19 = arith.select %4, %17, %18 : vector<8x512xi1>, vector<8x512xf32>
    %20 = arith.addf %19, %16 : vector<8x512xf32>
    %21 = vector.extract_strided_slice %20 {offsets = [0, 0], sizes = [8, 384], strides = [1, 1]} : vector<8x512xf32> to vector<8x384xf32>
    %22 = arith.negf %21 : vector<8x384xf32>
    %23 = math.exp %22 : vector<8x384xf32>
    %cst_15 = arith.constant 1.000000e+00 : f32
    %24 = vector.broadcast %cst_15 : f32 to vector<8x384xf32>
    %25 = arith.addf %24, %23 : vector<8x384xf32>
    %26 = arith.divf %24, %25 : vector<8x384xf32>
    %27 = vector.extract_strided_slice %20 {offsets = [0, 384], sizes = [8, 128], strides = [1, 1]} : vector<8x512xf32> to vector<8x128xf32>
    %28 = math.tanh %27 : vector<8x128xf32>
    %29 = vector.extract_strided_slice %26 {offsets = [0, 128], sizes = [8, 128], strides = [1, 1]} : vector<8x384xf32> to vector<8x128xf32>
    %30 = arith.mulf %29, %13 : vector<8x128xf32>
    %31 = vector.extract_strided_slice %26 {offsets = [0, 0], sizes = [8, 128], strides = [1, 1]} : vector<8x384xf32> to vector<8x128xf32>
    %32 = arith.mulf %31, %28 : vector<8x128xf32>
    %33 = arith.addf %30, %32 : vector<8x128xf32>
    %34 = vector.extract_strided_slice %26 {offsets = [0, 256], sizes = [8, 128], strides = [1, 1]} : vector<8x384xf32> to vector<8x128xf32>
    %35 = math.tanh %33 : vector<8x128xf32>
    %36 = arith.mulf %34, %35 : vector<8x128xf32>
    %37 = vector.extract_strided_slice %36 {offsets = [0, 0], sizes = [8, 64], strides = [1, 1]} : vector<8x128xf32> to vector<8x64xf32>
    %c0_16 = arith.constant 0 : index
    %c0_17 = arith.constant 0 : index
    %38 = vector.load %arg11[%c0_16, %c0_17] : memref<64x128xf32, #tpu.memory_space<vmem>>, vector<8x64xf32>
    tpu.vector_store %arg11[%c0_16, %c0_17], %37 {strides = array<i32>} : memref<64x128xf32, #tpu.memory_space<vmem>>, vector<8x64xf32>,
    %39 = vector.extract_strided_slice %36 {offsets = [0, 64], sizes = [8, 64], strides = [1, 1]} : vector<8x128xf32> to vector<8x64xf32>
    %c56_18 = arith.constant 56 : index
    %c64 = arith.constant 64 : index
    %40 = vector.load %arg11[%c56_18, %c64] : memref<64x128xf32, #tpu.memory_space<vmem>>, vector<8x64xf32>
    tpu.vector_store %arg11[%c56_18, %c64], %39 {strides = array<i32>} : memref<64x128xf32, #tpu.memory_space<vmem>>, vector<8x64xf32>,
    %41 = arith.truncf %36 : vector<8x128xf32> to vector<8x128xbf16>
    %c0_19 = arith.constant 0 : index
    %c0_20 = arith.constant 0 : index
    %42 = vector.load %arg3[%c0_19, %c0_20] : memref<128x512xbf16, #tpu.memory_space<vmem>>, vector<128x512xbf16>
    %cst_21 = arith.constant dense<0.000000e+00> : vector<8x512xf32>
    %43 = tpu.matmul %41, %42, %cst_21 {dimension_numbers = #tpu.dot_dimension_numbers<[1], [0], [0], [1], [0, 0, 1, 1], [], []>} : vector<8x128xbf16>, vector<128x512xbf16>, vector<8x512xf32> -> vector<8x512xf32>
    %c8 = arith.constant 8 : index
    %c0_22 = arith.constant 0 : index
    %44 = vector.load %arg10[%c8, %c0_22] : memref<64x512xf32, #tpu.memory_space<vmem>>, vector<8x512xf32>
    %c48 = arith.constant 48 : index
    %c0_23 = arith.constant 0 : index
    %45 = vector.load %arg10[%c48, %c0_23] : memref<64x512xf32, #tpu.memory_space<vmem>>, vector<8x512xf32>
    %46 = arith.select %4, %44, %45 : vector<8x512xi1>, vector<8x512xf32>
    %47 = arith.addf %46, %43 : vector<8x512xf32>
    %48 = vector.extract_strided_slice %47 {offsets = [0, 0], sizes = [8, 384], strides = [1, 1]} : vector<8x512xf32> to vector<8x384xf32>
    %49 = arith.negf %48 : vector<8x384xf32>
    %50 = math.exp %49 : vector<8x384xf32>
    %cst_24 = arith.constant 1.000000e+00 : f32
    %51 = vector.broadcast %cst_24 : f32 to vector<8x384xf32>
    %52 = arith.addf %51, %50 : vector<8x384xf32>
    %53 = arith.divf %51, %52 : vector<8x384xf32>
    %54 = vector.extract_strided_slice %47 {offsets = [0, 384], sizes = [8, 128], strides = [1, 1]} : vector<8x512xf32> to vector<8x128xf32>
    %55 = math.tanh %54 : vector<8x128xf32>
    %56 = vector.extract_strided_slice %53 {offsets = [0, 128], sizes = [8, 128], strides = [1, 1]} : vector<8x384xf32> to vector<8x128xf32>
    %57 = arith.mulf %56, %33 : vector<8x128xf32>
    %58 = vector.extract_strided_slice %53 {offsets = [0, 0], sizes = [8, 128], strides = [1, 1]} : vector<8x384xf32> to vector<8x128xf32>
    %59 = arith.mulf %58, %55 : vector<8x128xf32>
    %60 = arith.addf %57, %59 : vector<8x128xf32>
    %61 = vector.extract_strided_slice %53 {offsets = [0, 256], sizes = [8, 128], strides = [1, 1]} : vector<8x384xf32> to vector<8x128xf32>
    %62 = math.tanh %60 : vector<8x128xf32>
    %63 = arith.mulf %61, %62 : vector<8x128xf32>
    %64 = vector.extract_strided_slice %63 {offsets = [0, 0], sizes = [8, 64], strides = [1, 1]} : vector<8x128xf32> to vector<8x64xf32>
    %c8_25 = arith.constant 8 : index
    %c0_26 = arith.constant 0 : index
    %65 = vector.load %arg11[%c8_25, %c0_26] : memref<64x128xf32, #tpu.memory_space<vmem>>, vector<8x64xf32>
    tpu.vector_store %arg11[%c8_25, %c0_26], %64 {strides = array<i32>} : memref<64x128xf32, #tpu.memory_space<vmem>>, vector<8x64xf32>,
    %66 = vector.extract_strided_slice %63 {offsets = [0, 64], sizes = [8, 64], strides = [1, 1]} : vector<8x128xf32> to vector<8x64xf32>
    %c48_27 = arith.constant 48 : index
    %c64_28 = arith.constant 64 : index
    %67 = vector.load %arg11[%c48_27, %c64_28] : memref<64x128xf32, #tpu.memory_space<vmem>>, vector<8x64xf32>
    tpu.vector_store %arg11[%c48_27, %c64_28], %66 {strides = array<i32>} : memref<64x128xf32, #tpu.memory_space<vmem>>, vector<8x64xf32>,
    %68 = arith.truncf %63 : vector<8x128xf32> to vector<8x128xbf16>
    %c0_29 = arith.constant 0 : index
    %c0_30 = arith.constant 0 : index
    %69 = vector.load %arg3[%c0_29, %c0_30] : memref<128x512xbf16, #tpu.memory_space<vmem>>, vector<128x512xbf16>
    %cst_31 = arith.constant dense<0.000000e+00> : vector<8x512xf32>
    %70 = tpu.matmul %68, %69, %cst_31 {dimension_numbers = #tpu.dot_dimension_numbers<[1], [0], [0], [1], [0, 0, 1, 1], [], []>} : vector<8x128xbf16>, vector<128x512xbf16>, vector<8x512xf32> -> vector<8x512xf32>
    %c16 = arith.constant 16 : index
    %c0_32 = arith.constant 0 : index
    %71 = vector.load %arg10[%c16, %c0_32] : memref<64x512xf32, #tpu.memory_space<vmem>>, vector<8x512xf32>
    %c40 = arith.constant 40 : index
    %c0_33 = arith.constant 0 : index
    %72 = vector.load %arg10[%c40, %c0_33] : memref<64x512xf32, #tpu.memory_space<vmem>>, vector<8x512xf32>
    %73 = arith.select %4, %71, %72 : vector<8x512xi1>, vector<8x512xf32>
    %74 = arith.addf %73, %70 : vector<8x512xf32>
    %75 = vector.extract_strided_slice %74 {offsets = [0, 0], sizes = [8, 384], strides = [1, 1]} : vector<8x512xf32> to vector<8x384xf32>
    %76 = arith.negf %75 : vector<8x384xf32>
    %77 = math.exp %76 : vector<8x384xf32>
    %cst_34 = arith.constant 1.000000e+00 : f32
    %78 = vector.broadcast %cst_34 : f32 to vector<8x384xf32>
    %79 = arith.addf %78, %77 : vector<8x384xf32>
    %80 = arith.divf %78, %79 : vector<8x384xf32>
    %81 = vector.extract_strided_slice %74 {offsets = [0, 384], sizes = [8, 128], strides = [1, 1]} : vector<8x512xf32> to vector<8x128xf32>
    %82 = math.tanh %81 : vector<8x128xf32>
    %83 = vector.extract_strided_slice %80 {offsets = [0, 128], sizes = [8, 128], strides = [1, 1]} : vector<8x384xf32> to vector<8x128xf32>
    %84 = arith.mulf %83, %60 : vector<8x128xf32>
    %85 = vector.extract_strided_slice %80 {offsets = [0, 0], sizes = [8, 128], strides = [1, 1]} : vector<8x384xf32> to vector<8x128xf32>
    %86 = arith.mulf %85, %82 : vector<8x128xf32>
    %87 = arith.addf %84, %86 : vector<8x128xf32>
    %88 = vector.extract_strided_slice %80 {offsets = [0, 256], sizes = [8, 128], strides = [1, 1]} : vector<8x384xf32> to vector<8x128xf32>
    %89 = math.tanh %87 : vector<8x128xf32>
    %90 = arith.mulf %88, %89 : vector<8x128xf32>
    %91 = vector.extract_strided_slice %90 {offsets = [0, 0], sizes = [8, 64], strides = [1, 1]} : vector<8x128xf32> to vector<8x64xf32>
    %c16_35 = arith.constant 16 : index
    %c0_36 = arith.constant 0 : index
    %92 = vector.load %arg11[%c16_35, %c0_36] : memref<64x128xf32, #tpu.memory_space<vmem>>, vector<8x64xf32>
    tpu.vector_store %arg11[%c16_35, %c0_36], %91 {strides = array<i32>} : memref<64x128xf32, #tpu.memory_space<vmem>>, vector<8x64xf32>,
    %93 = vector.extract_strided_slice %90 {offsets = [0, 64], sizes = [8, 64], strides = [1, 1]} : vector<8x128xf32> to vector<8x64xf32>
    %c40_37 = arith.constant 40 : index
    %c64_38 = arith.constant 64 : index
    %94 = vector.load %arg11[%c40_37, %c64_38] : memref<64x128xf32, #tpu.memory_space<vmem>>, vector<8x64xf32>
    tpu.vector_store %arg11[%c40_37, %c64_38], %93 {strides = array<i32>} : memref<64x128xf32, #tpu.memory_space<vmem>>, vector<8x64xf32>,
    %95 = arith.truncf %90 : vector<8x128xf32> to vector<8x128xbf16>
    %c0_39 = arith.constant 0 : index
    %c0_40 = arith.constant 0 : index
    %96 = vector.load %arg3[%c0_39, %c0_40] : memref<128x512xbf16, #tpu.memory_space<vmem>>, vector<128x512xbf16>
    %cst_41 = arith.constant dense<0.000000e+00> : vector<8x512xf32>
    %97 = tpu.matmul %95, %96, %cst_41 {dimension_numbers = #tpu.dot_dimension_numbers<[1], [0], [0], [1], [0, 0, 1, 1], [], []>} : vector<8x128xbf16>, vector<128x512xbf16>, vector<8x512xf32> -> vector<8x512xf32>
    %c24 = arith.constant 24 : index
    %c0_42 = arith.constant 0 : index
    %98 = vector.load %arg10[%c24, %c0_42] : memref<64x512xf32, #tpu.memory_space<vmem>>, vector<8x512xf32>
    %c32 = arith.constant 32 : index
    %c0_43 = arith.constant 0 : index
    %99 = vector.load %arg10[%c32, %c0_43] : memref<64x512xf32, #tpu.memory_space<vmem>>, vector<8x512xf32>
    %100 = arith.select %4, %98, %99 : vector<8x512xi1>, vector<8x512xf32>
    %101 = arith.addf %100, %97 : vector<8x512xf32>
    %102 = vector.extract_strided_slice %101 {offsets = [0, 0], sizes = [8, 384], strides = [1, 1]} : vector<8x512xf32> to vector<8x384xf32>
    %103 = arith.negf %102 : vector<8x384xf32>
    %104 = math.exp %103 : vector<8x384xf32>
    %cst_44 = arith.constant 1.000000e+00 : f32
    %105 = vector.broadcast %cst_44 : f32 to vector<8x384xf32>
    %106 = arith.addf %105, %104 : vector<8x384xf32>
    %107 = arith.divf %105, %106 : vector<8x384xf32>
    %108 = vector.extract_strided_slice %101 {offsets = [0, 384], sizes = [8, 128], strides = [1, 1]} : vector<8x512xf32> to vector<8x128xf32>
    %109 = math.tanh %108 : vector<8x128xf32>
    %110 = vector.extract_strided_slice %107 {offsets = [0, 128], sizes = [8, 128], strides = [1, 1]} : vector<8x384xf32> to vector<8x128xf32>
    %111 = arith.mulf %110, %87 : vector<8x128xf32>
    %112 = vector.extract_strided_slice %107 {offsets = [0, 0], sizes = [8, 128], strides = [1, 1]} : vector<8x384xf32> to vector<8x128xf32>
    %113 = arith.mulf %112, %109 : vector<8x128xf32>
    %114 = arith.addf %111, %113 : vector<8x128xf32>
    %115 = vector.extract_strided_slice %107 {offsets = [0, 256], sizes = [8, 128], strides = [1, 1]} : vector<8x384xf32> to vector<8x128xf32>
    %116 = math.tanh %114 : vector<8x128xf32>
    %117 = arith.mulf %115, %116 : vector<8x128xf32>
    %118 = vector.extract_strided_slice %117 {offsets = [0, 0], sizes = [8, 64], strides = [1, 1]} : vector<8x128xf32> to vector<8x64xf32>
    %c24_45 = arith.constant 24 : index
    %c0_46 = arith.constant 0 : index
    %119 = vector.load %arg11[%c24_45, %c0_46] : memref<64x128xf32, #tpu.memory_space<vmem>>, vector<8x64xf32>
    tpu.vector_store %arg11[%c24_45, %c0_46], %118 {strides = array<i32>} : memref<64x128xf32, #tpu.memory_space<vmem>>, vector<8x64xf32>,
    %120 = vector.extract_strided_slice %117 {offsets = [0, 64], sizes = [8, 64], strides = [1, 1]} : vector<8x128xf32> to vector<8x64xf32>
    %c32_47 = arith.constant 32 : index
    %c64_48 = arith.constant 64 : index
    %121 = vector.load %arg11[%c32_47, %c64_48] : memref<64x128xf32, #tpu.memory_space<vmem>>, vector<8x64xf32>
    tpu.vector_store %arg11[%c32_47, %c64_48], %120 {strides = array<i32>} : memref<64x128xf32, #tpu.memory_space<vmem>>, vector<8x64xf32>,
    %122 = arith.truncf %117 : vector<8x128xf32> to vector<8x128xbf16>
    %c0_49 = arith.constant 0 : index
    %c0_50 = arith.constant 0 : index
    %123 = vector.load %arg3[%c0_49, %c0_50] : memref<128x512xbf16, #tpu.memory_space<vmem>>, vector<128x512xbf16>
    %cst_51 = arith.constant dense<0.000000e+00> : vector<8x512xf32>
    %124 = tpu.matmul %122, %123, %cst_51 {dimension_numbers = #tpu.dot_dimension_numbers<[1], [0], [0], [1], [0, 0, 1, 1], [], []>} : vector<8x128xbf16>, vector<128x512xbf16>, vector<8x512xf32> -> vector<8x512xf32>
    %c32_52 = arith.constant 32 : index
    %c0_53 = arith.constant 0 : index
    %125 = vector.load %arg10[%c32_52, %c0_53] : memref<64x512xf32, #tpu.memory_space<vmem>>, vector<8x512xf32>
    %c24_54 = arith.constant 24 : index
    %c0_55 = arith.constant 0 : index
    %126 = vector.load %arg10[%c24_54, %c0_55] : memref<64x512xf32, #tpu.memory_space<vmem>>, vector<8x512xf32>
    %127 = arith.select %4, %125, %126 : vector<8x512xi1>, vector<8x512xf32>
    %128 = arith.addf %127, %124 : vector<8x512xf32>
    %129 = vector.extract_strided_slice %128 {offsets = [0, 0], sizes = [8, 384], strides = [1, 1]} : vector<8x512xf32> to vector<8x384xf32>
    %130 = arith.negf %129 : vector<8x384xf32>
    %131 = math.exp %130 : vector<8x384xf32>
    %cst_56 = arith.constant 1.000000e+00 : f32
    %132 = vector.broadcast %cst_56 : f32 to vector<8x384xf32>
    %133 = arith.addf %132, %131 : vector<8x384xf32>
    %134 = arith.divf %132, %133 : vector<8x384xf32>
    %135 = vector.extract_strided_slice %128 {offsets = [0, 384], sizes = [8, 128], strides = [1, 1]} : vector<8x512xf32> to vector<8x128xf32>
    %136 = math.tanh %135 : vector<8x128xf32>
    %137 = vector.extract_strided_slice %134 {offsets = [0, 128], sizes = [8, 128], strides = [1, 1]} : vector<8x384xf32> to vector<8x128xf32>
    %138 = arith.mulf %137, %114 : vector<8x128xf32>
    %139 = vector.extract_strided_slice %134 {offsets = [0, 0], sizes = [8, 128], strides = [1, 1]} : vector<8x384xf32> to vector<8x128xf32>
    %140 = arith.mulf %139, %136 : vector<8x128xf32>
    %141 = arith.addf %138, %140 : vector<8x128xf32>
    %142 = vector.extract_strided_slice %134 {offsets = [0, 256], sizes = [8, 128], strides = [1, 1]} : vector<8x384xf32> to vector<8x128xf32>
    %143 = math.tanh %141 : vector<8x128xf32>
    %144 = arith.mulf %142, %143 : vector<8x128xf32>
    %145 = vector.extract_strided_slice %144 {offsets = [0, 0], sizes = [8, 64], strides = [1, 1]} : vector<8x128xf32> to vector<8x64xf32>
    %c32_57 = arith.constant 32 : index
    %c0_58 = arith.constant 0 : index
    %146 = vector.load %arg11[%c32_57, %c0_58] : memref<64x128xf32, #tpu.memory_space<vmem>>, vector<8x64xf32>
    tpu.vector_store %arg11[%c32_57, %c0_58], %145 {strides = array<i32>} : memref<64x128xf32, #tpu.memory_space<vmem>>, vector<8x64xf32>,
    %147 = vector.extract_strided_slice %144 {offsets = [0, 64], sizes = [8, 64], strides = [1, 1]} : vector<8x128xf32> to vector<8x64xf32>
    %c24_59 = arith.constant 24 : index
    %c64_60 = arith.constant 64 : index
    %148 = vector.load %arg11[%c24_59, %c64_60] : memref<64x128xf32, #tpu.memory_space<vmem>>, vector<8x64xf32>
    tpu.vector_store %arg11[%c24_59, %c64_60], %147 {strides = array<i32>} : memref<64x128xf32, #tpu.memory_space<vmem>>, vector<8x64xf32>,
    %149 = arith.truncf %144 : vector<8x128xf32> to vector<8x128xbf16>
    %c0_61 = arith.constant 0 : index
    %c0_62 = arith.constant 0 : index
    %150 = vector.load %arg3[%c0_61, %c0_62] : memref<128x512xbf16, #tpu.memory_space<vmem>>, vector<128x512xbf16>
    %cst_63 = arith.constant dense<0.000000e+00> : vector<8x512xf32>
    %151 = tpu.matmul %149, %150, %cst_63 {dimension_numbers = #tpu.dot_dimension_numbers<[1], [0], [0], [1], [0, 0, 1, 1], [], []>} : vector<8x128xbf16>, vector<128x512xbf16>, vector<8x512xf32> -> vector<8x512xf32>
    %c40_64 = arith.constant 40 : index
    %c0_65 = arith.constant 0 : index
    %152 = vector.load %arg10[%c40_64, %c0_65] : memref<64x512xf32, #tpu.memory_space<vmem>>, vector<8x512xf32>
    %c16_66 = arith.constant 16 : index
    %c0_67 = arith.constant 0 : index
    %153 = vector.load %arg10[%c16_66, %c0_67] : memref<64x512xf32, #tpu.memory_space<vmem>>, vector<8x512xf32>
    %154 = arith.select %4, %152, %153 : vector<8x512xi1>, vector<8x512xf32>
    %155 = arith.addf %154, %151 : vector<8x512xf32>
    %156 = vector.extract_strided_slice %155 {offsets = [0, 0], sizes = [8, 384], strides = [1, 1]} : vector<8x512xf32> to vector<8x384xf32>
    %157 = arith.negf %156 : vector<8x384xf32>
    %158 = math.exp %157 : vector<8x384xf32>
    %cst_68 = arith.constant 1.000000e+00 : f32
    %159 = vector.broadcast %cst_68 : f32 to vector<8x384xf32>
    %160 = arith.addf %159, %158 : vector<8x384xf32>
    %161 = arith.divf %159, %160 : vector<8x384xf32>
    %162 = vector.extract_strided_slice %155 {offsets = [0, 384], sizes = [8, 128], strides = [1, 1]} : vector<8x512xf32> to vector<8x128xf32>
    %163 = math.tanh %162 : vector<8x128xf32>
    %164 = vector.extract_strided_slice %161 {offsets = [0, 128], sizes = [8, 128], strides = [1, 1]} : vector<8x384xf32> to vector<8x128xf32>
    %165 = arith.mulf %164, %141 : vector<8x128xf32>
    %166 = vector.extract_strided_slice %161 {offsets = [0, 0], sizes = [8, 128], strides = [1, 1]} : vector<8x384xf32> to vector<8x128xf32>
    %167 = arith.mulf %166, %163 : vector<8x128xf32>
    %168 = arith.addf %165, %167 : vector<8x128xf32>
    %169 = vector.extract_strided_slice %161 {offsets = [0, 256], sizes = [8, 128], strides = [1, 1]} : vector<8x384xf32> to vector<8x128xf32>
    %170 = math.tanh %168 : vector<8x128xf32>
    %171 = arith.mulf %169, %170 : vector<8x128xf32>
    %172 = vector.extract_strided_slice %171 {offsets = [0, 0], sizes = [8, 64], strides = [1, 1]} : vector<8x128xf32> to vector<8x64xf32>
    %c40_69 = arith.constant 40 : index
    %c0_70 = arith.constant 0 : index
    %173 = vector.load %arg11[%c40_69, %c0_70] : memref<64x128xf32, #tpu.memory_space<vmem>>, vector<8x64xf32>
    tpu.vector_store %arg11[%c40_69, %c0_70], %172 {strides = array<i32>} : memref<64x128xf32, #tpu.memory_space<vmem>>, vector<8x64xf32>,
    %174 = vector.extract_strided_slice %171 {offsets = [0, 64], sizes = [8, 64], strides = [1, 1]} : vector<8x128xf32> to vector<8x64xf32>
    %c16_71 = arith.constant 16 : index
    %c64_72 = arith.constant 64 : index
    %175 = vector.load %arg11[%c16_71, %c64_72] : memref<64x128xf32, #tpu.memory_space<vmem>>, vector<8x64xf32>
    tpu.vector_store %arg11[%c16_71, %c64_72], %174 {strides = array<i32>} : memref<64x128xf32, #tpu.memory_space<vmem>>, vector<8x64xf32>,
    %176 = arith.truncf %171 : vector<8x128xf32> to vector<8x128xbf16>
    %c0_73 = arith.constant 0 : index
    %c0_74 = arith.constant 0 : index
    %177 = vector.load %arg3[%c0_73, %c0_74] : memref<128x512xbf16, #tpu.memory_space<vmem>>, vector<128x512xbf16>
    %cst_75 = arith.constant dense<0.000000e+00> : vector<8x512xf32>
    %178 = tpu.matmul %176, %177, %cst_75 {dimension_numbers = #tpu.dot_dimension_numbers<[1], [0], [0], [1], [0, 0, 1, 1], [], []>} : vector<8x128xbf16>, vector<128x512xbf16>, vector<8x512xf32> -> vector<8x512xf32>
    %c48_76 = arith.constant 48 : index
    %c0_77 = arith.constant 0 : index
    %179 = vector.load %arg10[%c48_76, %c0_77] : memref<64x512xf32, #tpu.memory_space<vmem>>, vector<8x512xf32>
    %c8_78 = arith.constant 8 : index
    %c0_79 = arith.constant 0 : index
    %180 = vector.load %arg10[%c8_78, %c0_79] : memref<64x512xf32, #tpu.memory_space<vmem>>, vector<8x512xf32>
    %181 = arith.select %4, %179, %180 : vector<8x512xi1>, vector<8x512xf32>
    %182 = arith.addf %181, %178 : vector<8x512xf32>
    %183 = vector.extract_strided_slice %182 {offsets = [0, 0], sizes = [8, 384], strides = [1, 1]} : vector<8x512xf32> to vector<8x384xf32>
    %184 = arith.negf %183 : vector<8x384xf32>
    %185 = math.exp %184 : vector<8x384xf32>
    %cst_80 = arith.constant 1.000000e+00 : f32
    %186 = vector.broadcast %cst_80 : f32 to vector<8x384xf32>
    %187 = arith.addf %186, %185 : vector<8x384xf32>
    %188 = arith.divf %186, %187 : vector<8x384xf32>
    %189 = vector.extract_strided_slice %182 {offsets = [0, 384], sizes = [8, 128], strides = [1, 1]} : vector<8x512xf32> to vector<8x128xf32>
    %190 = math.tanh %189 : vector<8x128xf32>
    %191 = vector.extract_strided_slice %188 {offsets = [0, 128], sizes = [8, 128], strides = [1, 1]} : vector<8x384xf32> to vector<8x128xf32>
    %192 = arith.mulf %191, %168 : vector<8x128xf32>
    %193 = vector.extract_strided_slice %188 {offsets = [0, 0], sizes = [8, 128], strides = [1, 1]} : vector<8x384xf32> to vector<8x128xf32>
    %194 = arith.mulf %193, %190 : vector<8x128xf32>
    %195 = arith.addf %192, %194 : vector<8x128xf32>
    %196 = vector.extract_strided_slice %188 {offsets = [0, 256], sizes = [8, 128], strides = [1, 1]} : vector<8x384xf32> to vector<8x128xf32>
    %197 = math.tanh %195 : vector<8x128xf32>
    %198 = arith.mulf %196, %197 : vector<8x128xf32>
    %199 = vector.extract_strided_slice %198 {offsets = [0, 0], sizes = [8, 64], strides = [1, 1]} : vector<8x128xf32> to vector<8x64xf32>
    %c48_81 = arith.constant 48 : index
    %c0_82 = arith.constant 0 : index
    %200 = vector.load %arg11[%c48_81, %c0_82] : memref<64x128xf32, #tpu.memory_space<vmem>>, vector<8x64xf32>
    tpu.vector_store %arg11[%c48_81, %c0_82], %199 {strides = array<i32>} : memref<64x128xf32, #tpu.memory_space<vmem>>, vector<8x64xf32>,
    %201 = vector.extract_strided_slice %198 {offsets = [0, 64], sizes = [8, 64], strides = [1, 1]} : vector<8x128xf32> to vector<8x64xf32>
    %c8_83 = arith.constant 8 : index
    %c64_84 = arith.constant 64 : index
    %202 = vector.load %arg11[%c8_83, %c64_84] : memref<64x128xf32, #tpu.memory_space<vmem>>, vector<8x64xf32>
    tpu.vector_store %arg11[%c8_83, %c64_84], %201 {strides = array<i32>} : memref<64x128xf32, #tpu.memory_space<vmem>>, vector<8x64xf32>,
    %203 = arith.truncf %198 : vector<8x128xf32> to vector<8x128xbf16>
    %c0_85 = arith.constant 0 : index
    %c0_86 = arith.constant 0 : index
    %204 = vector.load %arg3[%c0_85, %c0_86] : memref<128x512xbf16, #tpu.memory_space<vmem>>, vector<128x512xbf16>
    %cst_87 = arith.constant dense<0.000000e+00> : vector<8x512xf32>
    %205 = tpu.matmul %203, %204, %cst_87 {dimension_numbers = #tpu.dot_dimension_numbers<[1], [0], [0], [1], [0, 0, 1, 1], [], []>} : vector<8x128xbf16>, vector<128x512xbf16>, vector<8x512xf32> -> vector<8x512xf32>
    %c56_88 = arith.constant 56 : index
    %c0_89 = arith.constant 0 : index
    %206 = vector.load %arg10[%c56_88, %c0_89] : memref<64x512xf32, #tpu.memory_space<vmem>>, vector<8x512xf32>
    %c0_90 = arith.constant 0 : index
    %c0_91 = arith.constant 0 : index
    %207 = vector.load %arg10[%c0_90, %c0_91] : memref<64x512xf32, #tpu.memory_space<vmem>>, vector<8x512xf32>
    %208 = arith.select %4, %206, %207 : vector<8x512xi1>, vector<8x512xf32>
    %209 = arith.addf %208, %205 : vector<8x512xf32>
    %210 = vector.extract_strided_slice %209 {offsets = [0, 0], sizes = [8, 384], strides = [1, 1]} : vector<8x512xf32> to vector<8x384xf32>
    %211 = arith.negf %210 : vector<8x384xf32>
    %212 = math.exp %211 : vector<8x384xf32>
    %cst_92 = arith.constant 1.000000e+00 : f32
    %213 = vector.broadcast %cst_92 : f32 to vector<8x384xf32>
    %214 = arith.addf %213, %212 : vector<8x384xf32>
    %215 = arith.divf %213, %214 : vector<8x384xf32>
    %216 = vector.extract_strided_slice %209 {offsets = [0, 384], sizes = [8, 128], strides = [1, 1]} : vector<8x512xf32> to vector<8x128xf32>
    %217 = math.tanh %216 : vector<8x128xf32>
    %218 = vector.extract_strided_slice %215 {offsets = [0, 128], sizes = [8, 128], strides = [1, 1]} : vector<8x384xf32> to vector<8x128xf32>
    %219 = arith.mulf %218, %195 : vector<8x128xf32>
    %220 = vector.extract_strided_slice %215 {offsets = [0, 0], sizes = [8, 128], strides = [1, 1]} : vector<8x384xf32> to vector<8x128xf32>
    %221 = arith.mulf %220, %217 : vector<8x128xf32>
    %222 = arith.addf %219, %221 : vector<8x128xf32>
    %223 = vector.extract_strided_slice %215 {offsets = [0, 256], sizes = [8, 128], strides = [1, 1]} : vector<8x384xf32> to vector<8x128xf32>
    %224 = math.tanh %222 : vector<8x128xf32>
    %225 = arith.mulf %223, %224 : vector<8x128xf32>
    %226 = vector.extract_strided_slice %225 {offsets = [0, 0], sizes = [8, 64], strides = [1, 1]} : vector<8x128xf32> to vector<8x64xf32>
    %c56_93 = arith.constant 56 : index
    %c0_94 = arith.constant 0 : index
    %227 = vector.load %arg11[%c56_93, %c0_94] : memref<64x128xf32, #tpu.memory_space<vmem>>, vector<8x64xf32>
    tpu.vector_store %arg11[%c56_93, %c0_94], %226 {strides = array<i32>} : memref<64x128xf32, #tpu.memory_space<vmem>>, vector<8x64xf32>,
    %228 = vector.extract_strided_slice %225 {offsets = [0, 64], sizes = [8, 64], strides = [1, 1]} : vector<8x128xf32> to vector<8x64xf32>
    %c0_95 = arith.constant 0 : index
    %c64_96 = arith.constant 64 : index
    %229 = vector.load %arg11[%c0_95, %c64_96] : memref<64x128xf32, #tpu.memory_space<vmem>>, vector<8x64xf32>
    tpu.vector_store %arg11[%c0_95, %c64_96], %228 {strides = array<i32>} : memref<64x128xf32, #tpu.memory_space<vmem>>, vector<8x64xf32>,
    %c0_97 = arith.constant 0 : index
    %c0_98 = arith.constant 0 : index
    %230 = vector.load %arg11[%c0_97, %c0_98] : memref<64x128xf32, #tpu.memory_space<vmem>>, vector<64x128xf32>
    %231 = arith.truncf %230 : vector<64x128xf32> to vector<64x128xbf16>
    %c0_99 = arith.constant 0 : index
    %c0_100 = arith.constant 0 : index
    %232 = vector.load %arg4[%c0_99, %c0_100] : memref<128x512xbf16, #tpu.memory_space<vmem>>, vector<128x512xbf16>
    %cst_101 = arith.constant dense<0.000000e+00> : vector<64x512xf32>
    %233 = tpu.matmul %231, %232, %cst_101 {dimension_numbers = #tpu.dot_dimension_numbers<[1], [0], [0], [1], [0, 0, 1, 1], [], []>} : vector<64x128xbf16>, vector<128x512xbf16>, vector<64x512xf32> -> vector<64x512xf32>
    %c0_102 = arith.constant 0 : index
    %c0_103 = arith.constant 0 : index
    %234 = vector.load %arg5[%c0_102, %c0_103] : memref<1x512xf32, #tpu.memory_space<vmem>>, vector<1x512xf32>
    %235 = vector.broadcast %234 : vector<1x512xf32> to vector<64x512xf32>
    %236 = arith.addf %233, %235 : vector<64x512xf32>
    %c0_104 = arith.constant 0 : index
    %c0_105 = arith.constant 0 : index
    %237 = vector.load %arg10[%c0_104, %c0_105] : memref<64x512xf32, #tpu.memory_space<vmem>>, vector<64x512xf32>
    tpu.vector_store %arg10[%c0_104, %c0_105], %236 {strides = array<i32>} : memref<64x512xf32, #tpu.memory_space<vmem>>, vector<64x512xf32>,
    %cst_106 = arith.constant 0.000000e+00 : f32
    %238 = vector.broadcast %cst_106 : f32 to vector<8x128xf32>
    %cst_107 = arith.constant 0.000000e+00 : f32
    %239 = vector.broadcast %cst_107 : f32 to vector<8x128xf32>
    %240 = arith.truncf %238 : vector<8x128xf32> to vector<8x128xbf16>
    %c0_108 = arith.constant 0 : index
    %c0_109 = arith.constant 0 : index
    %241 = vector.load %arg6[%c0_108, %c0_109] : memref<128x512xbf16, #tpu.memory_space<vmem>>, vector<128x512xbf16>
    %cst_110 = arith.constant dense<0.000000e+00> : vector<8x512xf32>
    %242 = tpu.matmul %240, %241, %cst_110 {dimension_numbers = #tpu.dot_dimension_numbers<[1], [0], [0], [1], [0, 0, 1, 1], [], []>} : vector<8x128xbf16>, vector<128x512xbf16>, vector<8x512xf32> -> vector<8x512xf32>
    %c0_111 = arith.constant 0 : index
    %c0_112 = arith.constant 0 : index
    %243 = vector.load %arg10[%c0_111, %c0_112] : memref<64x512xf32, #tpu.memory_space<vmem>>, vector<8x512xf32>
    %c56_113 = arith.constant 56 : index
    %c0_114 = arith.constant 0 : index
    %244 = vector.load %arg10[%c56_113, %c0_114] : memref<64x512xf32, #tpu.memory_space<vmem>>, vector<8x512xf32>
    %245 = arith.select %4, %243, %244 : vector<8x512xi1>, vector<8x512xf32>
    %246 = arith.addf %245, %242 : vector<8x512xf32>
    %247 = vector.extract_strided_slice %246 {offsets = [0, 0], sizes = [8, 384], strides = [1, 1]} : vector<8x512xf32> to vector<8x384xf32>
    %248 = arith.negf %247 : vector<8x384xf32>
    %249 = math.exp %248 : vector<8x384xf32>
    %cst_115 = arith.constant 1.000000e+00 : f32
    %250 = vector.broadcast %cst_115 : f32 to vector<8x384xf32>
    %251 = arith.addf %250, %249 : vector<8x384xf32>
    %252 = arith.divf %250, %251 : vector<8x384xf32>
    %253 = vector.extract_strided_slice %246 {offsets = [0, 384], sizes = [8, 128], strides = [1, 1]} : vector<8x512xf32> to vector<8x128xf32>
    %254 = math.tanh %253 : vector<8x128xf32>
    %255 = vector.extract_strided_slice %252 {offsets = [0, 128], sizes = [8, 128], strides = [1, 1]} : vector<8x384xf32> to vector<8x128xf32>
    %256 = arith.mulf %255, %239 : vector<8x128xf32>
    %257 = vector.extract_strided_slice %252 {offsets = [0, 0], sizes = [8, 128], strides = [1, 1]} : vector<8x384xf32> to vector<8x128xf32>
    %258 = arith.mulf %257, %254 : vector<8x128xf32>
    %259 = arith.addf %256, %258 : vector<8x128xf32>
    %260 = vector.extract_strided_slice %252 {offsets = [0, 256], sizes = [8, 128], strides = [1, 1]} : vector<8x384xf32> to vector<8x128xf32>
    %261 = math.tanh %259 : vector<8x128xf32>
    %262 = arith.mulf %260, %261 : vector<8x128xf32>
    %263 = vector.extract_strided_slice %262 {offsets = [0, 0], sizes = [8, 64], strides = [1, 1]} : vector<8x128xf32> to vector<8x64xf32>
    %c0_116 = arith.constant 0 : index
    %c0_117 = arith.constant 0 : index
    %264 = vector.load %arg11[%c0_116, %c0_117] : memref<64x128xf32, #tpu.memory_space<vmem>>, vector<8x64xf32>
    tpu.vector_store %arg11[%c0_116, %c0_117], %263 {strides = array<i32>} : memref<64x128xf32, #tpu.memory_space<vmem>>, vector<8x64xf32>,
    %265 = vector.extract_strided_slice %262 {offsets = [0, 64], sizes = [8, 64], strides = [1, 1]} : vector<8x128xf32> to vector<8x64xf32>
    %c56_118 = arith.constant 56 : index
    %c64_119 = arith.constant 64 : index
    %266 = vector.load %arg11[%c56_118, %c64_119] : memref<64x128xf32, #tpu.memory_space<vmem>>, vector<8x64xf32>
    tpu.vector_store %arg11[%c56_118, %c64_119], %265 {strides = array<i32>} : memref<64x128xf32, #tpu.memory_space<vmem>>, vector<8x64xf32>,
    %267 = arith.truncf %262 : vector<8x128xf32> to vector<8x128xbf16>
    %c0_120 = arith.constant 0 : index
    %c0_121 = arith.constant 0 : index
    %268 = vector.load %arg6[%c0_120, %c0_121] : memref<128x512xbf16, #tpu.memory_space<vmem>>, vector<128x512xbf16>
    %cst_122 = arith.constant dense<0.000000e+00> : vector<8x512xf32>
    %269 = tpu.matmul %267, %268, %cst_122 {dimension_numbers = #tpu.dot_dimension_numbers<[1], [0], [0], [1], [0, 0, 1, 1], [], []>} : vector<8x128xbf16>, vector<128x512xbf16>, vector<8x512xf32> -> vector<8x512xf32>
    %c8_123 = arith.constant 8 : index
    %c0_124 = arith.constant 0 : index
    %270 = vector.load %arg10[%c8_123, %c0_124] : memref<64x512xf32, #tpu.memory_space<vmem>>, vector<8x512xf32>
    %c48_125 = arith.constant 48 : index
    %c0_126 = arith.constant 0 : index
    %271 = vector.load %arg10[%c48_125, %c0_126] : memref<64x512xf32, #tpu.memory_space<vmem>>, vector<8x512xf32>
    %272 = arith.select %4, %270, %271 : vector<8x512xi1>, vector<8x512xf32>
    %273 = arith.addf %272, %269 : vector<8x512xf32>
    %274 = vector.extract_strided_slice %273 {offsets = [0, 0], sizes = [8, 384], strides = [1, 1]} : vector<8x512xf32> to vector<8x384xf32>
    %275 = arith.negf %274 : vector<8x384xf32>
    %276 = math.exp %275 : vector<8x384xf32>
    %cst_127 = arith.constant 1.000000e+00 : f32
    %277 = vector.broadcast %cst_127 : f32 to vector<8x384xf32>
    %278 = arith.addf %277, %276 : vector<8x384xf32>
    %279 = arith.divf %277, %278 : vector<8x384xf32>
    %280 = vector.extract_strided_slice %273 {offsets = [0, 384], sizes = [8, 128], strides = [1, 1]} : vector<8x512xf32> to vector<8x128xf32>
    %281 = math.tanh %280 : vector<8x128xf32>
    %282 = vector.extract_strided_slice %279 {offsets = [0, 128], sizes = [8, 128], strides = [1, 1]} : vector<8x384xf32> to vector<8x128xf32>
    %283 = arith.mulf %282, %259 : vector<8x128xf32>
    %284 = vector.extract_strided_slice %279 {offsets = [0, 0], sizes = [8, 128], strides = [1, 1]} : vector<8x384xf32> to vector<8x128xf32>
    %285 = arith.mulf %284, %281 : vector<8x128xf32>
    %286 = arith.addf %283, %285 : vector<8x128xf32>
    %287 = vector.extract_strided_slice %279 {offsets = [0, 256], sizes = [8, 128], strides = [1, 1]} : vector<8x384xf32> to vector<8x128xf32>
    %288 = math.tanh %286 : vector<8x128xf32>
    %289 = arith.mulf %287, %288 : vector<8x128xf32>
    %290 = vector.extract_strided_slice %289 {offsets = [0, 0], sizes = [8, 64], strides = [1, 1]} : vector<8x128xf32> to vector<8x64xf32>
    %c8_128 = arith.constant 8 : index
    %c0_129 = arith.constant 0 : index
    %291 = vector.load %arg11[%c8_128, %c0_129] : memref<64x128xf32, #tpu.memory_space<vmem>>, vector<8x64xf32>
    tpu.vector_store %arg11[%c8_128, %c0_129], %290 {strides = array<i32>} : memref<64x128xf32, #tpu.memory_space<vmem>>, vector<8x64xf32>,
    %292 = vector.extract_strided_slice %289 {offsets = [0, 64], sizes = [8, 64], strides = [1, 1]} : vector<8x128xf32> to vector<8x64xf32>
    %c48_130 = arith.constant 48 : index
    %c64_131 = arith.constant 64 : index
    %293 = vector.load %arg11[%c48_130, %c64_131] : memref<64x128xf32, #tpu.memory_space<vmem>>, vector<8x64xf32>
    tpu.vector_store %arg11[%c48_130, %c64_131], %292 {strides = array<i32>} : memref<64x128xf32, #tpu.memory_space<vmem>>, vector<8x64xf32>,
    %294 = arith.truncf %289 : vector<8x128xf32> to vector<8x128xbf16>
    %c0_132 = arith.constant 0 : index
    %c0_133 = arith.constant 0 : index
    %295 = vector.load %arg6[%c0_132, %c0_133] : memref<128x512xbf16, #tpu.memory_space<vmem>>, vector<128x512xbf16>
    %cst_134 = arith.constant dense<0.000000e+00> : vector<8x512xf32>
    %296 = tpu.matmul %294, %295, %cst_134 {dimension_numbers = #tpu.dot_dimension_numbers<[1], [0], [0], [1], [0, 0, 1, 1], [], []>} : vector<8x128xbf16>, vector<128x512xbf16>, vector<8x512xf32> -> vector<8x512xf32>
    %c16_135 = arith.constant 16 : index
    %c0_136 = arith.constant 0 : index
    %297 = vector.load %arg10[%c16_135, %c0_136] : memref<64x512xf32, #tpu.memory_space<vmem>>, vector<8x512xf32>
    %c40_137 = arith.constant 40 : index
    %c0_138 = arith.constant 0 : index
    %298 = vector.load %arg10[%c40_137, %c0_138] : memref<64x512xf32, #tpu.memory_space<vmem>>, vector<8x512xf32>
    %299 = arith.select %4, %297, %298 : vector<8x512xi1>, vector<8x512xf32>
    %300 = arith.addf %299, %296 : vector<8x512xf32>
    %301 = vector.extract_strided_slice %300 {offsets = [0, 0], sizes = [8, 384], strides = [1, 1]} : vector<8x512xf32> to vector<8x384xf32>
    %302 = arith.negf %301 : vector<8x384xf32>
    %303 = math.exp %302 : vector<8x384xf32>
    %cst_139 = arith.constant 1.000000e+00 : f32
    %304 = vector.broadcast %cst_139 : f32 to vector<8x384xf32>
    %305 = arith.addf %304, %303 : vector<8x384xf32>
    %306 = arith.divf %304, %305 : vector<8x384xf32>
    %307 = vector.extract_strided_slice %300 {offsets = [0, 384], sizes = [8, 128], strides = [1, 1]} : vector<8x512xf32> to vector<8x128xf32>
    %308 = math.tanh %307 : vector<8x128xf32>
    %309 = vector.extract_strided_slice %306 {offsets = [0, 128], sizes = [8, 128], strides = [1, 1]} : vector<8x384xf32> to vector<8x128xf32>
    %310 = arith.mulf %309, %286 : vector<8x128xf32>
    %311 = vector.extract_strided_slice %306 {offsets = [0, 0], sizes = [8, 128], strides = [1, 1]} : vector<8x384xf32> to vector<8x128xf32>
    %312 = arith.mulf %311, %308 : vector<8x128xf32>
    %313 = arith.addf %310, %312 : vector<8x128xf32>
    %314 = vector.extract_strided_slice %306 {offsets = [0, 256], sizes = [8, 128], strides = [1, 1]} : vector<8x384xf32> to vector<8x128xf32>
    %315 = math.tanh %313 : vector<8x128xf32>
    %316 = arith.mulf %314, %315 : vector<8x128xf32>
    %317 = vector.extract_strided_slice %316 {offsets = [0, 0], sizes = [8, 64], strides = [1, 1]} : vector<8x128xf32> to vector<8x64xf32>
    %c16_140 = arith.constant 16 : index
    %c0_141 = arith.constant 0 : index
    %318 = vector.load %arg11[%c16_140, %c0_141] : memref<64x128xf32, #tpu.memory_space<vmem>>, vector<8x64xf32>
    tpu.vector_store %arg11[%c16_140, %c0_141], %317 {strides = array<i32>} : memref<64x128xf32, #tpu.memory_space<vmem>>, vector<8x64xf32>,
    %319 = vector.extract_strided_slice %316 {offsets = [0, 64], sizes = [8, 64], strides = [1, 1]} : vector<8x128xf32> to vector<8x64xf32>
    %c40_142 = arith.constant 40 : index
    %c64_143 = arith.constant 64 : index
    %320 = vector.load %arg11[%c40_142, %c64_143] : memref<64x128xf32, #tpu.memory_space<vmem>>, vector<8x64xf32>
    tpu.vector_store %arg11[%c40_142, %c64_143], %319 {strides = array<i32>} : memref<64x128xf32, #tpu.memory_space<vmem>>, vector<8x64xf32>,
    %321 = arith.truncf %316 : vector<8x128xf32> to vector<8x128xbf16>
    %c0_144 = arith.constant 0 : index
    %c0_145 = arith.constant 0 : index
    %322 = vector.load %arg6[%c0_144, %c0_145] : memref<128x512xbf16, #tpu.memory_space<vmem>>, vector<128x512xbf16>
    %cst_146 = arith.constant dense<0.000000e+00> : vector<8x512xf32>
    %323 = tpu.matmul %321, %322, %cst_146 {dimension_numbers = #tpu.dot_dimension_numbers<[1], [0], [0], [1], [0, 0, 1, 1], [], []>} : vector<8x128xbf16>, vector<128x512xbf16>, vector<8x512xf32> -> vector<8x512xf32>
    %c24_147 = arith.constant 24 : index
    %c0_148 = arith.constant 0 : index
    %324 = vector.load %arg10[%c24_147, %c0_148] : memref<64x512xf32, #tpu.memory_space<vmem>>, vector<8x512xf32>
    %c32_149 = arith.constant 32 : index
    %c0_150 = arith.constant 0 : index
    %325 = vector.load %arg10[%c32_149, %c0_150] : memref<64x512xf32, #tpu.memory_space<vmem>>, vector<8x512xf32>
    %326 = arith.select %4, %324, %325 : vector<8x512xi1>, vector<8x512xf32>
    %327 = arith.addf %326, %323 : vector<8x512xf32>
    %328 = vector.extract_strided_slice %327 {offsets = [0, 0], sizes = [8, 384], strides = [1, 1]} : vector<8x512xf32> to vector<8x384xf32>
    %329 = arith.negf %328 : vector<8x384xf32>
    %330 = math.exp %329 : vector<8x384xf32>
    %cst_151 = arith.constant 1.000000e+00 : f32
    %331 = vector.broadcast %cst_151 : f32 to vector<8x384xf32>
    %332 = arith.addf %331, %330 : vector<8x384xf32>
    %333 = arith.divf %331, %332 : vector<8x384xf32>
    %334 = vector.extract_strided_slice %327 {offsets = [0, 384], sizes = [8, 128], strides = [1, 1]} : vector<8x512xf32> to vector<8x128xf32>
    %335 = math.tanh %334 : vector<8x128xf32>
    %336 = vector.extract_strided_slice %333 {offsets = [0, 128], sizes = [8, 128], strides = [1, 1]} : vector<8x384xf32> to vector<8x128xf32>
    %337 = arith.mulf %336, %313 : vector<8x128xf32>
    %338 = vector.extract_strided_slice %333 {offsets = [0, 0], sizes = [8, 128], strides = [1, 1]} : vector<8x384xf32> to vector<8x128xf32>
    %339 = arith.mulf %338, %335 : vector<8x128xf32>
    %340 = arith.addf %337, %339 : vector<8x128xf32>
    %341 = vector.extract_strided_slice %333 {offsets = [0, 256], sizes = [8, 128], strides = [1, 1]} : vector<8x384xf32> to vector<8x128xf32>
    %342 = math.tanh %340 : vector<8x128xf32>
    %343 = arith.mulf %341, %342 : vector<8x128xf32>
    %344 = vector.extract_strided_slice %343 {offsets = [0, 0], sizes = [8, 64], strides = [1, 1]} : vector<8x128xf32> to vector<8x64xf32>
    %c24_152 = arith.constant 24 : index
    %c0_153 = arith.constant 0 : index
    %345 = vector.load %arg11[%c24_152, %c0_153] : memref<64x128xf32, #tpu.memory_space<vmem>>, vector<8x64xf32>
    tpu.vector_store %arg11[%c24_152, %c0_153], %344 {strides = array<i32>} : memref<64x128xf32, #tpu.memory_space<vmem>>, vector<8x64xf32>,
    %346 = vector.extract_strided_slice %343 {offsets = [0, 64], sizes = [8, 64], strides = [1, 1]} : vector<8x128xf32> to vector<8x64xf32>
    %c32_154 = arith.constant 32 : index
    %c64_155 = arith.constant 64 : index
    %347 = vector.load %arg11[%c32_154, %c64_155] : memref<64x128xf32, #tpu.memory_space<vmem>>, vector<8x64xf32>
    tpu.vector_store %arg11[%c32_154, %c64_155], %346 {strides = array<i32>} : memref<64x128xf32, #tpu.memory_space<vmem>>, vector<8x64xf32>,
    %348 = arith.truncf %343 : vector<8x128xf32> to vector<8x128xbf16>
    %c0_156 = arith.constant 0 : index
    %c0_157 = arith.constant 0 : index
    %349 = vector.load %arg6[%c0_156, %c0_157] : memref<128x512xbf16, #tpu.memory_space<vmem>>, vector<128x512xbf16>
    %cst_158 = arith.constant dense<0.000000e+00> : vector<8x512xf32>
    %350 = tpu.matmul %348, %349, %cst_158 {dimension_numbers = #tpu.dot_dimension_numbers<[1], [0], [0], [1], [0, 0, 1, 1], [], []>} : vector<8x128xbf16>, vector<128x512xbf16>, vector<8x512xf32> -> vector<8x512xf32>
    %c32_159 = arith.constant 32 : index
    %c0_160 = arith.constant 0 : index
    %351 = vector.load %arg10[%c32_159, %c0_160] : memref<64x512xf32, #tpu.memory_space<vmem>>, vector<8x512xf32>
    %c24_161 = arith.constant 24 : index
    %c0_162 = arith.constant 0 : index
    %352 = vector.load %arg10[%c24_161, %c0_162] : memref<64x512xf32, #tpu.memory_space<vmem>>, vector<8x512xf32>
    %353 = arith.select %4, %351, %352 : vector<8x512xi1>, vector<8x512xf32>
    %354 = arith.addf %353, %350 : vector<8x512xf32>
    %355 = vector.extract_strided_slice %354 {offsets = [0, 0], sizes = [8, 384], strides = [1, 1]} : vector<8x512xf32> to vector<8x384xf32>
    %356 = arith.negf %355 : vector<8x384xf32>
    %357 = math.exp %356 : vector<8x384xf32>
    %cst_163 = arith.constant 1.000000e+00 : f32
    %358 = vector.broadcast %cst_163 : f32 to vector<8x384xf32>
    %359 = arith.addf %358, %357 : vector<8x384xf32>
    %360 = arith.divf %358, %359 : vector<8x384xf32>
    %361 = vector.extract_strided_slice %354 {offsets = [0, 384], sizes = [8, 128], strides = [1, 1]} : vector<8x512xf32> to vector<8x128xf32>
    %362 = math.tanh %361 : vector<8x128xf32>
    %363 = vector.extract_strided_slice %360 {offsets = [0, 128], sizes = [8, 128], strides = [1, 1]} : vector<8x384xf32> to vector<8x128xf32>
    %364 = arith.mulf %363, %340 : vector<8x128xf32>
    %365 = vector.extract_strided_slice %360 {offsets = [0, 0], sizes = [8, 128], strides = [1, 1]} : vector<8x384xf32> to vector<8x128xf32>
    %366 = arith.mulf %365, %362 : vector<8x128xf32>
    %367 = arith.addf %364, %366 : vector<8x128xf32>
    %368 = vector.extract_strided_slice %360 {offsets = [0, 256], sizes = [8, 128], strides = [1, 1]} : vector<8x384xf32> to vector<8x128xf32>
    %369 = math.tanh %367 : vector<8x128xf32>
    %370 = arith.mulf %368, %369 : vector<8x128xf32>
    %371 = vector.extract_strided_slice %370 {offsets = [0, 0], sizes = [8, 64], strides = [1, 1]} : vector<8x128xf32> to vector<8x64xf32>
    %c32_164 = arith.constant 32 : index
    %c0_165 = arith.constant 0 : index
    %372 = vector.load %arg11[%c32_164, %c0_165] : memref<64x128xf32, #tpu.memory_space<vmem>>, vector<8x64xf32>
    tpu.vector_store %arg11[%c32_164, %c0_165], %371 {strides = array<i32>} : memref<64x128xf32, #tpu.memory_space<vmem>>, vector<8x64xf32>,
    %373 = vector.extract_strided_slice %370 {offsets = [0, 64], sizes = [8, 64], strides = [1, 1]} : vector<8x128xf32> to vector<8x64xf32>
    %c24_166 = arith.constant 24 : index
    %c64_167 = arith.constant 64 : index
    %374 = vector.load %arg11[%c24_166, %c64_167] : memref<64x128xf32, #tpu.memory_space<vmem>>, vector<8x64xf32>
    tpu.vector_store %arg11[%c24_166, %c64_167], %373 {strides = array<i32>} : memref<64x128xf32, #tpu.memory_space<vmem>>, vector<8x64xf32>,
    %375 = arith.truncf %370 : vector<8x128xf32> to vector<8x128xbf16>
    %c0_168 = arith.constant 0 : index
    %c0_169 = arith.constant 0 : index
    %376 = vector.load %arg6[%c0_168, %c0_169] : memref<128x512xbf16, #tpu.memory_space<vmem>>, vector<128x512xbf16>
    %cst_170 = arith.constant dense<0.000000e+00> : vector<8x512xf32>
    %377 = tpu.matmul %375, %376, %cst_170 {dimension_numbers = #tpu.dot_dimension_numbers<[1], [0], [0], [1], [0, 0, 1, 1], [], []>} : vector<8x128xbf16>, vector<128x512xbf16>, vector<8x512xf32> -> vector<8x512xf32>
    %c40_171 = arith.constant 40 : index
    %c0_172 = arith.constant 0 : index
    %378 = vector.load %arg10[%c40_171, %c0_172] : memref<64x512xf32, #tpu.memory_space<vmem>>, vector<8x512xf32>
    %c16_173 = arith.constant 16 : index
    %c0_174 = arith.constant 0 : index
    %379 = vector.load %arg10[%c16_173, %c0_174] : memref<64x512xf32, #tpu.memory_space<vmem>>, vector<8x512xf32>
    %380 = arith.select %4, %378, %379 : vector<8x512xi1>, vector<8x512xf32>
    %381 = arith.addf %380, %377 : vector<8x512xf32>
    %382 = vector.extract_strided_slice %381 {offsets = [0, 0], sizes = [8, 384], strides = [1, 1]} : vector<8x512xf32> to vector<8x384xf32>
    %383 = arith.negf %382 : vector<8x384xf32>
    %384 = math.exp %383 : vector<8x384xf32>
    %cst_175 = arith.constant 1.000000e+00 : f32
    %385 = vector.broadcast %cst_175 : f32 to vector<8x384xf32>
    %386 = arith.addf %385, %384 : vector<8x384xf32>
    %387 = arith.divf %385, %386 : vector<8x384xf32>
    %388 = vector.extract_strided_slice %381 {offsets = [0, 384], sizes = [8, 128], strides = [1, 1]} : vector<8x512xf32> to vector<8x128xf32>
    %389 = math.tanh %388 : vector<8x128xf32>
    %390 = vector.extract_strided_slice %387 {offsets = [0, 128], sizes = [8, 128], strides = [1, 1]} : vector<8x384xf32> to vector<8x128xf32>
    %391 = arith.mulf %390, %367 : vector<8x128xf32>
    %392 = vector.extract_strided_slice %387 {offsets = [0, 0], sizes = [8, 128], strides = [1, 1]} : vector<8x384xf32> to vector<8x128xf32>
    %393 = arith.mulf %392, %389 : vector<8x128xf32>
    %394 = arith.addf %391, %393 : vector<8x128xf32>
    %395 = vector.extract_strided_slice %387 {offsets = [0, 256], sizes = [8, 128], strides = [1, 1]} : vector<8x384xf32> to vector<8x128xf32>
    %396 = math.tanh %394 : vector<8x128xf32>
    %397 = arith.mulf %395, %396 : vector<8x128xf32>
    %398 = vector.extract_strided_slice %397 {offsets = [0, 0], sizes = [8, 64], strides = [1, 1]} : vector<8x128xf32> to vector<8x64xf32>
    %c40_176 = arith.constant 40 : index
    %c0_177 = arith.constant 0 : index
    %399 = vector.load %arg11[%c40_176, %c0_177] : memref<64x128xf32, #tpu.memory_space<vmem>>, vector<8x64xf32>
    tpu.vector_store %arg11[%c40_176, %c0_177], %398 {strides = array<i32>} : memref<64x128xf32, #tpu.memory_space<vmem>>, vector<8x64xf32>,
    %400 = vector.extract_strided_slice %397 {offsets = [0, 64], sizes = [8, 64], strides = [1, 1]} : vector<8x128xf32> to vector<8x64xf32>
    %c16_178 = arith.constant 16 : index
    %c64_179 = arith.constant 64 : index
    %401 = vector.load %arg11[%c16_178, %c64_179] : memref<64x128xf32, #tpu.memory_space<vmem>>, vector<8x64xf32>
    tpu.vector_store %arg11[%c16_178, %c64_179], %400 {strides = array<i32>} : memref<64x128xf32, #tpu.memory_space<vmem>>, vector<8x64xf32>,
    %402 = arith.truncf %397 : vector<8x128xf32> to vector<8x128xbf16>
    %c0_180 = arith.constant 0 : index
    %c0_181 = arith.constant 0 : index
    %403 = vector.load %arg6[%c0_180, %c0_181] : memref<128x512xbf16, #tpu.memory_space<vmem>>, vector<128x512xbf16>
    %cst_182 = arith.constant dense<0.000000e+00> : vector<8x512xf32>
    %404 = tpu.matmul %402, %403, %cst_182 {dimension_numbers = #tpu.dot_dimension_numbers<[1], [0], [0], [1], [0, 0, 1, 1], [], []>} : vector<8x128xbf16>, vector<128x512xbf16>, vector<8x512xf32> -> vector<8x512xf32>
    %c48_183 = arith.constant 48 : index
    %c0_184 = arith.constant 0 : index
    %405 = vector.load %arg10[%c48_183, %c0_184] : memref<64x512xf32, #tpu.memory_space<vmem>>, vector<8x512xf32>
    %c8_185 = arith.constant 8 : index
    %c0_186 = arith.constant 0 : index
    %406 = vector.load %arg10[%c8_185, %c0_186] : memref<64x512xf32, #tpu.memory_space<vmem>>, vector<8x512xf32>
    %407 = arith.select %4, %405, %406 : vector<8x512xi1>, vector<8x512xf32>
    %408 = arith.addf %407, %404 : vector<8x512xf32>
    %409 = vector.extract_strided_slice %408 {offsets = [0, 0], sizes = [8, 384], strides = [1, 1]} : vector<8x512xf32> to vector<8x384xf32>
    %410 = arith.negf %409 : vector<8x384xf32>
    %411 = math.exp %410 : vector<8x384xf32>
    %cst_187 = arith.constant 1.000000e+00 : f32
    %412 = vector.broadcast %cst_187 : f32 to vector<8x384xf32>
    %413 = arith.addf %412, %411 : vector<8x384xf32>
    %414 = arith.divf %412, %413 : vector<8x384xf32>
    %415 = vector.extract_strided_slice %408 {offsets = [0, 384], sizes = [8, 128], strides = [1, 1]} : vector<8x512xf32> to vector<8x128xf32>
    %416 = math.tanh %415 : vector<8x128xf32>
    %417 = vector.extract_strided_slice %414 {offsets = [0, 128], sizes = [8, 128], strides = [1, 1]} : vector<8x384xf32> to vector<8x128xf32>
    %418 = arith.mulf %417, %394 : vector<8x128xf32>
    %419 = vector.extract_strided_slice %414 {offsets = [0, 0], sizes = [8, 128], strides = [1, 1]} : vector<8x384xf32> to vector<8x128xf32>
    %420 = arith.mulf %419, %416 : vector<8x128xf32>
    %421 = arith.addf %418, %420 : vector<8x128xf32>
    %422 = vector.extract_strided_slice %414 {offsets = [0, 256], sizes = [8, 128], strides = [1, 1]} : vector<8x384xf32> to vector<8x128xf32>
    %423 = math.tanh %421 : vector<8x128xf32>
    %424 = arith.mulf %422, %423 : vector<8x128xf32>
    %425 = vector.extract_strided_slice %424 {offsets = [0, 0], sizes = [8, 64], strides = [1, 1]} : vector<8x128xf32> to vector<8x64xf32>
    %c48_188 = arith.constant 48 : index
    %c0_189 = arith.constant 0 : index
    %426 = vector.load %arg11[%c48_188, %c0_189] : memref<64x128xf32, #tpu.memory_space<vmem>>, vector<8x64xf32>
    tpu.vector_store %arg11[%c48_188, %c0_189], %425 {strides = array<i32>} : memref<64x128xf32, #tpu.memory_space<vmem>>, vector<8x64xf32>,
    %427 = vector.extract_strided_slice %424 {offsets = [0, 64], sizes = [8, 64], strides = [1, 1]} : vector<8x128xf32> to vector<8x64xf32>
    %c8_190 = arith.constant 8 : index
    %c64_191 = arith.constant 64 : index
    %428 = vector.load %arg11[%c8_190, %c64_191] : memref<64x128xf32, #tpu.memory_space<vmem>>, vector<8x64xf32>
    tpu.vector_store %arg11[%c8_190, %c64_191], %427 {strides = array<i32>} : memref<64x128xf32, #tpu.memory_space<vmem>>, vector<8x64xf32>,
    %429 = arith.truncf %424 : vector<8x128xf32> to vector<8x128xbf16>
    %c0_192 = arith.constant 0 : index
    %c0_193 = arith.constant 0 : index
    %430 = vector.load %arg6[%c0_192, %c0_193] : memref<128x512xbf16, #tpu.memory_space<vmem>>, vector<128x512xbf16>
    %cst_194 = arith.constant dense<0.000000e+00> : vector<8x512xf32>
    %431 = tpu.matmul %429, %430, %cst_194 {dimension_numbers = #tpu.dot_dimension_numbers<[1], [0], [0], [1], [0, 0, 1, 1], [], []>} : vector<8x128xbf16>, vector<128x512xbf16>, vector<8x512xf32> -> vector<8x512xf32>
    %c56_195 = arith.constant 56 : index
    %c0_196 = arith.constant 0 : index
    %432 = vector.load %arg10[%c56_195, %c0_196] : memref<64x512xf32, #tpu.memory_space<vmem>>, vector<8x512xf32>
    %c0_197 = arith.constant 0 : index
    %c0_198 = arith.constant 0 : index
    %433 = vector.load %arg10[%c0_197, %c0_198] : memref<64x512xf32, #tpu.memory_space<vmem>>, vector<8x512xf32>
    %434 = arith.select %4, %432, %433 : vector<8x512xi1>, vector<8x512xf32>
    %435 = arith.addf %434, %431 : vector<8x512xf32>
    %436 = vector.extract_strided_slice %435 {offsets = [0, 0], sizes = [8, 384], strides = [1, 1]} : vector<8x512xf32> to vector<8x384xf32>
    %437 = arith.negf %436 : vector<8x384xf32>
    %438 = math.exp %437 : vector<8x384xf32>
    %cst_199 = arith.constant 1.000000e+00 : f32
    %439 = vector.broadcast %cst_199 : f32 to vector<8x384xf32>
    %440 = arith.addf %439, %438 : vector<8x384xf32>
    %441 = arith.divf %439, %440 : vector<8x384xf32>
    %442 = vector.extract_strided_slice %435 {offsets = [0, 384], sizes = [8, 128], strides = [1, 1]} : vector<8x512xf32> to vector<8x128xf32>
    %443 = math.tanh %442 : vector<8x128xf32>
    %444 = vector.extract_strided_slice %441 {offsets = [0, 128], sizes = [8, 128], strides = [1, 1]} : vector<8x384xf32> to vector<8x128xf32>
    %445 = arith.mulf %444, %421 : vector<8x128xf32>
    %446 = vector.extract_strided_slice %441 {offsets = [0, 0], sizes = [8, 128], strides = [1, 1]} : vector<8x384xf32> to vector<8x128xf32>
    %447 = arith.mulf %446, %443 : vector<8x128xf32>
    %448 = arith.addf %445, %447 : vector<8x128xf32>
    %449 = vector.extract_strided_slice %441 {offsets = [0, 256], sizes = [8, 128], strides = [1, 1]} : vector<8x384xf32> to vector<8x128xf32>
    %450 = math.tanh %448 : vector<8x128xf32>
    %451 = arith.mulf %449, %450 : vector<8x128xf32>
    %452 = vector.extract_strided_slice %451 {offsets = [0, 0], sizes = [8, 64], strides = [1, 1]} : vector<8x128xf32> to vector<8x64xf32>
    %c56_200 = arith.constant 56 : index
    %c0_201 = arith.constant 0 : index
    %453 = vector.load %arg11[%c56_200, %c0_201] : memref<64x128xf32, #tpu.memory_space<vmem>>, vector<8x64xf32>
    tpu.vector_store %arg11[%c56_200, %c0_201], %452 {strides = array<i32>} : memref<64x128xf32, #tpu.memory_space<vmem>>, vector<8x64xf32>,
    %454 = vector.extract_strided_slice %451 {offsets = [0, 64], sizes = [8, 64], strides = [1, 1]} : vector<8x128xf32> to vector<8x64xf32>
    %c0_202 = arith.constant 0 : index
    %c64_203 = arith.constant 64 : index
    %455 = vector.load %arg11[%c0_202, %c64_203] : memref<64x128xf32, #tpu.memory_space<vmem>>, vector<8x64xf32>
    tpu.vector_store %arg11[%c0_202, %c64_203], %454 {strides = array<i32>} : memref<64x128xf32, #tpu.memory_space<vmem>>, vector<8x64xf32>,
    %c0_204 = arith.constant 0 : index
    %c0_205 = arith.constant 0 : index
    %456 = vector.load %arg11[%c0_204, %c0_205] : memref<64x128xf32, #tpu.memory_space<vmem>>, vector<64x128xf32>
    %457 = arith.truncf %456 : vector<64x128xf32> to vector<64x128xbf16>
    %c0_206 = arith.constant 0 : index
    %c0_207 = arith.constant 0 : index
    %458 = vector.load %arg7[%c0_206, %c0_207] : memref<128x128xbf16, #tpu.memory_space<vmem>>, vector<128x128xbf16>
    %cst_208 = arith.constant dense<0.000000e+00> : vector<64x128xf32>
    %459 = tpu.matmul %457, %458, %cst_208 {dimension_numbers = #tpu.dot_dimension_numbers<[1], [0], [0], [1], [0, 0, 1, 1], [], []>} : vector<64x128xbf16>, vector<128x128xbf16>, vector<64x128xf32> -> vector<64x128xf32>
    %c0_209 = arith.constant 0 : index
    %c0_210 = arith.constant 0 : index
    %460 = vector.load %arg8[%c0_209, %c0_210] : memref<1x128xf32, #tpu.memory_space<vmem>>, vector<1x128xf32>
    %461 = vector.broadcast %460 : vector<1x128xf32> to vector<64x128xf32>
    %462 = arith.addf %459, %461 : vector<64x128xf32>
    %c0_211 = arith.constant 0 : index
    %c0_212 = arith.constant 0 : index
    %463 = vector.load %arg9[%c0_211, %c0_212] : memref<64x128xf32, #tpu.memory_space<vmem>>, vector<64x128xf32>
    tpu.vector_store %arg9[%c0_211, %c0_212], %462 {strides = array<i32>} : memref<64x128xf32, #tpu.memory_space<vmem>>, vector<64x128xf32>,
    return
  }
}

</mosaic_0001>

<llo_original>
// kernel: tpu_custom_call.1
$region0: #{tpu_custom_call.1}
  #allocation0 [shape = 'u32[]', space=smem, size = 0x4, offset = 0x4, fixed_abs, tag = 'smem constant byte address 0x4 - core index']
  #allocation1 [shape = 'u32[144,128]{1,0:T(1,128)}', space=vmem, size = 0x12000, scoped, tag = 'internal scratch']
  #allocation2 [shape = 'f32[64,512]{1,0:T(8,128)}', space=vmem, size = 0x20000, scoped, tag = 'scratch operand']
  #allocation3 [shape = 'f32[64,128]{1,0:T(8,128)}', space=vmem, size = 0x8000, scoped, tag = 'scratch operand']
  %s0 = inlined_call_operand.vmem [shape: f32[64,20], index: 0, kind: input, shape index: {}]
  %s1 = inlined_call_operand.hbm [shape: f32[20,512], index: 1, kind: input, shape index: {}]
  %s2 = inlined_call_operand.vmem [shape: f32[1,512], index: 2, kind: input, shape index: {}]
  %s3 = inlined_call_operand.hbm [shape: bf16[128,512], index: 3, kind: input, shape index: {}]
  %s4 = inlined_call_operand.hbm [shape: bf16[128,512], index: 4, kind: input, shape index: {}]
  %s5 = inlined_call_operand.vmem [shape: f32[1,512], index: 5, kind: input, shape index: {}]
  %s6 = inlined_call_operand.hbm [shape: bf16[128,512], index: 6, kind: input, shape index: {}]
  %s7 = inlined_call_operand.vmem [shape: bf16[128,128], index: 7, kind: input, shape index: {}]
  %s8 = inlined_call_operand.vmem [shape: f32[1,128], index: 8, kind: input, shape index: {}]
  %s9 = inlined_call_operand.hbm [shape: f32[64,128], index: 9, kind: output, shape index: {}]
  %s10 = sld [smem:[#allocation0]]
  $region62: #{tpu_custom_call.1} parent=0
    _
  %s12 = ssub.s32 1, %s10
  %s13 = scalar_select 0, %s12, %s10
  $region1: #{tpu_custom_call.1} parent=0
    #allocation4 [shape = 'u8[49152]{0}', space=vmem, size = 0xc000, scoped, tag = 'input window, operand 1, single buffered']
    #allocation5 [shape = 's32[1]{0}', space=sflag, size = 0x4, scoped, tag = 'scoped memory for tpu_custom_call.1']
    #allocation6 [shape = 's32[1]{0}', space=sflag, size = 0x4, scoped, tag = 'scoped memory for tpu_custom_call.1']
    #allocation7 [shape = 'u8[131072]{0}', space=vmem, size = 0x20000, scoped, tag = 'input window, operand 3, single buffered']
    #allocation8 [shape = 's32[1]{0}', space=sflag, size = 0x4, scoped, tag = 'scoped memory for tpu_custom_call.1']
    #allocation9 [shape = 'u8[131072]{0}', space=vmem, size = 0x20000, scoped, tag = 'input window, operand 4, single buffered']
    #allocation10 [shape = 'u8[131072]{0}', space=vmem, size = 0x20000, scoped, tag = 'input window, operand 6, single buffered']
    #allocation11 [shape = 's32[1]{0}', space=sflag, size = 0x4, scoped, tag = 'scoped memory for tpu_custom_call.1']
    #allocation12 [shape = 'u8[32768]{0}', space=vmem, size = 0x8000, scoped, tag = 'output window, operand 0, single buffered']
    %14 = vsyncpa [#allocation5], 0
    %15 = vsyncpa [#allocation8], 0
    %16 = vsyncpa [#allocation11], 0
    %17 = vsyncpa [#allocation6], 0
    // Predicated region
    $region2: #{tpu_custom_call.1} parent=1 // pred_check
      _
    $region3: #{tpu_custom_call.1} parent=1 // pred_check_branch
      %19 = sbr.rel (0) target = $region5
    $region4: #{tpu_custom_call.1} parent=1 // pred_region
      _
    $region5: #{tpu_custom_call.1} parent=1 // pred_fallthru
      _
    // Predicated region
    $region6: #{tpu_custom_call.1} parent=1 // pred_check
      _
    $region7: #{tpu_custom_call.1} parent=1 // pred_check_branch
      %21 = sbr.rel (0) target = $region9
    $region8: #{tpu_custom_call.1} parent=1 // pred_region
      %s23 = ssub.s32 1536, 1536
      %24 = vsyncadd [#allocation5], %s23
      %s25 = sshll.u32 [#allocation4], 4
      %s26 = int_to_ptr.vmem [resolvable:$true] %s25
      %31 = dma.hbm_to_vmem [thread:$0]  %s1, 1536, %s26, [#allocation5], 512, 512, 32
    $region9: #{tpu_custom_call.1} parent=1 // pred_fallthru
      _
    // Predicated region
    $region10: #{tpu_custom_call.1} parent=1 // pred_check
      _
    $region11: #{tpu_custom_call.1} parent=1 // pred_check_branch
      %33 = sbr.rel (0) target = $region13
    $region12: #{tpu_custom_call.1} parent=1 // pred_region
      _
    $region13: #{tpu_custom_call.1} parent=1 // pred_fallthru
      _
    // Predicated region
    $region14: #{tpu_custom_call.1} parent=1 // pred_check
      _
    $region15: #{tpu_custom_call.1} parent=1 // pred_check_branch
      %35 = sbr.rel (0) target = $region17
    $region16: #{tpu_custom_call.1} parent=1 // pred_region
      %s37 = ssub.s32 4096, 4096
      %38 = vsyncadd [#allocation8], %s37
      %s39 = sshll.u32 [#allocation7], 4
      %s40 = int_to_ptr.vmem [resolvable:$true] %s39
      %45 = dma.hbm_to_vmem [thread:$0]  %s3, 4096, %s40, [#allocation8], 256, 256, 16
    $region17: #{tpu_custom_call.1} parent=1 // pred_fallthru
      _
    // Predicated region
    $region18: #{tpu_custom_call.1} parent=1 // pred_check
      _
    $region19: #{tpu_custom_call.1} parent=1 // pred_check_branch
      %47 = sbr.rel (0) target = $region21
    $region20: #{tpu_custom_call.1} parent=1 // pred_region
      %s49 = ssub.s32 4096, 4096
      %50 = vsyncadd [#allocation8], %s49
      %s51 = sshll.u32 [#allocation9], 4
      %s52 = int_to_ptr.vmem [resolvable:$true] %s51
      %57 = dma.hbm_to_vmem [thread:$0]  %s4, 4096, %s52, [#allocation8], 256, 256, 16
    $region21: #{tpu_custom_call.1} parent=1 // pred_fallthru
      _
    // Predicated region
    $region22: #{tpu_custom_call.1} parent=1 // pred_check
      _
    $region23: #{tpu_custom_call.1} parent=1 // pred_check_branch
      %59 = sbr.rel (0) target = $region25
    $region24: #{tpu_custom_call.1} parent=1 // pred_region
      _
    $region25: #{tpu_custom_call.1} parent=1 // pred_fallthru
      _
    // Predicated region
    $region26: #{tpu_custom_call.1} parent=1 // pred_check
      _
    $region27: #{tpu_custom_call.1} parent=1 // pred_check_branch
      %61 = sbr.rel (0) target = $region29
    $region28: #{tpu_custom_call.1} parent=1 // pred_region
      %s63 = ssub.s32 4096, 4096
      %64 = vsyncadd [#allocation11], %s63
      %s65 = sshll.u32 [#allocation10], 4
      %s66 = int_to_ptr.vmem [resolvable:$true] %s65
      %71 = dma.hbm_to_vmem [thread:$0]  %s6, 4096, %s66, [#allocation11], 256, 256, 16
    $region29: #{tpu_custom_call.1} parent=1 // pred_fallthru
      _
    // Predicated region
    $region30: #{tpu_custom_call.1} parent=1 // pred_check
      _
    $region31: #{tpu_custom_call.1} parent=1 // pred_check_branch
      %73 = sbr.rel (0) target = $region33
    $region32: #{tpu_custom_call.1} parent=1 // pred_region
      _
    $region33: #{tpu_custom_call.1} parent=1 // pred_fallthru
      _
    // Predicated region
    $region34: #{tpu_custom_call.1} parent=1 // pred_check
      _
    $region35: #{tpu_custom_call.1} parent=1 // pred_check_branch
      %75 = sbr.rel (0) target = $region37
    $region36: #{tpu_custom_call.1} parent=1 // pred_region
      _
    $region37: #{tpu_custom_call.1} parent=1 // pred_fallthru
      _
    // Predicated region
    $region38: #{tpu_custom_call.1} parent=1 // pred_check
      _
    $region39: #{tpu_custom_call.1} parent=1 // pred_check_branch
      %77 = sbr.rel (0) target = $region41
    $region40: #{tpu_custom_call.1} parent=1 // pred_region
      %78 = dma.done [#allocation5], 1536
    $region41: #{tpu_custom_call.1} parent=1 // pred_fallthru
      _
    // Predicated region
    $region42: #{tpu_custom_call.1} parent=1 // pred_check
      _
    $region43: #{tpu_custom_call.1} parent=1 // pred_check_branch
      %80 = sbr.rel (0) target = $region45
    $region44: #{tpu_custom_call.1} parent=1 // pred_region
      %81 = dma.done [#allocation8], 4096
    $region45: #{tpu_custom_call.1} parent=1 // pred_fallthru
      _
    // Predicated region
    $region46: #{tpu_custom_call.1} parent=1 // pred_check
      _
    $region47: #{tpu_custom_call.1} parent=1 // pred_check_branch
      %83 = sbr.rel (0) target = $region49
    $region48: #{tpu_custom_call.1} parent=1 // pred_region
      %84 = dma.done [#allocation8], 4096
    $region49: #{tpu_custom_call.1} parent=1 // pred_fallthru
      _
    // Predicated region
    $region50: #{tpu_custom_call.1} parent=1 // pred_check
      _
    $region51: #{tpu_custom_call.1} parent=1 // pred_check_branch
      %86 = sbr.rel (0) target = $region53
    $region52: #{tpu_custom_call.1} parent=1 // pred_region
      %87 = dma.done [#allocation11], 4096
    $region53: #{tpu_custom_call.1} parent=1 // pred_fallthru
      _
    %v89 = vlaneseq
    %v90 = vand.u32 %v89, 127
    %v91 = vadd.s32 %v90, 128
    %v92 = vadd.s32 %v90, 256
    %v93 = vadd.s32 %v90, 384
    %v94 = vand.u32 %v90, 64
    %v95 = vand.u32 %v91, 64
    %v96 = vand.u32 %v92, 64
    %v97 = vand.u32 %v93, 64
    %vm98 = vcmp.eq.s32.totalorder %v94, 0
    %vm99 = vcmp.eq.s32.totalorder %v95, 0
    %vm100 = vcmp.eq.s32.totalorder %v96, 0
    %vm101 = vcmp.eq.s32.totalorder %v97, 0
    %v102 = vld [vmem:[%s0] sm:$0xff]
    %v103 = vld [vmem:[%s0 + $0x8] sm:$0xff]
    %v104 = vld [vmem:[%s0 + $0x10] sm:$0xff]
    %v105 = vld [vmem:[%s0 + $0x18] sm:$0xff]
    %v106 = vld [vmem:[%s0 + $0x20] sm:$0xff]
    %v107 = vld [vmem:[%s0 + $0x28] sm:$0xff]
    %v108 = vld [vmem:[%s0 + $0x30] sm:$0xff]
    %v109 = vld [vmem:[%s0 + $0x38] sm:$0xff]
    %v110 = vld [vmem:[#allocation4] sm:$0xff]
    %v111 = vld [vmem:[#allocation4 + $0x8] sm:$0xff]
    %v112 = vld [vmem:[#allocation4 + $0x10] sm:$0xff]
    %v113 = vld [vmem:[#allocation4 + $0x18] sm:$0xff]
    %v114 = vld [vmem:[#allocation4 + $0x20] sm:$0xff]
    %v115 = vld [vmem:[#allocation4 + $0x28] sm:$0xff]
    %v116 = vld [vmem:[#allocation4 + $0x30] sm:$0xff]
    %v117 = vld [vmem:[#allocation4 + $0x38] sm:$0xff]
    %v118 = vld [vmem:[#allocation4 + $0x40] sm:$0xf]
    %v119 = vld [vmem:[#allocation4 + $0x48] sm:$0xf]
    %v120 = vld [vmem:[#allocation4 + $0x50] sm:$0xf]
    %v121 = vld [vmem:[#allocation4 + $0x58] sm:$0xf]
    %v122 = vld [vmem:[%s2] sm:$0xf]
    %v124 = vlaneseq
    %v125 = vshrl.u32 %v124, 7
    %v126 = vsub.s32 0, %v125
    %v127 = vrot.slane %v122, %v126
    %v128 = vlaneseq
    %v129 = vshrl.u32 %v128, 7
    %v130 = vsub.s32 1, %v129
    %v131 = vrot.slane %v122, %v130
    %v132 = vlaneseq
    %v133 = vshrl.u32 %v132, 7
    %v134 = vsub.s32 2, %v133
    %v135 = vrot.slane %v122, %v134
    %v136 = vlaneseq
    %v137 = vshrl.u32 %v136, 7
    %v138 = vsub.s32 3, %v137
    %v139 = vrot.slane %v122, %v138
    %vm144 = vcmask 162816
    %v146 = vsel %vm144, %v102, 0
    %v149 = vsel %vm144, %v103, 0
    %v152 = vsel %vm144, %v104, 0
    %v155 = vsel %vm144, %v105, 0
    %v158 = vsel %vm144, %v106, 0
    %v161 = vsel %vm144, %v107, 0
    %v164 = vsel %vm144, %v108, 0
    %v167 = vsel %vm144, %v109, 0
    %vm169 = vcmask 1043456
    %v171 = vsel %vm169, %v118, 0
    %v174 = vsel %vm169, %v119, 0
    %v177 = vsel %vm169, %v120, 0
    %v180 = vsel %vm169, %v121, 0
    %182 = vmatprep.subr.mxu0 %v111
    %183 = vmatpush1.msra.mxu0 %v110
    %184 = vmatprep.subr.mxu0 %v115
    %185 = vmatpush1.msra.mxu0 %v114
    %186 = vmatprep.subr.mxu0 %v174
    %187 = vmatpush1.msra.mxu0 %v171
    %188 = vmatprep.subr.mxu0 0.0
    %189 = vmatpush1.msra.mxu0 0.0
    %190 = vmatprep.subr.mxu0 0.0
    %191 = vmatpush1.msra.mxu0 0.0
    %192 = vmatprep.subr.mxu0 0.0
    %193 = vmatpush1.msra.mxu0 0.0
    %194 = vmatprep.subr.mxu0 0.0
    %195 = vmatpush1.msra.mxu0 0.0
    %196 = vmatprep.subr.mxu0 0.0
    %197 = vmatpush1.msra.mxu0 0.0
    %198 = vmatprep.subr.mxu0 0.0
    %199 = vmatpush1.msra.mxu0 0.0
    %200 = vmatprep.subr.mxu0 0.0
    %201 = vmatpush1.msra.mxu0 0.0
    %202 = vmatprep.subr.mxu0 0.0
    %203 = vmatpush1.msra.mxu0 0.0
    %204 = vmatprep.subr.mxu0 0.0
    %205 = vmatpush1.msra.mxu0 0.0
    %206 = vmatprep.subr.mxu0 0.0
    %207 = vmatpush1.msra.mxu0 0.0
    %208 = vmatprep.subr.mxu0 0.0
    %209 = vmatpush1.msra.mxu0 0.0
    %210 = vmatprep.subr.mxu0 0.0
    %211 = vmatpush1.msra.mxu0 0.0
    %212 = vmatprep.subr.mxu0 0.0
    %213 = vmatpush1.msra.mxu0 0.0
    %214 = vmatprep.subr.mxu0 0.0
    %215 = vmatpush1.msra.mxu0 0.0
    %216 = vmatprep.subr.mxu0 0.0
    %217 = vmatpush1.msra.mxu0 0.0
    %218 = vmatprep.subr.mxu0 0.0
    %219 = vmatpush1.msra.mxu0 0.0
    %220 = vmatprep.subr.mxu0 0.0
    %221 = vmatpush1.msra.mxu0 0.0
    %222 = vmatprep.subr.mxu0 0.0
    %223 = vmatpush1.msra.mxu0 0.0
    %224 = vmatprep.subr.mxu0 0.0
    %225 = vmatpush1.msra.mxu0 0.0
    %226 = vmatprep.subr.mxu0 0.0
    %227 = vmatpush1.msra.mxu0 0.0
    %228 = vmatprep.subr.mxu0 0.0
    %229 = vmatpush1.msra.mxu0 0.0
    %230 = vmatprep.subr.mxu0 0.0
    %231 = vmatpush1.msra.mxu0 0.0
    %232 = vmatprep.subr.mxu0 0.0
    %233 = vmatpush1.msra.mxu0 0.0
    %234 = vmatprep.subr.mxu0 0.0
    %235 = vmatpush1.msra.mxu0 0.0
    %236 = vmatprep.subr.mxu0 0.0
    %237 = vmatpush1.msra.mxu0 0.0
    %238 = vmatprep.subr.mxu0 0.0
    %239 = vmatpush1.msra.mxu0 0.0
    %240 = vmatprep.subr.mxu0 0.0
    %241 = vmatpush1.msra.mxu0 0.0
    %242 = vmatprep.subr.mxu0 0.0
    %243 = vmatpush1.msra.mxu0 0.0
    %244 = vmatprep.subr.mxu0 0.0
    %245 = vmatpush1.msra.mxu0 0.0
    %246 = vmatprep.mubr.f32.mxu0 0.0
    %247 = vmatmul.mubr.f32.gmra.mrb[0].mxu0 %v146
    %v248 = vpop.f32.mrb[0].mxu0
    %v249 = vadd.f32 %v127, %v248
    %v250 = vpop.f32.mrb[0].mxu0
    %v251 = vadd.f32 %v131, %v250
    %252 = vmatprep.mubr.f32.mxu0 0.0
    %253 = vmatmul.mubr.f32.gmra.mrb[0].mxu0 %v149
    %v254 = vpop.f32.mrb[0].mxu0
    %v255 = vadd.f32 %v127, %v254
    %v256 = vpop.f32.mrb[0].mxu0
    %v257 = vadd.f32 %v131, %v256
    %258 = vmatprep.mubr.f32.mxu0 0.0
    %259 = vmatmul.mubr.f32.gmra.mrb[0].mxu0 %v152
    %v260 = vpop.f32.mrb[0].mxu0
    %v261 = vadd.f32 %v127, %v260
    %v262 = vpop.f32.mrb[0].mxu0
    %v263 = vadd.f32 %v131, %v262
    %264 = vmatprep.mubr.f32.mxu0 0.0
    %265 = vmatmul.mubr.f32.gmra.mrb[0].mxu0 %v155
    %v266 = vpop.f32.mrb[0].mxu0
    %v267 = vadd.f32 %v127, %v266
    %v268 = vpop.f32.mrb[0].mxu0
    %v269 = vadd.f32 %v131, %v268
    %270 = vmatprep.mubr.f32.mxu0 0.0
    %271 = vmatmul.mubr.f32.gmra.mrb[0].mxu0 %v158
    %v272 = vpop.f32.mrb[0].mxu0
    %v273 = vadd.f32 %v127, %v272
    %v274 = vpop.f32.mrb[0].mxu0
    %v275 = vadd.f32 %v131, %v274
    %276 = vmatprep.mubr.f32.mxu0 0.0
    %277 = vmatmul.mubr.f32.gmra.mrb[0].mxu0 %v161
    %v278 = vpop.f32.mrb[0].mxu0
    %v279 = vadd.f32 %v127, %v278
    %v280 = vpop.f32.mrb[0].mxu0
    %v281 = vadd.f32 %v131, %v280
    %282 = vmatprep.mubr.f32.mxu0 0.0
    %283 = vmatmul.mubr.f32.gmra.mrb[0].mxu0 %v164
    %v284 = vpop.f32.mrb[0].mxu0
    %v285 = vadd.f32 %v127, %v284
    %v286 = vpop.f32.mrb[0].mxu0
    %v287 = vadd.f32 %v131, %v286
    %288 = vmatprep.mubr.f32.mxu0 0.0
    %289 = vmatmul.mubr.f32.gmra.mrb[0].mxu0 %v167
    %v290 = vpop.f32.mrb[0].mxu0
    %v291 = vadd.f32 %v127, %v290
    %v292 = vpop.f32.mrb[0].mxu0
    %v293 = vadd.f32 %v131, %v292
    %294 = vdwg.mxu0
    %295 = vmatprep.subr.mxu0 %v113
    %296 = vmatpush1.msra.mxu0 %v112
    %297 = vmatprep.subr.mxu0 %v117
    %298 = vmatpush1.msra.mxu0 %v116
    %299 = vmatprep.subr.mxu0 %v180
    %300 = vmatpush1.msra.mxu0 %v177
    %301 = vmatprep.subr.mxu0 0.0
    %302 = vmatpush1.msra.mxu0 0.0
    %303 = vmatprep.subr.mxu0 0.0
    %304 = vmatpush1.msra.mxu0 0.0
    %305 = vmatprep.subr.mxu0 0.0
    %306 = vmatpush1.msra.mxu0 0.0
    %307 = vmatprep.subr.mxu0 0.0
    %308 = vmatpush1.msra.mxu0 0.0
    %309 = vmatprep.subr.mxu0 0.0
    %310 = vmatpush1.msra.mxu0 0.0
    %311 = vmatprep.subr.mxu0 0.0
    %312 = vmatpush1.msra.mxu0 0.0
    %313 = vmatprep.subr.mxu0 0.0
    %314 = vmatpush1.msra.mxu0 0.0
    %315 = vmatprep.subr.mxu0 0.0
    %316 = vmatpush1.msra.mxu0 0.0
    %317 = vmatprep.subr.mxu0 0.0
    %318 = vmatpush1.msra.mxu0 0.0
    %319 = vmatprep.subr.mxu0 0.0
    %320 = vmatpush1.msra.mxu0 0.0
    %321 = vmatprep.subr.mxu0 0.0
    %322 = vmatpush1.msra.mxu0 0.0
    %323 = vmatprep.subr.mxu0 0.0
    %324 = vmatpush1.msra.mxu0 0.0
    %325 = vmatprep.subr.mxu0 0.0
    %326 = vmatpush1.msra.mxu0 0.0
    %327 = vmatprep.subr.mxu0 0.0
    %328 = vmatpush1.msra.mxu0 0.0
    %329 = vmatprep.subr.mxu0 0.0
    %330 = vmatpush1.msra.mxu0 0.0
    %331 = vmatprep.subr.mxu0 0.0
    %332 = vmatpush1.msra.mxu0 0.0
    %333 = vmatprep.subr.mxu0 0.0
    %334 = vmatpush1.msra.mxu0 0.0
    %335 = vmatprep.subr.mxu0 0.0
    %336 = vmatpush1.msra.mxu0 0.0
    %337 = vmatprep.subr.mxu0 0.0
    %338 = vmatpush1.msra.mxu0 0.0
    %339 = vmatprep.subr.mxu0 0.0
    %340 = vmatpush1.msra.mxu0 0.0
    %341 = vmatprep.subr.mxu0 0.0
    %342 = vmatpush1.msra.mxu0 0.0
    %343 = vmatprep.subr.mxu0 0.0
    %344 = vmatpush1.msra.mxu0 0.0
    %345 = vmatprep.subr.mxu0 0.0
    %346 = vmatpush1.msra.mxu0 0.0
    %347 = vmatprep.subr.mxu0 0.0
    %348 = vmatpush1.msra.mxu0 0.0
    %349 = vmatprep.subr.mxu0 0.0
    %350 = vmatpush1.msra.mxu0 0.0
    %351 = vmatprep.subr.mxu0 0.0
    %352 = vmatpush1.msra.mxu0 0.0
    %353 = vmatprep.subr.mxu0 0.0
    %354 = vmatpush1.msra.mxu0 0.0
    %355 = vmatprep.subr.mxu0 0.0
    %356 = vmatpush1.msra.mxu0 0.0
    %357 = vmatprep.subr.mxu0 0.0
    %358 = vmatpush1.msra.mxu0 0.0
    %359 = vmatprep.mubr.f32.mxu0 0.0
    %360 = vmatmul.mubr.f32.gmra.mrb[0].mxu0 %v146
    %v361 = vpop.f32.mrb[0].mxu0
    %v362 = vadd.f32 %v135, %v361
    %v363 = vpop.f32.mrb[0].mxu0
    %v364 = vadd.f32 %v139, %v363
    %365 = vmatprep.mubr.f32.mxu0 0.0
    %366 = vmatmul.mubr.f32.gmra.mrb[0].mxu0 %v149
    %v367 = vpop.f32.mrb[0].mxu0
    %v368 = vadd.f32 %v135, %v367
    %v369 = vpop.f32.mrb[0].mxu0
    %v370 = vadd.f32 %v139, %v369
    %371 = vmatprep.mubr.f32.mxu0 0.0
    %372 = vmatmul.mubr.f32.gmra.mrb[0].mxu0 %v152
    %v373 = vpop.f32.mrb[0].mxu0
    %v374 = vadd.f32 %v135, %v373
    %v375 = vpop.f32.mrb[0].mxu0
    %v376 = vadd.f32 %v139, %v375
    %377 = vmatprep.mubr.f32.mxu0 0.0
    %378 = vmatmul.mubr.f32.gmra.mrb[0].mxu0 %v155
    %v379 = vpop.f32.mrb[0].mxu0
    %v380 = vadd.f32 %v135, %v379
    %v381 = vpop.f32.mrb[0].mxu0
    %v382 = vadd.f32 %v139, %v381
    %383 = vmatprep.mubr.f32.mxu0 0.0
    %384 = vmatmul.mubr.f32.gmra.mrb[0].mxu0 %v158
    %v385 = vpop.f32.mrb[0].mxu0
    %v386 = vadd.f32 %v135, %v385
    %v387 = vpop.f32.mrb[0].mxu0
    %v388 = vadd.f32 %v139, %v387
    %389 = vmatprep.mubr.f32.mxu0 0.0
    %390 = vmatmul.mubr.f32.gmra.mrb[0].mxu0 %v161
    %v391 = vpop.f32.mrb[0].mxu0
    %v392 = vadd.f32 %v135, %v391
    %v393 = vpop.f32.mrb[0].mxu0
    %v394 = vadd.f32 %v139, %v393
    %395 = vmatprep.mubr.f32.mxu0 0.0
    %396 = vmatmul.mubr.f32.gmra.mrb[0].mxu0 %v164
    %v397 = vpop.f32.mrb[0].mxu0
    %v398 = vadd.f32 %v135, %v397
    %v399 = vpop.f32.mrb[0].mxu0
    %v400 = vadd.f32 %v139, %v399
    %401 = vmatprep.mubr.f32.mxu0 0.0
    %402 = vmatmul.mubr.f32.gmra.mrb[0].mxu0 %v167
    %v403 = vpop.f32.mrb[0].mxu0
    %v404 = vadd.f32 %v135, %v403
    %v405 = vpop.f32.mrb[0].mxu0
    %v406 = vadd.f32 %v139, %v405
    %407 = vdwg.mxu0
    %408 = vst [vmem:[#allocation2] sm:$0xff] %v249
    %409 = vst [vmem:[#allocation2 + $0x8] sm:$0xff] %v251
    %410 = vst [vmem:[#allocation2 + $0x10] sm:$0xff] %v362
    %411 = vst [vmem:[#allocation2 + $0x18] sm:$0xff] %v364
    %412 = vst [vmem:[#allocation2 + $0x20] sm:$0xff] %v255
    %413 = vst [vmem:[#allocation2 + $0x28] sm:$0xff] %v257
    %414 = vst [vmem:[#allocation2 + $0x30] sm:$0xff] %v368
    %415 = vst [vmem:[#allocation2 + $0x38] sm:$0xff] %v370
    %416 = vst [vmem:[#allocation2 + $0x40] sm:$0xff] %v261
    %417 = vst [vmem:[#allocation2 + $0x48] sm:$0xff] %v263
    %418 = vst [vmem:[#allocation2 + $0x50] sm:$0xff] %v374
    %419 = vst [vmem:[#allocation2 + $0x58] sm:$0xff] %v376
    %420 = vst [vmem:[#allocation2 + $0x60] sm:$0xff] %v267
    %421 = vst [vmem:[#allocation2 + $0x68] sm:$0xff] %v269
    %422 = vst [vmem:[#allocation2 + $0x70] sm:$0xff] %v380
    %423 = vst [vmem:[#allocation2 + $0x78] sm:$0xff] %v382
    %424 = vst [vmem:[#allocation2 + $0x80] sm:$0xff] %v273
    %425 = vst [vmem:[#allocation2 + $0x88] sm:$0xff] %v275
    %426 = vst [vmem:[#allocation2 + $0x90] sm:$0xff] %v386
    %427 = vst [vmem:[#allocation2 + $0x98] sm:$0xff] %v388
    %428 = vst [vmem:[#allocation2 + $0xa0] sm:$0xff] %v279
    %429 = vst [vmem:[#allocation2 + $0xa8] sm:$0xff] %v281
    %430 = vst [vmem:[#allocation2 + $0xb0] sm:$0xff] %v392
    %431 = vst [vmem:[#allocation2 + $0xb8] sm:$0xff] %v394
    %432 = vst [vmem:[#allocation2 + $0xc0] sm:$0xff] %v285
    %433 = vst [vmem:[#allocation2 + $0xc8] sm:$0xff] %v287
    %434 = vst [vmem:[#allocation2 + $0xd0] sm:$0xff] %v398
    %435 = vst [vmem:[#allocation2 + $0xd8] sm:$0xff] %v400
    %436 = vst [vmem:[#allocation2 + $0xe0] sm:$0xff] %v291
    %437 = vst [vmem:[#allocation2 + $0xe8] sm:$0xff] %v293
    %438 = vst [vmem:[#allocation2 + $0xf0] sm:$0xff] %v404
    %439 = vst [vmem:[#allocation2 + $0xf8] sm:$0xff] %v406
    %v440 = vld [vmem:[#allocation7] sm:$0xff]
    %v441 = vld [vmem:[#allocation7 + $0x8] sm:$0xff]
    %v442 = vld [vmem:[#allocation7 + $0x10] sm:$0xff]
    %v443 = vld [vmem:[#allocation7 + $0x18] sm:$0xff]
    %v444 = vld [vmem:[#allocation7 + $0x20] sm:$0xff]
    %v445 = vld [vmem:[#allocation7 + $0x28] sm:$0xff]
    %v446 = vld [vmem:[#allocation7 + $0x30] sm:$0xff]
    %v447 = vld [vmem:[#allocation7 + $0x38] sm:$0xff]
    %v448 = vld [vmem:[#allocation7 + $0x40] sm:$0xff]
    %v449 = vld [vmem:[#allocation7 + $0x48] sm:$0xff]
    %v450 = vld [vmem:[#allocation7 + $0x50] sm:$0xff]
    %v451 = vld [vmem:[#allocation7 + $0x58] sm:$0xff]
    %v452 = vld [vmem:[#allocation7 + $0x60] sm:$0xff]
    %v453 = vld [vmem:[#allocation7 + $0x68] sm:$0xff]
    %v454 = vld [vmem:[#allocation7 + $0x70] sm:$0xff]
    %v455 = vld [vmem:[#allocation7 + $0x78] sm:$0xff]
    %v456 = vld [vmem:[#allocation7 + $0x80] sm:$0xff]
    %v457 = vld [vmem:[#allocation7 + $0x88] sm:$0xff]
    %v458 = vld [vmem:[#allocation7 + $0x90] sm:$0xff]
    %v459 = vld [vmem:[#allocation7 + $0x98] sm:$0xff]
    %v460 = vld [vmem:[#allocation7 + $0xa0] sm:$0xff]
    %v461 = vld [vmem:[#allocation7 + $0xa8] sm:$0xff]
    %v462 = vld [vmem:[#allocation7 + $0xb0] sm:$0xff]
    %v463 = vld [vmem:[#allocation7 + $0xb8] sm:$0xff]
    %v464 = vld [vmem:[#allocation7 + $0xc0] sm:$0xff]
    %v465 = vld [vmem:[#allocation7 + $0xc8] sm:$0xff]
    %v466 = vld [vmem:[#allocation7 + $0xd0] sm:$0xff]
    %v467 = vld [vmem:[#allocation7 + $0xd8] sm:$0xff]
    %v468 = vld [vmem:[#allocation7 + $0xe0] sm:$0xff]
    %v469 = vld [vmem:[#allocation7 + $0xe8] sm:$0xff]
    %v470 = vld [vmem:[#allocation7 + $0xf0] sm:$0xff]
    %v471 = vld [vmem:[#allocation7 + $0xf8] sm:$0xff]
    %v504 = vunpack.c.l.b16 %v440
    %v505 = vunpack.c.h.b16 %v440
    %v506 = vunpack.c.l.b16 %v441
    %v507 = vunpack.c.h.b16 %v441
    %v508 = vunpack.c.l.b16 %v442
    %v509 = vunpack.c.h.b16 %v442
    %v510 = vunpack.c.l.b16 %v443
    %v511 = vunpack.c.h.b16 %v443
    %v512 = vunpack.c.l.b16 %v444
    %v513 = vunpack.c.h.b16 %v444
    %v514 = vunpack.c.l.b16 %v445
    %v515 = vunpack.c.h.b16 %v445
    %v516 = vunpack.c.l.b16 %v446
    %v517 = vunpack.c.h.b16 %v446
    %v518 = vunpack.c.l.b16 %v447
    %v519 = vunpack.c.h.b16 %v447
    %v520 = vunpack.c.l.b16 %v448
    %v521 = vunpack.c.h.b16 %v448
    %v522 = vunpack.c.l.b16 %v449
    %v523 = vunpack.c.h.b16 %v449
    %v524 = vunpack.c.l.b16 %v450
    %v525 = vunpack.c.h.b16 %v450
    %v526 = vunpack.c.l.b16 %v451
    %v527 = vunpack.c.h.b16 %v451
    %v528 = vunpack.c.l.b16 %v452
    %v529 = vunpack.c.h.b16 %v452
    %v530 = vunpack.c.l.b16 %v453
    %v531 = vunpack.c.h.b16 %v453
    %v532 = vunpack.c.l.b16 %v454
    %v533 = vunpack.c.h.b16 %v454
    %v534 = vunpack.c.l.b16 %v455
    %v535 = vunpack.c.h.b16 %v455
    %v536 = vunpack.c.l.b16 %v456
    %v537 = vunpack.c.h.b16 %v456
    %v538 = vunpack.c.l.b16 %v457
    %v539 = vunpack.c.h.b16 %v457
    %v540 = vunpack.c.l.b16 %v458
    %v541 = vunpack.c.h.b16 %v458
    %v542 = vunpack.c.l.b16 %v459
    %v543 = vunpack.c.h.b16 %v459
    %v544 = vunpack.c.l.b16 %v460
    %v545 = vunpack.c.h.b16 %v460
    %v546 = vunpack.c.l.b16 %v461
    %v547 = vunpack.c.h.b16 %v461
    %v548 = vunpack.c.l.b16 %v462
    %v549 = vunpack.c.h.b16 %v462
    %v550 = vunpack.c.l.b16 %v463
    %v551 = vunpack.c.h.b16 %v463
    %v552 = vunpack.c.l.b16 %v464
    %v553 = vunpack.c.h.b16 %v464
    %v554 = vunpack.c.l.b16 %v465
    %v555 = vunpack.c.h.b16 %v465
    %v556 = vunpack.c.l.b16 %v466
    %v557 = vunpack.c.h.b16 %v466
    %v558 = vunpack.c.l.b16 %v467
    %v559 = vunpack.c.h.b16 %v467
    %v560 = vunpack.c.l.b16 %v468
    %v561 = vunpack.c.h.b16 %v468
    %v562 = vunpack.c.l.b16 %v469
    %v563 = vunpack.c.h.b16 %v469
    %v564 = vunpack.c.l.b16 %v470
    %v565 = vunpack.c.h.b16 %v470
    %v566 = vunpack.c.l.b16 %v471
    %v567 = vunpack.c.h.b16 %v471
    %v568 = vpack.c.b16 %v508, %v504
    %v569 = vpack.c.b16 %v509, %v505
    %v570 = vpack.c.b16 %v510, %v506
    %v571 = vpack.c.b16 %v511, %v507
    %v572 = vpack.c.b16 %v516, %v512
    %v573 = vpack.c.b16 %v517, %v513
    %v574 = vpack.c.b16 %v518, %v514
    %v575 = vpack.c.b16 %v519, %v515
    %v576 = vpack.c.b16 %v524, %v520
    %v577 = vpack.c.b16 %v525, %v521
    %v578 = vpack.c.b16 %v526, %v522
    %v579 = vpack.c.b16 %v527, %v523
    %v580 = vpack.c.b16 %v532, %v528
    %v581 = vpack.c.b16 %v533, %v529
    %v582 = vpack.c.b16 %v534, %v530
    %v583 = vpack.c.b16 %v535, %v531
    %v584 = vpack.c.b16 %v540, %v536
    %v585 = vpack.c.b16 %v541, %v537
    %v586 = vpack.c.b16 %v542, %v538
    %v587 = vpack.c.b16 %v543, %v539
    %v588 = vpack.c.b16 %v548, %v544
    %v589 = vpack.c.b16 %v549, %v545
    %v590 = vpack.c.b16 %v550, %v546
    %v591 = vpack.c.b16 %v551, %v547
    %v592 = vpack.c.b16 %v556, %v552
    %v593 = vpack.c.b16 %v557, %v553
    %v594 = vpack.c.b16 %v558, %v554
    %v595 = vpack.c.b16 %v559, %v555
    %v596 = vpack.c.b16 %v564, %v560
    %v597 = vpack.c.b16 %v565, %v561
    %v598 = vpack.c.b16 %v566, %v562
    %v599 = vpack.c.b16 %v567, %v563
    %632 = vmatprep.subr.bf16.mxu0 %v569
    %633 = vmatpush1.bf16.msra.mxu0 %v568
    %634 = vmatprep.subr.bf16.mxu0 %v573
    %635 = vmatpush1.bf16.msra.mxu0 %v572
    %636 = vmatprep.subr.bf16.mxu0 %v577
    %637 = vmatpush1.bf16.msra.mxu0 %v576
    %638 = vmatprep.subr.bf16.mxu0 %v581
    %639 = vmatpush1.bf16.msra.mxu0 %v580
    %640 = vmatprep.subr.bf16.mxu0 %v585
    %641 = vmatpush1.bf16.msra.mxu0 %v584
    %642 = vmatprep.subr.bf16.mxu0 %v589
    %643 = vmatpush1.bf16.msra.mxu0 %v588
    %644 = vmatprep.subr.bf16.mxu0 %v593
    %645 = vmatpush1.bf16.msra.mxu0 %v592
    %646 = vmatprep.subr.bf16.mxu0 %v597
    %647 = vmatpush1.bf16.msra.mxu0 %v596
    %648 = vmatprep.subr.bf16.mxu0 0
    %649 = vmatpush1.bf16.msra.mxu0 0
    %650 = vmatprep.subr.bf16.mxu0 0
    %651 = vmatpush1.bf16.msra.mxu0 0
    %652 = vmatprep.subr.bf16.mxu0 0
    %653 = vmatpush1.bf16.msra.mxu0 0
    %654 = vmatprep.subr.bf16.mxu0 0
    %655 = vmatpush1.bf16.msra.mxu0 0
    %656 = vmatprep.subr.bf16.mxu0 0
    %657 = vmatpush1.bf16.msra.mxu0 0
    %658 = vmatprep.subr.bf16.mxu0 0
    %659 = vmatpush1.bf16.msra.mxu0 0
    %660 = vmatprep.subr.bf16.mxu0 0
    %661 = vmatpush1.bf16.msra.mxu0 0
    %662 = vmatprep.subr.bf16.mxu0 0
    %663 = vmatpush1.bf16.msra.mxu0 0
    %664 = vmatprep.mubr.bf16.mxu0 0
    %665 = vmatmul.mubr.bf16.gmra.mrb[0].mxu0 0
    %v666 = vpop.f32.mrb[0].mxu0
    %v667 = vadd.f32 0.0, %v666
    %v668 = vpop.f32.mrb[0].mxu0
    %v669 = vadd.f32 0.0, %v668
    %v670 = vpop.f32.mrb[0].mxu0
    %v671 = vpop.f32.mrb[0].mxu0
    %672 = vdwg.mxu0
    %673 = vmatprep.subr.bf16.mxu0 %v571
    %674 = vmatpush1.bf16.msra.mxu0 %v570
    %675 = vmatprep.subr.bf16.mxu0 %v575
    %676 = vmatpush1.bf16.msra.mxu0 %v574
    %677 = vmatprep.subr.bf16.mxu0 %v579
    %678 = vmatpush1.bf16.msra.mxu0 %v578
    %679 = vmatprep.subr.bf16.mxu0 %v583
    %680 = vmatpush1.bf16.msra.mxu0 %v582
    %681 = vmatprep.subr.bf16.mxu0 %v587
    %682 = vmatpush1.bf16.msra.mxu0 %v586
    %683 = vmatprep.subr.bf16.mxu0 %v591
    %684 = vmatpush1.bf16.msra.mxu0 %v590
    %685 = vmatprep.subr.bf16.mxu0 %v595
    %686 = vmatpush1.bf16.msra.mxu0 %v594
    %687 = vmatprep.subr.bf16.mxu0 %v599
    %688 = vmatpush1.bf16.msra.mxu0 %v598
    %689 = vmatprep.subr.bf16.mxu0 0
    %690 = vmatpush1.bf16.msra.mxu0 0
    %691 = vmatprep.subr.bf16.mxu0 0
    %692 = vmatpush1.bf16.msra.mxu0 0
    %693 = vmatprep.subr.bf16.mxu0 0
    %694 = vmatpush1.bf16.msra.mxu0 0
    %695 = vmatprep.subr.bf16.mxu0 0
    %696 = vmatpush1.bf16.msra.mxu0 0
    %697 = vmatprep.subr.bf16.mxu0 0
    %698 = vmatpush1.bf16.msra.mxu0 0
    %699 = vmatprep.subr.bf16.mxu0 0
    %700 = vmatpush1.bf16.msra.mxu0 0
    %701 = vmatprep.subr.bf16.mxu0 0
    %702 = vmatpush1.bf16.msra.mxu0 0
    %703 = vmatprep.subr.bf16.mxu0 0
    %704 = vmatpush1.bf16.msra.mxu0 0
    %705 = vmatprep.mubr.bf16.mxu0 0
    %706 = vmatmul.mubr.bf16.gmra.mrb[0].mxu0 0
    %v707 = vpop.f32.mrb[0].mxu0
    %v708 = vadd.f32 0.0, %v707
    %v709 = vpop.f32.mrb[0].mxu0
    %v710 = vadd.f32 0.0, %v709
    %v711 = vpop.f32.mrb[0].mxu0
    %v712 = vpop.f32.mrb[0].mxu0
    %713 = vdwg.mxu0
    %v714 = vld [vmem:[#allocation2] sm:$0xff]
    %v715 = vld [vmem:[#allocation2 + $0x8] sm:$0xff]
    %v716 = vld [vmem:[#allocation2 + $0x10] sm:$0xff]
    %v717 = vld [vmem:[#allocation2 + $0x18] sm:$0xff]
    %v718 = vld [vmem:[#allocation2 + $0xe0] sm:$0xff]
    %v719 = vld [vmem:[#allocation2 + $0xe8] sm:$0xff]
    %v720 = vld [vmem:[#allocation2 + $0xf0] sm:$0xff]
    %v721 = vld [vmem:[#allocation2 + $0xf8] sm:$0xff]
    %v722 = vsel %vm98, %v714, %v718
    %v723 = vsel %vm99, %v715, %v719
    %v724 = vsel %vm100, %v716, %v720
    %v725 = vsel %vm101, %v717, %v721
    %v726 = vadd.f32 %v722, %v667
    %v727 = vadd.f32 %v723, %v669
    %v728 = vadd.f32 %v724, %v708
    %v729 = vadd.f32 %v725, %v710
    %v730 = vxor.u32 %v726, 2147483648
    %v731 = vxor.u32 %v727, 2147483648
    %v732 = vxor.u32 %v728, 2147483648
    %v733 = vmul.f32 %v730, 1.442695
    %v734 = vpow.pop %v733
    %v735 = vmul.f32 %v731, 1.442695
    %v736 = vpow.pop %v735
    %v737 = vmul.f32 %v732, 1.442695
    %v738 = vpow.pop %v737
    %v739 = vadd.f32 %v734, 1.0
    %v740 = vadd.f32 %v736, 1.0
    %v741 = vadd.f32 %v738, 1.0
    %v742 = vrcp.pop %v739
    %v743 = vmul.f32 1.0, %v742
    %v744 = vrcp.pop %v740
    %v745 = vmul.f32 1.0, %v744
    %v746 = vrcp.pop %v741
    %v747 = vmul.f32 1.0, %v746
    %v748 = vtanh.pop %v729
    %v749 = vmul.f32 %v745, 0.0
    %v750 = vmul.f32 %v743, %v748
    %v751 = vadd.f32 %v749, %v750
    %v752 = vtanh.pop %v751
    %v753 = vmul.f32 %v747, %v752
    %vm754 = vcmask 523264
    %755 = vst.msk [vmem:[#allocation3] sm:$0xff] %vm754, %v753
    %vm756 = vcmask 1048064
    %757 = vst.msk [vmem:[#allocation3 + $0x38] sm:$0xff] %vm756, %v753
    %v758 = vpack.c.bf16 %v753, %v753
    %v759 = vld [vmem:[#allocation7] sm:$0xff]
    %v760 = vld [vmem:[#allocation7 + $0x8] sm:$0xff]
    %v761 = vld [vmem:[#allocation7 + $0x10] sm:$0xff]
    %v762 = vld [vmem:[#allocation7 + $0x18] sm:$0xff]
    %v763 = vld [vmem:[#allocation7 + $0x20] sm:$0xff]
    %v764 = vld [vmem:[#allocation7 + $0x28] sm:$0xff]
    %v765 = vld [vmem:[#allocation7 + $0x30] sm:$0xff]
    %v766 = vld [vmem:[#allocation7 + $0x38] sm:$0xff]
    %v767 = vld [vmem:[#allocation7 + $0x40] sm:$0xff]
    %v768 = vld [vmem:[#allocation7 + $0x48] sm:$0xff]
    %v769 = vld [vmem:[#allocation7 + $0x50] sm:$0xff]
    %v770 = vld [vmem:[#allocation7 + $0x58] sm:$0xff]
    %v771 = vld [vmem:[#allocation7 + $0x60] sm:$0xff]
    %v772 = vld [vmem:[#allocation7 + $0x68] sm:$0xff]
    %v773 = vld [vmem:[#allocation7 + $0x70] sm:$0xff]
    %v774 = vld [vmem:[#allocation7 + $0x78] sm:$0xff]
    %v775 = vld [vmem:[#allocation7 + $0x80] sm:$0xff]
    %v776 = vld [vmem:[#allocation7 + $0x88] sm:$0xff]
    %v777 = vld [vmem:[#allocation7 + $0x90] sm:$0xff]
    %v778 = vld [vmem:[#allocation7 + $0x98] sm:$0xff]
    %v779 = vld [vmem:[#allocation7 + $0xa0] sm:$0xff]
    %v780 = vld [vmem:[#allocation7 + $0xa8] sm:$0xff]
    %v781 = vld [vmem:[#allocation7 + $0xb0] sm:$0xff]
    %v782 = vld [vmem:[#allocation7 + $0xb8] sm:$0xff]
    %v783 = vld [vmem:[#allocation7 + $0xc0] sm:$0xff]
    %v784 = vld [vmem:[#allocation7 + $0xc8] sm:$0xff]
    %v785 = vld [vmem:[#allocation7 + $0xd0] sm:$0xff]
    %v786 = vld [vmem:[#allocation7 + $0xd8] sm:$0xff]
    %v787 = vld [vmem:[#allocation7 + $0xe0] sm:$0xff]
    %v788 = vld [vmem:[#allocation7 + $0xe8] sm:$0xff]
    %v789 = vld [vmem:[#allocation7 + $0xf0] sm:$0xff]
    %v790 = vld [vmem:[#allocation7 + $0xf8] sm:$0xff]
    %v823 = vunpack.c.l.b16 %v759
    %v824 = vunpack.c.h.b16 %v759
    %v825 = vunpack.c.l.b16 %v760
    %v826 = vunpack.c.h.b16 %v760
    %v827 = vunpack.c.l.b16 %v761
    %v828 = vunpack.c.h.b16 %v761
    %v829 = vunpack.c.l.b16 %v762
    %v830 = vunpack.c.h.b16 %v762
    %v831 = vunpack.c.l.b16 %v763
    %v832 = vunpack.c.h.b16 %v763
    %v833 = vunpack.c.l.b16 %v764
    %v834 = vunpack.c.h.b16 %v764
    %v835 = vunpack.c.l.b16 %v765
    %v836 = vunpack.c.h.b16 %v765
    %v837 = vunpack.c.l.b16 %v766
    %v838 = vunpack.c.h.b16 %v766
    %v839 = vunpack.c.l.b16 %v767
    %v840 = vunpack.c.h.b16 %v767
    %v841 = vunpack.c.l.b16 %v768
    %v842 = vunpack.c.h.b16 %v768
    %v843 = vunpack.c.l.b16 %v769
    %v844 = vunpack.c.h.b16 %v769
    %v845 = vunpack.c.l.b16 %v770
    %v846 = vunpack.c.h.b16 %v770
    %v847 = vunpack.c.l.b16 %v771
    %v848 = vunpack.c.h.b16 %v771
    %v849 = vunpack.c.l.b16 %v772
    %v850 = vunpack.c.h.b16 %v772
    %v851 = vunpack.c.l.b16 %v773
    %v852 = vunpack.c.h.b16 %v773
    %v853 = vunpack.c.l.b16 %v774
    %v854 = vunpack.c.h.b16 %v774
    %v855 = vunpack.c.l.b16 %v775
    %v856 = vunpack.c.h.b16 %v775
    %v857 = vunpack.c.l.b16 %v776
    %v858 = vunpack.c.h.b16 %v776
    %v859 = vunpack.c.l.b16 %v777
    %v860 = vunpack.c.h.b16 %v777
    %v861 = vunpack.c.l.b16 %v778
    %v862 = vunpack.c.h.b16 %v778
    %v863 = vunpack.c.l.b16 %v779
    %v864 = vunpack.c.h.b16 %v779
    %v865 = vunpack.c.l.b16 %v780
    %v866 = vunpack.c.h.b16 %v780
    %v867 = vunpack.c.l.b16 %v781
    %v868 = vunpack.c.h.b16 %v781
    %v869 = vunpack.c.l.b16 %v782
    %v870 = vunpack.c.h.b16 %v782
    %v871 = vunpack.c.l.b16 %v783
    %v872 = vunpack.c.h.b16 %v783
    %v873 = vunpack.c.l.b16 %v784
    %v874 = vunpack.c.h.b16 %v784
    %v875 = vunpack.c.l.b16 %v785
    %v876 = vunpack.c.h.b16 %v785
    %v877 = vunpack.c.l.b16 %v786
    %v878 = vunpack.c.h.b16 %v786
    %v879 = vunpack.c.l.b16 %v787
    %v880 = vunpack.c.h.b16 %v787
    %v881 = vunpack.c.l.b16 %v788
    %v882 = vunpack.c.h.b16 %v788
    %v883 = vunpack.c.l.b16 %v789
    %v884 = vunpack.c.h.b16 %v789
    %v885 = vunpack.c.l.b16 %v790
    %v886 = vunpack.c.h.b16 %v790
    %v887 = vpack.c.b16 %v827, %v823
    %v888 = vpack.c.b16 %v828, %v824
    %v889 = vpack.c.b16 %v829, %v825
    %v890 = vpack.c.b16 %v830, %v826
    %v891 = vpack.c.b16 %v835, %v831
    %v892 = vpack.c.b16 %v836, %v832
    %v893 = vpack.c.b16 %v837, %v833
    %v894 = vpack.c.b16 %v838, %v834
    %v895 = vpack.c.b16 %v843, %v839
    %v896 = vpack.c.b16 %v844, %v840
    %v897 = vpack.c.b16 %v845, %v841
    %v898 = vpack.c.b16 %v846, %v842
    %v899 = vpack.c.b16 %v851, %v847
    %v900 = vpack.c.b16 %v852, %v848
    %v901 = vpack.c.b16 %v853, %v849
    %v902 = vpack.c.b16 %v854, %v850
    %v903 = vpack.c.b16 %v859, %v855
    %v904 = vpack.c.b16 %v860, %v856
    %v905 = vpack.c.b16 %v861, %v857
    %v906 = vpack.c.b16 %v862, %v858
    %v907 = vpack.c.b16 %v867, %v863
    %v908 = vpack.c.b16 %v868, %v864
    %v909 = vpack.c.b16 %v869, %v865
    %v910 = vpack.c.b16 %v870, %v866
    %v911 = vpack.c.b16 %v875, %v871
    %v912 = vpack.c.b16 %v876, %v872
    %v913 = vpack.c.b16 %v877, %v873
    %v914 = vpack.c.b16 %v878, %v874
    %v915 = vpack.c.b16 %v883, %v879
    %v916 = vpack.c.b16 %v884, %v880
    %v917 = vpack.c.b16 %v885, %v881
    %v918 = vpack.c.b16 %v886, %v882
    %951 = vmatprep.subr.bf16.mxu0 %v888
    %952 = vmatpush1.bf16.msra.mxu0 %v887
    %953 = vmatprep.subr.bf16.mxu0 %v892
    %954 = vmatpush1.bf16.msra.mxu0 %v891
    %955 = vmatprep.subr.bf16.mxu0 %v896
    %956 = vmatpush1.bf16.msra.mxu0 %v895
    %957 = vmatprep.subr.bf16.mxu0 %v900
    %958 = vmatpush1.bf16.msra.mxu0 %v899
    %959 = vmatprep.subr.bf16.mxu0 %v904
    %960 = vmatpush1.bf16.msra.mxu0 %v903
    %961 = vmatprep.subr.bf16.mxu0 %v908
    %962 = vmatpush1.bf16.msra.mxu0 %v907
    %963 = vmatprep.subr.bf16.mxu0 %v912
    %964 = vmatpush1.bf16.msra.mxu0 %v911
    %965 = vmatprep.subr.bf16.mxu0 %v916
    %966 = vmatpush1.bf16.msra.mxu0 %v915
    %967 = vmatprep.subr.bf16.mxu0 0
    %968 = vmatpush1.bf16.msra.mxu0 0
    %969 = vmatprep.subr.bf16.mxu0 0
    %970 = vmatpush1.bf16.msra.mxu0 0
    %971 = vmatprep.subr.bf16.mxu0 0
    %972 = vmatpush1.bf16.msra.mxu0 0
    %973 = vmatprep.subr.bf16.mxu0 0
    %974 = vmatpush1.bf16.msra.mxu0 0
    %975 = vmatprep.subr.bf16.mxu0 0
    %976 = vmatpush1.bf16.msra.mxu0 0
    %977 = vmatprep.subr.bf16.mxu0 0
    %978 = vmatpush1.bf16.msra.mxu0 0
    %979 = vmatprep.subr.bf16.mxu0 0
    %980 = vmatpush1.bf16.msra.mxu0 0
    %981 = vmatprep.subr.bf16.mxu0 0
    %982 = vmatpush1.bf16.msra.mxu0 0
    %983 = vmatprep.mubr.bf16.mxu0 0
    %984 = vmatmul.mubr.bf16.gmra.mrb[0].mxu0 %v758
    %v985 = vpop.f32.mrb[0].mxu0
    %v986 = vadd.f32 0.0, %v985
    %v987 = vpop.f32.mrb[0].mxu0
    %v988 = vadd.f32 0.0, %v987
    %v989 = vpop.f32.mrb[0].mxu0
    %v990 = vpop.f32.mrb[0].mxu0
    %991 = vdwg.mxu0
    %992 = vmatprep.subr.bf16.mxu0 %v890
    %993 = vmatpush1.bf16.msra.mxu0 %v889
    %994 = vmatprep.subr.bf16.mxu0 %v894
    %995 = vmatpush1.bf16.msra.mxu0 %v893
    %996 = vmatprep.subr.bf16.mxu0 %v898
    %997 = vmatpush1.bf16.msra.mxu0 %v897
    %998 = vmatprep.subr.bf16.mxu0 %v902
    %999 = vmatpush1.bf16.msra.mxu0 %v901
    %1000 = vmatprep.subr.bf16.mxu0 %v906
    %1001 = vmatpush1.bf16.msra.mxu0 %v905
    %1002 = vmatprep.subr.bf16.mxu0 %v910
    %1003 = vmatpush1.bf16.msra.mxu0 %v909
    %1004 = vmatprep.subr.bf16.mxu0 %v914
    %1005 = vmatpush1.bf16.msra.mxu0 %v913
    %1006 = vmatprep.subr.bf16.mxu0 %v918
    %1007 = vmatpush1.bf16.msra.mxu0 %v917
    %1008 = vmatprep.subr.bf16.mxu0 0
    %1009 = vmatpush1.bf16.msra.mxu0 0
    %1010 = vmatprep.subr.bf16.mxu0 0
    %1011 = vmatpush1.bf16.msra.mxu0 0
    %1012 = vmatprep.subr.bf16.mxu0 0
    %1013 = vmatpush1.bf16.msra.mxu0 0
    %1014 = vmatprep.subr.bf16.mxu0 0
    %1015 = vmatpush1.bf16.msra.mxu0 0
    %1016 = vmatprep.subr.bf16.mxu0 0
    %1017 = vmatpush1.bf16.msra.mxu0 0
    %1018 = vmatprep.subr.bf16.mxu0 0
    %1019 = vmatpush1.bf16.msra.mxu0 0
    %1020 = vmatprep.subr.bf16.mxu0 0
    %1021 = vmatpush1.bf16.msra.mxu0 0
    %1022 = vmatprep.subr.bf16.mxu0 0
    %1023 = vmatpush1.bf16.msra.mxu0 0
    %1024 = vmatprep.mubr.bf16.mxu0 0
    %1025 = vmatmul.mubr.bf16.gmra.mrb[0].mxu0 %v758
    %v1026 = vpop.f32.mrb[0].mxu0
    %v1027 = vadd.f32 0.0, %v1026
    %v1028 = vpop.f32.mrb[0].mxu0
    %v1029 = vadd.f32 0.0, %v1028
    %v1030 = vpop.f32.mrb[0].mxu0
    %v1031 = vpop.f32.mrb[0].mxu0
    %1032 = vdwg.mxu0
    %v1033 = vld [vmem:[#allocation2 + $0x20] sm:$0xff]
    %v1034 = vld [vmem:[#allocation2 + $0x28] sm:$0xff]
    %v1035 = vld [vmem:[#allocation2 + $0x30] sm:$0xff]
    %v1036 = vld [vmem:[#allocation2 + $0x38] sm:$0xff]
    %v1037 = vld [vmem:[#allocation2 + $0xc0] sm:$0xff]
    %v1038 = vld [vmem:[#allocation2 + $0xc8] sm:$0xff]
    %v1039 = vld [vmem:[#allocation2 + $0xd0] sm:$0xff]
    %v1040 = vld [vmem:[#allocation2 + $0xd8] sm:$0xff]
    %v1041 = vsel %vm98, %v1033, %v1037
    %v1042 = vsel %vm99, %v1034, %v1038
    %v1043 = vsel %vm100, %v1035, %v1039
    %v1044 = vsel %vm101, %v1036, %v1040
    %v1045 = vadd.f32 %v1041, %v986
    %v1046 = vadd.f32 %v1042, %v988
    %v1047 = vadd.f32 %v1043, %v1027
    %v1048 = vadd.f32 %v1044, %v1029
    %v1049 = vxor.u32 %v1045, 2147483648
    %v1050 = vxor.u32 %v1046, 2147483648
    %v1051 = vxor.u32 %v1047, 2147483648
    %v1052 = vmul.f32 %v1049, 1.442695
    %v1053 = vpow.pop %v1052
    %v1054 = vmul.f32 %v1050, 1.442695
    %v1055 = vpow.pop %v1054
    %v1056 = vmul.f32 %v1051, 1.442695
    %v1057 = vpow.pop %v1056
    %v1058 = vadd.f32 %v1053, 1.0
    %v1059 = vadd.f32 %v1055, 1.0
    %v1060 = vadd.f32 %v1057, 1.0
    %v1061 = vrcp.pop %v1058
    %v1062 = vmul.f32 1.0, %v1061
    %v1063 = vrcp.pop %v1059
    %v1064 = vmul.f32 1.0, %v1063
    %v1065 = vrcp.pop %v1060
    %v1066 = vmul.f32 1.0, %v1065
    %v1067 = vtanh.pop %v1048
    %v1068 = vmul.f32 %v1064, %v751
    %v1069 = vmul.f32 %v1062, %v1067
    %v1070 = vadd.f32 %v1068, %v1069
    %v1071 = vtanh.pop %v1070
    %v1072 = vmul.f32 %v1066, %v1071
    %1073 = vst.msk [vmem:[#allocation3 + $0x8] sm:$0xff] %vm754, %v1072
    %1074 = vst.msk [vmem:[#allocation3 + $0x30] sm:$0xff] %vm756, %v1072
    %v1075 = vpack.c.bf16 %v1072, %v1072
    %v1076 = vld [vmem:[#allocation7] sm:$0xff]
    %v1077 = vld [vmem:[#allocation7 + $0x8] sm:$0xff]
    %v1078 = vld [vmem:[#allocation7 + $0x10] sm:$0xff]
    %v1079 = vld [vmem:[#allocation7 + $0x18] sm:$0xff]
    %v1080 = vld [vmem:[#allocation7 + $0x20] sm:$0xff]
    %v1081 = vld [vmem:[#allocation7 + $0x28] sm:$0xff]
    %v1082 = vld [vmem:[#allocation7 + $0x30] sm:$0xff]
    %v1083 = vld [vmem:[#allocation7 + $0x38] sm:$0xff]
    %v1084 = vld [vmem:[#allocation7 + $0x40] sm:$0xff]
    %v1085 = vld [vmem:[#allocation7 + $0x48] sm:$0xff]
    %v1086 = vld [vmem:[#allocation7 + $0x50] sm:$0xff]
    %v1087 = vld [vmem:[#allocation7 + $0x58] sm:$0xff]
    %v1088 = vld [vmem:[#allocation7 + $0x60] sm:$0xff]
    %v1089 = vld [vmem:[#allocation7 + $0x68] sm:$0xff]
    %v1090 = vld [vmem:[#allocation7 + $0x70] sm:$0xff]
    %v1091 = vld [vmem:[#allocation7 + $0x78] sm:$0xff]
    %v1092 = vld [vmem:[#allocation7 + $0x80] sm:$0xff]
    %v1093 = vld [vmem:[#allocation7 + $0x88] sm:$0xff]
    %v1094 = vld [vmem:[#allocation7 + $0x90] sm:$0xff]
    %v1095 = vld [vmem:[#allocation7 + $0x98] sm:$0xff]
    %v1096 = vld [vmem:[#allocation7 + $0xa0] sm:$0xff]
    %v1097 = vld [vmem:[#allocation7 + $0xa8] sm:$0xff]
    %v1098 = vld [vmem:[#allocation7 + $0xb0] sm:$0xff]
    %v1099 = vld [vmem:[#allocation7 + $0xb8] sm:$0xff]
    %v1100 = vld [vmem:[#allocation7 + $0xc0] sm:$0xff]
    %v1101 = vld [vmem:[#allocation7 + $0xc8] sm:$0xff]
    %v1102 = vld [vmem:[#allocation7 + $0xd0] sm:$0xff]
    %v1103 = vld [vmem:[#allocation7 + $0xd8] sm:$0xff]
    %v1104 = vld [vmem:[#allocation7 + $0xe0] sm:$0xff]
    %v1105 = vld [vmem:[#allocation7 + $0xe8] sm:$0xff]
    %v1106 = vld [vmem:[#allocation7 + $0xf0] sm:$0xff]
    %v1107 = vld [vmem:[#allocation7 + $0xf8] sm:$0xff]
    %v1140 = vunpack.c.l.b16 %v1076
    %v1141 = vunpack.c.h.b16 %v1076
    %v1142 = vunpack.c.l.b16 %v1077
    %v1143 = vunpack.c.h.b16 %v1077
    %v1144 = vunpack.c.l.b16 %v1078
    %v1145 = vunpack.c.h.b16 %v1078
    %v1146 = vunpack.c.l.b16 %v1079
    %v1147 = vunpack.c.h.b16 %v1079
    %v1148 = vunpack.c.l.b16 %v1080
    %v1149 = vunpack.c.h.b16 %v1080
    %v1150 = vunpack.c.l.b16 %v1081
    %v1151 = vunpack.c.h.b16 %v1081
    %v1152 = vunpack.c.l.b16 %v1082
    %v1153 = vunpack.c.h.b16 %v1082
    %v1154 = vunpack.c.l.b16 %v1083
    %v1155 = vunpack.c.h.b16 %v1083
    %v1156 = vunpack.c.l.b16 %v1084
    %v1157 = vunpack.c.h.b16 %v1084
    %v1158 = vunpack.c.l.b16 %v1085
    %v1159 = vunpack.c.h.b16 %v1085
    %v1160 = vunpack.c.l.b16 %v1086
    %v1161 = vunpack.c.h.b16 %v1086
    %v1162 = vunpack.c.l.b16 %v1087
    %v1163 = vunpack.c.h.b16 %v1087
    %v1164 = vunpack.c.l.b16 %v1088
    %v1165 = vunpack.c.h.b16 %v1088
    %v1166 = vunpack.c.l.b16 %v1089
    %v1167 = vunpack.c.h.b16 %v1089
    %v1168 = vunpack.c.l.b16 %v1090
    %v1169 = vunpack.c.h.b16 %v1090
    %v1170 = vunpack.c.l.b16 %v1091
    %v1171 = vunpack.c.h.b16 %v1091
    %v1172 = vunpack.c.l.b16 %v1092
    %v1173 = vunpack.c.h.b16 %v1092
    %v1174 = vunpack.c.l.b16 %v1093
    %v1175 = vunpack.c.h.b16 %v1093
    %v1176 = vunpack.c.l.b16 %v1094
    %v1177 = vunpack.c.h.b16 %v1094
    %v1178 = vunpack.c.l.b16 %v1095
    %v1179 = vunpack.c.h.b16 %v1095
    %v1180 = vunpack.c.l.b16 %v1096
    %v1181 = vunpack.c.h.b16 %v1096
    %v1182 = vunpack.c.l.b16 %v1097
    %v1183 = vunpack.c.h.b16 %v1097
    %v1184 = vunpack.c.l.b16 %v1098
    %v1185 = vunpack.c.h.b16 %v1098
    %v1186 = vunpack.c.l.b16 %v1099
    %v1187 = vunpack.c.h.b16 %v1099
    %v1188 = vunpack.c.l.b16 %v1100
    %v1189 = vunpack.c.h.b16 %v1100
    %v1190 = vunpack.c.l.b16 %v1101
    %v1191 = vunpack.c.h.b16 %v1101
    %v1192 = vunpack.c.l.b16 %v1102
    %v1193 = vunpack.c.h.b16 %v1102
    %v1194 = vunpack.c.l.b16 %v1103
    %v1195 = vunpack.c.h.b16 %v1103
    %v1196 = vunpack.c.l.b16 %v1104
    %v1197 = vunpack.c.h.b16 %v1104
    %v1198 = vunpack.c.l.b16 %v1105
    %v1199 = vunpack.c.h.b16 %v1105
    %v1200 = vunpack.c.l.b16 %v1106
    %v1201 = vunpack.c.h.b16 %v1106
    %v1202 = vunpack.c.l.b16 %v1107
    %v1203 = vunpack.c.h.b16 %v1107
    %v1204 = vpack.c.b16 %v1144, %v1140
    %v1205 = vpack.c.b16 %v1145, %v1141
    %v1206 = vpack.c.b16 %v1146, %v1142
    %v1207 = vpack.c.b16 %v1147, %v1143
    %v1208 = vpack.c.b16 %v1152, %v1148
    %v1209 = vpack.c.b16 %v1153, %v1149
    %v1210 = vpack.c.b16 %v1154, %v1150
    %v1211 = vpack.c.b16 %v1155, %v1151
    %v1212 = vpack.c.b16 %v1160, %v1156
    %v1213 = vpack.c.b16 %v1161, %v1157
    %v1214 = vpack.c.b16 %v1162, %v1158
    %v1215 = vpack.c.b16 %v1163, %v1159
    %v1216 = vpack.c.b16 %v1168, %v1164
    %v1217 = vpack.c.b16 %v1169, %v1165
    %v1218 = vpack.c.b16 %v1170, %v1166
    %v1219 = vpack.c.b16 %v1171, %v1167
    %v1220 = vpack.c.b16 %v1176, %v1172
    %v1221 = vpack.c.b16 %v1177, %v1173
    %v1222 = vpack.c.b16 %v1178, %v1174
    %v1223 = vpack.c.b16 %v1179, %v1175
    %v1224 = vpack.c.b16 %v1184, %v1180
    %v1225 = vpack.c.b16 %v1185, %v1181
    %v1226 = vpack.c.b16 %v1186, %v1182
    %v1227 = vpack.c.b16 %v1187, %v1183
    %v1228 = vpack.c.b16 %v1192, %v1188
    %v1229 = vpack.c.b16 %v1193, %v1189
    %v1230 = vpack.c.b16 %v1194, %v1190
    %v1231 = vpack.c.b16 %v1195, %v1191
    %v1232 = vpack.c.b16 %v1200, %v1196
    %v1233 = vpack.c.b16 %v1201, %v1197
    %v1234 = vpack.c.b16 %v1202, %v1198
    %v1235 = vpack.c.b16 %v1203, %v1199
    %1268 = vmatprep.subr.bf16.mxu0 %v1205
    %1269 = vmatpush1.bf16.msra.mxu0 %v1204
    %1270 = vmatprep.subr.bf16.mxu0 %v1209
    %1271 = vmatpush1.bf16.msra.mxu0 %v1208
    %1272 = vmatprep.subr.bf16.mxu0 %v1213
    %1273 = vmatpush1.bf16.msra.mxu0 %v1212
    %1274 = vmatprep.subr.bf16.mxu0 %v1217
    %1275 = vmatpush1.bf16.msra.mxu0 %v1216
    %1276 = vmatprep.subr.bf16.mxu0 %v1221
    %1277 = vmatpush1.bf16.msra.mxu0 %v1220
    %1278 = vmatprep.subr.bf16.mxu0 %v1225
    %1279 = vmatpush1.bf16.msra.mxu0 %v1224
    %1280 = vmatprep.subr.bf16.mxu0 %v1229
    %1281 = vmatpush1.bf16.msra.mxu0 %v1228
    %1282 = vmatprep.subr.bf16.mxu0 %v1233
    %1283 = vmatpush1.bf16.msra.mxu0 %v1232
    %1284 = vmatprep.subr.bf16.mxu0 0
    %1285 = vmatpush1.bf16.msra.mxu0 0
    %1286 = vmatprep.subr.bf16.mxu0 0
    %1287 = vmatpush1.bf16.msra.mxu0 0
    %1288 = vmatprep.subr.bf16.mxu0 0
    %1289 = vmatpush1.bf16.msra.mxu0 0
    %1290 = vmatprep.subr.bf16.mxu0 0
    %1291 = vmatpush1.bf16.msra.mxu0 0
    %1292 = vmatprep.subr.bf16.mxu0 0
    %1293 = vmatpush1.bf16.msra.mxu0 0
    %1294 = vmatprep.subr.bf16.mxu0 0
    %1295 = vmatpush1.bf16.msra.mxu0 0
    %1296 = vmatprep.subr.bf16.mxu0 0
    %1297 = vmatpush1.bf16.msra.mxu0 0
    %1298 = vmatprep.subr.bf16.mxu0 0
    %1299 = vmatpush1.bf16.msra.mxu0 0
    %1300 = vmatprep.mubr.bf16.mxu0 0
    %1301 = vmatmul.mubr.bf16.gmra.mrb[0].mxu0 %v1075
    %v1302 = vpop.f32.mrb[0].mxu0
    %v1303 = vadd.f32 0.0, %v1302
    %v1304 = vpop.f32.mrb[0].mxu0
    %v1305 = vadd.f32 0.0, %v1304
    %v1306 = vpop.f32.mrb[0].mxu0
    %v1307 = vpop.f32.mrb[0].mxu0
    %1308 = vdwg.mxu0
    %1309 = vmatprep.subr.bf16.mxu0 %v1207
    %1310 = vmatpush1.bf16.msra.mxu0 %v1206
    %1311 = vmatprep.subr.bf16.mxu0 %v1211
    %1312 = vmatpush1.bf16.msra.mxu0 %v1210
    %1313 = vmatprep.subr.bf16.mxu0 %v1215
    %1314 = vmatpush1.bf16.msra.mxu0 %v1214
    %1315 = vmatprep.subr.bf16.mxu0 %v1219
    %1316 = vmatpush1.bf16.msra.mxu0 %v1218
    %1317 = vmatprep.subr.bf16.mxu0 %v1223
    %1318 = vmatpush1.bf16.msra.mxu0 %v1222
    %1319 = vmatprep.subr.bf16.mxu0 %v1227
    %1320 = vmatpush1.bf16.msra.mxu0 %v1226
    %1321 = vmatprep.subr.bf16.mxu0 %v1231
    %1322 = vmatpush1.bf16.msra.mxu0 %v1230
    %1323 = vmatprep.subr.bf16.mxu0 %v1235
    %1324 = vmatpush1.bf16.msra.mxu0 %v1234
    %1325 = vmatprep.subr.bf16.mxu0 0
    %1326 = vmatpush1.bf16.msra.mxu0 0
    %1327 = vmatprep.subr.bf16.mxu0 0
    %1328 = vmatpush1.bf16.msra.mxu0 0
    %1329 = vmatprep.subr.bf16.mxu0 0
    %1330 = vmatpush1.bf16.msra.mxu0 0
    %1331 = vmatprep.subr.bf16.mxu0 0
    %1332 = vmatpush1.bf16.msra.mxu0 0
    %1333 = vmatprep.subr.bf16.mxu0 0
    %1334 = vmatpush1.bf16.msra.mxu0 0
    %1335 = vmatprep.subr.bf16.mxu0 0
    %1336 = vmatpush1.bf16.msra.mxu0 0
    %1337 = vmatprep.subr.bf16.mxu0 0
    %1338 = vmatpush1.bf16.msra.mxu0 0
    %1339 = vmatprep.subr.bf16.mxu0 0
    %1340 = vmatpush1.bf16.msra.mxu0 0
    %1341 = vmatprep.mubr.bf16.mxu0 0
    %1342 = vmatmul.mubr.bf16.gmra.mrb[0].mxu0 %v1075
    %v1343 = vpop.f32.mrb[0].mxu0
    %v1344 = vadd.f32 0.0, %v1343
    %v1345 = vpop.f32.mrb[0].mxu0
    %v1346 = vadd.f32 0.0, %v1345
    %v1347 = vpop.f32.mrb[0].mxu0
    %v1348 = vpop.f32.mrb[0].mxu0
    %1349 = vdwg.mxu0
    %v1350 = vld [vmem:[#allocation2 + $0x40] sm:$0xff]
    %v1351 = vld [vmem:[#allocation2 + $0x48] sm:$0xff]
    %v1352 = vld [vmem:[#allocation2 + $0x50] sm:$0xff]
    %v1353 = vld [vmem:[#allocation2 + $0x58] sm:$0xff]
    %v1354 = vld [vmem:[#allocation2 + $0xa0] sm:$0xff]
    %v1355 = vld [vmem:[#allocation2 + $0xa8] sm:$0xff]
    %v1356 = vld [vmem:[#allocation2 + $0xb0] sm:$0xff]
    %v1357 = vld [vmem:[#allocation2 + $0xb8] sm:$0xff]
    %v1358 = vsel %vm98, %v1350, %v1354
    %v1359 = vsel %vm99, %v1351, %v1355
    %v1360 = vsel %vm100, %v1352, %v1356
    %v1361 = vsel %vm101, %v1353, %v1357
    %v1362 = vadd.f32 %v1358, %v1303
    %v1363 = vadd.f32 %v1359, %v1305
    %v1364 = vadd.f32 %v1360, %v1344
    %v1365 = vadd.f32 %v1361, %v1346
    %v1366 = vxor.u32 %v1362, 2147483648
    %v1367 = vxor.u32 %v1363, 2147483648
    %v1368 = vxor.u32 %v1364, 2147483648
    %v1369 = vmul.f32 %v1366, 1.442695
    %v1370 = vpow.pop %v1369
    %v1371 = vmul.f32 %v1367, 1.442695
    %v1372 = vpow.pop %v1371
    %v1373 = vmul.f32 %v1368, 1.442695
    %v1374 = vpow.pop %v1373
    %v1375 = vadd.f32 %v1370, 1.0
    %v1376 = vadd.f32 %v1372, 1.0
    %v1377 = vadd.f32 %v1374, 1.0
    %v1378 = vrcp.pop %v1375
    %v1379 = vmul.f32 1.0, %v1378
    %v1380 = vrcp.pop %v1376
    %v1381 = vmul.f32 1.0, %v1380
    %v1382 = vrcp.pop %v1377
    %v1383 = vmul.f32 1.0, %v1382
    %v1384 = vtanh.pop %v1365
    %v1385 = vmul.f32 %v1381, %v1070
    %v1386 = vmul.f32 %v1379, %v1384
    %v1387 = vadd.f32 %v1385, %v1386
    %v1388 = vtanh.pop %v1387
    %v1389 = vmul.f32 %v1383, %v1388
    %1390 = vst.msk [vmem:[#allocation3 + $0x10] sm:$0xff] %vm754, %v1389
    %1391 = vst.msk [vmem:[#allocation3 + $0x28] sm:$0xff] %vm756, %v1389
    %v1392 = vpack.c.bf16 %v1389, %v1389
    %v1393 = vld [vmem:[#allocation7] sm:$0xff]
    %v1394 = vld [vmem:[#allocation7 + $0x8] sm:$0xff]
    %v1395 = vld [vmem:[#allocation7 + $0x10] sm:$0xff]
    %v1396 = vld [vmem:[#allocation7 + $0x18] sm:$0xff]
    %v1397 = vld [vmem:[#allocation7 + $0x20] sm:$0xff]
    %v1398 = vld [vmem:[#allocation7 + $0x28] sm:$0xff]
    %v1399 = vld [vmem:[#allocation7 + $0x30] sm:$0xff]
    %v1400 = vld [vmem:[#allocation7 + $0x38] sm:$0xff]
    %v1401 = vld [vmem:[#allocation7 + $0x40] sm:$0xff]
    %v1402 = vld [vmem:[#allocation7 + $0x48] sm:$0xff]
    %v1403 = vld [vmem:[#allocation7 + $0x50] sm:$0xff]
    %v1404 = vld [vmem:[#allocation7 + $0x58] sm:$0xff]
    %v1405 = vld [vmem:[#allocation7 + $0x60] sm:$0xff]
    %v1406 = vld [vmem:[#allocation7 + $0x68] sm:$0xff]
    %v1407 = vld [vmem:[#allocation7 + $0x70] sm:$0xff]
    %v1408 = vld [vmem:[#allocation7 + $0x78] sm:$0xff]
    %v1409 = vld [vmem:[#allocation7 + $0x80] sm:$0xff]
    %v1410 = vld [vmem:[#allocation7 + $0x88] sm:$0xff]
    %v1411 = vld [vmem:[#allocation7 + $0x90] sm:$0xff]
    %v1412 = vld [vmem:[#allocation7 + $0x98] sm:$0xff]
    %v1413 = vld [vmem:[#allocation7 + $0xa0] sm:$0xff]
    %v1414 = vld [vmem:[#allocation7 + $0xa8] sm:$0xff]
    %v1415 = vld [vmem:[#allocation7 + $0xb0] sm:$0xff]
    %v1416 = vld [vmem:[#allocation7 + $0xb8] sm:$0xff]
    %v1417 = vld [vmem:[#allocation7 + $0xc0] sm:$0xff]
    %v1418 = vld [vmem:[#allocation7 + $0xc8] sm:$0xff]
    %v1419 = vld [vmem:[#allocation7 + $0xd0] sm:$0xff]
    %v1420 = vld [vmem:[#allocation7 + $0xd8] sm:$0xff]
    %v1421 = vld [vmem:[#allocation7 + $0xe0] sm:$0xff]
    %v1422 = vld [vmem:[#allocation7 + $0xe8] sm:$0xff]
    %v1423 = vld [vmem:[#allocation7 + $0xf0] sm:$0xff]
    %v1424 = vld [vmem:[#allocation7 + $0xf8] sm:$0xff]
    %v1457 = vunpack.c.l.b16 %v1393
    %v1458 = vunpack.c.h.b16 %v1393
    %v1459 = vunpack.c.l.b16 %v1394
    %v1460 = vunpack.c.h.b16 %v1394
    %v1461 = vunpack.c.l.b16 %v1395
    %v1462 = vunpack.c.h.b16 %v1395
    %v1463 = vunpack.c.l.b16 %v1396
    %v1464 = vunpack.c.h.b16 %v1396
    %v1465 = vunpack.c.l.b16 %v1397
    %v1466 = vunpack.c.h.b16 %v1397
    %v1467 = vunpack.c.l.b16 %v1398
    %v1468 = vunpack.c.h.b16 %v1398
    %v1469 = vunpack.c.l.b16 %v1399
    %v1470 = vunpack.c.h.b16 %v1399
    %v1471 = vunpack.c.l.b16 %v1400
    %v1472 = vunpack.c.h.b16 %v1400
    %v1473 = vunpack.c.l.b16 %v1401
    %v1474 = vunpack.c.h.b16 %v1401
    %v1475 = vunpack.c.l.b16 %v1402
    %v1476 = vunpack.c.h.b16 %v1402
    %v1477 = vunpack.c.l.b16 %v1403
    %v1478 = vunpack.c.h.b16 %v1403
    %v1479 = vunpack.c.l.b16 %v1404
    %v1480 = vunpack.c.h.b16 %v1404
    %v1481 = vunpack.c.l.b16 %v1405
    %v1482 = vunpack.c.h.b16 %v1405
    %v1483 = vunpack.c.l.b16 %v1406
    %v1484 = vunpack.c.h.b16 %v1406
    %v1485 = vunpack.c.l.b16 %v1407
    %v1486 = vunpack.c.h.b16 %v1407
    %v1487 = vunpack.c.l.b16 %v1408
    %v1488 = vunpack.c.h.b16 %v1408
    %v1489 = vunpack.c.l.b16 %v1409
    %v1490 = vunpack.c.h.b16 %v1409
    %v1491 = vunpack.c.l.b16 %v1410
    %v1492 = vunpack.c.h.b16 %v1410
    %v1493 = vunpack.c.l.b16 %v1411
    %v1494 = vunpack.c.h.b16 %v1411
    %v1495 = vunpack.c.l.b16 %v1412
    %v1496 = vunpack.c.h.b16 %v1412
    %v1497 = vunpack.c.l.b16 %v1413
    %v1498 = vunpack.c.h.b16 %v1413
    %v1499 = vunpack.c.l.b16 %v1414
    %v1500 = vunpack.c.h.b16 %v1414
    %v1501 = vunpack.c.l.b16 %v1415
    %v1502 = vunpack.c.h.b16 %v1415
    %v1503 = vunpack.c.l.b16 %v1416
    %v1504 = vunpack.c.h.b16 %v1416
    %v1505 = vunpack.c.l.b16 %v1417
    %v1506 = vunpack.c.h.b16 %v1417
    %v1507 = vunpack.c.l.b16 %v1418
    %v1508 = vunpack.c.h.b16 %v1418
    %v1509 = vunpack.c.l.b16 %v1419
    %v1510 = vunpack.c.h.b16 %v1419
    %v1511 = vunpack.c.l.b16 %v1420
    %v1512 = vunpack.c.h.b16 %v1420
    %v1513 = vunpack.c.l.b16 %v1421
    %v1514 = vunpack.c.h.b16 %v1421
    %v1515 = vunpack.c.l.b16 %v1422
    %v1516 = vunpack.c.h.b16 %v1422
    %v1517 = vunpack.c.l.b16 %v1423
    %v1518 = vunpack.c.h.b16 %v1423
    %v1519 = vunpack.c.l.b16 %v1424
    %v1520 = vunpack.c.h.b16 %v1424
    %v1521 = vpack.c.b16 %v1461, %v1457
    %v1522 = vpack.c.b16 %v1462, %v1458
    %v1523 = vpack.c.b16 %v1463, %v1459
    %v1524 = vpack.c.b16 %v1464, %v1460
    %v1525 = vpack.c.b16 %v1469, %v1465
    %v1526 = vpack.c.b16 %v1470, %v1466
    %v1527 = vpack.c.b16 %v1471, %v1467
    %v1528 = vpack.c.b16 %v1472, %v1468
    %v1529 = vpack.c.b16 %v1477, %v1473
    %v1530 = vpack.c.b16 %v1478, %v1474
    %v1531 = vpack.c.b16 %v1479, %v1475
    %v1532 = vpack.c.b16 %v1480, %v1476
    %v1533 = vpack.c.b16 %v1485, %v1481
    %v1534 = vpack.c.b16 %v1486, %v1482
    %v1535 = vpack.c.b16 %v1487, %v1483
    %v1536 = vpack.c.b16 %v1488, %v1484
    %v1537 = vpack.c.b16 %v1493, %v1489
    %v1538 = vpack.c.b16 %v1494, %v1490
    %v1539 = vpack.c.b16 %v1495, %v1491
    %v1540 = vpack.c.b16 %v1496, %v1492
    %v1541 = vpack.c.b16 %v1501, %v1497
    %v1542 = vpack.c.b16 %v1502, %v1498
    %v1543 = vpack.c.b16 %v1503, %v1499
    %v1544 = vpack.c.b16 %v1504, %v1500
    %v1545 = vpack.c.b16 %v1509, %v1505
    %v1546 = vpack.c.b16 %v1510, %v1506
    %v1547 = vpack.c.b16 %v1511, %v1507
    %v1548 = vpack.c.b16 %v1512, %v1508
    %v1549 = vpack.c.b16 %v1517, %v1513
    %v1550 = vpack.c.b16 %v1518, %v1514
    %v1551 = vpack.c.b16 %v1519, %v1515
    %v1552 = vpack.c.b16 %v1520, %v1516
    %1585 = vmatprep.subr.bf16.mxu0 %v1522
    %1586 = vmatpush1.bf16.msra.mxu0 %v1521
    %1587 = vmatprep.subr.bf16.mxu0 %v1526
    %1588 = vmatpush1.bf16.msra.mxu0 %v1525
    %1589 = vmatprep.subr.bf16.mxu0 %v1530
    %1590 = vmatpush1.bf16.msra.mxu0 %v1529
    %1591 = vmatprep.subr.bf16.mxu0 %v1534
    %1592 = vmatpush1.bf16.msra.mxu0 %v1533
    %1593 = vmatprep.subr.bf16.mxu0 %v1538
    %1594 = vmatpush1.bf16.msra.mxu0 %v1537
    %1595 = vmatprep.subr.bf16.mxu0 %v1542
    %1596 = vmatpush1.bf16.msra.mxu0 %v1541
    %1597 = vmatprep.subr.bf16.mxu0 %v1546
    %1598 = vmatpush1.bf16.msra.mxu0 %v1545
    %1599 = vmatprep.subr.bf16.mxu0 %v1550
    %1600 = vmatpush1.bf16.msra.mxu0 %v1549
    %1601 = vmatprep.subr.bf16.mxu0 0
    %1602 = vmatpush1.bf16.msra.mxu0 0
    %1603 = vmatprep.subr.bf16.mxu0 0
    %1604 = vmatpush1.bf16.msra.mxu0 0
    %1605 = vmatprep.subr.bf16.mxu0 0
    %1606 = vmatpush1.bf16.msra.mxu0 0
    %1607 = vmatprep.subr.bf16.mxu0 0
    %1608 = vmatpush1.bf16.msra.mxu0 0
    %1609 = vmatprep.subr.bf16.mxu0 0
    %1610 = vmatpush1.bf16.msra.mxu0 0
    %1611 = vmatprep.subr.bf16.mxu0 0
    %1612 = vmatpush1.bf16.msra.mxu0 0
    %1613 = vmatprep.subr.bf16.mxu0 0
    %1614 = vmatpush1.bf16.msra.mxu0 0
    %1615 = vmatprep.subr.bf16.mxu0 0
    %1616 = vmatpush1.bf16.msra.mxu0 0
    %1617 = vmatprep.mubr.bf16.mxu0 0
    %1618 = vmatmul.mubr.bf16.gmra.mrb[0].mxu0 %v1392
    %v1619 = vpop.f32.mrb[0].mxu0
    %v1620 = vadd.f32 0.0, %v1619
    %v1621 = vpop.f32.mrb[0].mxu0
    %v1622 = vadd.f32 0.0, %v1621
    %v1623 = vpop.f32.mrb[0].mxu0
    %v1624 = vpop.f32.mrb[0].mxu0
    %1625 = vdwg.mxu0
    %1626 = vmatprep.subr.bf16.mxu0 %v1524
    %1627 = vmatpush1.bf16.msra.mxu0 %v1523
    %1628 = vmatprep.subr.bf16.mxu0 %v1528
    %1629 = vmatpush1.bf16.msra.mxu0 %v1527
    %1630 = vmatprep.subr.bf16.mxu0 %v1532
    %1631 = vmatpush1.bf16.msra.mxu0 %v1531
    %1632 = vmatprep.subr.bf16.mxu0 %v1536
    %1633 = vmatpush1.bf16.msra.mxu0 %v1535
    %1634 = vmatprep.subr.bf16.mxu0 %v1540
    %1635 = vmatpush1.bf16.msra.mxu0 %v1539
    %1636 = vmatprep.subr.bf16.mxu0 %v1544
    %1637 = vmatpush1.bf16.msra.mxu0 %v1543
    %1638 = vmatprep.subr.bf16.mxu0 %v1548
    %1639 = vmatpush1.bf16.msra.mxu0 %v1547
    %1640 = vmatprep.subr.bf16.mxu0 %v1552
    %1641 = vmatpush1.bf16.msra.mxu0 %v1551
    %1642 = vmatprep.subr.bf16.mxu0 0
    %1643 = vmatpush1.bf16.msra.mxu0 0
    %1644 = vmatprep.subr.bf16.mxu0 0
    %1645 = vmatpush1.bf16.msra.mxu0 0
    %1646 = vmatprep.subr.bf16.mxu0 0
    %1647 = vmatpush1.bf16.msra.mxu0 0
    %1648 = vmatprep.subr.bf16.mxu0 0
    %1649 = vmatpush1.bf16.msra.mxu0 0
    %1650 = vmatprep.subr.bf16.mxu0 0
    %1651 = vmatpush1.bf16.msra.mxu0 0
    %1652 = vmatprep.subr.bf16.mxu0 0
    %1653 = vmatpush1.bf16.msra.mxu0 0
    %1654 = vmatprep.subr.bf16.mxu0 0
    %1655 = vmatpush1.bf16.msra.mxu0 0
    %1656 = vmatprep.subr.bf16.mxu0 0
    %1657 = vmatpush1.bf16.msra.mxu0 0
    %1658 = vmatprep.mubr.bf16.mxu0 0
    %1659 = vmatmul.mubr.bf16.gmra.mrb[0].mxu0 %v1392
    %v1660 = vpop.f32.mrb[0].mxu0
    %v1661 = vadd.f32 0.0, %v1660
    %v1662 = vpop.f32.mrb[0].mxu0
    %v1663 = vadd.f32 0.0, %v1662
    %v1664 = vpop.f32.mrb[0].mxu0
    %v1665 = vpop.f32.mrb[0].mxu0
    %1666 = vdwg.mxu0
    %v1667 = vld [vmem:[#allocation2 + $0x60] sm:$0xff]
    %v1668 = vld [vmem:[#allocation2 + $0x68] sm:$0xff]
    %v1669 = vld [vmem:[#allocation2 + $0x70] sm:$0xff]
    %v1670 = vld [vmem:[#allocation2 + $0x78] sm:$0xff]
    %v1671 = vld [vmem:[#allocation2 + $0x80] sm:$0xff]
    %v1672 = vld [vmem:[#allocation2 + $0x88] sm:$0xff]
    %v1673 = vld [vmem:[#allocation2 + $0x90] sm:$0xff]
    %v1674 = vld [vmem:[#allocation2 + $0x98] sm:$0xff]
    %v1675 = vsel %vm98, %v1667, %v1671
    %v1676 = vsel %vm99, %v1668, %v1672
    %v1677 = vsel %vm100, %v1669, %v1673
    %v1678 = vsel %vm101, %v1670, %v1674
    %v1679 = vadd.f32 %v1675, %v1620
    %v1680 = vadd.f32 %v1676, %v1622
    %v1681 = vadd.f32 %v1677, %v1661
    %v1682 = vadd.f32 %v1678, %v1663
    %v1683 = vxor.u32 %v1679, 2147483648
    %v1684 = vxor.u32 %v1680, 2147483648
    %v1685 = vxor.u32 %v1681, 2147483648
    %v1686 = vmul.f32 %v1683, 1.442695
    %v1687 = vpow.pop %v1686
    %v1688 = vmul.f32 %v1684, 1.442695
    %v1689 = vpow.pop %v1688
    %v1690 = vmul.f32 %v1685, 1.442695
    %v1691 = vpow.pop %v1690
    %v1692 = vadd.f32 %v1687, 1.0
    %v1693 = vadd.f32 %v1689, 1.0
    %v1694 = vadd.f32 %v1691, 1.0
    %v1695 = vrcp.pop %v1692
    %v1696 = vmul.f32 1.0, %v1695
    %v1697 = vrcp.pop %v1693
    %v1698 = vmul.f32 1.0, %v1697
    %v1699 = vrcp.pop %v1694
    %v1700 = vmul.f32 1.0, %v1699
    %v1701 = vtanh.pop %v1682
    %v1702 = vmul.f32 %v1698, %v1387
    %v1703 = vmul.f32 %v1696, %v1701
    %v1704 = vadd.f32 %v1702, %v1703
    %v1705 = vtanh.pop %v1704
    %v1706 = vmul.f32 %v1700, %v1705
    %1707 = vst.msk [vmem:[#allocation3 + $0x18] sm:$0xff] %vm754, %v1706
    %1708 = vst.msk [vmem:[#allocation3 + $0x20] sm:$0xff] %vm756, %v1706
    %v1709 = vpack.c.bf16 %v1706, %v1706
    %v1710 = vld [vmem:[#allocation7] sm:$0xff]
    %v1711 = vld [vmem:[#allocation7 + $0x8] sm:$0xff]
    %v1712 = vld [vmem:[#allocation7 + $0x10] sm:$0xff]
    %v1713 = vld [vmem:[#allocation7 + $0x18] sm:$0xff]
    %v1714 = vld [vmem:[#allocation7 + $0x20] sm:$0xff]
    %v1715 = vld [vmem:[#allocation7 + $0x28] sm:$0xff]
    %v1716 = vld [vmem:[#allocation7 + $0x30] sm:$0xff]
    %v1717 = vld [vmem:[#allocation7 + $0x38] sm:$0xff]
    %v1718 = vld [vmem:[#allocation7 + $0x40] sm:$0xff]
    %v1719 = vld [vmem:[#allocation7 + $0x48] sm:$0xff]
    %v1720 = vld [vmem:[#allocation7 + $0x50] sm:$0xff]
    %v1721 = vld [vmem:[#allocation7 + $0x58] sm:$0xff]
    %v1722 = vld [vmem:[#allocation7 + $0x60] sm:$0xff]
    %v1723 = vld [vmem:[#allocation7 + $0x68] sm:$0xff]
    %v1724 = vld [vmem:[#allocation7 + $0x70] sm:$0xff]
    %v1725 = vld [vmem:[#allocation7 + $0x78] sm:$0xff]
    %v1726 = vld [vmem:[#allocation7 + $0x80] sm:$0xff]
    %v1727 = vld [vmem:[#allocation7 + $0x88] sm:$0xff]
    %v1728 = vld [vmem:[#allocation7 + $0x90] sm:$0xff]
    %v1729 = vld [vmem:[#allocation7 + $0x98] sm:$0xff]
    %v1730 = vld [vmem:[#allocation7 + $0xa0] sm:$0xff]
    %v1731 = vld [vmem:[#allocation7 + $0xa8] sm:$0xff]
    %v1732 = vld [vmem:[#allocation7 + $0xb0] sm:$0xff]
    %v1733 = vld [vmem:[#allocation7 + $0xb8] sm:$0xff]
    %v1734 = vld [vmem:[#allocation7 + $0xc0] sm:$0xff]
    %v1735 = vld [vmem:[#allocation7 + $0xc8] sm:$0xff]
    %v1736 = vld [vmem:[#allocation7 + $0xd0] sm:$0xff]
    %v1737 = vld [vmem:[#allocation7 + $0xd8] sm:$0xff]
    %v1738 = vld [vmem:[#allocation7 + $0xe0] sm:$0xff]
    %v1739 = vld [vmem:[#allocation7 + $0xe8] sm:$0xff]
    %v1740 = vld [vmem:[#allocation7 + $0xf0] sm:$0xff]
    %v1741 = vld [vmem:[#allocation7 + $0xf8] sm:$0xff]
    %v1774 = vunpack.c.l.b16 %v1710
    %v1775 = vunpack.c.h.b16 %v1710
    %v1776 = vunpack.c.l.b16 %v1711
    %v1777 = vunpack.c.h.b16 %v1711
    %v1778 = vunpack.c.l.b16 %v1712
    %v1779 = vunpack.c.h.b16 %v1712
    %v1780 = vunpack.c.l.b16 %v1713
    %v1781 = vunpack.c.h.b16 %v1713
    %v1782 = vunpack.c.l.b16 %v1714
    %v1783 = vunpack.c.h.b16 %v1714
    %v1784 = vunpack.c.l.b16 %v1715
    %v1785 = vunpack.c.h.b16 %v1715
    %v1786 = vunpack.c.l.b16 %v1716
    %v1787 = vunpack.c.h.b16 %v1716
    %v1788 = vunpack.c.l.b16 %v1717
    %v1789 = vunpack.c.h.b16 %v1717
    %v1790 = vunpack.c.l.b16 %v1718
    %v1791 = vunpack.c.h.b16 %v1718
    %v1792 = vunpack.c.l.b16 %v1719
    %v1793 = vunpack.c.h.b16 %v1719
    %v1794 = vunpack.c.l.b16 %v1720
    %v1795 = vunpack.c.h.b16 %v1720
    %v1796 = vunpack.c.l.b16 %v1721
    %v1797 = vunpack.c.h.b16 %v1721
    %v1798 = vunpack.c.l.b16 %v1722
    %v1799 = vunpack.c.h.b16 %v1722
    %v1800 = vunpack.c.l.b16 %v1723
    %v1801 = vunpack.c.h.b16 %v1723
    %v1802 = vunpack.c.l.b16 %v1724
    %v1803 = vunpack.c.h.b16 %v1724
    %v1804 = vunpack.c.l.b16 %v1725
    %v1805 = vunpack.c.h.b16 %v1725
    %v1806 = vunpack.c.l.b16 %v1726
    %v1807 = vunpack.c.h.b16 %v1726
    %v1808 = vunpack.c.l.b16 %v1727
    %v1809 = vunpack.c.h.b16 %v1727
    %v1810 = vunpack.c.l.b16 %v1728
    %v1811 = vunpack.c.h.b16 %v1728
    %v1812 = vunpack.c.l.b16 %v1729
    %v1813 = vunpack.c.h.b16 %v1729
    %v1814 = vunpack.c.l.b16 %v1730
    %v1815 = vunpack.c.h.b16 %v1730
    %v1816 = vunpack.c.l.b16 %v1731
    %v1817 = vunpack.c.h.b16 %v1731
    %v1818 = vunpack.c.l.b16 %v1732
    %v1819 = vunpack.c.h.b16 %v1732
    %v1820 = vunpack.c.l.b16 %v1733
    %v1821 = vunpack.c.h.b16 %v1733
    %v1822 = vunpack.c.l.b16 %v1734
    %v1823 = vunpack.c.h.b16 %v1734
    %v1824 = vunpack.c.l.b16 %v1735
    %v1825 = vunpack.c.h.b16 %v1735
    %v1826 = vunpack.c.l.b16 %v1736
    %v1827 = vunpack.c.h.b16 %v1736
    %v1828 = vunpack.c.l.b16 %v1737
    %v1829 = vunpack.c.h.b16 %v1737
    %v1830 = vunpack.c.l.b16 %v1738
    %v1831 = vunpack.c.h.b16 %v1738
    %v1832 = vunpack.c.l.b16 %v1739
    %v1833 = vunpack.c.h.b16 %v1739
    %v1834 = vunpack.c.l.b16 %v1740
    %v1835 = vunpack.c.h.b16 %v1740
    %v1836 = vunpack.c.l.b16 %v1741
    %v1837 = vunpack.c.h.b16 %v1741
    %v1838 = vpack.c.b16 %v1778, %v1774
    %v1839 = vpack.c.b16 %v1779, %v1775
    %v1840 = vpack.c.b16 %v1780, %v1776
    %v1841 = vpack.c.b16 %v1781, %v1777
    %v1842 = vpack.c.b16 %v1786, %v1782
    %v1843 = vpack.c.b16 %v1787, %v1783
    %v1844 = vpack.c.b16 %v1788, %v1784
    %v1845 = vpack.c.b16 %v1789, %v1785
    %v1846 = vpack.c.b16 %v1794, %v1790
    %v1847 = vpack.c.b16 %v1795, %v1791
    %v1848 = vpack.c.b16 %v1796, %v1792
    %v1849 = vpack.c.b16 %v1797, %v1793
    %v1850 = vpack.c.b16 %v1802, %v1798
    %v1851 = vpack.c.b16 %v1803, %v1799
    %v1852 = vpack.c.b16 %v1804, %v1800
    %v1853 = vpack.c.b16 %v1805, %v1801
    %v1854 = vpack.c.b16 %v1810, %v1806
    %v1855 = vpack.c.b16 %v1811, %v1807
    %v1856 = vpack.c.b16 %v1812, %v1808
    %v1857 = vpack.c.b16 %v1813, %v1809
    %v1858 = vpack.c.b16 %v1818, %v1814
    %v1859 = vpack.c.b16 %v1819, %v1815
    %v1860 = vpack.c.b16 %v1820, %v1816
    %v1861 = vpack.c.b16 %v1821, %v1817
    %v1862 = vpack.c.b16 %v1826, %v1822
    %v1863 = vpack.c.b16 %v1827, %v1823
    %v1864 = vpack.c.b16 %v1828, %v1824
    %v1865 = vpack.c.b16 %v1829, %v1825
    %v1866 = vpack.c.b16 %v1834, %v1830
    %v1867 = vpack.c.b16 %v1835, %v1831
    %v1868 = vpack.c.b16 %v1836, %v1832
    %v1869 = vpack.c.b16 %v1837, %v1833
    %1902 = vmatprep.subr.bf16.mxu0 %v1839
    %1903 = vmatpush1.bf16.msra.mxu0 %v1838
    %1904 = vmatprep.subr.bf16.mxu0 %v1843
    %1905 = vmatpush1.bf16.msra.mxu0 %v1842
    %1906 = vmatprep.subr.bf16.mxu0 %v1847
    %1907 = vmatpush1.bf16.msra.mxu0 %v1846
    %1908 = vmatprep.subr.bf16.mxu0 %v1851
    %1909 = vmatpush1.bf16.msra.mxu0 %v1850
    %1910 = vmatprep.subr.bf16.mxu0 %v1855
    %1911 = vmatpush1.bf16.msra.mxu0 %v1854
    %1912 = vmatprep.subr.bf16.mxu0 %v1859
    %1913 = vmatpush1.bf16.msra.mxu0 %v1858
    %1914 = vmatprep.subr.bf16.mxu0 %v1863
    %1915 = vmatpush1.bf16.msra.mxu0 %v1862
    %1916 = vmatprep.subr.bf16.mxu0 %v1867
    %1917 = vmatpush1.bf16.msra.mxu0 %v1866
    %1918 = vmatprep.subr.bf16.mxu0 0
    %1919 = vmatpush1.bf16.msra.mxu0 0
    %1920 = vmatprep.subr.bf16.mxu0 0
    %1921 = vmatpush1.bf16.msra.mxu0 0
    %1922 = vmatprep.subr.bf16.mxu0 0
    %1923 = vmatpush1.bf16.msra.mxu0 0
    %1924 = vmatprep.subr.bf16.mxu0 0
    %1925 = vmatpush1.bf16.msra.mxu0 0
    %1926 = vmatprep.subr.bf16.mxu0 0
    %1927 = vmatpush1.bf16.msra.mxu0 0
    %1928 = vmatprep.subr.bf16.mxu0 0
    %1929 = vmatpush1.bf16.msra.mxu0 0
    %1930 = vmatprep.subr.bf16.mxu0 0
    %1931 = vmatpush1.bf16.msra.mxu0 0
    %1932 = vmatprep.subr.bf16.mxu0 0
    %1933 = vmatpush1.bf16.msra.mxu0 0
    %1934 = vmatprep.mubr.bf16.mxu0 0
    %1935 = vmatmul.mubr.bf16.gmra.mrb[0].mxu0 %v1709
    %v1936 = vpop.f32.mrb[0].mxu0
    %v1937 = vadd.f32 0.0, %v1936
    %v1938 = vpop.f32.mrb[0].mxu0
    %v1939 = vadd.f32 0.0, %v1938
    %v1940 = vpop.f32.mrb[0].mxu0
    %v1941 = vpop.f32.mrb[0].mxu0
    %1942 = vdwg.mxu0
    %1943 = vmatprep.subr.bf16.mxu0 %v1841
    %1944 = vmatpush1.bf16.msra.mxu0 %v1840
    %1945 = vmatprep.subr.bf16.mxu0 %v1845
    %1946 = vmatpush1.bf16.msra.mxu0 %v1844
    %1947 = vmatprep.subr.bf16.mxu0 %v1849
    %1948 = vmatpush1.bf16.msra.mxu0 %v1848
    %1949 = vmatprep.subr.bf16.mxu0 %v1853
    %1950 = vmatpush1.bf16.msra.mxu0 %v1852
    %1951 = vmatprep.subr.bf16.mxu0 %v1857
    %1952 = vmatpush1.bf16.msra.mxu0 %v1856
    %1953 = vmatprep.subr.bf16.mxu0 %v1861
    %1954 = vmatpush1.bf16.msra.mxu0 %v1860
    %1955 = vmatprep.subr.bf16.mxu0 %v1865
    %1956 = vmatpush1.bf16.msra.mxu0 %v1864
    %1957 = vmatprep.subr.bf16.mxu0 %v1869
    %1958 = vmatpush1.bf16.msra.mxu0 %v1868
    %1959 = vmatprep.subr.bf16.mxu0 0
    %1960 = vmatpush1.bf16.msra.mxu0 0
    %1961 = vmatprep.subr.bf16.mxu0 0
    %1962 = vmatpush1.bf16.msra.mxu0 0
    %1963 = vmatprep.subr.bf16.mxu0 0
    %1964 = vmatpush1.bf16.msra.mxu0 0
    %1965 = vmatprep.subr.bf16.mxu0 0
    %1966 = vmatpush1.bf16.msra.mxu0 0
    %1967 = vmatprep.subr.bf16.mxu0 0
    %1968 = vmatpush1.bf16.msra.mxu0 0
    %1969 = vmatprep.subr.bf16.mxu0 0
    %1970 = vmatpush1.bf16.msra.mxu0 0
    %1971 = vmatprep.subr.bf16.mxu0 0
    %1972 = vmatpush1.bf16.msra.mxu0 0
    %1973 = vmatprep.subr.bf16.mxu0 0
    %1974 = vmatpush1.bf16.msra.mxu0 0
    %1975 = vmatprep.mubr.bf16.mxu0 0
    %1976 = vmatmul.mubr.bf16.gmra.mrb[0].mxu0 %v1709
    %v1977 = vpop.f32.mrb[0].mxu0
    %v1978 = vadd.f32 0.0, %v1977
    %v1979 = vpop.f32.mrb[0].mxu0
    %v1980 = vadd.f32 0.0, %v1979
    %v1981 = vpop.f32.mrb[0].mxu0
    %v1982 = vpop.f32.mrb[0].mxu0
    %1983 = vdwg.mxu0
    %v1984 = vld [vmem:[#allocation2 + $0x80] sm:$0xff]
    %v1985 = vld [vmem:[#allocation2 + $0x88] sm:$0xff]
    %v1986 = vld [vmem:[#allocation2 + $0x90] sm:$0xff]
    %v1987 = vld [vmem:[#allocation2 + $0x98] sm:$0xff]
    %v1988 = vld [vmem:[#allocation2 + $0x60] sm:$0xff]
    %v1989 = vld [vmem:[#allocation2 + $0x68] sm:$0xff]
    %v1990 = vld [vmem:[#allocation2 + $0x70] sm:$0xff]
    %v1991 = vld [vmem:[#allocation2 + $0x78] sm:$0xff]
    %v1992 = vsel %vm98, %v1984, %v1988
    %v1993 = vsel %vm99, %v1985, %v1989
    %v1994 = vsel %vm100, %v1986, %v1990
    %v1995 = vsel %vm101, %v1987, %v1991
    %v1996 = vadd.f32 %v1992, %v1937
    %v1997 = vadd.f32 %v1993, %v1939
    %v1998 = vadd.f32 %v1994, %v1978
    %v1999 = vadd.f32 %v1995, %v1980
    %v2000 = vxor.u32 %v1996, 2147483648
    %v2001 = vxor.u32 %v1997, 2147483648
    %v2002 = vxor.u32 %v1998, 2147483648
    %v2003 = vmul.f32 %v2000, 1.442695
    %v2004 = vpow.pop %v2003
    %v2005 = vmul.f32 %v2001, 1.442695
    %v2006 = vpow.pop %v2005
    %v2007 = vmul.f32 %v2002, 1.442695
    %v2008 = vpow.pop %v2007
    %v2009 = vadd.f32 %v2004, 1.0
    %v2010 = vadd.f32 %v2006, 1.0
    %v2011 = vadd.f32 %v2008, 1.0
    %v2012 = vrcp.pop %v2009
    %v2013 = vmul.f32 1.0, %v2012
    %v2014 = vrcp.pop %v2010
    %v2015 = vmul.f32 1.0, %v2014
    %v2016 = vrcp.pop %v2011
    %v2017 = vmul.f32 1.0, %v2016
    %v2018 = vtanh.pop %v1999
    %v2019 = vmul.f32 %v2015, %v1704
    %v2020 = vmul.f32 %v2013, %v2018
    %v2021 = vadd.f32 %v2019, %v2020
    %v2022 = vtanh.pop %v2021
    %v2023 = vmul.f32 %v2017, %v2022
    %2024 = vst.msk [vmem:[#allocation3 + $0x20] sm:$0xff] %vm754, %v2023
    %2025 = vst.msk [vmem:[#allocation3 + $0x18] sm:$0xff] %vm756, %v2023
    %v2026 = vpack.c.bf16 %v2023, %v2023
    %v2027 = vld [vmem:[#allocation7] sm:$0xff]
    %v2028 = vld [vmem:[#allocation7 + $0x8] sm:$0xff]
    %v2029 = vld [vmem:[#allocation7 + $0x10] sm:$0xff]
    %v2030 = vld [vmem:[#allocation7 + $0x18] sm:$0xff]
    %v2031 = vld [vmem:[#allocation7 + $0x20] sm:$0xff]
    %v2032 = vld [vmem:[#allocation7 + $0x28] sm:$0xff]
    %v2033 = vld [vmem:[#allocation7 + $0x30] sm:$0xff]
    %v2034 = vld [vmem:[#allocation7 + $0x38] sm:$0xff]
    %v2035 = vld [vmem:[#allocation7 + $0x40] sm:$0xff]
    %v2036 = vld [vmem:[#allocation7 + $0x48] sm:$0xff]
    %v2037 = vld [vmem:[#allocation7 + $0x50] sm:$0xff]
    %v2038 = vld [vmem:[#allocation7 + $0x58] sm:$0xff]
    %v2039 = vld [vmem:[#allocation7 + $0x60] sm:$0xff]
    %v2040 = vld [vmem:[#allocation7 + $0x68] sm:$0xff]
    %v2041 = vld [vmem:[#allocation7 + $0x70] sm:$0xff]
    %v2042 = vld [vmem:[#allocation7 + $0x78] sm:$0xff]
    %v2043 = vld [vmem:[#allocation7 + $0x80] sm:$0xff]
    %v2044 = vld [vmem:[#allocation7 + $0x88] sm:$0xff]
    %v2045 = vld [vmem:[#allocation7 + $0x90] sm:$0xff]
    %v2046 = vld [vmem:[#allocation7 + $0x98] sm:$0xff]
    %v2047 = vld [vmem:[#allocation7 + $0xa0] sm:$0xff]
    %v2048 = vld [vmem:[#allocation7 + $0xa8] sm:$0xff]
    %v2049 = vld [vmem:[#allocation7 + $0xb0] sm:$0xff]
    %v2050 = vld [vmem:[#allocation7 + $0xb8] sm:$0xff]
    %v2051 = vld [vmem:[#allocation7 + $0xc0] sm:$0xff]
    %v2052 = vld [vmem:[#allocation7 + $0xc8] sm:$0xff]
    %v2053 = vld [vmem:[#allocation7 + $0xd0] sm:$0xff]
    %v2054 = vld [vmem:[#allocation7 + $0xd8] sm:$0xff]
    %v2055 = vld [vmem:[#allocation7 + $0xe0] sm:$0xff]
    %v2056 = vld [vmem:[#allocation7 + $0xe8] sm:$0xff]
    %v2057 = vld [vmem:[#allocation7 + $0xf0] sm:$0xff]
    %v2058 = vld [vmem:[#allocation7 + $0xf8] sm:$0xff]
    %v2091 = vunpack.c.l.b16 %v2027
    %v2092 = vunpack.c.h.b16 %v2027
    %v2093 = vunpack.c.l.b16 %v2028
    %v2094 = vunpack.c.h.b16 %v2028
    %v2095 = vunpack.c.l.b16 %v2029
    %v2096 = vunpack.c.h.b16 %v2029
    %v2097 = vunpack.c.l.b16 %v2030
    %v2098 = vunpack.c.h.b16 %v2030
    %v2099 = vunpack.c.l.b16 %v2031
    %v2100 = vunpack.c.h.b16 %v2031
    %v2101 = vunpack.c.l.b16 %v2032
    %v2102 = vunpack.c.h.b16 %v2032
    %v2103 = vunpack.c.l.b16 %v2033
    %v2104 = vunpack.c.h.b16 %v2033
    %v2105 = vunpack.c.l.b16 %v2034
    %v2106 = vunpack.c.h.b16 %v2034
    %v2107 = vunpack.c.l.b16 %v2035
    %v2108 = vunpack.c.h.b16 %v2035
    %v2109 = vunpack.c.l.b16 %v2036
    %v2110 = vunpack.c.h.b16 %v2036
    %v2111 = vunpack.c.l.b16 %v2037
    %v2112 = vunpack.c.h.b16 %v2037
    %v2113 = vunpack.c.l.b16 %v2038
    %v2114 = vunpack.c.h.b16 %v2038
    %v2115 = vunpack.c.l.b16 %v2039
    %v2116 = vunpack.c.h.b16 %v2039
    %v2117 = vunpack.c.l.b16 %v2040
    %v2118 = vunpack.c.h.b16 %v2040
    %v2119 = vunpack.c.l.b16 %v2041
    %v2120 = vunpack.c.h.b16 %v2041
    %v2121 = vunpack.c.l.b16 %v2042
    %v2122 = vunpack.c.h.b16 %v2042
    %v2123 = vunpack.c.l.b16 %v2043
    %v2124 = vunpack.c.h.b16 %v2043
    %v2125 = vunpack.c.l.b16 %v2044
    %v2126 = vunpack.c.h.b16 %v2044
    %v2127 = vunpack.c.l.b16 %v2045
    %v2128 = vunpack.c.h.b16 %v2045
    %v2129 = vunpack.c.l.b16 %v2046
    %v2130 = vunpack.c.h.b16 %v2046
    %v2131 = vunpack.c.l.b16 %v2047
    %v2132 = vunpack.c.h.b16 %v2047
    %v2133 = vunpack.c.l.b16 %v2048
    %v2134 = vunpack.c.h.b16 %v2048
    %v2135 = vunpack.c.l.b16 %v2049
    %v2136 = vunpack.c.h.b16 %v2049
    %v2137 = vunpack.c.l.b16 %v2050
    %v2138 = vunpack.c.h.b16 %v2050
    %v2139 = vunpack.c.l.b16 %v2051
    %v2140 = vunpack.c.h.b16 %v2051
    %v2141 = vunpack.c.l.b16 %v2052
    %v2142 = vunpack.c.h.b16 %v2052
    %v2143 = vunpack.c.l.b16 %v2053
    %v2144 = vunpack.c.h.b16 %v2053
    %v2145 = vunpack.c.l.b16 %v2054
    %v2146 = vunpack.c.h.b16 %v2054
    %v2147 = vunpack.c.l.b16 %v2055
    %v2148 = vunpack.c.h.b16 %v2055
    %v2149 = vunpack.c.l.b16 %v2056
    %v2150 = vunpack.c.h.b16 %v2056
    %v2151 = vunpack.c.l.b16 %v2057
    %v2152 = vunpack.c.h.b16 %v2057
    %v2153 = vunpack.c.l.b16 %v2058
    %v2154 = vunpack.c.h.b16 %v2058
    %v2155 = vpack.c.b16 %v2095, %v2091
    %v2156 = vpack.c.b16 %v2096, %v2092
    %v2157 = vpack.c.b16 %v2097, %v2093
    %v2158 = vpack.c.b16 %v2098, %v2094
    %v2159 = vpack.c.b16 %v2103, %v2099
    %v2160 = vpack.c.b16 %v2104, %v2100
    %v2161 = vpack.c.b16 %v2105, %v2101
    %v2162 = vpack.c.b16 %v2106, %v2102
    %v2163 = vpack.c.b16 %v2111, %v2107
    %v2164 = vpack.c.b16 %v2112, %v2108
    %v2165 = vpack.c.b16 %v2113, %v2109
    %v2166 = vpack.c.b16 %v2114, %v2110
    %v2167 = vpack.c.b16 %v2119, %v2115
    %v2168 = vpack.c.b16 %v2120, %v2116
    %v2169 = vpack.c.b16 %v2121, %v2117
    %v2170 = vpack.c.b16 %v2122, %v2118
    %v2171 = vpack.c.b16 %v2127, %v2123
    %v2172 = vpack.c.b16 %v2128, %v2124
    %v2173 = vpack.c.b16 %v2129, %v2125
    %v2174 = vpack.c.b16 %v2130, %v2126
    %v2175 = vpack.c.b16 %v2135, %v2131
    %v2176 = vpack.c.b16 %v2136, %v2132
    %v2177 = vpack.c.b16 %v2137, %v2133
    %v2178 = vpack.c.b16 %v2138, %v2134
    %v2179 = vpack.c.b16 %v2143, %v2139
    %v2180 = vpack.c.b16 %v2144, %v2140
    %v2181 = vpack.c.b16 %v2145, %v2141
    %v2182 = vpack.c.b16 %v2146, %v2142
    %v2183 = vpack.c.b16 %v2151, %v2147
    %v2184 = vpack.c.b16 %v2152, %v2148
    %v2185 = vpack.c.b16 %v2153, %v2149
    %v2186 = vpack.c.b16 %v2154, %v2150
    %2219 = vmatprep.subr.bf16.mxu0 %v2156
    %2220 = vmatpush1.bf16.msra.mxu0 %v2155
    %2221 = vmatprep.subr.bf16.mxu0 %v2160
    %2222 = vmatpush1.bf16.msra.mxu0 %v2159
    %2223 = vmatprep.subr.bf16.mxu0 %v2164
    %2224 = vmatpush1.bf16.msra.mxu0 %v2163
    %2225 = vmatprep.subr.bf16.mxu0 %v2168
    %2226 = vmatpush1.bf16.msra.mxu0 %v2167
    %2227 = vmatprep.subr.bf16.mxu0 %v2172
    %2228 = vmatpush1.bf16.msra.mxu0 %v2171
    %2229 = vmatprep.subr.bf16.mxu0 %v2176
    %2230 = vmatpush1.bf16.msra.mxu0 %v2175
    %2231 = vmatprep.subr.bf16.mxu0 %v2180
    %2232 = vmatpush1.bf16.msra.mxu0 %v2179
    %2233 = vmatprep.subr.bf16.mxu0 %v2184
    %2234 = vmatpush1.bf16.msra.mxu0 %v2183
    %2235 = vmatprep.subr.bf16.mxu0 0
    %2236 = vmatpush1.bf16.msra.mxu0 0
    %2237 = vmatprep.subr.bf16.mxu0 0
    %2238 = vmatpush1.bf16.msra.mxu0 0
    %2239 = vmatprep.subr.bf16.mxu0 0
    %2240 = vmatpush1.bf16.msra.mxu0 0
    %2241 = vmatprep.subr.bf16.mxu0 0
    %2242 = vmatpush1.bf16.msra.mxu0 0
    %2243 = vmatprep.subr.bf16.mxu0 0
    %2244 = vmatpush1.bf16.msra.mxu0 0
    %2245 = vmatprep.subr.bf16.mxu0 0
    %2246 = vmatpush1.bf16.msra.mxu0 0
    %2247 = vmatprep.subr.bf16.mxu0 0
    %2248 = vmatpush1.bf16.msra.mxu0 0
    %2249 = vmatprep.subr.bf16.mxu0 0
    %2250 = vmatpush1.bf16.msra.mxu0 0
    %2251 = vmatprep.mubr.bf16.mxu0 0
    %2252 = vmatmul.mubr.bf16.gmra.mrb[0].mxu0 %v2026
    %v2253 = vpop.f32.mrb[0].mxu0
    %v2254 = vadd.f32 0.0, %v2253
    %v2255 = vpop.f32.mrb[0].mxu0
    %v2256 = vadd.f32 0.0, %v2255
    %v2257 = vpop.f32.mrb[0].mxu0
    %v2258 = vpop.f32.mrb[0].mxu0
    %2259 = vdwg.mxu0
    %2260 = vmatprep.subr.bf16.mxu0 %v2158
    %2261 = vmatpush1.bf16.msra.mxu0 %v2157
    %2262 = vmatprep.subr.bf16.mxu0 %v2162
    %2263 = vmatpush1.bf16.msra.mxu0 %v2161
    %2264 = vmatprep.subr.bf16.mxu0 %v2166
    %2265 = vmatpush1.bf16.msra.mxu0 %v2165
    %2266 = vmatprep.subr.bf16.mxu0 %v2170
    %2267 = vmatpush1.bf16.msra.mxu0 %v2169
    %2268 = vmatprep.subr.bf16.mxu0 %v2174
    %2269 = vmatpush1.bf16.msra.mxu0 %v2173
    %2270 = vmatprep.subr.bf16.mxu0 %v2178
    %2271 = vmatpush1.bf16.msra.mxu0 %v2177
    %2272 = vmatprep.subr.bf16.mxu0 %v2182
    %2273 = vmatpush1.bf16.msra.mxu0 %v2181
    %2274 = vmatprep.subr.bf16.mxu0 %v2186
    %2275 = vmatpush1.bf16.msra.mxu0 %v2185
    %2276 = vmatprep.subr.bf16.mxu0 0
    %2277 = vmatpush1.bf16.msra.mxu0 0
    %2278 = vmatprep.subr.bf16.mxu0 0
    %2279 = vmatpush1.bf16.msra.mxu0 0
    %2280 = vmatprep.subr.bf16.mxu0 0
    %2281 = vmatpush1.bf16.msra.mxu0 0
    %2282 = vmatprep.subr.bf16.mxu0 0
    %2283 = vmatpush1.bf16.msra.mxu0 0
    %2284 = vmatprep.subr.bf16.mxu0 0
    %2285 = vmatpush1.bf16.msra.mxu0 0
    %2286 = vmatprep.subr.bf16.mxu0 0
    %2287 = vmatpush1.bf16.msra.mxu0 0
    %2288 = vmatprep.subr.bf16.mxu0 0
    %2289 = vmatpush1.bf16.msra.mxu0 0
    %2290 = vmatprep.subr.bf16.mxu0 0
    %2291 = vmatpush1.bf16.msra.mxu0 0
    %2292 = vmatprep.mubr.bf16.mxu0 0
    %2293 = vmatmul.mubr.bf16.gmra.mrb[0].mxu0 %v2026
    %v2294 = vpop.f32.mrb[0].mxu0
    %v2295 = vadd.f32 0.0, %v2294
    %v2296 = vpop.f32.mrb[0].mxu0
    %v2297 = vadd.f32 0.0, %v2296
    %v2298 = vpop.f32.mrb[0].mxu0
    %v2299 = vpop.f32.mrb[0].mxu0
    %2300 = vdwg.mxu0
    %v2301 = vld [vmem:[#allocation2 + $0xa0] sm:$0xff]
    %v2302 = vld [vmem:[#allocation2 + $0xa8] sm:$0xff]
    %v2303 = vld [vmem:[#allocation2 + $0xb0] sm:$0xff]
    %v2304 = vld [vmem:[#allocation2 + $0xb8] sm:$0xff]
    %v2305 = vld [vmem:[#allocation2 + $0x40] sm:$0xff]
    %v2306 = vld [vmem:[#allocation2 + $0x48] sm:$0xff]
    %v2307 = vld [vmem:[#allocation2 + $0x50] sm:$0xff]
    %v2308 = vld [vmem:[#allocation2 + $0x58] sm:$0xff]
    %v2309 = vsel %vm98, %v2301, %v2305
    %v2310 = vsel %vm99, %v2302, %v2306
    %v2311 = vsel %vm100, %v2303, %v2307
    %v2312 = vsel %vm101, %v2304, %v2308
    %v2313 = vadd.f32 %v2309, %v2254
    %v2314 = vadd.f32 %v2310, %v2256
    %v2315 = vadd.f32 %v2311, %v2295
    %v2316 = vadd.f32 %v2312, %v2297
    %v2317 = vxor.u32 %v2313, 2147483648
    %v2318 = vxor.u32 %v2314, 2147483648
    %v2319 = vxor.u32 %v2315, 2147483648
    %v2320 = vmul.f32 %v2317, 1.442695
    %v2321 = vpow.pop %v2320
    %v2322 = vmul.f32 %v2318, 1.442695
    %v2323 = vpow.pop %v2322
    %v2324 = vmul.f32 %v2319, 1.442695
    %v2325 = vpow.pop %v2324
    %v2326 = vadd.f32 %v2321, 1.0
    %v2327 = vadd.f32 %v2323, 1.0
    %v2328 = vadd.f32 %v2325, 1.0
    %v2329 = vrcp.pop %v2326
    %v2330 = vmul.f32 1.0, %v2329
    %v2331 = vrcp.pop %v2327
    %v2332 = vmul.f32 1.0, %v2331
    %v2333 = vrcp.pop %v2328
    %v2334 = vmul.f32 1.0, %v2333
    %v2335 = vtanh.pop %v2316
    %v2336 = vmul.f32 %v2332, %v2021
    %v2337 = vmul.f32 %v2330, %v2335
    %v2338 = vadd.f32 %v2336, %v2337
    %v2339 = vtanh.pop %v2338
    %v2340 = vmul.f32 %v2334, %v2339
    %2341 = vst.msk [vmem:[#allocation3 + $0x28] sm:$0xff] %vm754, %v2340
    %2342 = vst.msk [vmem:[#allocation3 + $0x10] sm:$0xff] %vm756, %v2340
    %v2343 = vpack.c.bf16 %v2340, %v2340
    %v2344 = vld [vmem:[#allocation7] sm:$0xff]
    %v2345 = vld [vmem:[#allocation7 + $0x8] sm:$0xff]
    %v2346 = vld [vmem:[#allocation7 + $0x10] sm:$0xff]
    %v2347 = vld [vmem:[#allocation7 + $0x18] sm:$0xff]
    %v2348 = vld [vmem:[#allocation7 + $0x20] sm:$0xff]
    %v2349 = vld [vmem:[#allocation7 + $0x28] sm:$0xff]
    %v2350 = vld [vmem:[#allocation7 + $0x30] sm:$0xff]
    %v2351 = vld [vmem:[#allocation7 + $0x38] sm:$0xff]
    %v2352 = vld [vmem:[#allocation7 + $0x40] sm:$0xff]
    %v2353 = vld [vmem:[#allocation7 + $0x48] sm:$0xff]
    %v2354 = vld [vmem:[#allocation7 + $0x50] sm:$0xff]
    %v2355 = vld [vmem:[#allocation7 + $0x58] sm:$0xff]
    %v2356 = vld [vmem:[#allocation7 + $0x60] sm:$0xff]
    %v2357 = vld [vmem:[#allocation7 + $0x68] sm:$0xff]
    %v2358 = vld [vmem:[#allocation7 + $0x70] sm:$0xff]
    %v2359 = vld [vmem:[#allocation7 + $0x78] sm:$0xff]
    %v2360 = vld [vmem:[#allocation7 + $0x80] sm:$0xff]
    %v2361 = vld [vmem:[#allocation7 + $0x88] sm:$0xff]
    %v2362 = vld [vmem:[#allocation7 + $0x90] sm:$0xff]
    %v2363 = vld [vmem:[#allocation7 + $0x98] sm:$0xff]
    %v2364 = vld [vmem:[#allocation7 + $0xa0] sm:$0xff]
    %v2365 = vld [vmem:[#allocation7 + $0xa8] sm:$0xff]
    %v2366 = vld [vmem:[#allocation7 + $0xb0] sm:$0xff]
    %v2367 = vld [vmem:[#allocation7 + $0xb8] sm:$0xff]
    %v2368 = vld [vmem:[#allocation7 + $0xc0] sm:$0xff]
    %v2369 = vld [vmem:[#allocation7 + $0xc8] sm:$0xff]
    %v2370 = vld [vmem:[#allocation7 + $0xd0] sm:$0xff]
    %v2371 = vld [vmem:[#allocation7 + $0xd8] sm:$0xff]
    %v2372 = vld [vmem:[#allocation7 + $0xe0] sm:$0xff]
    %v2373 = vld [vmem:[#allocation7 + $0xe8] sm:$0xff]
    %v2374 = vld [vmem:[#allocation7 + $0xf0] sm:$0xff]
    %v2375 = vld [vmem:[#allocation7 + $0xf8] sm:$0xff]
    %v2408 = vunpack.c.l.b16 %v2344
    %v2409 = vunpack.c.h.b16 %v2344
    %v2410 = vunpack.c.l.b16 %v2345
    %v2411 = vunpack.c.h.b16 %v2345
    %v2412 = vunpack.c.l.b16 %v2346
    %v2413 = vunpack.c.h.b16 %v2346
    %v2414 = vunpack.c.l.b16 %v2347
    %v2415 = vunpack.c.h.b16 %v2347
    %v2416 = vunpack.c.l.b16 %v2348
    %v2417 = vunpack.c.h.b16 %v2348
    %v2418 = vunpack.c.l.b16 %v2349
    %v2419 = vunpack.c.h.b16 %v2349
    %v2420 = vunpack.c.l.b16 %v2350
    %v2421 = vunpack.c.h.b16 %v2350
    %v2422 = vunpack.c.l.b16 %v2351
    %v2423 = vunpack.c.h.b16 %v2351
    %v2424 = vunpack.c.l.b16 %v2352
    %v2425 = vunpack.c.h.b16 %v2352
    %v2426 = vunpack.c.l.b16 %v2353
    %v2427 = vunpack.c.h.b16 %v2353
    %v2428 = vunpack.c.l.b16 %v2354
    %v2429 = vunpack.c.h.b16 %v2354
    %v2430 = vunpack.c.l.b16 %v2355
    %v2431 = vunpack.c.h.b16 %v2355
    %v2432 = vunpack.c.l.b16 %v2356
    %v2433 = vunpack.c.h.b16 %v2356
    %v2434 = vunpack.c.l.b16 %v2357
    %v2435 = vunpack.c.h.b16 %v2357
    %v2436 = vunpack.c.l.b16 %v2358
    %v2437 = vunpack.c.h.b16 %v2358
    %v2438 = vunpack.c.l.b16 %v2359
    %v2439 = vunpack.c.h.b16 %v2359
    %v2440 = vunpack.c.l.b16 %v2360
    %v2441 = vunpack.c.h.b16 %v2360
    %v2442 = vunpack.c.l.b16 %v2361
    %v2443 = vunpack.c.h.b16 %v2361
    %v2444 = vunpack.c.l.b16 %v2362
    %v2445 = vunpack.c.h.b16 %v2362
    %v2446 = vunpack.c.l.b16 %v2363
    %v2447 = vunpack.c.h.b16 %v2363
    %v2448 = vunpack.c.l.b16 %v2364
    %v2449 = vunpack.c.h.b16 %v2364
    %v2450 = vunpack.c.l.b16 %v2365
    %v2451 = vunpack.c.h.b16 %v2365
    %v2452 = vunpack.c.l.b16 %v2366
    %v2453 = vunpack.c.h.b16 %v2366
    %v2454 = vunpack.c.l.b16 %v2367
    %v2455 = vunpack.c.h.b16 %v2367
    %v2456 = vunpack.c.l.b16 %v2368
    %v2457 = vunpack.c.h.b16 %v2368
    %v2458 = vunpack.c.l.b16 %v2369
    %v2459 = vunpack.c.h.b16 %v2369
    %v2460 = vunpack.c.l.b16 %v2370
    %v2461 = vunpack.c.h.b16 %v2370
    %v2462 = vunpack.c.l.b16 %v2371
    %v2463 = vunpack.c.h.b16 %v2371
    %v2464 = vunpack.c.l.b16 %v2372
    %v2465 = vunpack.c.h.b16 %v2372
    %v2466 = vunpack.c.l.b16 %v2373
    %v2467 = vunpack.c.h.b16 %v2373
    %v2468 = vunpack.c.l.b16 %v2374
    %v2469 = vunpack.c.h.b16 %v2374
    %v2470 = vunpack.c.l.b16 %v2375
    %v2471 = vunpack.c.h.b16 %v2375
    %v2472 = vpack.c.b16 %v2412, %v2408
    %v2473 = vpack.c.b16 %v2413, %v2409
    %v2474 = vpack.c.b16 %v2414, %v2410
    %v2475 = vpack.c.b16 %v2415, %v2411
    %v2476 = vpack.c.b16 %v2420, %v2416
    %v2477 = vpack.c.b16 %v2421, %v2417
    %v2478 = vpack.c.b16 %v2422, %v2418
    %v2479 = vpack.c.b16 %v2423, %v2419
    %v2480 = vpack.c.b16 %v2428, %v2424
    %v2481 = vpack.c.b16 %v2429, %v2425
    %v2482 = vpack.c.b16 %v2430, %v2426
    %v2483 = vpack.c.b16 %v2431, %v2427
    %v2484 = vpack.c.b16 %v2436, %v2432
    %v2485 = vpack.c.b16 %v2437, %v2433
    %v2486 = vpack.c.b16 %v2438, %v2434
    %v2487 = vpack.c.b16 %v2439, %v2435
    %v2488 = vpack.c.b16 %v2444, %v2440
    %v2489 = vpack.c.b16 %v2445, %v2441
    %v2490 = vpack.c.b16 %v2446, %v2442
    %v2491 = vpack.c.b16 %v2447, %v2443
    %v2492 = vpack.c.b16 %v2452, %v2448
    %v2493 = vpack.c.b16 %v2453, %v2449
    %v2494 = vpack.c.b16 %v2454, %v2450
    %v2495 = vpack.c.b16 %v2455, %v2451
    %v2496 = vpack.c.b16 %v2460, %v2456
    %v2497 = vpack.c.b16 %v2461, %v2457
    %v2498 = vpack.c.b16 %v2462, %v2458
    %v2499 = vpack.c.b16 %v2463, %v2459
    %v2500 = vpack.c.b16 %v2468, %v2464
    %v2501 = vpack.c.b16 %v2469, %v2465
    %v2502 = vpack.c.b16 %v2470, %v2466
    %v2503 = vpack.c.b16 %v2471, %v2467
    %2536 = vmatprep.subr.bf16.mxu0 %v2473
    %2537 = vmatpush1.bf16.msra.mxu0 %v2472
    %2538 = vmatprep.subr.bf16.mxu0 %v2477
    %2539 = vmatpush1.bf16.msra.mxu0 %v2476
    %2540 = vmatprep.subr.bf16.mxu0 %v2481
    %2541 = vmatpush1.bf16.msra.mxu0 %v2480
    %2542 = vmatprep.subr.bf16.mxu0 %v2485
    %2543 = vmatpush1.bf16.msra.mxu0 %v2484
    %2544 = vmatprep.subr.bf16.mxu0 %v2489
    %2545 = vmatpush1.bf16.msra.mxu0 %v2488
    %2546 = vmatprep.subr.bf16.mxu0 %v2493
    %2547 = vmatpush1.bf16.msra.mxu0 %v2492
    %2548 = vmatprep.subr.bf16.mxu0 %v2497
    %2549 = vmatpush1.bf16.msra.mxu0 %v2496
    %2550 = vmatprep.subr.bf16.mxu0 %v2501
    %2551 = vmatpush1.bf16.msra.mxu0 %v2500
    %2552 = vmatprep.subr.bf16.mxu0 0
    %2553 = vmatpush1.bf16.msra.mxu0 0
    %2554 = vmatprep.subr.bf16.mxu0 0
    %2555 = vmatpush1.bf16.msra.mxu0 0
    %2556 = vmatprep.subr.bf16.mxu0 0
    %2557 = vmatpush1.bf16.msra.mxu0 0
    %2558 = vmatprep.subr.bf16.mxu0 0
    %2559 = vmatpush1.bf16.msra.mxu0 0
    %2560 = vmatprep.subr.bf16.mxu0 0
    %2561 = vmatpush1.bf16.msra.mxu0 0
    %2562 = vmatprep.subr.bf16.mxu0 0
    %2563 = vmatpush1.bf16.msra.mxu0 0
    %2564 = vmatprep.subr.bf16.mxu0 0
    %2565 = vmatpush1.bf16.msra.mxu0 0
    %2566 = vmatprep.subr.bf16.mxu0 0
    %2567 = vmatpush1.bf16.msra.mxu0 0
    %2568 = vmatprep.mubr.bf16.mxu0 0
    %2569 = vmatmul.mubr.bf16.gmra.mrb[0].mxu0 %v2343
    %v2570 = vpop.f32.mrb[0].mxu0
    %v2571 = vadd.f32 0.0, %v2570
    %v2572 = vpop.f32.mrb[0].mxu0
    %v2573 = vadd.f32 0.0, %v2572
    %v2574 = vpop.f32.mrb[0].mxu0
    %v2575 = vpop.f32.mrb[0].mxu0
    %2576 = vdwg.mxu0
    %2577 = vmatprep.subr.bf16.mxu0 %v2475
    %2578 = vmatpush1.bf16.msra.mxu0 %v2474
    %2579 = vmatprep.subr.bf16.mxu0 %v2479
    %2580 = vmatpush1.bf16.msra.mxu0 %v2478
    %2581 = vmatprep.subr.bf16.mxu0 %v2483
    %2582 = vmatpush1.bf16.msra.mxu0 %v2482
    %2583 = vmatprep.subr.bf16.mxu0 %v2487
    %2584 = vmatpush1.bf16.msra.mxu0 %v2486
    %2585 = vmatprep.subr.bf16.mxu0 %v2491
    %2586 = vmatpush1.bf16.msra.mxu0 %v2490
    %2587 = vmatprep.subr.bf16.mxu0 %v2495
    %2588 = vmatpush1.bf16.msra.mxu0 %v2494
    %2589 = vmatprep.subr.bf16.mxu0 %v2499
    %2590 = vmatpush1.bf16.msra.mxu0 %v2498
    %2591 = vmatprep.subr.bf16.mxu0 %v2503
    %2592 = vmatpush1.bf16.msra.mxu0 %v2502
    %2593 = vmatprep.subr.bf16.mxu0 0
    %2594 = vmatpush1.bf16.msra.mxu0 0
    %2595 = vmatprep.subr.bf16.mxu0 0
    %2596 = vmatpush1.bf16.msra.mxu0 0
    %2597 = vmatprep.subr.bf16.mxu0 0
    %2598 = vmatpush1.bf16.msra.mxu0 0
    %2599 = vmatprep.subr.bf16.mxu0 0
    %2600 = vmatpush1.bf16.msra.mxu0 0
    %2601 = vmatprep.subr.bf16.mxu0 0
    %2602 = vmatpush1.bf16.msra.mxu0 0
    %2603 = vmatprep.subr.bf16.mxu0 0
    %2604 = vmatpush1.bf16.msra.mxu0 0
    %2605 = vmatprep.subr.bf16.mxu0 0
    %2606 = vmatpush1.bf16.msra.mxu0 0
    %2607 = vmatprep.subr.bf16.mxu0 0
    %2608 = vmatpush1.bf16.msra.mxu0 0
    %2609 = vmatprep.mubr.bf16.mxu0 0
    %2610 = vmatmul.mubr.bf16.gmra.mrb[0].mxu0 %v2343
    %v2611 = vpop.f32.mrb[0].mxu0
    %v2612 = vadd.f32 0.0, %v2611
    %v2613 = vpop.f32.mrb[0].mxu0
    %v2614 = vadd.f32 0.0, %v2613
    %v2615 = vpop.f32.mrb[0].mxu0
    %v2616 = vpop.f32.mrb[0].mxu0
    %2617 = vdwg.mxu0
    %v2618 = vld [vmem:[#allocation2 + $0xc0] sm:$0xff]
    %v2619 = vld [vmem:[#allocation2 + $0xc8] sm:$0xff]
    %v2620 = vld [vmem:[#allocation2 + $0xd0] sm:$0xff]
    %v2621 = vld [vmem:[#allocation2 + $0xd8] sm:$0xff]
    %v2622 = vld [vmem:[#allocation2 + $0x20] sm:$0xff]
    %v2623 = vld [vmem:[#allocation2 + $0x28] sm:$0xff]
    %v2624 = vld [vmem:[#allocation2 + $0x30] sm:$0xff]
    %v2625 = vld [vmem:[#allocation2 + $0x38] sm:$0xff]
    %v2626 = vsel %vm98, %v2618, %v2622
    %v2627 = vsel %vm99, %v2619, %v2623
    %v2628 = vsel %vm100, %v2620, %v2624
    %v2629 = vsel %vm101, %v2621, %v2625
    %v2630 = vadd.f32 %v2626, %v2571
    %v2631 = vadd.f32 %v2627, %v2573
    %v2632 = vadd.f32 %v2628, %v2612
    %v2633 = vadd.f32 %v2629, %v2614
    %v2634 = vxor.u32 %v2630, 2147483648
    %v2635 = vxor.u32 %v2631, 2147483648
    %v2636 = vxor.u32 %v2632, 2147483648
    %v2637 = vmul.f32 %v2634, 1.442695
    %v2638 = vpow.pop %v2637
    %v2639 = vmul.f32 %v2635, 1.442695
    %v2640 = vpow.pop %v2639
    %v2641 = vmul.f32 %v2636, 1.442695
    %v2642 = vpow.pop %v2641
    %v2643 = vadd.f32 %v2638, 1.0
    %v2644 = vadd.f32 %v2640, 1.0
    %v2645 = vadd.f32 %v2642, 1.0
    %v2646 = vrcp.pop %v2643
    %v2647 = vmul.f32 1.0, %v2646
    %v2648 = vrcp.pop %v2644
    %v2649 = vmul.f32 1.0, %v2648
    %v2650 = vrcp.pop %v2645
    %v2651 = vmul.f32 1.0, %v2650
    %v2652 = vtanh.pop %v2633
    %v2653 = vmul.f32 %v2649, %v2338
    %v2654 = vmul.f32 %v2647, %v2652
    %v2655 = vadd.f32 %v2653, %v2654
    %v2656 = vtanh.pop %v2655
    %v2657 = vmul.f32 %v2651, %v2656
    %2658 = vst.msk [vmem:[#allocation3 + $0x30] sm:$0xff] %vm754, %v2657
    %2659 = vst.msk [vmem:[#allocation3 + $0x8] sm:$0xff] %vm756, %v2657
    %v2660 = vpack.c.bf16 %v2657, %v2657
    %v2661 = vld [vmem:[#allocation7] sm:$0xff]
    %v2662 = vld [vmem:[#allocation7 + $0x8] sm:$0xff]
    %v2663 = vld [vmem:[#allocation7 + $0x10] sm:$0xff]
    %v2664 = vld [vmem:[#allocation7 + $0x18] sm:$0xff]
    %v2665 = vld [vmem:[#allocation7 + $0x20] sm:$0xff]
    %v2666 = vld [vmem:[#allocation7 + $0x28] sm:$0xff]
    %v2667 = vld [vmem:[#allocation7 + $0x30] sm:$0xff]
    %v2668 = vld [vmem:[#allocation7 + $0x38] sm:$0xff]
    %v2669 = vld [vmem:[#allocation7 + $0x40] sm:$0xff]
    %v2670 = vld [vmem:[#allocation7 + $0x48] sm:$0xff]
    %v2671 = vld [vmem:[#allocation7 + $0x50] sm:$0xff]
    %v2672 = vld [vmem:[#allocation7 + $0x58] sm:$0xff]
    %v2673 = vld [vmem:[#allocation7 + $0x60] sm:$0xff]
    %v2674 = vld [vmem:[#allocation7 + $0x68] sm:$0xff]
    %v2675 = vld [vmem:[#allocation7 + $0x70] sm:$0xff]
    %v2676 = vld [vmem:[#allocation7 + $0x78] sm:$0xff]
    %v2677 = vld [vmem:[#allocation7 + $0x80] sm:$0xff]
    %v2678 = vld [vmem:[#allocation7 + $0x88] sm:$0xff]
    %v2679 = vld [vmem:[#allocation7 + $0x90] sm:$0xff]
    %v2680 = vld [vmem:[#allocation7 + $0x98] sm:$0xff]
    %v2681 = vld [vmem:[#allocation7 + $0xa0] sm:$0xff]
    %v2682 = vld [vmem:[#allocation7 + $0xa8] sm:$0xff]
    %v2683 = vld [vmem:[#allocation7 + $0xb0] sm:$0xff]
    %v2684 = vld [vmem:[#allocation7 + $0xb8] sm:$0xff]
    %v2685 = vld [vmem:[#allocation7 + $0xc0] sm:$0xff]
    %v2686 = vld [vmem:[#allocation7 + $0xc8] sm:$0xff]
    %v2687 = vld [vmem:[#allocation7 + $0xd0] sm:$0xff]
    %v2688 = vld [vmem:[#allocation7 + $0xd8] sm:$0xff]
    %v2689 = vld [vmem:[#allocation7 + $0xe0] sm:$0xff]
    %v2690 = vld [vmem:[#allocation7 + $0xe8] sm:$0xff]
    %v2691 = vld [vmem:[#allocation7 + $0xf0] sm:$0xff]
    %v2692 = vld [vmem:[#allocation7 + $0xf8] sm:$0xff]
    %v2725 = vunpack.c.l.b16 %v2661
    %v2726 = vunpack.c.h.b16 %v2661
    %v2727 = vunpack.c.l.b16 %v2662
    %v2728 = vunpack.c.h.b16 %v2662
    %v2729 = vunpack.c.l.b16 %v2663
    %v2730 = vunpack.c.h.b16 %v2663
    %v2731 = vunpack.c.l.b16 %v2664
    %v2732 = vunpack.c.h.b16 %v2664
    %v2733 = vunpack.c.l.b16 %v2665
    %v2734 = vunpack.c.h.b16 %v2665
    %v2735 = vunpack.c.l.b16 %v2666
    %v2736 = vunpack.c.h.b16 %v2666
    %v2737 = vunpack.c.l.b16 %v2667
    %v2738 = vunpack.c.h.b16 %v2667
    %v2739 = vunpack.c.l.b16 %v2668
    %v2740 = vunpack.c.h.b16 %v2668
    %v2741 = vunpack.c.l.b16 %v2669
    %v2742 = vunpack.c.h.b16 %v2669
    %v2743 = vunpack.c.l.b16 %v2670
    %v2744 = vunpack.c.h.b16 %v2670
    %v2745 = vunpack.c.l.b16 %v2671
    %v2746 = vunpack.c.h.b16 %v2671
    %v2747 = vunpack.c.l.b16 %v2672
    %v2748 = vunpack.c.h.b16 %v2672
    %v2749 = vunpack.c.l.b16 %v2673
    %v2750 = vunpack.c.h.b16 %v2673
    %v2751 = vunpack.c.l.b16 %v2674
    %v2752 = vunpack.c.h.b16 %v2674
    %v2753 = vunpack.c.l.b16 %v2675
    %v2754 = vunpack.c.h.b16 %v2675
    %v2755 = vunpack.c.l.b16 %v2676
    %v2756 = vunpack.c.h.b16 %v2676
    %v2757 = vunpack.c.l.b16 %v2677
    %v2758 = vunpack.c.h.b16 %v2677
    %v2759 = vunpack.c.l.b16 %v2678
    %v2760 = vunpack.c.h.b16 %v2678
    %v2761 = vunpack.c.l.b16 %v2679
    %v2762 = vunpack.c.h.b16 %v2679
    %v2763 = vunpack.c.l.b16 %v2680
    %v2764 = vunpack.c.h.b16 %v2680
    %v2765 = vunpack.c.l.b16 %v2681
    %v2766 = vunpack.c.h.b16 %v2681
    %v2767 = vunpack.c.l.b16 %v2682
    %v2768 = vunpack.c.h.b16 %v2682
    %v2769 = vunpack.c.l.b16 %v2683
    %v2770 = vunpack.c.h.b16 %v2683
    %v2771 = vunpack.c.l.b16 %v2684
    %v2772 = vunpack.c.h.b16 %v2684
    %v2773 = vunpack.c.l.b16 %v2685
    %v2774 = vunpack.c.h.b16 %v2685
    %v2775 = vunpack.c.l.b16 %v2686
    %v2776 = vunpack.c.h.b16 %v2686
    %v2777 = vunpack.c.l.b16 %v2687
    %v2778 = vunpack.c.h.b16 %v2687
    %v2779 = vunpack.c.l.b16 %v2688
    %v2780 = vunpack.c.h.b16 %v2688
    %v2781 = vunpack.c.l.b16 %v2689
    %v2782 = vunpack.c.h.b16 %v2689
    %v2783 = vunpack.c.l.b16 %v2690
    %v2784 = vunpack.c.h.b16 %v2690
    %v2785 = vunpack.c.l.b16 %v2691
    %v2786 = vunpack.c.h.b16 %v2691
    %v2787 = vunpack.c.l.b16 %v2692
    %v2788 = vunpack.c.h.b16 %v2692
    %v2789 = vpack.c.b16 %v2729, %v2725
    %v2790 = vpack.c.b16 %v2730, %v2726
    %v2791 = vpack.c.b16 %v2731, %v2727
    %v2792 = vpack.c.b16 %v2732, %v2728
    %v2793 = vpack.c.b16 %v2737, %v2733
    %v2794 = vpack.c.b16 %v2738, %v2734
    %v2795 = vpack.c.b16 %v2739, %v2735
    %v2796 = vpack.c.b16 %v2740, %v2736
    %v2797 = vpack.c.b16 %v2745, %v2741
    %v2798 = vpack.c.b16 %v2746, %v2742
    %v2799 = vpack.c.b16 %v2747, %v2743
    %v2800 = vpack.c.b16 %v2748, %v2744
    %v2801 = vpack.c.b16 %v2753, %v2749
    %v2802 = vpack.c.b16 %v2754, %v2750
    %v2803 = vpack.c.b16 %v2755, %v2751
    %v2804 = vpack.c.b16 %v2756, %v2752
    %v2805 = vpack.c.b16 %v2761, %v2757
    %v2806 = vpack.c.b16 %v2762, %v2758
    %v2807 = vpack.c.b16 %v2763, %v2759
    %v2808 = vpack.c.b16 %v2764, %v2760
    %v2809 = vpack.c.b16 %v2769, %v2765
    %v2810 = vpack.c.b16 %v2770, %v2766
    %v2811 = vpack.c.b16 %v2771, %v2767
    %v2812 = vpack.c.b16 %v2772, %v2768
    %v2813 = vpack.c.b16 %v2777, %v2773
    %v2814 = vpack.c.b16 %v2778, %v2774
    %v2815 = vpack.c.b16 %v2779, %v2775
    %v2816 = vpack.c.b16 %v2780, %v2776
    %v2817 = vpack.c.b16 %v2785, %v2781
    %v2818 = vpack.c.b16 %v2786, %v2782
    %v2819 = vpack.c.b16 %v2787, %v2783
    %v2820 = vpack.c.b16 %v2788, %v2784
    %2853 = vmatprep.subr.bf16.mxu0 %v2790
    %2854 = vmatpush1.bf16.msra.mxu0 %v2789
    %2855 = vmatprep.subr.bf16.mxu0 %v2794
    %2856 = vmatpush1.bf16.msra.mxu0 %v2793
    %2857 = vmatprep.subr.bf16.mxu0 %v2798
    %2858 = vmatpush1.bf16.msra.mxu0 %v2797
    %2859 = vmatprep.subr.bf16.mxu0 %v2802
    %2860 = vmatpush1.bf16.msra.mxu0 %v2801
    %2861 = vmatprep.subr.bf16.mxu0 %v2806
    %2862 = vmatpush1.bf16.msra.mxu0 %v2805
    %2863 = vmatprep.subr.bf16.mxu0 %v2810
    %2864 = vmatpush1.bf16.msra.mxu0 %v2809
    %2865 = vmatprep.subr.bf16.mxu0 %v2814
    %2866 = vmatpush1.bf16.msra.mxu0 %v2813
    %2867 = vmatprep.subr.bf16.mxu0 %v2818
    %2868 = vmatpush1.bf16.msra.mxu0 %v2817
    %2869 = vmatprep.subr.bf16.mxu0 0
    %2870 = vmatpush1.bf16.msra.mxu0 0
    %2871 = vmatprep.subr.bf16.mxu0 0
    %2872 = vmatpush1.bf16.msra.mxu0 0
    %2873 = vmatprep.subr.bf16.mxu0 0
    %2874 = vmatpush1.bf16.msra.mxu0 0
    %2875 = vmatprep.subr.bf16.mxu0 0
    %2876 = vmatpush1.bf16.msra.mxu0 0
    %2877 = vmatprep.subr.bf16.mxu0 0
    %2878 = vmatpush1.bf16.msra.mxu0 0
    %2879 = vmatprep.subr.bf16.mxu0 0
    %2880 = vmatpush1.bf16.msra.mxu0 0
    %2881 = vmatprep.subr.bf16.mxu0 0
    %2882 = vmatpush1.bf16.msra.mxu0 0
    %2883 = vmatprep.subr.bf16.mxu0 0
    %2884 = vmatpush1.bf16.msra.mxu0 0
    %2885 = vmatprep.mubr.bf16.mxu0 0
    %2886 = vmatmul.mubr.bf16.gmra.mrb[0].mxu0 %v2660
    %v2887 = vpop.f32.mrb[0].mxu0
    %v2888 = vadd.f32 0.0, %v2887
    %v2889 = vpop.f32.mrb[0].mxu0
    %v2890 = vadd.f32 0.0, %v2889
    %v2891 = vpop.f32.mrb[0].mxu0
    %v2892 = vpop.f32.mrb[0].mxu0
    %2893 = vdwg.mxu0
    %2894 = vmatprep.subr.bf16.mxu0 %v2792
    %2895 = vmatpush1.bf16.msra.mxu0 %v2791
    %2896 = vmatprep.subr.bf16.mxu0 %v2796
    %2897 = vmatpush1.bf16.msra.mxu0 %v2795
    %2898 = vmatprep.subr.bf16.mxu0 %v2800
    %2899 = vmatpush1.bf16.msra.mxu0 %v2799
    %2900 = vmatprep.subr.bf16.mxu0 %v2804
    %2901 = vmatpush1.bf16.msra.mxu0 %v2803
    %2902 = vmatprep.subr.bf16.mxu0 %v2808
    %2903 = vmatpush1.bf16.msra.mxu0 %v2807
    %2904 = vmatprep.subr.bf16.mxu0 %v2812
    %2905 = vmatpush1.bf16.msra.mxu0 %v2811
    %2906 = vmatprep.subr.bf16.mxu0 %v2816
    %2907 = vmatpush1.bf16.msra.mxu0 %v2815
    %2908 = vmatprep.subr.bf16.mxu0 %v2820
    %2909 = vmatpush1.bf16.msra.mxu0 %v2819
    %2910 = vmatprep.subr.bf16.mxu0 0
    %2911 = vmatpush1.bf16.msra.mxu0 0
    %2912 = vmatprep.subr.bf16.mxu0 0
    %2913 = vmatpush1.bf16.msra.mxu0 0
    %2914 = vmatprep.subr.bf16.mxu0 0
    %2915 = vmatpush1.bf16.msra.mxu0 0
    %2916 = vmatprep.subr.bf16.mxu0 0
    %2917 = vmatpush1.bf16.msra.mxu0 0
    %2918 = vmatprep.subr.bf16.mxu0 0
    %2919 = vmatpush1.bf16.msra.mxu0 0
    %2920 = vmatprep.subr.bf16.mxu0 0
    %2921 = vmatpush1.bf16.msra.mxu0 0
    %2922 = vmatprep.subr.bf16.mxu0 0
    %2923 = vmatpush1.bf16.msra.mxu0 0
    %2924 = vmatprep.subr.bf16.mxu0 0
    %2925 = vmatpush1.bf16.msra.mxu0 0
    %2926 = vmatprep.mubr.bf16.mxu0 0
    %2927 = vmatmul.mubr.bf16.gmra.mrb[0].mxu0 %v2660
    %v2928 = vpop.f32.mrb[0].mxu0
    %v2929 = vadd.f32 0.0, %v2928
    %v2930 = vpop.f32.mrb[0].mxu0
    %v2931 = vadd.f32 0.0, %v2930
    %v2932 = vpop.f32.mrb[0].mxu0
    %v2933 = vpop.f32.mrb[0].mxu0
    %2934 = vdwg.mxu0
    %v2935 = vld [vmem:[#allocation2 + $0xe0] sm:$0xff]
    %v2936 = vld [vmem:[#allocation2 + $0xe8] sm:$0xff]
    %v2937 = vld [vmem:[#allocation2 + $0xf0] sm:$0xff]
    %v2938 = vld [vmem:[#allocation2 + $0xf8] sm:$0xff]
    %v2939 = vld [vmem:[#allocation2] sm:$0xff]
    %v2940 = vld [vmem:[#allocation2 + $0x8] sm:$0xff]
    %v2941 = vld [vmem:[#allocation2 + $0x10] sm:$0xff]
    %v2942 = vld [vmem:[#allocation2 + $0x18] sm:$0xff]
    %v2943 = vsel %vm98, %v2935, %v2939
    %v2944 = vsel %vm99, %v2936, %v2940
    %v2945 = vsel %vm100, %v2937, %v2941
    %v2946 = vsel %vm101, %v2938, %v2942
    %v2947 = vadd.f32 %v2943, %v2888
    %v2948 = vadd.f32 %v2944, %v2890
    %v2949 = vadd.f32 %v2945, %v2929
    %v2950 = vadd.f32 %v2946, %v2931
    %v2951 = vxor.u32 %v2947, 2147483648
    %v2952 = vxor.u32 %v2948, 2147483648
    %v2953 = vxor.u32 %v2949, 2147483648
    %v2954 = vmul.f32 %v2951, 1.442695
    %v2955 = vpow.pop %v2954
    %v2956 = vmul.f32 %v2952, 1.442695
    %v2957 = vpow.pop %v2956
    %v2958 = vmul.f32 %v2953, 1.442695
    %v2959 = vpow.pop %v2958
    %v2960 = vadd.f32 %v2955, 1.0
    %v2961 = vadd.f32 %v2957, 1.0
    %v2962 = vadd.f32 %v2959, 1.0
    %v2963 = vrcp.pop %v2960
    %v2964 = vmul.f32 1.0, %v2963
    %v2965 = vrcp.pop %v2961
    %v2966 = vmul.f32 1.0, %v2965
    %v2967 = vrcp.pop %v2962
    %v2968 = vmul.f32 1.0, %v2967
    %v2969 = vtanh.pop %v2950
    %v2970 = vmul.f32 %v2966, %v2655
    %v2971 = vmul.f32 %v2964, %v2969
    %v2972 = vadd.f32 %v2970, %v2971
    %v2973 = vtanh.pop %v2972
    %v2974 = vmul.f32 %v2968, %v2973
    %2975 = vst.msk [vmem:[#allocation3 + $0x38] sm:$0xff] %vm754, %v2974
    %2976 = vst.msk [vmem:[#allocation3] sm:$0xff] %vm756, %v2974
    %v2977 = vld [vmem:[#allocation3] sm:$0xff]
    %v2978 = vld [vmem:[#allocation3 + $0x8] sm:$0xff]
    %v2979 = vld [vmem:[#allocation3 + $0x10] sm:$0xff]
    %v2980 = vld [vmem:[#allocation3 + $0x18] sm:$0xff]
    %v2981 = vld [vmem:[#allocation3 + $0x20] sm:$0xff]
    %v2982 = vld [vmem:[#allocation3 + $0x28] sm:$0xff]
    %v2983 = vld [vmem:[#allocation3 + $0x30] sm:$0xff]
    %v2984 = vld [vmem:[#allocation3 + $0x38] sm:$0xff]
    %v2985 = vpack.c.bf16 %v2978, %v2977
    %v2986 = vpack.c.bf16 %v2980, %v2979
    %v2987 = vpack.c.bf16 %v2982, %v2981
    %v2988 = vpack.c.bf16 %v2984, %v2983
    %v2989 = vld [vmem:[#allocation9] sm:$0xff]
    %v2990 = vld [vmem:[#allocation9 + $0x8] sm:$0xff]
    %v2991 = vld [vmem:[#allocation9 + $0x10] sm:$0xff]
    %v2992 = vld [vmem:[#allocation9 + $0x18] sm:$0xff]
    %v2993 = vld [vmem:[#allocation9 + $0x20] sm:$0xff]
    %v2994 = vld [vmem:[#allocation9 + $0x28] sm:$0xff]
    %v2995 = vld [vmem:[#allocation9 + $0x30] sm:$0xff]
    %v2996 = vld [vmem:[#allocation9 + $0x38] sm:$0xff]
    %v2997 = vld [vmem:[#allocation9 + $0x40] sm:$0xff]
    %v2998 = vld [vmem:[#allocation9 + $0x48] sm:$0xff]
    %v2999 = vld [vmem:[#allocation9 + $0x50] sm:$0xff]
    %v3000 = vld [vmem:[#allocation9 + $0x58] sm:$0xff]
    %v3001 = vld [vmem:[#allocation9 + $0x60] sm:$0xff]
    %v3002 = vld [vmem:[#allocation9 + $0x68] sm:$0xff]
    %v3003 = vld [vmem:[#allocation9 + $0x70] sm:$0xff]
    %v3004 = vld [vmem:[#allocation9 + $0x78] sm:$0xff]
    %v3005 = vld [vmem:[#allocation9 + $0x80] sm:$0xff]
    %v3006 = vld [vmem:[#allocation9 + $0x88] sm:$0xff]
    %v3007 = vld [vmem:[#allocation9 + $0x90] sm:$0xff]
    %v3008 = vld [vmem:[#allocation9 + $0x98] sm:$0xff]
    %v3009 = vld [vmem:[#allocation9 + $0xa0] sm:$0xff]
    %v3010 = vld [vmem:[#allocation9 + $0xa8] sm:$0xff]
    %v3011 = vld [vmem:[#allocation9 + $0xb0] sm:$0xff]
    %v3012 = vld [vmem:[#allocation9 + $0xb8] sm:$0xff]
    %v3013 = vld [vmem:[#allocation9 + $0xc0] sm:$0xff]
    %v3014 = vld [vmem:[#allocation9 + $0xc8] sm:$0xff]
    %v3015 = vld [vmem:[#allocation9 + $0xd0] sm:$0xff]
    %v3016 = vld [vmem:[#allocation9 + $0xd8] sm:$0xff]
    %v3017 = vld [vmem:[#allocation9 + $0xe0] sm:$0xff]
    %v3018 = vld [vmem:[#allocation9 + $0xe8] sm:$0xff]
    %v3019 = vld [vmem:[#allocation9 + $0xf0] sm:$0xff]
    %v3020 = vld [vmem:[#allocation9 + $0xf8] sm:$0xff]
    %v3021 = vld [vmem:[%s5] sm:$0xf]
    %v3023 = vlaneseq
    %v3024 = vshrl.u32 %v3023, 7
    %v3025 = vsub.s32 0, %v3024
    %v3026 = vrot.slane %v3021, %v3025
    %v3027 = vlaneseq
    %v3028 = vshrl.u32 %v3027, 7
    %v3029 = vsub.s32 1, %v3028
    %v3030 = vrot.slane %v3021, %v3029
    %v3031 = vlaneseq
    %v3032 = vshrl.u32 %v3031, 7
    %v3033 = vsub.s32 2, %v3032
    %v3034 = vrot.slane %v3021, %v3033
    %v3035 = vlaneseq
    %v3036 = vshrl.u32 %v3035, 7
    %v3037 = vsub.s32 3, %v3036
    %v3038 = vrot.slane %v3021, %v3037
    %v3075 = vunpack.c.l.b16 %v2989
    %v3076 = vunpack.c.h.b16 %v2989
    %v3077 = vunpack.c.l.b16 %v2990
    %v3078 = vunpack.c.h.b16 %v2990
    %v3079 = vunpack.c.l.b16 %v2991
    %v3080 = vunpack.c.h.b16 %v2991
    %v3081 = vunpack.c.l.b16 %v2992
    %v3082 = vunpack.c.h.b16 %v2992
    %v3083 = vunpack.c.l.b16 %v2993
    %v3084 = vunpack.c.h.b16 %v2993
    %v3085 = vunpack.c.l.b16 %v2994
    %v3086 = vunpack.c.h.b16 %v2994
    %v3087 = vunpack.c.l.b16 %v2995
    %v3088 = vunpack.c.h.b16 %v2995
    %v3089 = vunpack.c.l.b16 %v2996
    %v3090 = vunpack.c.h.b16 %v2996
    %v3091 = vunpack.c.l.b16 %v2997
    %v3092 = vunpack.c.h.b16 %v2997
    %v3093 = vunpack.c.l.b16 %v2998
    %v3094 = vunpack.c.h.b16 %v2998
    %v3095 = vunpack.c.l.b16 %v2999
    %v3096 = vunpack.c.h.b16 %v2999
    %v3097 = vunpack.c.l.b16 %v3000
    %v3098 = vunpack.c.h.b16 %v3000
    %v3099 = vunpack.c.l.b16 %v3001
    %v3100 = vunpack.c.h.b16 %v3001
    %v3101 = vunpack.c.l.b16 %v3002
    %v3102 = vunpack.c.h.b16 %v3002
    %v3103 = vunpack.c.l.b16 %v3003
    %v3104 = vunpack.c.h.b16 %v3003
    %v3105 = vunpack.c.l.b16 %v3004
    %v3106 = vunpack.c.h.b16 %v3004
    %v3107 = vunpack.c.l.b16 %v3005
    %v3108 = vunpack.c.h.b16 %v3005
    %v3109 = vunpack.c.l.b16 %v3006
    %v3110 = vunpack.c.h.b16 %v3006
    %v3111 = vunpack.c.l.b16 %v3007
    %v3112 = vunpack.c.h.b16 %v3007
    %v3113 = vunpack.c.l.b16 %v3008
    %v3114 = vunpack.c.h.b16 %v3008
    %v3115 = vunpack.c.l.b16 %v3009
    %v3116 = vunpack.c.h.b16 %v3009
    %v3117 = vunpack.c.l.b16 %v3010
    %v3118 = vunpack.c.h.b16 %v3010
    %v3119 = vunpack.c.l.b16 %v3011
    %v3120 = vunpack.c.h.b16 %v3011
    %v3121 = vunpack.c.l.b16 %v3012
    %v3122 = vunpack.c.h.b16 %v3012
    %v3123 = vunpack.c.l.b16 %v3013
    %v3124 = vunpack.c.h.b16 %v3013
    %v3125 = vunpack.c.l.b16 %v3014
    %v3126 = vunpack.c.h.b16 %v3014
    %v3127 = vunpack.c.l.b16 %v3015
    %v3128 = vunpack.c.h.b16 %v3015
    %v3129 = vunpack.c.l.b16 %v3016
    %v3130 = vunpack.c.h.b16 %v3016
    %v3131 = vunpack.c.l.b16 %v3017
    %v3132 = vunpack.c.h.b16 %v3017
    %v3133 = vunpack.c.l.b16 %v3018
    %v3134 = vunpack.c.h.b16 %v3018
    %v3135 = vunpack.c.l.b16 %v3019
    %v3136 = vunpack.c.h.b16 %v3019
    %v3137 = vunpack.c.l.b16 %v3020
    %v3138 = vunpack.c.h.b16 %v3020
    %v3139 = vpack.c.b16 %v3079, %v3075
    %v3140 = vpack.c.b16 %v3080, %v3076
    %v3141 = vpack.c.b16 %v3081, %v3077
    %v3142 = vpack.c.b16 %v3082, %v3078
    %v3143 = vpack.c.b16 %v3087, %v3083
    %v3144 = vpack.c.b16 %v3088, %v3084
    %v3145 = vpack.c.b16 %v3089, %v3085
    %v3146 = vpack.c.b16 %v3090, %v3086
    %v3147 = vpack.c.b16 %v3095, %v3091
    %v3148 = vpack.c.b16 %v3096, %v3092
    %v3149 = vpack.c.b16 %v3097, %v3093
    %v3150 = vpack.c.b16 %v3098, %v3094
    %v3151 = vpack.c.b16 %v3103, %v3099
    %v3152 = vpack.c.b16 %v3104, %v3100
    %v3153 = vpack.c.b16 %v3105, %v3101
    %v3154 = vpack.c.b16 %v3106, %v3102
    %v3155 = vpack.c.b16 %v3111, %v3107
    %v3156 = vpack.c.b16 %v3112, %v3108
    %v3157 = vpack.c.b16 %v3113, %v3109
    %v3158 = vpack.c.b16 %v3114, %v3110
    %v3159 = vpack.c.b16 %v3119, %v3115
    %v3160 = vpack.c.b16 %v3120, %v3116
    %v3161 = vpack.c.b16 %v3121, %v3117
    %v3162 = vpack.c.b16 %v3122, %v3118
    %v3163 = vpack.c.b16 %v3127, %v3123
    %v3164 = vpack.c.b16 %v3128, %v3124
    %v3165 = vpack.c.b16 %v3129, %v3125
    %v3166 = vpack.c.b16 %v3130, %v3126
    %v3167 = vpack.c.b16 %v3135, %v3131
    %v3168 = vpack.c.b16 %v3136, %v3132
    %v3169 = vpack.c.b16 %v3137, %v3133
    %v3170 = vpack.c.b16 %v3138, %v3134
    %3203 = vmatprep.subr.bf16.mxu0 %v3140
    %3204 = vmatpush1.bf16.msra.mxu0 %v3139
    %3205 = vmatprep.subr.bf16.mxu0 %v3144
    %3206 = vmatpush1.bf16.msra.mxu0 %v3143
    %3207 = vmatprep.subr.bf16.mxu0 %v3148
    %3208 = vmatpush1.bf16.msra.mxu0 %v3147
    %3209 = vmatprep.subr.bf16.mxu0 %v3152
    %3210 = vmatpush1.bf16.msra.mxu0 %v3151
    %3211 = vmatprep.subr.bf16.mxu0 %v3156
    %3212 = vmatpush1.bf16.msra.mxu0 %v3155
    %3213 = vmatprep.subr.bf16.mxu0 %v3160
    %3214 = vmatpush1.bf16.msra.mxu0 %v3159
    %3215 = vmatprep.subr.bf16.mxu0 %v3164
    %3216 = vmatpush1.bf16.msra.mxu0 %v3163
    %3217 = vmatprep.subr.bf16.mxu0 %v3168
    %3218 = vmatpush1.bf16.msra.mxu0 %v3167
    %3219 = vmatprep.subr.bf16.mxu0 0
    %3220 = vmatpush1.bf16.msra.mxu0 0
    %3221 = vmatprep.subr.bf16.mxu0 0
    %3222 = vmatpush1.bf16.msra.mxu0 0
    %3223 = vmatprep.subr.bf16.mxu0 0
    %3224 = vmatpush1.bf16.msra.mxu0 0
    %3225 = vmatprep.subr.bf16.mxu0 0
    %3226 = vmatpush1.bf16.msra.mxu0 0
    %3227 = vmatprep.subr.bf16.mxu0 0
    %3228 = vmatpush1.bf16.msra.mxu0 0
    %3229 = vmatprep.subr.bf16.mxu0 0
    %3230 = vmatpush1.bf16.msra.mxu0 0
    %3231 = vmatprep.subr.bf16.mxu0 0
    %3232 = vmatpush1.bf16.msra.mxu0 0
    %3233 = vmatprep.subr.bf16.mxu0 0
    %3234 = vmatpush1.bf16.msra.mxu0 0
    %3235 = vmatprep.mubr.bf16.mxu0 0
    %3236 = vmatmul.mubr.bf16.gmra.mrb[0].mxu0 %v2985
    %v3237 = vpop.f32.mrb[0].mxu0
    %v3238 = vadd.f32 %v3026, %v3237
    %v3239 = vpop.f32.mrb[0].mxu0
    %v3240 = vadd.f32 %v3030, %v3239
    %v3241 = vpop.f32.mrb[0].mxu0
    %v3242 = vadd.f32 %v3026, %v3241
    %v3243 = vpop.f32.mrb[0].mxu0
    %v3244 = vadd.f32 %v3030, %v3243
    %3245 = vmatprep.mubr.bf16.mxu0 0
    %3246 = vmatmul.mubr.bf16.gmra.mrb[0].mxu0 %v2986
    %v3247 = vpop.f32.mrb[0].mxu0
    %v3248 = vadd.f32 %v3026, %v3247
    %v3249 = vpop.f32.mrb[0].mxu0
    %v3250 = vadd.f32 %v3030, %v3249
    %v3251 = vpop.f32.mrb[0].mxu0
    %v3252 = vadd.f32 %v3026, %v3251
    %v3253 = vpop.f32.mrb[0].mxu0
    %v3254 = vadd.f32 %v3030, %v3253
    %3255 = vmatprep.mubr.bf16.mxu0 0
    %3256 = vmatmul.mubr.bf16.gmra.mrb[0].mxu0 %v2987
    %v3257 = vpop.f32.mrb[0].mxu0
    %v3258 = vadd.f32 %v3026, %v3257
    %v3259 = vpop.f32.mrb[0].mxu0
    %v3260 = vadd.f32 %v3030, %v3259
    %v3261 = vpop.f32.mrb[0].mxu0
    %v3262 = vadd.f32 %v3026, %v3261
    %v3263 = vpop.f32.mrb[0].mxu0
    %v3264 = vadd.f32 %v3030, %v3263
    %3265 = vmatprep.mubr.bf16.mxu0 0
    %3266 = vmatmul.mubr.bf16.gmra.mrb[0].mxu0 %v2988
    %v3267 = vpop.f32.mrb[0].mxu0
    %v3268 = vadd.f32 %v3026, %v3267
    %v3269 = vpop.f32.mrb[0].mxu0
    %v3270 = vadd.f32 %v3030, %v3269
    %v3271 = vpop.f32.mrb[0].mxu0
    %v3272 = vadd.f32 %v3026, %v3271
    %v3273 = vpop.f32.mrb[0].mxu0
    %v3274 = vadd.f32 %v3030, %v3273
    %3275 = vdwg.mxu0
    %3276 = vmatprep.subr.bf16.mxu0 %v3142
    %3277 = vmatpush1.bf16.msra.mxu0 %v3141
    %3278 = vmatprep.subr.bf16.mxu0 %v3146
    %3279 = vmatpush1.bf16.msra.mxu0 %v3145
    %3280 = vmatprep.subr.bf16.mxu0 %v3150
    %3281 = vmatpush1.bf16.msra.mxu0 %v3149
    %3282 = vmatprep.subr.bf16.mxu0 %v3154
    %3283 = vmatpush1.bf16.msra.mxu0 %v3153
    %3284 = vmatprep.subr.bf16.mxu0 %v3158
    %3285 = vmatpush1.bf16.msra.mxu0 %v3157
    %3286 = vmatprep.subr.bf16.mxu0 %v3162
    %3287 = vmatpush1.bf16.msra.mxu0 %v3161
    %3288 = vmatprep.subr.bf16.mxu0 %v3166
    %3289 = vmatpush1.bf16.msra.mxu0 %v3165
    %3290 = vmatprep.subr.bf16.mxu0 %v3170
    %3291 = vmatpush1.bf16.msra.mxu0 %v3169
    %3292 = vmatprep.subr.bf16.mxu0 0
    %3293 = vmatpush1.bf16.msra.mxu0 0
    %3294 = vmatprep.subr.bf16.mxu0 0
    %3295 = vmatpush1.bf16.msra.mxu0 0
    %3296 = vmatprep.subr.bf16.mxu0 0
    %3297 = vmatpush1.bf16.msra.mxu0 0
    %3298 = vmatprep.subr.bf16.mxu0 0
    %3299 = vmatpush1.bf16.msra.mxu0 0
    %3300 = vmatprep.subr.bf16.mxu0 0
    %3301 = vmatpush1.bf16.msra.mxu0 0
    %3302 = vmatprep.subr.bf16.mxu0 0
    %3303 = vmatpush1.bf16.msra.mxu0 0
    %3304 = vmatprep.subr.bf16.mxu0 0
    %3305 = vmatpush1.bf16.msra.mxu0 0
    %3306 = vmatprep.subr.bf16.mxu0 0
    %3307 = vmatpush1.bf16.msra.mxu0 0
    %3308 = vmatprep.mubr.bf16.mxu0 0
    %3309 = vmatmul.mubr.bf16.gmra.mrb[0].mxu0 %v2985
    %v3310 = vpop.f32.mrb[0].mxu0
    %v3311 = vadd.f32 %v3034, %v3310
    %v3312 = vpop.f32.mrb[0].mxu0
    %v3313 = vadd.f32 %v3038, %v3312
    %v3314 = vpop.f32.mrb[0].mxu0
    %v3315 = vadd.f32 %v3034, %v3314
    %v3316 = vpop.f32.mrb[0].mxu0
    %v3317 = vadd.f32 %v3038, %v3316
    %3318 = vmatprep.mubr.bf16.mxu0 0
    %3319 = vmatmul.mubr.bf16.gmra.mrb[0].mxu0 %v2986
    %v3320 = vpop.f32.mrb[0].mxu0
    %v3321 = vadd.f32 %v3034, %v3320
    %v3322 = vpop.f32.mrb[0].mxu0
    %v3323 = vadd.f32 %v3038, %v3322
    %v3324 = vpop.f32.mrb[0].mxu0
    %v3325 = vadd.f32 %v3034, %v3324
    %v3326 = vpop.f32.mrb[0].mxu0
    %v3327 = vadd.f32 %v3038, %v3326
    %3328 = vmatprep.mubr.bf16.mxu0 0
    %3329 = vmatmul.mubr.bf16.gmra.mrb[0].mxu0 %v2987
    %v3330 = vpop.f32.mrb[0].mxu0
    %v3331 = vadd.f32 %v3034, %v3330
    %v3332 = vpop.f32.mrb[0].mxu0
    %v3333 = vadd.f32 %v3038, %v3332
    %v3334 = vpop.f32.mrb[0].mxu0
    %v3335 = vadd.f32 %v3034, %v3334
    %v3336 = vpop.f32.mrb[0].mxu0
    %v3337 = vadd.f32 %v3038, %v3336
    %3338 = vmatprep.mubr.bf16.mxu0 0
    %3339 = vmatmul.mubr.bf16.gmra.mrb[0].mxu0 %v2988
    %v3340 = vpop.f32.mrb[0].mxu0
    %v3341 = vadd.f32 %v3034, %v3340
    %v3342 = vpop.f32.mrb[0].mxu0
    %v3343 = vadd.f32 %v3038, %v3342
    %v3344 = vpop.f32.mrb[0].mxu0
    %v3345 = vadd.f32 %v3034, %v3344
    %v3346 = vpop.f32.mrb[0].mxu0
    %v3347 = vadd.f32 %v3038, %v3346
    %3348 = vdwg.mxu0
    %3349 = vst [vmem:[#allocation2] sm:$0xff] %v3238
    %3350 = vst [vmem:[#allocation2 + $0x8] sm:$0xff] %v3240
    %3351 = vst [vmem:[#allocation2 + $0x10] sm:$0xff] %v3311
    %3352 = vst [vmem:[#allocation2 + $0x18] sm:$0xff] %v3313
    %3353 = vst [vmem:[#allocation2 + $0x20] sm:$0xff] %v3242
    %3354 = vst [vmem:[#allocation2 + $0x28] sm:$0xff] %v3244
    %3355 = vst [vmem:[#allocation2 + $0x30] sm:$0xff] %v3315
    %3356 = vst [vmem:[#allocation2 + $0x38] sm:$0xff] %v3317
    %3357 = vst [vmem:[#allocation2 + $0x40] sm:$0xff] %v3248
    %3358 = vst [vmem:[#allocation2 + $0x48] sm:$0xff] %v3250
    %3359 = vst [vmem:[#allocation2 + $0x50] sm:$0xff] %v3321
    %3360 = vst [vmem:[#allocation2 + $0x58] sm:$0xff] %v3323
    %3361 = vst [vmem:[#allocation2 + $0x60] sm:$0xff] %v3252
    %3362 = vst [vmem:[#allocation2 + $0x68] sm:$0xff] %v3254
    %3363 = vst [vmem:[#allocation2 + $0x70] sm:$0xff] %v3325
    %3364 = vst [vmem:[#allocation2 + $0x78] sm:$0xff] %v3327
    %3365 = vst [vmem:[#allocation2 + $0x80] sm:$0xff] %v3258
    %3366 = vst [vmem:[#allocation2 + $0x88] sm:$0xff] %v3260
    %3367 = vst [vmem:[#allocation2 + $0x90] sm:$0xff] %v3331
    %3368 = vst [vmem:[#allocation2 + $0x98] sm:$0xff] %v3333
    %3369 = vst [vmem:[#allocation2 + $0xa0] sm:$0xff] %v3262
    %3370 = vst [vmem:[#allocation2 + $0xa8] sm:$0xff] %v3264
    %3371 = vst [vmem:[#allocation2 + $0xb0] sm:$0xff] %v3335
    %3372 = vst [vmem:[#allocation2 + $0xb8] sm:$0xff] %v3337
    %3373 = vst [vmem:[#allocation2 + $0xc0] sm:$0xff] %v3268
    %3374 = vst [vmem:[#allocation2 + $0xc8] sm:$0xff] %v3270
    %3375 = vst [vmem:[#allocation2 + $0xd0] sm:$0xff] %v3341
    %3376 = vst [vmem:[#allocation2 + $0xd8] sm:$0xff] %v3343
    %3377 = vst [vmem:[#allocation2 + $0xe0] sm:$0xff] %v3272
    %3378 = vst [vmem:[#allocation2 + $0xe8] sm:$0xff] %v3274
    %3379 = vst [vmem:[#allocation2 + $0xf0] sm:$0xff] %v3345
    %3380 = vst [vmem:[#allocation2 + $0xf8] sm:$0xff] %v3347
    %v3381 = vld [vmem:[#allocation10] sm:$0xff]
    %v3382 = vld [vmem:[#allocation10 + $0x8] sm:$0xff]
    %v3383 = vld [vmem:[#allocation10 + $0x10] sm:$0xff]
    %v3384 = vld [vmem:[#allocation10 + $0x18] sm:$0xff]
    %v3385 = vld [vmem:[#allocation10 + $0x20] sm:$0xff]
    %v3386 = vld [vmem:[#allocation10 + $0x28] sm:$0xff]
    %v3387 = vld [vmem:[#allocation10 + $0x30] sm:$0xff]
    %v3388 = vld [vmem:[#allocation10 + $0x38] sm:$0xff]
    %v3389 = vld [vmem:[#allocation10 + $0x40] sm:$0xff]
    %v3390 = vld [vmem:[#allocation10 + $0x48] sm:$0xff]
    %v3391 = vld [vmem:[#allocation10 + $0x50] sm:$0xff]
    %v3392 = vld [vmem:[#allocation10 + $0x58] sm:$0xff]
    %v3393 = vld [vmem:[#allocation10 + $0x60] sm:$0xff]
    %v3394 = vld [vmem:[#allocation10 + $0x68] sm:$0xff]
    %v3395 = vld [vmem:[#allocation10 + $0x70] sm:$0xff]
    %v3396 = vld [vmem:[#allocation10 + $0x78] sm:$0xff]
    %v3397 = vld [vmem:[#allocation10 + $0x80] sm:$0xff]
    %v3398 = vld [vmem:[#allocation10 + $0x88] sm:$0xff]
    %v3399 = vld [vmem:[#allocation10 + $0x90] sm:$0xff]
    %v3400 = vld [vmem:[#allocation10 + $0x98] sm:$0xff]
    %v3401 = vld [vmem:[#allocation10 + $0xa0] sm:$0xff]
    %v3402 = vld [vmem:[#allocation10 + $0xa8] sm:$0xff]
    %v3403 = vld [vmem:[#allocation10 + $0xb0] sm:$0xff]
    %v3404 = vld [vmem:[#allocation10 + $0xb8] sm:$0xff]
    %v3405 = vld [vmem:[#allocation10 + $0xc0] sm:$0xff]
    %v3406 = vld [vmem:[#allocation10 + $0xc8] sm:$0xff]
    %v3407 = vld [vmem:[#allocation10 + $0xd0] sm:$0xff]
    %v3408 = vld [vmem:[#allocation10 + $0xd8] sm:$0xff]
    %v3409 = vld [vmem:[#allocation10 + $0xe0] sm:$0xff]
    %v3410 = vld [vmem:[#allocation10 + $0xe8] sm:$0xff]
    %v3411 = vld [vmem:[#allocation10 + $0xf0] sm:$0xff]
    %v3412 = vld [vmem:[#allocation10 + $0xf8] sm:$0xff]
    %v3445 = vunpack.c.l.b16 %v3381
    %v3446 = vunpack.c.h.b16 %v3381
    %v3447 = vunpack.c.l.b16 %v3382
    %v3448 = vunpack.c.h.b16 %v3382
    %v3449 = vunpack.c.l.b16 %v3383
    %v3450 = vunpack.c.h.b16 %v3383
    %v3451 = vunpack.c.l.b16 %v3384
    %v3452 = vunpack.c.h.b16 %v3384
    %v3453 = vunpack.c.l.b16 %v3385
    %v3454 = vunpack.c.h.b16 %v3385
    %v3455 = vunpack.c.l.b16 %v3386
    %v3456 = vunpack.c.h.b16 %v3386
    %v3457 = vunpack.c.l.b16 %v3387
    %v3458 = vunpack.c.h.b16 %v3387
    %v3459 = vunpack.c.l.b16 %v3388
    %v3460 = vunpack.c.h.b16 %v3388
    %v3461 = vunpack.c.l.b16 %v3389
    %v3462 = vunpack.c.h.b16 %v3389
    %v3463 = vunpack.c.l.b16 %v3390
    %v3464 = vunpack.c.h.b16 %v3390
    %v3465 = vunpack.c.l.b16 %v3391
    %v3466 = vunpack.c.h.b16 %v3391
    %v3467 = vunpack.c.l.b16 %v3392
    %v3468 = vunpack.c.h.b16 %v3392
    %v3469 = vunpack.c.l.b16 %v3393
    %v3470 = vunpack.c.h.b16 %v3393
    %v3471 = vunpack.c.l.b16 %v3394
    %v3472 = vunpack.c.h.b16 %v3394
    %v3473 = vunpack.c.l.b16 %v3395
    %v3474 = vunpack.c.h.b16 %v3395
    %v3475 = vunpack.c.l.b16 %v3396
    %v3476 = vunpack.c.h.b16 %v3396
    %v3477 = vunpack.c.l.b16 %v3397
    %v3478 = vunpack.c.h.b16 %v3397
    %v3479 = vunpack.c.l.b16 %v3398
    %v3480 = vunpack.c.h.b16 %v3398
    %v3481 = vunpack.c.l.b16 %v3399
    %v3482 = vunpack.c.h.b16 %v3399
    %v3483 = vunpack.c.l.b16 %v3400
    %v3484 = vunpack.c.h.b16 %v3400
    %v3485 = vunpack.c.l.b16 %v3401
    %v3486 = vunpack.c.h.b16 %v3401
    %v3487 = vunpack.c.l.b16 %v3402
    %v3488 = vunpack.c.h.b16 %v3402
    %v3489 = vunpack.c.l.b16 %v3403
    %v3490 = vunpack.c.h.b16 %v3403
    %v3491 = vunpack.c.l.b16 %v3404
    %v3492 = vunpack.c.h.b16 %v3404
    %v3493 = vunpack.c.l.b16 %v3405
    %v3494 = vunpack.c.h.b16 %v3405
    %v3495 = vunpack.c.l.b16 %v3406
    %v3496 = vunpack.c.h.b16 %v3406
    %v3497 = vunpack.c.l.b16 %v3407
    %v3498 = vunpack.c.h.b16 %v3407
    %v3499 = vunpack.c.l.b16 %v3408
    %v3500 = vunpack.c.h.b16 %v3408
    %v3501 = vunpack.c.l.b16 %v3409
    %v3502 = vunpack.c.h.b16 %v3409
    %v3503 = vunpack.c.l.b16 %v3410
    %v3504 = vunpack.c.h.b16 %v3410
    %v3505 = vunpack.c.l.b16 %v3411
    %v3506 = vunpack.c.h.b16 %v3411
    %v3507 = vunpack.c.l.b16 %v3412
    %v3508 = vunpack.c.h.b16 %v3412
    %v3509 = vpack.c.b16 %v3449, %v3445
    %v3510 = vpack.c.b16 %v3450, %v3446
    %v3511 = vpack.c.b16 %v3451, %v3447
    %v3512 = vpack.c.b16 %v3452, %v3448
    %v3513 = vpack.c.b16 %v3457, %v3453
    %v3514 = vpack.c.b16 %v3458, %v3454
    %v3515 = vpack.c.b16 %v3459, %v3455
    %v3516 = vpack.c.b16 %v3460, %v3456
    %v3517 = vpack.c.b16 %v3465, %v3461
    %v3518 = vpack.c.b16 %v3466, %v3462
    %v3519 = vpack.c.b16 %v3467, %v3463
    %v3520 = vpack.c.b16 %v3468, %v3464
    %v3521 = vpack.c.b16 %v3473, %v3469
    %v3522 = vpack.c.b16 %v3474, %v3470
    %v3523 = vpack.c.b16 %v3475, %v3471
    %v3524 = vpack.c.b16 %v3476, %v3472
    %v3525 = vpack.c.b16 %v3481, %v3477
    %v3526 = vpack.c.b16 %v3482, %v3478
    %v3527 = vpack.c.b16 %v3483, %v3479
    %v3528 = vpack.c.b16 %v3484, %v3480
    %v3529 = vpack.c.b16 %v3489, %v3485
    %v3530 = vpack.c.b16 %v3490, %v3486
    %v3531 = vpack.c.b16 %v3491, %v3487
    %v3532 = vpack.c.b16 %v3492, %v3488
    %v3533 = vpack.c.b16 %v3497, %v3493
    %v3534 = vpack.c.b16 %v3498, %v3494
    %v3535 = vpack.c.b16 %v3499, %v3495
    %v3536 = vpack.c.b16 %v3500, %v3496
    %v3537 = vpack.c.b16 %v3505, %v3501
    %v3538 = vpack.c.b16 %v3506, %v3502
    %v3539 = vpack.c.b16 %v3507, %v3503
    %v3540 = vpack.c.b16 %v3508, %v3504
    %3573 = vmatprep.subr.bf16.mxu0 %v3510
    %3574 = vmatpush1.bf16.msra.mxu0 %v3509
    %3575 = vmatprep.subr.bf16.mxu0 %v3514
    %3576 = vmatpush1.bf16.msra.mxu0 %v3513
    %3577 = vmatprep.subr.bf16.mxu0 %v3518
    %3578 = vmatpush1.bf16.msra.mxu0 %v3517
    %3579 = vmatprep.subr.bf16.mxu0 %v3522
    %3580 = vmatpush1.bf16.msra.mxu0 %v3521
    %3581 = vmatprep.subr.bf16.mxu0 %v3526
    %3582 = vmatpush1.bf16.msra.mxu0 %v3525
    %3583 = vmatprep.subr.bf16.mxu0 %v3530
    %3584 = vmatpush1.bf16.msra.mxu0 %v3529
    %3585 = vmatprep.subr.bf16.mxu0 %v3534
    %3586 = vmatpush1.bf16.msra.mxu0 %v3533
    %3587 = vmatprep.subr.bf16.mxu0 %v3538
    %3588 = vmatpush1.bf16.msra.mxu0 %v3537
    %3589 = vmatprep.subr.bf16.mxu0 0
    %3590 = vmatpush1.bf16.msra.mxu0 0
    %3591 = vmatprep.subr.bf16.mxu0 0
    %3592 = vmatpush1.bf16.msra.mxu0 0
    %3593 = vmatprep.subr.bf16.mxu0 0
    %3594 = vmatpush1.bf16.msra.mxu0 0
    %3595 = vmatprep.subr.bf16.mxu0 0
    %3596 = vmatpush1.bf16.msra.mxu0 0
    %3597 = vmatprep.subr.bf16.mxu0 0
    %3598 = vmatpush1.bf16.msra.mxu0 0
    %3599 = vmatprep.subr.bf16.mxu0 0
    %3600 = vmatpush1.bf16.msra.mxu0 0
    %3601 = vmatprep.subr.bf16.mxu0 0
    %3602 = vmatpush1.bf16.msra.mxu0 0
    %3603 = vmatprep.subr.bf16.mxu0 0
    %3604 = vmatpush1.bf16.msra.mxu0 0
    %3605 = vmatprep.mubr.bf16.mxu0 0
    %3606 = vmatmul.mubr.bf16.gmra.mrb[0].mxu0 0
    %v3607 = vpop.f32.mrb[0].mxu0
    %v3608 = vadd.f32 0.0, %v3607
    %v3609 = vpop.f32.mrb[0].mxu0
    %v3610 = vadd.f32 0.0, %v3609
    %v3611 = vpop.f32.mrb[0].mxu0
    %v3612 = vpop.f32.mrb[0].mxu0
    %3613 = vdwg.mxu0
    %3614 = vmatprep.subr.bf16.mxu0 %v3512
    %3615 = vmatpush1.bf16.msra.mxu0 %v3511
    %3616 = vmatprep.subr.bf16.mxu0 %v3516
    %3617 = vmatpush1.bf16.msra.mxu0 %v3515
    %3618 = vmatprep.subr.bf16.mxu0 %v3520
    %3619 = vmatpush1.bf16.msra.mxu0 %v3519
    %3620 = vmatprep.subr.bf16.mxu0 %v3524
    %3621 = vmatpush1.bf16.msra.mxu0 %v3523
    %3622 = vmatprep.subr.bf16.mxu0 %v3528
    %3623 = vmatpush1.bf16.msra.mxu0 %v3527
    %3624 = vmatprep.subr.bf16.mxu0 %v3532
    %3625 = vmatpush1.bf16.msra.mxu0 %v3531
    %3626 = vmatprep.subr.bf16.mxu0 %v3536
    %3627 = vmatpush1.bf16.msra.mxu0 %v3535
    %3628 = vmatprep.subr.bf16.mxu0 %v3540
    %3629 = vmatpush1.bf16.msra.mxu0 %v3539
    %3630 = vmatprep.subr.bf16.mxu0 0
    %3631 = vmatpush1.bf16.msra.mxu0 0
    %3632 = vmatprep.subr.bf16.mxu0 0
    %3633 = vmatpush1.bf16.msra.mxu0 0
    %3634 = vmatprep.subr.bf16.mxu0 0
    %3635 = vmatpush1.bf16.msra.mxu0 0
    %3636 = vmatprep.subr.bf16.mxu0 0
    %3637 = vmatpush1.bf16.msra.mxu0 0
    %3638 = vmatprep.subr.bf16.mxu0 0
    %3639 = vmatpush1.bf16.msra.mxu0 0
    %3640 = vmatprep.subr.bf16.mxu0 0
    %3641 = vmatpush1.bf16.msra.mxu0 0
    %3642 = vmatprep.subr.bf16.mxu0 0
    %3643 = vmatpush1.bf16.msra.mxu0 0
    %3644 = vmatprep.subr.bf16.mxu0 0
    %3645 = vmatpush1.bf16.msra.mxu0 0
    %3646 = vmatprep.mubr.bf16.mxu0 0
    %3647 = vmatmul.mubr.bf16.gmra.mrb[0].mxu0 0
    %v3648 = vpop.f32.mrb[0].mxu0
    %v3649 = vadd.f32 0.0, %v3648
    %v3650 = vpop.f32.mrb[0].mxu0
    %v3651 = vadd.f32 0.0, %v3650
    %v3652 = vpop.f32.mrb[0].mxu0
    %v3653 = vpop.f32.mrb[0].mxu0
    %3654 = vdwg.mxu0
    %v3655 = vld [vmem:[#allocation2] sm:$0xff]
    %v3656 = vld [vmem:[#allocation2 + $0x8] sm:$0xff]
    %v3657 = vld [vmem:[#allocation2 + $0x10] sm:$0xff]
    %v3658 = vld [vmem:[#allocation2 + $0x18] sm:$0xff]
    %v3659 = vld [vmem:[#allocation2 + $0xe0] sm:$0xff]
    %v3660 = vld [vmem:[#allocation2 + $0xe8] sm:$0xff]
    %v3661 = vld [vmem:[#allocation2 + $0xf0] sm:$0xff]
    %v3662 = vld [vmem:[#allocation2 + $0xf8] sm:$0xff]
    %v3663 = vsel %vm98, %v3655, %v3659
    %v3664 = vsel %vm99, %v3656, %v3660
    %v3665 = vsel %vm100, %v3657, %v3661
    %v3666 = vsel %vm101, %v3658, %v3662
    %v3667 = vadd.f32 %v3663, %v3608
    %v3668 = vadd.f32 %v3664, %v3610
    %v3669 = vadd.f32 %v3665, %v3649
    %v3670 = vadd.f32 %v3666, %v3651
    %v3671 = vxor.u32 %v3667, 2147483648
    %v3672 = vxor.u32 %v3668, 2147483648
    %v3673 = vxor.u32 %v3669, 2147483648
    %v3674 = vmul.f32 %v3671, 1.442695
    %v3675 = vpow.pop %v3674
    %v3676 = vmul.f32 %v3672, 1.442695
    %v3677 = vpow.pop %v3676
    %v3678 = vmul.f32 %v3673, 1.442695
    %v3679 = vpow.pop %v3678
    %v3680 = vadd.f32 %v3675, 1.0
    %v3681 = vadd.f32 %v3677, 1.0
    %v3682 = vadd.f32 %v3679, 1.0
    %v3683 = vrcp.pop %v3680
    %v3684 = vmul.f32 1.0, %v3683
    %v3685 = vrcp.pop %v3681
    %v3686 = vmul.f32 1.0, %v3685
    %v3687 = vrcp.pop %v3682
    %v3688 = vmul.f32 1.0, %v3687
    %v3689 = vtanh.pop %v3670
    %v3690 = vmul.f32 %v3686, 0.0
    %v3691 = vmul.f32 %v3684, %v3689
    %v3692 = vadd.f32 %v3690, %v3691
    %v3693 = vtanh.pop %v3692
    %v3694 = vmul.f32 %v3688, %v3693
    %3695 = vst.msk [vmem:[#allocation3] sm:$0xff] %vm754, %v3694
    %3696 = vst.msk [vmem:[#allocation3 + $0x38] sm:$0xff] %vm756, %v3694
    %v3697 = vpack.c.bf16 %v3694, %v3694
    %v3698 = vld [vmem:[#allocation10] sm:$0xff]
    %v3699 = vld [vmem:[#allocation10 + $0x8] sm:$0xff]
    %v3700 = vld [vmem:[#allocation10 + $0x10] sm:$0xff]
    %v3701 = vld [vmem:[#allocation10 + $0x18] sm:$0xff]
    %v3702 = vld [vmem:[#allocation10 + $0x20] sm:$0xff]
    %v3703 = vld [vmem:[#allocation10 + $0x28] sm:$0xff]
    %v3704 = vld [vmem:[#allocation10 + $0x30] sm:$0xff]
    %v3705 = vld [vmem:[#allocation10 + $0x38] sm:$0xff]
    %v3706 = vld [vmem:[#allocation10 + $0x40] sm:$0xff]
    %v3707 = vld [vmem:[#allocation10 + $0x48] sm:$0xff]
    %v3708 = vld [vmem:[#allocation10 + $0x50] sm:$0xff]
    %v3709 = vld [vmem:[#allocation10 + $0x58] sm:$0xff]
    %v3710 = vld [vmem:[#allocation10 + $0x60] sm:$0xff]
    %v3711 = vld [vmem:[#allocation10 + $0x68] sm:$0xff]
    %v3712 = vld [vmem:[#allocation10 + $0x70] sm:$0xff]
    %v3713 = vld [vmem:[#allocation10 + $0x78] sm:$0xff]
    %v3714 = vld [vmem:[#allocation10 + $0x80] sm:$0xff]
    %v3715 = vld [vmem:[#allocation10 + $0x88] sm:$0xff]
    %v3716 = vld [vmem:[#allocation10 + $0x90] sm:$0xff]
    %v3717 = vld [vmem:[#allocation10 + $0x98] sm:$0xff]
    %v3718 = vld [vmem:[#allocation10 + $0xa0] sm:$0xff]
    %v3719 = vld [vmem:[#allocation10 + $0xa8] sm:$0xff]
    %v3720 = vld [vmem:[#allocation10 + $0xb0] sm:$0xff]
    %v3721 = vld [vmem:[#allocation10 + $0xb8] sm:$0xff]
    %v3722 = vld [vmem:[#allocation10 + $0xc0] sm:$0xff]
    %v3723 = vld [vmem:[#allocation10 + $0xc8] sm:$0xff]
    %v3724 = vld [vmem:[#allocation10 + $0xd0] sm:$0xff]
    %v3725 = vld [vmem:[#allocation10 + $0xd8] sm:$0xff]
    %v3726 = vld [vmem:[#allocation10 + $0xe0] sm:$0xff]
    %v3727 = vld [vmem:[#allocation10 + $0xe8] sm:$0xff]
    %v3728 = vld [vmem:[#allocation10 + $0xf0] sm:$0xff]
    %v3729 = vld [vmem:[#allocation10 + $0xf8] sm:$0xff]
    %v3762 = vunpack.c.l.b16 %v3698
    %v3763 = vunpack.c.h.b16 %v3698
    %v3764 = vunpack.c.l.b16 %v3699
    %v3765 = vunpack.c.h.b16 %v3699
    %v3766 = vunpack.c.l.b16 %v3700
    %v3767 = vunpack.c.h.b16 %v3700
    %v3768 = vunpack.c.l.b16 %v3701
    %v3769 = vunpack.c.h.b16 %v3701
    %v3770 = vunpack.c.l.b16 %v3702
    %v3771 = vunpack.c.h.b16 %v3702
    %v3772 = vunpack.c.l.b16 %v3703
    %v3773 = vunpack.c.h.b16 %v3703
    %v3774 = vunpack.c.l.b16 %v3704
    %v3775 = vunpack.c.h.b16 %v3704
    %v3776 = vunpack.c.l.b16 %v3705
    %v3777 = vunpack.c.h.b16 %v3705
    %v3778 = vunpack.c.l.b16 %v3706
    %v3779 = vunpack.c.h.b16 %v3706
    %v3780 = vunpack.c.l.b16 %v3707
    %v3781 = vunpack.c.h.b16 %v3707
    %v3782 = vunpack.c.l.b16 %v3708
    %v3783 = vunpack.c.h.b16 %v3708
    %v3784 = vunpack.c.l.b16 %v3709
    %v3785 = vunpack.c.h.b16 %v3709
    %v3786 = vunpack.c.l.b16 %v3710
    %v3787 = vunpack.c.h.b16 %v3710
    %v3788 = vunpack.c.l.b16 %v3711
    %v3789 = vunpack.c.h.b16 %v3711
    %v3790 = vunpack.c.l.b16 %v3712
    %v3791 = vunpack.c.h.b16 %v3712
    %v3792 = vunpack.c.l.b16 %v3713
    %v3793 = vunpack.c.h.b16 %v3713
    %v3794 = vunpack.c.l.b16 %v3714
    %v3795 = vunpack.c.h.b16 %v3714
    %v3796 = vunpack.c.l.b16 %v3715
    %v3797 = vunpack.c.h.b16 %v3715
    %v3798 = vunpack.c.l.b16 %v3716
    %v3799 = vunpack.c.h.b16 %v3716
    %v3800 = vunpack.c.l.b16 %v3717
    %v3801 = vunpack.c.h.b16 %v3717
    %v3802 = vunpack.c.l.b16 %v3718
    %v3803 = vunpack.c.h.b16 %v3718
    %v3804 = vunpack.c.l.b16 %v3719
    %v3805 = vunpack.c.h.b16 %v3719
    %v3806 = vunpack.c.l.b16 %v3720
    %v3807 = vunpack.c.h.b16 %v3720
    %v3808 = vunpack.c.l.b16 %v3721
    %v3809 = vunpack.c.h.b16 %v3721
    %v3810 = vunpack.c.l.b16 %v3722
    %v3811 = vunpack.c.h.b16 %v3722
    %v3812 = vunpack.c.l.b16 %v3723
    %v3813 = vunpack.c.h.b16 %v3723
    %v3814 = vunpack.c.l.b16 %v3724
    %v3815 = vunpack.c.h.b16 %v3724
    %v3816 = vunpack.c.l.b16 %v3725
    %v3817 = vunpack.c.h.b16 %v3725
    %v3818 = vunpack.c.l.b16 %v3726
    %v3819 = vunpack.c.h.b16 %v3726
    %v3820 = vunpack.c.l.b16 %v3727
    %v3821 = vunpack.c.h.b16 %v3727
    %v3822 = vunpack.c.l.b16 %v3728
    %v3823 = vunpack.c.h.b16 %v3728
    %v3824 = vunpack.c.l.b16 %v3729
    %v3825 = vunpack.c.h.b16 %v3729
    %v3826 = vpack.c.b16 %v3766, %v3762
    %v3827 = vpack.c.b16 %v3767, %v3763
    %v3828 = vpack.c.b16 %v3768, %v3764
    %v3829 = vpack.c.b16 %v3769, %v3765
    %v3830 = vpack.c.b16 %v3774, %v3770
    %v3831 = vpack.c.b16 %v3775, %v3771
    %v3832 = vpack.c.b16 %v3776, %v3772
    %v3833 = vpack.c.b16 %v3777, %v3773
    %v3834 = vpack.c.b16 %v3782, %v3778
    %v3835 = vpack.c.b16 %v3783, %v3779
    %v3836 = vpack.c.b16 %v3784, %v3780
    %v3837 = vpack.c.b16 %v3785, %v3781
    %v3838 = vpack.c.b16 %v3790, %v3786
    %v3839 = vpack.c.b16 %v3791, %v3787
    %v3840 = vpack.c.b16 %v3792, %v3788
    %v3841 = vpack.c.b16 %v3793, %v3789
    %v3842 = vpack.c.b16 %v3798, %v3794
    %v3843 = vpack.c.b16 %v3799, %v3795
    %v3844 = vpack.c.b16 %v3800, %v3796
    %v3845 = vpack.c.b16 %v3801, %v3797
    %v3846 = vpack.c.b16 %v3806, %v3802
    %v3847 = vpack.c.b16 %v3807, %v3803
    %v3848 = vpack.c.b16 %v3808, %v3804
    %v3849 = vpack.c.b16 %v3809, %v3805
    %v3850 = vpack.c.b16 %v3814, %v3810
    %v3851 = vpack.c.b16 %v3815, %v3811
    %v3852 = vpack.c.b16 %v3816, %v3812
    %v3853 = vpack.c.b16 %v3817, %v3813
    %v3854 = vpack.c.b16 %v3822, %v3818
    %v3855 = vpack.c.b16 %v3823, %v3819
    %v3856 = vpack.c.b16 %v3824, %v3820
    %v3857 = vpack.c.b16 %v3825, %v3821
    %3890 = vmatprep.subr.bf16.mxu0 %v3827
    %3891 = vmatpush1.bf16.msra.mxu0 %v3826
    %3892 = vmatprep.subr.bf16.mxu0 %v3831
    %3893 = vmatpush1.bf16.msra.mxu0 %v3830
    %3894 = vmatprep.subr.bf16.mxu0 %v3835
    %3895 = vmatpush1.bf16.msra.mxu0 %v3834
    %3896 = vmatprep.subr.bf16.mxu0 %v3839
    %3897 = vmatpush1.bf16.msra.mxu0 %v3838
    %3898 = vmatprep.subr.bf16.mxu0 %v3843
    %3899 = vmatpush1.bf16.msra.mxu0 %v3842
    %3900 = vmatprep.subr.bf16.mxu0 %v3847
    %3901 = vmatpush1.bf16.msra.mxu0 %v3846
    %3902 = vmatprep.subr.bf16.mxu0 %v3851
    %3903 = vmatpush1.bf16.msra.mxu0 %v3850
    %3904 = vmatprep.subr.bf16.mxu0 %v3855
    %3905 = vmatpush1.bf16.msra.mxu0 %v3854
    %3906 = vmatprep.subr.bf16.mxu0 0
    %3907 = vmatpush1.bf16.msra.mxu0 0
    %3908 = vmatprep.subr.bf16.mxu0 0
    %3909 = vmatpush1.bf16.msra.mxu0 0
    %3910 = vmatprep.subr.bf16.mxu0 0
    %3911 = vmatpush1.bf16.msra.mxu0 0
    %3912 = vmatprep.subr.bf16.mxu0 0
    %3913 = vmatpush1.bf16.msra.mxu0 0
    %3914 = vmatprep.subr.bf16.mxu0 0
    %3915 = vmatpush1.bf16.msra.mxu0 0
    %3916 = vmatprep.subr.bf16.mxu0 0
    %3917 = vmatpush1.bf16.msra.mxu0 0
    %3918 = vmatprep.subr.bf16.mxu0 0
    %3919 = vmatpush1.bf16.msra.mxu0 0
    %3920 = vmatprep.subr.bf16.mxu0 0
    %3921 = vmatpush1.bf16.msra.mxu0 0
    %3922 = vmatprep.mubr.bf16.mxu0 0
    %3923 = vmatmul.mubr.bf16.gmra.mrb[0].mxu0 %v3697
    %v3924 = vpop.f32.mrb[0].mxu0
    %v3925 = vadd.f32 0.0, %v3924
    %v3926 = vpop.f32.mrb[0].mxu0
    %v3927 = vadd.f32 0.0, %v3926
    %v3928 = vpop.f32.mrb[0].mxu0
    %v3929 = vpop.f32.mrb[0].mxu0
    %3930 = vdwg.mxu0
    %3931 = vmatprep.subr.bf16.mxu0 %v3829
    %3932 = vmatpush1.bf16.msra.mxu0 %v3828
    %3933 = vmatprep.subr.bf16.mxu0 %v3833
    %3934 = vmatpush1.bf16.msra.mxu0 %v3832
    %3935 = vmatprep.subr.bf16.mxu0 %v3837
    %3936 = vmatpush1.bf16.msra.mxu0 %v3836
    %3937 = vmatprep.subr.bf16.mxu0 %v3841
    %3938 = vmatpush1.bf16.msra.mxu0 %v3840
    %3939 = vmatprep.subr.bf16.mxu0 %v3845
    %3940 = vmatpush1.bf16.msra.mxu0 %v3844
    %3941 = vmatprep.subr.bf16.mxu0 %v3849
    %3942 = vmatpush1.bf16.msra.mxu0 %v3848
    %3943 = vmatprep.subr.bf16.mxu0 %v3853
    %3944 = vmatpush1.bf16.msra.mxu0 %v3852
    %3945 = vmatprep.subr.bf16.mxu0 %v3857
    %3946 = vmatpush1.bf16.msra.mxu0 %v3856
    %3947 = vmatprep.subr.bf16.mxu0 0
    %3948 = vmatpush1.bf16.msra.mxu0 0
    %3949 = vmatprep.subr.bf16.mxu0 0
    %3950 = vmatpush1.bf16.msra.mxu0 0
    %3951 = vmatprep.subr.bf16.mxu0 0
    %3952 = vmatpush1.bf16.msra.mxu0 0
    %3953 = vmatprep.subr.bf16.mxu0 0
    %3954 = vmatpush1.bf16.msra.mxu0 0
    %3955 = vmatprep.subr.bf16.mxu0 0
    %3956 = vmatpush1.bf16.msra.mxu0 0
    %3957 = vmatprep.subr.bf16.mxu0 0
    %3958 = vmatpush1.bf16.msra.mxu0 0
    %3959 = vmatprep.subr.bf16.mxu0 0
    %3960 = vmatpush1.bf16.msra.mxu0 0
    %3961 = vmatprep.subr.bf16.mxu0 0
    %3962 = vmatpush1.bf16.msra.mxu0 0
    %3963 = vmatprep.mubr.bf16.mxu0 0
    %3964 = vmatmul.mubr.bf16.gmra.mrb[0].mxu0 %v3697
    %v3965 = vpop.f32.mrb[0].mxu0
    %v3966 = vadd.f32 0.0, %v3965
    %v3967 = vpop.f32.mrb[0].mxu0
    %v3968 = vadd.f32 0.0, %v3967
    %v3969 = vpop.f32.mrb[0].mxu0
    %v3970 = vpop.f32.mrb[0].mxu0
    %3971 = vdwg.mxu0
    %v3972 = vld [vmem:[#allocation2 + $0x20] sm:$0xff]
    %v3973 = vld [vmem:[#allocation2 + $0x28] sm:$0xff]
    %v3974 = vld [vmem:[#allocation2 + $0x30] sm:$0xff]
    %v3975 = vld [vmem:[#allocation2 + $0x38] sm:$0xff]
    %v3976 = vld [vmem:[#allocation2 + $0xc0] sm:$0xff]
    %v3977 = vld [vmem:[#allocation2 + $0xc8] sm:$0xff]
    %v3978 = vld [vmem:[#allocation2 + $0xd0] sm:$0xff]
    %v3979 = vld [vmem:[#allocation2 + $0xd8] sm:$0xff]
    %v3980 = vsel %vm98, %v3972, %v3976
    %v3981 = vsel %vm99, %v3973, %v3977
    %v3982 = vsel %vm100, %v3974, %v3978
    %v3983 = vsel %vm101, %v3975, %v3979
    %v3984 = vadd.f32 %v3980, %v3925
    %v3985 = vadd.f32 %v3981, %v3927
    %v3986 = vadd.f32 %v3982, %v3966
    %v3987 = vadd.f32 %v3983, %v3968
    %v3988 = vxor.u32 %v3984, 2147483648
    %v3989 = vxor.u32 %v3985, 2147483648
    %v3990 = vxor.u32 %v3986, 2147483648
    %v3991 = vmul.f32 %v3988, 1.442695
    %v3992 = vpow.pop %v3991
    %v3993 = vmul.f32 %v3989, 1.442695
    %v3994 = vpow.pop %v3993
    %v3995 = vmul.f32 %v3990, 1.442695
    %v3996 = vpow.pop %v3995
    %v3997 = vadd.f32 %v3992, 1.0
    %v3998 = vadd.f32 %v3994, 1.0
    %v3999 = vadd.f32 %v3996, 1.0
    %v4000 = vrcp.pop %v3997
    %v4001 = vmul.f32 1.0, %v4000
    %v4002 = vrcp.pop %v3998
    %v4003 = vmul.f32 1.0, %v4002
    %v4004 = vrcp.pop %v3999
    %v4005 = vmul.f32 1.0, %v4004
    %v4006 = vtanh.pop %v3987
    %v4007 = vmul.f32 %v4003, %v3692
    %v4008 = vmul.f32 %v4001, %v4006
    %v4009 = vadd.f32 %v4007, %v4008
    %v4010 = vtanh.pop %v4009
    %v4011 = vmul.f32 %v4005, %v4010
    %4012 = vst.msk [vmem:[#allocation3 + $0x8] sm:$0xff] %vm754, %v4011
    %4013 = vst.msk [vmem:[#allocation3 + $0x30] sm:$0xff] %vm756, %v4011
    %v4014 = vpack.c.bf16 %v4011, %v4011
    %v4015 = vld [vmem:[#allocation10] sm:$0xff]
    %v4016 = vld [vmem:[#allocation10 + $0x8] sm:$0xff]
    %v4017 = vld [vmem:[#allocation10 + $0x10] sm:$0xff]
    %v4018 = vld [vmem:[#allocation10 + $0x18] sm:$0xff]
    %v4019 = vld [vmem:[#allocation10 + $0x20] sm:$0xff]
    %v4020 = vld [vmem:[#allocation10 + $0x28] sm:$0xff]
    %v4021 = vld [vmem:[#allocation10 + $0x30] sm:$0xff]
    %v4022 = vld [vmem:[#allocation10 + $0x38] sm:$0xff]
    %v4023 = vld [vmem:[#allocation10 + $0x40] sm:$0xff]
    %v4024 = vld [vmem:[#allocation10 + $0x48] sm:$0xff]
    %v4025 = vld [vmem:[#allocation10 + $0x50] sm:$0xff]
    %v4026 = vld [vmem:[#allocation10 + $0x58] sm:$0xff]
    %v4027 = vld [vmem:[#allocation10 + $0x60] sm:$0xff]
    %v4028 = vld [vmem:[#allocation10 + $0x68] sm:$0xff]
    %v4029 = vld [vmem:[#allocation10 + $0x70] sm:$0xff]
    %v4030 = vld [vmem:[#allocation10 + $0x78] sm:$0xff]
    %v4031 = vld [vmem:[#allocation10 + $0x80] sm:$0xff]
    %v4032 = vld [vmem:[#allocation10 + $0x88] sm:$0xff]
    %v4033 = vld [vmem:[#allocation10 + $0x90] sm:$0xff]
    %v4034 = vld [vmem:[#allocation10 + $0x98] sm:$0xff]
    %v4035 = vld [vmem:[#allocation10 + $0xa0] sm:$0xff]
    %v4036 = vld [vmem:[#allocation10 + $0xa8] sm:$0xff]
    %v4037 = vld [vmem:[#allocation10 + $0xb0] sm:$0xff]
    %v4038 = vld [vmem:[#allocation10 + $0xb8] sm:$0xff]
    %v4039 = vld [vmem:[#allocation10 + $0xc0] sm:$0xff]
    %v4040 = vld [vmem:[#allocation10 + $0xc8] sm:$0xff]
    %v4041 = vld [vmem:[#allocation10 + $0xd0] sm:$0xff]
    %v4042 = vld [vmem:[#allocation10 + $0xd8] sm:$0xff]
    %v4043 = vld [vmem:[#allocation10 + $0xe0] sm:$0xff]
    %v4044 = vld [vmem:[#allocation10 + $0xe8] sm:$0xff]
    %v4045 = vld [vmem:[#allocation10 + $0xf0] sm:$0xff]
    %v4046 = vld [vmem:[#allocation10 + $0xf8] sm:$0xff]
    %v4079 = vunpack.c.l.b16 %v4015
    %v4080 = vunpack.c.h.b16 %v4015
    %v4081 = vunpack.c.l.b16 %v4016
    %v4082 = vunpack.c.h.b16 %v4016
    %v4083 = vunpack.c.l.b16 %v4017
    %v4084 = vunpack.c.h.b16 %v4017
    %v4085 = vunpack.c.l.b16 %v4018
    %v4086 = vunpack.c.h.b16 %v4018
    %v4087 = vunpack.c.l.b16 %v4019
    %v4088 = vunpack.c.h.b16 %v4019
    %v4089 = vunpack.c.l.b16 %v4020
    %v4090 = vunpack.c.h.b16 %v4020
    %v4091 = vunpack.c.l.b16 %v4021
    %v4092 = vunpack.c.h.b16 %v4021
    %v4093 = vunpack.c.l.b16 %v4022
    %v4094 = vunpack.c.h.b16 %v4022
    %v4095 = vunpack.c.l.b16 %v4023
    %v4096 = vunpack.c.h.b16 %v4023
    %v4097 = vunpack.c.l.b16 %v4024
    %v4098 = vunpack.c.h.b16 %v4024
    %v4099 = vunpack.c.l.b16 %v4025
    %v4100 = vunpack.c.h.b16 %v4025
    %v4101 = vunpack.c.l.b16 %v4026
    %v4102 = vunpack.c.h.b16 %v4026
    %v4103 = vunpack.c.l.b16 %v4027
    %v4104 = vunpack.c.h.b16 %v4027
    %v4105 = vunpack.c.l.b16 %v4028
    %v4106 = vunpack.c.h.b16 %v4028
    %v4107 = vunpack.c.l.b16 %v4029
    %v4108 = vunpack.c.h.b16 %v4029
    %v4109 = vunpack.c.l.b16 %v4030
    %v4110 = vunpack.c.h.b16 %v4030
    %v4111 = vunpack.c.l.b16 %v4031
    %v4112 = vunpack.c.h.b16 %v4031
    %v4113 = vunpack.c.l.b16 %v4032
    %v4114 = vunpack.c.h.b16 %v4032
    %v4115 = vunpack.c.l.b16 %v4033
    %v4116 = vunpack.c.h.b16 %v4033
    %v4117 = vunpack.c.l.b16 %v4034
    %v4118 = vunpack.c.h.b16 %v4034
    %v4119 = vunpack.c.l.b16 %v4035
    %v4120 = vunpack.c.h.b16 %v4035
    %v4121 = vunpack.c.l.b16 %v4036
    %v4122 = vunpack.c.h.b16 %v4036
    %v4123 = vunpack.c.l.b16 %v4037
    %v4124 = vunpack.c.h.b16 %v4037
    %v4125 = vunpack.c.l.b16 %v4038
    %v4126 = vunpack.c.h.b16 %v4038
    %v4127 = vunpack.c.l.b16 %v4039
    %v4128 = vunpack.c.h.b16 %v4039
    %v4129 = vunpack.c.l.b16 %v4040
    %v4130 = vunpack.c.h.b16 %v4040
    %v4131 = vunpack.c.l.b16 %v4041
    %v4132 = vunpack.c.h.b16 %v4041
    %v4133 = vunpack.c.l.b16 %v4042
    %v4134 = vunpack.c.h.b16 %v4042
    %v4135 = vunpack.c.l.b16 %v4043
    %v4136 = vunpack.c.h.b16 %v4043
    %v4137 = vunpack.c.l.b16 %v4044
    %v4138 = vunpack.c.h.b16 %v4044
    %v4139 = vunpack.c.l.b16 %v4045
    %v4140 = vunpack.c.h.b16 %v4045
    %v4141 = vunpack.c.l.b16 %v4046
    %v4142 = vunpack.c.h.b16 %v4046
    %v4143 = vpack.c.b16 %v4083, %v4079
    %v4144 = vpack.c.b16 %v4084, %v4080
    %v4145 = vpack.c.b16 %v4085, %v4081
    %v4146 = vpack.c.b16 %v4086, %v4082
    %v4147 = vpack.c.b16 %v4091, %v4087
    %v4148 = vpack.c.b16 %v4092, %v4088
    %v4149 = vpack.c.b16 %v4093, %v4089
    %v4150 = vpack.c.b16 %v4094, %v4090
    %v4151 = vpack.c.b16 %v4099, %v4095
    %v4152 = vpack.c.b16 %v4100, %v4096
    %v4153 = vpack.c.b16 %v4101, %v4097
    %v4154 = vpack.c.b16 %v4102, %v4098
    %v4155 = vpack.c.b16 %v4107, %v4103
    %v4156 = vpack.c.b16 %v4108, %v4104
    %v4157 = vpack.c.b16 %v4109, %v4105
    %v4158 = vpack.c.b16 %v4110, %v4106
    %v4159 = vpack.c.b16 %v4115, %v4111
    %v4160 = vpack.c.b16 %v4116, %v4112
    %v4161 = vpack.c.b16 %v4117, %v4113
    %v4162 = vpack.c.b16 %v4118, %v4114
    %v4163 = vpack.c.b16 %v4123, %v4119
    %v4164 = vpack.c.b16 %v4124, %v4120
    %v4165 = vpack.c.b16 %v4125, %v4121
    %v4166 = vpack.c.b16 %v4126, %v4122
    %v4167 = vpack.c.b16 %v4131, %v4127
    %v4168 = vpack.c.b16 %v4132, %v4128
    %v4169 = vpack.c.b16 %v4133, %v4129
    %v4170 = vpack.c.b16 %v4134, %v4130
    %v4171 = vpack.c.b16 %v4139, %v4135
    %v4172 = vpack.c.b16 %v4140, %v4136
    %v4173 = vpack.c.b16 %v4141, %v4137
    %v4174 = vpack.c.b16 %v4142, %v4138
    %4207 = vmatprep.subr.bf16.mxu0 %v4144
    %4208 = vmatpush1.bf16.msra.mxu0 %v4143
    %4209 = vmatprep.subr.bf16.mxu0 %v4148
    %4210 = vmatpush1.bf16.msra.mxu0 %v4147
    %4211 = vmatprep.subr.bf16.mxu0 %v4152
    %4212 = vmatpush1.bf16.msra.mxu0 %v4151
    %4213 = vmatprep.subr.bf16.mxu0 %v4156
    %4214 = vmatpush1.bf16.msra.mxu0 %v4155
    %4215 = vmatprep.subr.bf16.mxu0 %v4160
    %4216 = vmatpush1.bf16.msra.mxu0 %v4159
    %4217 = vmatprep.subr.bf16.mxu0 %v4164
    %4218 = vmatpush1.bf16.msra.mxu0 %v4163
    %4219 = vmatprep.subr.bf16.mxu0 %v4168
    %4220 = vmatpush1.bf16.msra.mxu0 %v4167
    %4221 = vmatprep.subr.bf16.mxu0 %v4172
    %4222 = vmatpush1.bf16.msra.mxu0 %v4171
    %4223 = vmatprep.subr.bf16.mxu0 0
    %4224 = vmatpush1.bf16.msra.mxu0 0
    %4225 = vmatprep.subr.bf16.mxu0 0
    %4226 = vmatpush1.bf16.msra.mxu0 0
    %4227 = vmatprep.subr.bf16.mxu0 0
    %4228 = vmatpush1.bf16.msra.mxu0 0
    %4229 = vmatprep.subr.bf16.mxu0 0
    %4230 = vmatpush1.bf16.msra.mxu0 0
    %4231 = vmatprep.subr.bf16.mxu0 0
    %4232 = vmatpush1.bf16.msra.mxu0 0
    %4233 = vmatprep.subr.bf16.mxu0 0
    %4234 = vmatpush1.bf16.msra.mxu0 0
    %4235 = vmatprep.subr.bf16.mxu0 0
    %4236 = vmatpush1.bf16.msra.mxu0 0
    %4237 = vmatprep.subr.bf16.mxu0 0
    %4238 = vmatpush1.bf16.msra.mxu0 0
    %4239 = vmatprep.mubr.bf16.mxu0 0
    %4240 = vmatmul.mubr.bf16.gmra.mrb[0].mxu0 %v4014
    %v4241 = vpop.f32.mrb[0].mxu0
    %v4242 = vadd.f32 0.0, %v4241
    %v4243 = vpop.f32.mrb[0].mxu0
    %v4244 = vadd.f32 0.0, %v4243
    %v4245 = vpop.f32.mrb[0].mxu0
    %v4246 = vpop.f32.mrb[0].mxu0
    %4247 = vdwg.mxu0
    %4248 = vmatprep.subr.bf16.mxu0 %v4146
    %4249 = vmatpush1.bf16.msra.mxu0 %v4145
    %4250 = vmatprep.subr.bf16.mxu0 %v4150
    %4251 = vmatpush1.bf16.msra.mxu0 %v4149
    %4252 = vmatprep.subr.bf16.mxu0 %v4154
    %4253 = vmatpush1.bf16.msra.mxu0 %v4153
    %4254 = vmatprep.subr.bf16.mxu0 %v4158
    %4255 = vmatpush1.bf16.msra.mxu0 %v4157
    %4256 = vmatprep.subr.bf16.mxu0 %v4162
    %4257 = vmatpush1.bf16.msra.mxu0 %v4161
    %4258 = vmatprep.subr.bf16.mxu0 %v4166
    %4259 = vmatpush1.bf16.msra.mxu0 %v4165
    %4260 = vmatprep.subr.bf16.mxu0 %v4170
    %4261 = vmatpush1.bf16.msra.mxu0 %v4169
    %4262 = vmatprep.subr.bf16.mxu0 %v4174
    %4263 = vmatpush1.bf16.msra.mxu0 %v4173
    %4264 = vmatprep.subr.bf16.mxu0 0
    %4265 = vmatpush1.bf16.msra.mxu0 0
    %4266 = vmatprep.subr.bf16.mxu0 0
    %4267 = vmatpush1.bf16.msra.mxu0 0
    %4268 = vmatprep.subr.bf16.mxu0 0
    %4269 = vmatpush1.bf16.msra.mxu0 0
    %4270 = vmatprep.subr.bf16.mxu0 0
    %4271 = vmatpush1.bf16.msra.mxu0 0
    %4272 = vmatprep.subr.bf16.mxu0 0
    %4273 = vmatpush1.bf16.msra.mxu0 0
    %4274 = vmatprep.subr.bf16.mxu0 0
    %4275 = vmatpush1.bf16.msra.mxu0 0
    %4276 = vmatprep.subr.bf16.mxu0 0
    %4277 = vmatpush1.bf16.msra.mxu0 0
    %4278 = vmatprep.subr.bf16.mxu0 0
    %4279 = vmatpush1.bf16.msra.mxu0 0
    %4280 = vmatprep.mubr.bf16.mxu0 0
    %4281 = vmatmul.mubr.bf16.gmra.mrb[0].mxu0 %v4014
    %v4282 = vpop.f32.mrb[0].mxu0
    %v4283 = vadd.f32 0.0, %v4282
    %v4284 = vpop.f32.mrb[0].mxu0
    %v4285 = vadd.f32 0.0, %v4284
    %v4286 = vpop.f32.mrb[0].mxu0
    %v4287 = vpop.f32.mrb[0].mxu0
    %4288 = vdwg.mxu0
    %v4289 = vld [vmem:[#allocation2 + $0x40] sm:$0xff]
    %v4290 = vld [vmem:[#allocation2 + $0x48] sm:$0xff]
    %v4291 = vld [vmem:[#allocation2 + $0x50] sm:$0xff]
    %v4292 = vld [vmem:[#allocation2 + $0x58] sm:$0xff]
    %v4293 = vld [vmem:[#allocation2 + $0xa0] sm:$0xff]
    %v4294 = vld [vmem:[#allocation2 + $0xa8] sm:$0xff]
    %v4295 = vld [vmem:[#allocation2 + $0xb0] sm:$0xff]
    %v4296 = vld [vmem:[#allocation2 + $0xb8] sm:$0xff]
    %v4297 = vsel %vm98, %v4289, %v4293
    %v4298 = vsel %vm99, %v4290, %v4294
    %v4299 = vsel %vm100, %v4291, %v4295
    %v4300 = vsel %vm101, %v4292, %v4296
    %v4301 = vadd.f32 %v4297, %v4242
    %v4302 = vadd.f32 %v4298, %v4244
    %v4303 = vadd.f32 %v4299, %v4283
    %v4304 = vadd.f32 %v4300, %v4285
    %v4305 = vxor.u32 %v4301, 2147483648
    %v4306 = vxor.u32 %v4302, 2147483648
    %v4307 = vxor.u32 %v4303, 2147483648
    %v4308 = vmul.f32 %v4305, 1.442695
    %v4309 = vpow.pop %v4308
    %v4310 = vmul.f32 %v4306, 1.442695
    %v4311 = vpow.pop %v4310
    %v4312 = vmul.f32 %v4307, 1.442695
    %v4313 = vpow.pop %v4312
    %v4314 = vadd.f32 %v4309, 1.0
    %v4315 = vadd.f32 %v4311, 1.0
    %v4316 = vadd.f32 %v4313, 1.0
    %v4317 = vrcp.pop %v4314
    %v4318 = vmul.f32 1.0, %v4317
    %v4319 = vrcp.pop %v4315
    %v4320 = vmul.f32 1.0, %v4319
    %v4321 = vrcp.pop %v4316
    %v4322 = vmul.f32 1.0, %v4321
    %v4323 = vtanh.pop %v4304
    %v4324 = vmul.f32 %v4320, %v4009
    %v4325 = vmul.f32 %v4318, %v4323
    %v4326 = vadd.f32 %v4324, %v4325
    %v4327 = vtanh.pop %v4326
    %v4328 = vmul.f32 %v4322, %v4327
    %4329 = vst.msk [vmem:[#allocation3 + $0x10] sm:$0xff] %vm754, %v4328
    %4330 = vst.msk [vmem:[#allocation3 + $0x28] sm:$0xff] %vm756, %v4328
    %v4331 = vpack.c.bf16 %v4328, %v4328
    %v4332 = vld [vmem:[#allocation10] sm:$0xff]
    %v4333 = vld [vmem:[#allocation10 + $0x8] sm:$0xff]
    %v4334 = vld [vmem:[#allocation10 + $0x10] sm:$0xff]
    %v4335 = vld [vmem:[#allocation10 + $0x18] sm:$0xff]
    %v4336 = vld [vmem:[#allocation10 + $0x20] sm:$0xff]
    %v4337 = vld [vmem:[#allocation10 + $0x28] sm:$0xff]
    %v4338 = vld [vmem:[#allocation10 + $0x30] sm:$0xff]
    %v4339 = vld [vmem:[#allocation10 + $0x38] sm:$0xff]
    %v4340 = vld [vmem:[#allocation10 + $0x40] sm:$0xff]
    %v4341 = vld [vmem:[#allocation10 + $0x48] sm:$0xff]
    %v4342 = vld [vmem:[#allocation10 + $0x50] sm:$0xff]
    %v4343 = vld [vmem:[#allocation10 + $0x58] sm:$0xff]
    %v4344 = vld [vmem:[#allocation10 + $0x60] sm:$0xff]
    %v4345 = vld [vmem:[#allocation10 + $0x68] sm:$0xff]
    %v4346 = vld [vmem:[#allocation10 + $0x70] sm:$0xff]
    %v4347 = vld [vmem:[#allocation10 + $0x78] sm:$0xff]
    %v4348 = vld [vmem:[#allocation10 + $0x80] sm:$0xff]
    %v4349 = vld [vmem:[#allocation10 + $0x88] sm:$0xff]
    %v4350 = vld [vmem:[#allocation10 + $0x90] sm:$0xff]
    %v4351 = vld [vmem:[#allocation10 + $0x98] sm:$0xff]
    %v4352 = vld [vmem:[#allocation10 + $0xa0] sm:$0xff]
    %v4353 = vld [vmem:[#allocation10 + $0xa8] sm:$0xff]
    %v4354 = vld [vmem:[#allocation10 + $0xb0] sm:$0xff]
    %v4355 = vld [vmem:[#allocation10 + $0xb8] sm:$0xff]
    %v4356 = vld [vmem:[#allocation10 + $0xc0] sm:$0xff]
    %v4357 = vld [vmem:[#allocation10 + $0xc8] sm:$0xff]
    %v4358 = vld [vmem:[#allocation10 + $0xd0] sm:$0xff]
    %v4359 = vld [vmem:[#allocation10 + $0xd8] sm:$0xff]
    %v4360 = vld [vmem:[#allocation10 + $0xe0] sm:$0xff]
    %v4361 = vld [vmem:[#allocation10 + $0xe8] sm:$0xff]
    %v4362 = vld [vmem:[#allocation10 + $0xf0] sm:$0xff]
    %v4363 = vld [vmem:[#allocation10 + $0xf8] sm:$0xff]
    %v4396 = vunpack.c.l.b16 %v4332
    %v4397 = vunpack.c.h.b16 %v4332
    %v4398 = vunpack.c.l.b16 %v4333
    %v4399 = vunpack.c.h.b16 %v4333
    %v4400 = vunpack.c.l.b16 %v4334
    %v4401 = vunpack.c.h.b16 %v4334
    %v4402 = vunpack.c.l.b16 %v4335
    %v4403 = vunpack.c.h.b16 %v4335
    %v4404 = vunpack.c.l.b16 %v4336
    %v4405 = vunpack.c.h.b16 %v4336
    %v4406 = vunpack.c.l.b16 %v4337
    %v4407 = vunpack.c.h.b16 %v4337
    %v4408 = vunpack.c.l.b16 %v4338
    %v4409 = vunpack.c.h.b16 %v4338
    %v4410 = vunpack.c.l.b16 %v4339
    %v4411 = vunpack.c.h.b16 %v4339
    %v4412 = vunpack.c.l.b16 %v4340
    %v4413 = vunpack.c.h.b16 %v4340
    %v4414 = vunpack.c.l.b16 %v4341
    %v4415 = vunpack.c.h.b16 %v4341
    %v4416 = vunpack.c.l.b16 %v4342
    %v4417 = vunpack.c.h.b16 %v4342
    %v4418 = vunpack.c.l.b16 %v4343
    %v4419 = vunpack.c.h.b16 %v4343
    %v4420 = vunpack.c.l.b16 %v4344
    %v4421 = vunpack.c.h.b16 %v4344
    %v4422 = vunpack.c.l.b16 %v4345
    %v4423 = vunpack.c.h.b16 %v4345
    %v4424 = vunpack.c.l.b16 %v4346
    %v4425 = vunpack.c.h.b16 %v4346
    %v4426 = vunpack.c.l.b16 %v4347
    %v4427 = vunpack.c.h.b16 %v4347
    %v4428 = vunpack.c.l.b16 %v4348
    %v4429 = vunpack.c.h.b16 %v4348
    %v4430 = vunpack.c.l.b16 %v4349
    %v4431 = vunpack.c.h.b16 %v4349
    %v4432 = vunpack.c.l.b16 %v4350
    %v4433 = vunpack.c.h.b16 %v4350
    %v4434 = vunpack.c.l.b16 %v4351
    %v4435 = vunpack.c.h.b16 %v4351
    %v4436 = vunpack.c.l.b16 %v4352
    %v4437 = vunpack.c.h.b16 %v4352
    %v4438 = vunpack.c.l.b16 %v4353
    %v4439 = vunpack.c.h.b16 %v4353
    %v4440 = vunpack.c.l.b16 %v4354
    %v4441 = vunpack.c.h.b16 %v4354
    %v4442 = vunpack.c.l.b16 %v4355
    %v4443 = vunpack.c.h.b16 %v4355
    %v4444 = vunpack.c.l.b16 %v4356
    %v4445 = vunpack.c.h.b16 %v4356
    %v4446 = vunpack.c.l.b16 %v4357
    %v4447 = vunpack.c.h.b16 %v4357
    %v4448 = vunpack.c.l.b16 %v4358
    %v4449 = vunpack.c.h.b16 %v4358
    %v4450 = vunpack.c.l.b16 %v4359
    %v4451 = vunpack.c.h.b16 %v4359
    %v4452 = vunpack.c.l.b16 %v4360
    %v4453 = vunpack.c.h.b16 %v4360
    %v4454 = vunpack.c.l.b16 %v4361
    %v4455 = vunpack.c.h.b16 %v4361
    %v4456 = vunpack.c.l.b16 %v4362
    %v4457 = vunpack.c.h.b16 %v4362
    %v4458 = vunpack.c.l.b16 %v4363
    %v4459 = vunpack.c.h.b16 %v4363
    %v4460 = vpack.c.b16 %v4400, %v4396
    %v4461 = vpack.c.b16 %v4401, %v4397
    %v4462 = vpack.c.b16 %v4402, %v4398
    %v4463 = vpack.c.b16 %v4403, %v4399
    %v4464 = vpack.c.b16 %v4408, %v4404
    %v4465 = vpack.c.b16 %v4409, %v4405
    %v4466 = vpack.c.b16 %v4410, %v4406
    %v4467 = vpack.c.b16 %v4411, %v4407
    %v4468 = vpack.c.b16 %v4416, %v4412
    %v4469 = vpack.c.b16 %v4417, %v4413
    %v4470 = vpack.c.b16 %v4418, %v4414
    %v4471 = vpack.c.b16 %v4419, %v4415
    %v4472 = vpack.c.b16 %v4424, %v4420
    %v4473 = vpack.c.b16 %v4425, %v4421
    %v4474 = vpack.c.b16 %v4426, %v4422
    %v4475 = vpack.c.b16 %v4427, %v4423
    %v4476 = vpack.c.b16 %v4432, %v4428
    %v4477 = vpack.c.b16 %v4433, %v4429
    %v4478 = vpack.c.b16 %v4434, %v4430
    %v4479 = vpack.c.b16 %v4435, %v4431
    %v4480 = vpack.c.b16 %v4440, %v4436
    %v4481 = vpack.c.b16 %v4441, %v4437
    %v4482 = vpack.c.b16 %v4442, %v4438
    %v4483 = vpack.c.b16 %v4443, %v4439
    %v4484 = vpack.c.b16 %v4448, %v4444
    %v4485 = vpack.c.b16 %v4449, %v4445
    %v4486 = vpack.c.b16 %v4450, %v4446
    %v4487 = vpack.c.b16 %v4451, %v4447
    %v4488 = vpack.c.b16 %v4456, %v4452
    %v4489 = vpack.c.b16 %v4457, %v4453
    %v4490 = vpack.c.b16 %v4458, %v4454
    %v4491 = vpack.c.b16 %v4459, %v4455
    %4524 = vmatprep.subr.bf16.mxu0 %v4461
    %4525 = vmatpush1.bf16.msra.mxu0 %v4460
    %4526 = vmatprep.subr.bf16.mxu0 %v4465
    %4527 = vmatpush1.bf16.msra.mxu0 %v4464
    %4528 = vmatprep.subr.bf16.mxu0 %v4469
    %4529 = vmatpush1.bf16.msra.mxu0 %v4468
    %4530 = vmatprep.subr.bf16.mxu0 %v4473
    %4531 = vmatpush1.bf16.msra.mxu0 %v4472
    %4532 = vmatprep.subr.bf16.mxu0 %v4477
    %4533 = vmatpush1.bf16.msra.mxu0 %v4476
    %4534 = vmatprep.subr.bf16.mxu0 %v4481
    %4535 = vmatpush1.bf16.msra.mxu0 %v4480
    %4536 = vmatprep.subr.bf16.mxu0 %v4485
    %4537 = vmatpush1.bf16.msra.mxu0 %v4484
    %4538 = vmatprep.subr.bf16.mxu0 %v4489
    %4539 = vmatpush1.bf16.msra.mxu0 %v4488
    %4540 = vmatprep.subr.bf16.mxu0 0
    %4541 = vmatpush1.bf16.msra.mxu0 0
    %4542 = vmatprep.subr.bf16.mxu0 0
    %4543 = vmatpush1.bf16.msra.mxu0 0
    %4544 = vmatprep.subr.bf16.mxu0 0
    %4545 = vmatpush1.bf16.msra.mxu0 0
    %4546 = vmatprep.subr.bf16.mxu0 0
    %4547 = vmatpush1.bf16.msra.mxu0 0
    %4548 = vmatprep.subr.bf16.mxu0 0
    %4549 = vmatpush1.bf16.msra.mxu0 0
    %4550 = vmatprep.subr.bf16.mxu0 0
    %4551 = vmatpush1.bf16.msra.mxu0 0
    %4552 = vmatprep.subr.bf16.mxu0 0
    %4553 = vmatpush1.bf16.msra.mxu0 0
    %4554 = vmatprep.subr.bf16.mxu0 0
    %4555 = vmatpush1.bf16.msra.mxu0 0
    %4556 = vmatprep.mubr.bf16.mxu0 0
    %4557 = vmatmul.mubr.bf16.gmra.mrb[0].mxu0 %v4331
    %v4558 = vpop.f32.mrb[0].mxu0
    %v4559 = vadd.f32 0.0, %v4558
    %v4560 = vpop.f32.mrb[0].mxu0
    %v4561 = vadd.f32 0.0, %v4560
    %v4562 = vpop.f32.mrb[0].mxu0
    %v4563 = vpop.f32.mrb[0].mxu0
    %4564 = vdwg.mxu0
    %4565 = vmatprep.subr.bf16.mxu0 %v4463
    %4566 = vmatpush1.bf16.msra.mxu0 %v4462
    %4567 = vmatprep.subr.bf16.mxu0 %v4467
    %4568 = vmatpush1.bf16.msra.mxu0 %v4466
    %4569 = vmatprep.subr.bf16.mxu0 %v4471
    %4570 = vmatpush1.bf16.msra.mxu0 %v4470
    %4571 = vmatprep.subr.bf16.mxu0 %v4475
    %4572 = vmatpush1.bf16.msra.mxu0 %v4474
    %4573 = vmatprep.subr.bf16.mxu0 %v4479
    %4574 = vmatpush1.bf16.msra.mxu0 %v4478
    %4575 = vmatprep.subr.bf16.mxu0 %v4483
    %4576 = vmatpush1.bf16.msra.mxu0 %v4482
    %4577 = vmatprep.subr.bf16.mxu0 %v4487
    %4578 = vmatpush1.bf16.msra.mxu0 %v4486
    %4579 = vmatprep.subr.bf16.mxu0 %v4491
    %4580 = vmatpush1.bf16.msra.mxu0 %v4490
    %4581 = vmatprep.subr.bf16.mxu0 0
    %4582 = vmatpush1.bf16.msra.mxu0 0
    %4583 = vmatprep.subr.bf16.mxu0 0
    %4584 = vmatpush1.bf16.msra.mxu0 0
    %4585 = vmatprep.subr.bf16.mxu0 0
    %4586 = vmatpush1.bf16.msra.mxu0 0
    %4587 = vmatprep.subr.bf16.mxu0 0
    %4588 = vmatpush1.bf16.msra.mxu0 0
    %4589 = vmatprep.subr.bf16.mxu0 0
    %4590 = vmatpush1.bf16.msra.mxu0 0
    %4591 = vmatprep.subr.bf16.mxu0 0
    %4592 = vmatpush1.bf16.msra.mxu0 0
    %4593 = vmatprep.subr.bf16.mxu0 0
    %4594 = vmatpush1.bf16.msra.mxu0 0
    %4595 = vmatprep.subr.bf16.mxu0 0
    %4596 = vmatpush1.bf16.msra.mxu0 0
    %4597 = vmatprep.mubr.bf16.mxu0 0
    %4598 = vmatmul.mubr.bf16.gmra.mrb[0].mxu0 %v4331
    %v4599 = vpop.f32.mrb[0].mxu0
    %v4600 = vadd.f32 0.0, %v4599
    %v4601 = vpop.f32.mrb[0].mxu0
    %v4602 = vadd.f32 0.0, %v4601
    %v4603 = vpop.f32.mrb[0].mxu0
    %v4604 = vpop.f32.mrb[0].mxu0
    %4605 = vdwg.mxu0
    %v4606 = vld [vmem:[#allocation2 + $0x60] sm:$0xff]
    %v4607 = vld [vmem:[#allocation2 + $0x68] sm:$0xff]
    %v4608 = vld [vmem:[#allocation2 + $0x70] sm:$0xff]
    %v4609 = vld [vmem:[#allocation2 + $0x78] sm:$0xff]
    %v4610 = vld [vmem:[#allocation2 + $0x80] sm:$0xff]
    %v4611 = vld [vmem:[#allocation2 + $0x88] sm:$0xff]
    %v4612 = vld [vmem:[#allocation2 + $0x90] sm:$0xff]
    %v4613 = vld [vmem:[#allocation2 + $0x98] sm:$0xff]
    %v4614 = vsel %vm98, %v4606, %v4610
    %v4615 = vsel %vm99, %v4607, %v4611
    %v4616 = vsel %vm100, %v4608, %v4612
    %v4617 = vsel %vm101, %v4609, %v4613
    %v4618 = vadd.f32 %v4614, %v4559
    %v4619 = vadd.f32 %v4615, %v4561
    %v4620 = vadd.f32 %v4616, %v4600
    %v4621 = vadd.f32 %v4617, %v4602
    %v4622 = vxor.u32 %v4618, 2147483648
    %v4623 = vxor.u32 %v4619, 2147483648
    %v4624 = vxor.u32 %v4620, 2147483648
    %v4625 = vmul.f32 %v4622, 1.442695
    %v4626 = vpow.pop %v4625
    %v4627 = vmul.f32 %v4623, 1.442695
    %v4628 = vpow.pop %v4627
    %v4629 = vmul.f32 %v4624, 1.442695
    %v4630 = vpow.pop %v4629
    %v4631 = vadd.f32 %v4626, 1.0
    %v4632 = vadd.f32 %v4628, 1.0
    %v4633 = vadd.f32 %v4630, 1.0
    %v4634 = vrcp.pop %v4631
    %v4635 = vmul.f32 1.0, %v4634
    %v4636 = vrcp.pop %v4632
    %v4637 = vmul.f32 1.0, %v4636
    %v4638 = vrcp.pop %v4633
    %v4639 = vmul.f32 1.0, %v4638
    %v4640 = vtanh.pop %v4621
    %v4641 = vmul.f32 %v4637, %v4326
    %v4642 = vmul.f32 %v4635, %v4640
    %v4643 = vadd.f32 %v4641, %v4642
    %v4644 = vtanh.pop %v4643
    %v4645 = vmul.f32 %v4639, %v4644
    %4646 = vst.msk [vmem:[#allocation3 + $0x18] sm:$0xff] %vm754, %v4645
    %4647 = vst.msk [vmem:[#allocation3 + $0x20] sm:$0xff] %vm756, %v4645
    %v4648 = vpack.c.bf16 %v4645, %v4645
    %v4649 = vld [vmem:[#allocation10] sm:$0xff]
    %v4650 = vld [vmem:[#allocation10 + $0x8] sm:$0xff]
    %v4651 = vld [vmem:[#allocation10 + $0x10] sm:$0xff]
    %v4652 = vld [vmem:[#allocation10 + $0x18] sm:$0xff]
    %v4653 = vld [vmem:[#allocation10 + $0x20] sm:$0xff]
    %v4654 = vld [vmem:[#allocation10 + $0x28] sm:$0xff]
    %v4655 = vld [vmem:[#allocation10 + $0x30] sm:$0xff]
    %v4656 = vld [vmem:[#allocation10 + $0x38] sm:$0xff]
    %v4657 = vld [vmem:[#allocation10 + $0x40] sm:$0xff]
    %v4658 = vld [vmem:[#allocation10 + $0x48] sm:$0xff]
    %v4659 = vld [vmem:[#allocation10 + $0x50] sm:$0xff]
    %v4660 = vld [vmem:[#allocation10 + $0x58] sm:$0xff]
    %v4661 = vld [vmem:[#allocation10 + $0x60] sm:$0xff]
    %v4662 = vld [vmem:[#allocation10 + $0x68] sm:$0xff]
    %v4663 = vld [vmem:[#allocation10 + $0x70] sm:$0xff]
    %v4664 = vld [vmem:[#allocation10 + $0x78] sm:$0xff]
    %v4665 = vld [vmem:[#allocation10 + $0x80] sm:$0xff]
    %v4666 = vld [vmem:[#allocation10 + $0x88] sm:$0xff]
    %v4667 = vld [vmem:[#allocation10 + $0x90] sm:$0xff]
    %v4668 = vld [vmem:[#allocation10 + $0x98] sm:$0xff]
    %v4669 = vld [vmem:[#allocation10 + $0xa0] sm:$0xff]
    %v4670 = vld [vmem:[#allocation10 + $0xa8] sm:$0xff]
    %v4671 = vld [vmem:[#allocation10 + $0xb0] sm:$0xff]
    %v4672 = vld [vmem:[#allocation10 + $0xb8] sm:$0xff]
    %v4673 = vld [vmem:[#allocation10 + $0xc0] sm:$0xff]
    %v4674 = vld [vmem:[#allocation10 + $0xc8] sm:$0xff]
    %v4675 = vld [vmem:[#allocation10 + $0xd0] sm:$0xff]
    %v4676 = vld [vmem:[#allocation10 + $0xd8] sm:$0xff]
    %v4677 = vld [vmem:[#allocation10 + $0xe0] sm:$0xff]
    %v4678 = vld [vmem:[#allocation10 + $0xe8] sm:$0xff]
    %v4679 = vld [vmem:[#allocation10 + $0xf0] sm:$0xff]
    %v4680 = vld [vmem:[#allocation10 + $0xf8] sm:$0xff]
    %v4713 = vunpack.c.l.b16 %v4649
    %v4714 = vunpack.c.h.b16 %v4649
    %v4715 = vunpack.c.l.b16 %v4650
    %v4716 = vunpack.c.h.b16 %v4650
    %v4717 = vunpack.c.l.b16 %v4651
    %v4718 = vunpack.c.h.b16 %v4651
    %v4719 = vunpack.c.l.b16 %v4652
    %v4720 = vunpack.c.h.b16 %v4652
    %v4721 = vunpack.c.l.b16 %v4653
    %v4722 = vunpack.c.h.b16 %v4653
    %v4723 = vunpack.c.l.b16 %v4654
    %v4724 = vunpack.c.h.b16 %v4654
    %v4725 = vunpack.c.l.b16 %v4655
    %v4726 = vunpack.c.h.b16 %v4655
    %v4727 = vunpack.c.l.b16 %v4656
    %v4728 = vunpack.c.h.b16 %v4656
    %v4729 = vunpack.c.l.b16 %v4657
    %v4730 = vunpack.c.h.b16 %v4657
    %v4731 = vunpack.c.l.b16 %v4658
    %v4732 = vunpack.c.h.b16 %v4658
    %v4733 = vunpack.c.l.b16 %v4659
    %v4734 = vunpack.c.h.b16 %v4659
    %v4735 = vunpack.c.l.b16 %v4660
    %v4736 = vunpack.c.h.b16 %v4660
    %v4737 = vunpack.c.l.b16 %v4661
    %v4738 = vunpack.c.h.b16 %v4661
    %v4739 = vunpack.c.l.b16 %v4662
    %v4740 = vunpack.c.h.b16 %v4662
    %v4741 = vunpack.c.l.b16 %v4663
    %v4742 = vunpack.c.h.b16 %v4663
    %v4743 = vunpack.c.l.b16 %v4664
    %v4744 = vunpack.c.h.b16 %v4664
    %v4745 = vunpack.c.l.b16 %v4665
    %v4746 = vunpack.c.h.b16 %v4665
    %v4747 = vunpack.c.l.b16 %v4666
    %v4748 = vunpack.c.h.b16 %v4666
    %v4749 = vunpack.c.l.b16 %v4667
    %v4750 = vunpack.c.h.b16 %v4667
    %v4751 = vunpack.c.l.b16 %v4668
    %v4752 = vunpack.c.h.b16 %v4668
    %v4753 = vunpack.c.l.b16 %v4669
    %v4754 = vunpack.c.h.b16 %v4669
    %v4755 = vunpack.c.l.b16 %v4670
    %v4756 = vunpack.c.h.b16 %v4670
    %v4757 = vunpack.c.l.b16 %v4671
    %v4758 = vunpack.c.h.b16 %v4671
    %v4759 = vunpack.c.l.b16 %v4672
    %v4760 = vunpack.c.h.b16 %v4672
    %v4761 = vunpack.c.l.b16 %v4673
    %v4762 = vunpack.c.h.b16 %v4673
    %v4763 = vunpack.c.l.b16 %v4674
    %v4764 = vunpack.c.h.b16 %v4674
    %v4765 = vunpack.c.l.b16 %v4675
    %v4766 = vunpack.c.h.b16 %v4675
    %v4767 = vunpack.c.l.b16 %v4676
    %v4768 = vunpack.c.h.b16 %v4676
    %v4769 = vunpack.c.l.b16 %v4677
    %v4770 = vunpack.c.h.b16 %v4677
    %v4771 = vunpack.c.l.b16 %v4678
    %v4772 = vunpack.c.h.b16 %v4678
    %v4773 = vunpack.c.l.b16 %v4679
    %v4774 = vunpack.c.h.b16 %v4679
    %v4775 = vunpack.c.l.b16 %v4680
    %v4776 = vunpack.c.h.b16 %v4680
    %v4777 = vpack.c.b16 %v4717, %v4713
    %v4778 = vpack.c.b16 %v4718, %v4714
    %v4779 = vpack.c.b16 %v4719, %v4715
    %v4780 = vpack.c.b16 %v4720, %v4716
    %v4781 = vpack.c.b16 %v4725, %v4721
    %v4782 = vpack.c.b16 %v4726, %v4722
    %v4783 = vpack.c.b16 %v4727, %v4723
    %v4784 = vpack.c.b16 %v4728, %v4724
    %v4785 = vpack.c.b16 %v4733, %v4729
    %v4786 = vpack.c.b16 %v4734, %v4730
    %v4787 = vpack.c.b16 %v4735, %v4731
    %v4788 = vpack.c.b16 %v4736, %v4732
    %v4789 = vpack.c.b16 %v4741, %v4737
    %v4790 = vpack.c.b16 %v4742, %v4738
    %v4791 = vpack.c.b16 %v4743, %v4739
    %v4792 = vpack.c.b16 %v4744, %v4740
    %v4793 = vpack.c.b16 %v4749, %v4745
    %v4794 = vpack.c.b16 %v4750, %v4746
    %v4795 = vpack.c.b16 %v4751, %v4747
    %v4796 = vpack.c.b16 %v4752, %v4748
    %v4797 = vpack.c.b16 %v4757, %v4753
    %v4798 = vpack.c.b16 %v4758, %v4754
    %v4799 = vpack.c.b16 %v4759, %v4755
    %v4800 = vpack.c.b16 %v4760, %v4756
    %v4801 = vpack.c.b16 %v4765, %v4761
    %v4802 = vpack.c.b16 %v4766, %v4762
    %v4803 = vpack.c.b16 %v4767, %v4763
    %v4804 = vpack.c.b16 %v4768, %v4764
    %v4805 = vpack.c.b16 %v4773, %v4769
    %v4806 = vpack.c.b16 %v4774, %v4770
    %v4807 = vpack.c.b16 %v4775, %v4771
    %v4808 = vpack.c.b16 %v4776, %v4772
    %4841 = vmatprep.subr.bf16.mxu0 %v4778
    %4842 = vmatpush1.bf16.msra.mxu0 %v4777
    %4843 = vmatprep.subr.bf16.mxu0 %v4782
    %4844 = vmatpush1.bf16.msra.mxu0 %v4781
    %4845 = vmatprep.subr.bf16.mxu0 %v4786
    %4846 = vmatpush1.bf16.msra.mxu0 %v4785
    %4847 = vmatprep.subr.bf16.mxu0 %v4790
    %4848 = vmatpush1.bf16.msra.mxu0 %v4789
    %4849 = vmatprep.subr.bf16.mxu0 %v4794
    %4850 = vmatpush1.bf16.msra.mxu0 %v4793
    %4851 = vmatprep.subr.bf16.mxu0 %v4798
    %4852 = vmatpush1.bf16.msra.mxu0 %v4797
    %4853 = vmatprep.subr.bf16.mxu0 %v4802
    %4854 = vmatpush1.bf16.msra.mxu0 %v4801
    %4855 = vmatprep.subr.bf16.mxu0 %v4806
    %4856 = vmatpush1.bf16.msra.mxu0 %v4805
    %4857 = vmatprep.subr.bf16.mxu0 0
    %4858 = vmatpush1.bf16.msra.mxu0 0
    %4859 = vmatprep.subr.bf16.mxu0 0
    %4860 = vmatpush1.bf16.msra.mxu0 0
    %4861 = vmatprep.subr.bf16.mxu0 0
    %4862 = vmatpush1.bf16.msra.mxu0 0
    %4863 = vmatprep.subr.bf16.mxu0 0
    %4864 = vmatpush1.bf16.msra.mxu0 0
    %4865 = vmatprep.subr.bf16.mxu0 0
    %4866 = vmatpush1.bf16.msra.mxu0 0
    %4867 = vmatprep.subr.bf16.mxu0 0
    %4868 = vmatpush1.bf16.msra.mxu0 0
    %4869 = vmatprep.subr.bf16.mxu0 0
    %4870 = vmatpush1.bf16.msra.mxu0 0
    %4871 = vmatprep.subr.bf16.mxu0 0
    %4872 = vmatpush1.bf16.msra.mxu0 0
    %4873 = vmatprep.mubr.bf16.mxu0 0
    %4874 = vmatmul.mubr.bf16.gmra.mrb[0].mxu0 %v4648
    %v4875 = vpop.f32.mrb[0].mxu0
    %v4876 = vadd.f32 0.0, %v4875
    %v4877 = vpop.f32.mrb[0].mxu0
    %v4878 = vadd.f32 0.0, %v4877
    %v4879 = vpop.f32.mrb[0].mxu0
    %v4880 = vpop.f32.mrb[0].mxu0
    %4881 = vdwg.mxu0
    %4882 = vmatprep.subr.bf16.mxu0 %v4780
    %4883 = vmatpush1.bf16.msra.mxu0 %v4779
    %4884 = vmatprep.subr.bf16.mxu0 %v4784
    %4885 = vmatpush1.bf16.msra.mxu0 %v4783
    %4886 = vmatprep.subr.bf16.mxu0 %v4788
    %4887 = vmatpush1.bf16.msra.mxu0 %v4787
    %4888 = vmatprep.subr.bf16.mxu0 %v4792
    %4889 = vmatpush1.bf16.msra.mxu0 %v4791
    %4890 = vmatprep.subr.bf16.mxu0 %v4796
    %4891 = vmatpush1.bf16.msra.mxu0 %v4795
    %4892 = vmatprep.subr.bf16.mxu0 %v4800
    %4893 = vmatpush1.bf16.msra.mxu0 %v4799
    %4894 = vmatprep.subr.bf16.mxu0 %v4804
    %4895 = vmatpush1.bf16.msra.mxu0 %v4803
    %4896 = vmatprep.subr.bf16.mxu0 %v4808
    %4897 = vmatpush1.bf16.msra.mxu0 %v4807
    %4898 = vmatprep.subr.bf16.mxu0 0
    %4899 = vmatpush1.bf16.msra.mxu0 0
    %4900 = vmatprep.subr.bf16.mxu0 0
    %4901 = vmatpush1.bf16.msra.mxu0 0
    %4902 = vmatprep.subr.bf16.mxu0 0
    %4903 = vmatpush1.bf16.msra.mxu0 0
    %4904 = vmatprep.subr.bf16.mxu0 0
    %4905 = vmatpush1.bf16.msra.mxu0 0
    %4906 = vmatprep.subr.bf16.mxu0 0
    %4907 = vmatpush1.bf16.msra.mxu0 0
    %4908 = vmatprep.subr.bf16.mxu0 0
    %4909 = vmatpush1.bf16.msra.mxu0 0
    %4910 = vmatprep.subr.bf16.mxu0 0
    %4911 = vmatpush1.bf16.msra.mxu0 0
    %4912 = vmatprep.subr.bf16.mxu0 0
    %4913 = vmatpush1.bf16.msra.mxu0 0
    %4914 = vmatprep.mubr.bf16.mxu0 0
    %4915 = vmatmul.mubr.bf16.gmra.mrb[0].mxu0 %v4648
    %v4916 = vpop.f32.mrb[0].mxu0
    %v4917 = vadd.f32 0.0, %v4916
    %v4918 = vpop.f32.mrb[0].mxu0
    %v4919 = vadd.f32 0.0, %v4918
    %v4920 = vpop.f32.mrb[0].mxu0
    %v4921 = vpop.f32.mrb[0].mxu0
    %4922 = vdwg.mxu0
    %v4923 = vld [vmem:[#allocation2 + $0x80] sm:$0xff]
    %v4924 = vld [vmem:[#allocation2 + $0x88] sm:$0xff]
    %v4925 = vld [vmem:[#allocation2 + $0x90] sm:$0xff]
    %v4926 = vld [vmem:[#allocation2 + $0x98] sm:$0xff]
    %v4927 = vld [vmem:[#allocation2 + $0x60] sm:$0xff]
    %v4928 = vld [vmem:[#allocation2 + $0x68] sm:$0xff]
    %v4929 = vld [vmem:[#allocation2 + $0x70] sm:$0xff]
    %v4930 = vld [vmem:[#allocation2 + $0x78] sm:$0xff]
    %v4931 = vsel %vm98, %v4923, %v4927
    %v4932 = vsel %vm99, %v4924, %v4928
    %v4933 = vsel %vm100, %v4925, %v4929
    %v4934 = vsel %vm101, %v4926, %v4930
    %v4935 = vadd.f32 %v4931, %v4876
    %v4936 = vadd.f32 %v4932, %v4878
    %v4937 = vadd.f32 %v4933, %v4917
    %v4938 = vadd.f32 %v4934, %v4919
    %v4939 = vxor.u32 %v4935, 2147483648
    %v4940 = vxor.u32 %v4936, 2147483648
    %v4941 = vxor.u32 %v4937, 2147483648
    %v4942 = vmul.f32 %v4939, 1.442695
    %v4943 = vpow.pop %v4942
    %v4944 = vmul.f32 %v4940, 1.442695
    %v4945 = vpow.pop %v4944
    %v4946 = vmul.f32 %v4941, 1.442695
    %v4947 = vpow.pop %v4946
    %v4948 = vadd.f32 %v4943, 1.0
    %v4949 = vadd.f32 %v4945, 1.0
    %v4950 = vadd.f32 %v4947, 1.0
    %v4951 = vrcp.pop %v4948
    %v4952 = vmul.f32 1.0, %v4951
    %v4953 = vrcp.pop %v4949
    %v4954 = vmul.f32 1.0, %v4953
    %v4955 = vrcp.pop %v4950
    %v4956 = vmul.f32 1.0, %v4955
    %v4957 = vtanh.pop %v4938
    %v4958 = vmul.f32 %v4954, %v4643
    %v4959 = vmul.f32 %v4952, %v4957
    %v4960 = vadd.f32 %v4958, %v4959
    %v4961 = vtanh.pop %v4960
    %v4962 = vmul.f32 %v4956, %v4961
    %4963 = vst.msk [vmem:[#allocation3 + $0x20] sm:$0xff] %vm754, %v4962
    %4964 = vst.msk [vmem:[#allocation3 + $0x18] sm:$0xff] %vm756, %v4962
    %v4965 = vpack.c.bf16 %v4962, %v4962
    %v4966 = vld [vmem:[#allocation10] sm:$0xff]
    %v4967 = vld [vmem:[#allocation10 + $0x8] sm:$0xff]
    %v4968 = vld [vmem:[#allocation10 + $0x10] sm:$0xff]
    %v4969 = vld [vmem:[#allocation10 + $0x18] sm:$0xff]
    %v4970 = vld [vmem:[#allocation10 + $0x20] sm:$0xff]
    %v4971 = vld [vmem:[#allocation10 + $0x28] sm:$0xff]
    %v4972 = vld [vmem:[#allocation10 + $0x30] sm:$0xff]
    %v4973 = vld [vmem:[#allocation10 + $0x38] sm:$0xff]
    %v4974 = vld [vmem:[#allocation10 + $0x40] sm:$0xff]
    %v4975 = vld [vmem:[#allocation10 + $0x48] sm:$0xff]
    %v4976 = vld [vmem:[#allocation10 + $0x50] sm:$0xff]
    %v4977 = vld [vmem:[#allocation10 + $0x58] sm:$0xff]
    %v4978 = vld [vmem:[#allocation10 + $0x60] sm:$0xff]
    %v4979 = vld [vmem:[#allocation10 + $0x68] sm:$0xff]
    %v4980 = vld [vmem:[#allocation10 + $0x70] sm:$0xff]
    %v4981 = vld [vmem:[#allocation10 + $0x78] sm:$0xff]
    %v4982 = vld [vmem:[#allocation10 + $0x80] sm:$0xff]
    %v4983 = vld [vmem:[#allocation10 + $0x88] sm:$0xff]
    %v4984 = vld [vmem:[#allocation10 + $0x90] sm:$0xff]
    %v4985 = vld [vmem:[#allocation10 + $0x98] sm:$0xff]
    %v4986 = vld [vmem:[#allocation10 + $0xa0] sm:$0xff]
    %v4987 = vld [vmem:[#allocation10 + $0xa8] sm:$0xff]
    %v4988 = vld [vmem:[#allocation10 + $0xb0] sm:$0xff]
    %v4989 = vld [vmem:[#allocation10 + $0xb8] sm:$0xff]
    %v4990 = vld [vmem:[#allocation10 + $0xc0] sm:$0xff]
    %v4991 = vld [vmem:[#allocation10 + $0xc8] sm:$0xff]
    %v4992 = vld [vmem:[#allocation10 + $0xd0] sm:$0xff]
    %v4993 = vld [vmem:[#allocation10 + $0xd8] sm:$0xff]
    %v4994 = vld [vmem:[#allocation10 + $0xe0] sm:$0xff]
    %v4995 = vld [vmem:[#allocation10 + $0xe8] sm:$0xff]
    %v4996 = vld [vmem:[#allocation10 + $0xf0] sm:$0xff]
    %v4997 = vld [vmem:[#allocation10 + $0xf8] sm:$0xff]
    %v5030 = vunpack.c.l.b16 %v4966
    %v5031 = vunpack.c.h.b16 %v4966
    %v5032 = vunpack.c.l.b16 %v4967
    %v5033 = vunpack.c.h.b16 %v4967
    %v5034 = vunpack.c.l.b16 %v4968
    %v5035 = vunpack.c.h.b16 %v4968
    %v5036 = vunpack.c.l.b16 %v4969
    %v5037 = vunpack.c.h.b16 %v4969
    %v5038 = vunpack.c.l.b16 %v4970
    %v5039 = vunpack.c.h.b16 %v4970
    %v5040 = vunpack.c.l.b16 %v4971
    %v5041 = vunpack.c.h.b16 %v4971
    %v5042 = vunpack.c.l.b16 %v4972
    %v5043 = vunpack.c.h.b16 %v4972
    %v5044 = vunpack.c.l.b16 %v4973
    %v5045 = vunpack.c.h.b16 %v4973
    %v5046 = vunpack.c.l.b16 %v4974
    %v5047 = vunpack.c.h.b16 %v4974
    %v5048 = vunpack.c.l.b16 %v4975
    %v5049 = vunpack.c.h.b16 %v4975
    %v5050 = vunpack.c.l.b16 %v4976
    %v5051 = vunpack.c.h.b16 %v4976
    %v5052 = vunpack.c.l.b16 %v4977
    %v5053 = vunpack.c.h.b16 %v4977
    %v5054 = vunpack.c.l.b16 %v4978
    %v5055 = vunpack.c.h.b16 %v4978
    %v5056 = vunpack.c.l.b16 %v4979
    %v5057 = vunpack.c.h.b16 %v4979
    %v5058 = vunpack.c.l.b16 %v4980
    %v5059 = vunpack.c.h.b16 %v4980
    %v5060 = vunpack.c.l.b16 %v4981
    %v5061 = vunpack.c.h.b16 %v4981
    %v5062 = vunpack.c.l.b16 %v4982
    %v5063 = vunpack.c.h.b16 %v4982
    %v5064 = vunpack.c.l.b16 %v4983
    %v5065 = vunpack.c.h.b16 %v4983
    %v5066 = vunpack.c.l.b16 %v4984
    %v5067 = vunpack.c.h.b16 %v4984
    %v5068 = vunpack.c.l.b16 %v4985
    %v5069 = vunpack.c.h.b16 %v4985
    %v5070 = vunpack.c.l.b16 %v4986
    %v5071 = vunpack.c.h.b16 %v4986
    %v5072 = vunpack.c.l.b16 %v4987
    %v5073 = vunpack.c.h.b16 %v4987
    %v5074 = vunpack.c.l.b16 %v4988
    %v5075 = vunpack.c.h.b16 %v4988
    %v5076 = vunpack.c.l.b16 %v4989
    %v5077 = vunpack.c.h.b16 %v4989
    %v5078 = vunpack.c.l.b16 %v4990
    %v5079 = vunpack.c.h.b16 %v4990
    %v5080 = vunpack.c.l.b16 %v4991
    %v5081 = vunpack.c.h.b16 %v4991
    %v5082 = vunpack.c.l.b16 %v4992
    %v5083 = vunpack.c.h.b16 %v4992
    %v5084 = vunpack.c.l.b16 %v4993
    %v5085 = vunpack.c.h.b16 %v4993
    %v5086 = vunpack.c.l.b16 %v4994
    %v5087 = vunpack.c.h.b16 %v4994
    %v5088 = vunpack.c.l.b16 %v4995
    %v5089 = vunpack.c.h.b16 %v4995
    %v5090 = vunpack.c.l.b16 %v4996
    %v5091 = vunpack.c.h.b16 %v4996
    %v5092 = vunpack.c.l.b16 %v4997
    %v5093 = vunpack.c.h.b16 %v4997
    %v5094 = vpack.c.b16 %v5034, %v5030
    %v5095 = vpack.c.b16 %v5035, %v5031
    %v5096 = vpack.c.b16 %v5036, %v5032
    %v5097 = vpack.c.b16 %v5037, %v5033
    %v5098 = vpack.c.b16 %v5042, %v5038
    %v5099 = vpack.c.b16 %v5043, %v5039
    %v5100 = vpack.c.b16 %v5044, %v5040
    %v5101 = vpack.c.b16 %v5045, %v5041
    %v5102 = vpack.c.b16 %v5050, %v5046
    %v5103 = vpack.c.b16 %v5051, %v5047
    %v5104 = vpack.c.b16 %v5052, %v5048
    %v5105 = vpack.c.b16 %v5053, %v5049
    %v5106 = vpack.c.b16 %v5058, %v5054
    %v5107 = vpack.c.b16 %v5059, %v5055
    %v5108 = vpack.c.b16 %v5060, %v5056
    %v5109 = vpack.c.b16 %v5061, %v5057
    %v5110 = vpack.c.b16 %v5066, %v5062
    %v5111 = vpack.c.b16 %v5067, %v5063
    %v5112 = vpack.c.b16 %v5068, %v5064
    %v5113 = vpack.c.b16 %v5069, %v5065
    %v5114 = vpack.c.b16 %v5074, %v5070
    %v5115 = vpack.c.b16 %v5075, %v5071
    %v5116 = vpack.c.b16 %v5076, %v5072
    %v5117 = vpack.c.b16 %v5077, %v5073
    %v5118 = vpack.c.b16 %v5082, %v5078
    %v5119 = vpack.c.b16 %v5083, %v5079
    %v5120 = vpack.c.b16 %v5084, %v5080
    %v5121 = vpack.c.b16 %v5085, %v5081
    %v5122 = vpack.c.b16 %v5090, %v5086
    %v5123 = vpack.c.b16 %v5091, %v5087
    %v5124 = vpack.c.b16 %v5092, %v5088
    %v5125 = vpack.c.b16 %v5093, %v5089
    %5158 = vmatprep.subr.bf16.mxu0 %v5095
    %5159 = vmatpush1.bf16.msra.mxu0 %v5094
    %5160 = vmatprep.subr.bf16.mxu0 %v5099
    %5161 = vmatpush1.bf16.msra.mxu0 %v5098
    %5162 = vmatprep.subr.bf16.mxu0 %v5103
    %5163 = vmatpush1.bf16.msra.mxu0 %v5102
    %5164 = vmatprep.subr.bf16.mxu0 %v5107
    %5165 = vmatpush1.bf16.msra.mxu0 %v5106
    %5166 = vmatprep.subr.bf16.mxu0 %v5111
    %5167 = vmatpush1.bf16.msra.mxu0 %v5110
    %5168 = vmatprep.subr.bf16.mxu0 %v5115
    %5169 = vmatpush1.bf16.msra.mxu0 %v5114
    %5170 = vmatprep.subr.bf16.mxu0 %v5119
    %5171 = vmatpush1.bf16.msra.mxu0 %v5118
    %5172 = vmatprep.subr.bf16.mxu0 %v5123
    %5173 = vmatpush1.bf16.msra.mxu0 %v5122
    %5174 = vmatprep.subr.bf16.mxu0 0
    %5175 = vmatpush1.bf16.msra.mxu0 0
    %5176 = vmatprep.subr.bf16.mxu0 0
    %5177 = vmatpush1.bf16.msra.mxu0 0
    %5178 = vmatprep.subr.bf16.mxu0 0
    %5179 = vmatpush1.bf16.msra.mxu0 0
    %5180 = vmatprep.subr.bf16.mxu0 0
    %5181 = vmatpush1.bf16.msra.mxu0 0
    %5182 = vmatprep.subr.bf16.mxu0 0
    %5183 = vmatpush1.bf16.msra.mxu0 0
    %5184 = vmatprep.subr.bf16.mxu0 0
    %5185 = vmatpush1.bf16.msra.mxu0 0
    %5186 = vmatprep.subr.bf16.mxu0 0
    %5187 = vmatpush1.bf16.msra.mxu0 0
    %5188 = vmatprep.subr.bf16.mxu0 0
    %5189 = vmatpush1.bf16.msra.mxu0 0
    %5190 = vmatprep.mubr.bf16.mxu0 0
    %5191 = vmatmul.mubr.bf16.gmra.mrb[0].mxu0 %v4965
    %v5192 = vpop.f32.mrb[0].mxu0
    %v5193 = vadd.f32 0.0, %v5192
    %v5194 = vpop.f32.mrb[0].mxu0
    %v5195 = vadd.f32 0.0, %v5194
    %v5196 = vpop.f32.mrb[0].mxu0
    %v5197 = vpop.f32.mrb[0].mxu0
    %5198 = vdwg.mxu0
    %5199 = vmatprep.subr.bf16.mxu0 %v5097
    %5200 = vmatpush1.bf16.msra.mxu0 %v5096
    %5201 = vmatprep.subr.bf16.mxu0 %v5101
    %5202 = vmatpush1.bf16.msra.mxu0 %v5100
    %5203 = vmatprep.subr.bf16.mxu0 %v5105
    %5204 = vmatpush1.bf16.msra.mxu0 %v5104
    %5205 = vmatprep.subr.bf16.mxu0 %v5109
    %5206 = vmatpush1.bf16.msra.mxu0 %v5108
    %5207 = vmatprep.subr.bf16.mxu0 %v5113
    %5208 = vmatpush1.bf16.msra.mxu0 %v5112
    %5209 = vmatprep.subr.bf16.mxu0 %v5117
    %5210 = vmatpush1.bf16.msra.mxu0 %v5116
    %5211 = vmatprep.subr.bf16.mxu0 %v5121
    %5212 = vmatpush1.bf16.msra.mxu0 %v5120
    %5213 = vmatprep.subr.bf16.mxu0 %v5125
    %5214 = vmatpush1.bf16.msra.mxu0 %v5124
    %5215 = vmatprep.subr.bf16.mxu0 0
    %5216 = vmatpush1.bf16.msra.mxu0 0
    %5217 = vmatprep.subr.bf16.mxu0 0
    %5218 = vmatpush1.bf16.msra.mxu0 0
    %5219 = vmatprep.subr.bf16.mxu0 0
    %5220 = vmatpush1.bf16.msra.mxu0 0
    %5221 = vmatprep.subr.bf16.mxu0 0
    %5222 = vmatpush1.bf16.msra.mxu0 0
    %5223 = vmatprep.subr.bf16.mxu0 0
    %5224 = vmatpush1.bf16.msra.mxu0 0
    %5225 = vmatprep.subr.bf16.mxu0 0
    %5226 = vmatpush1.bf16.msra.mxu0 0
    %5227 = vmatprep.subr.bf16.mxu0 0
    %5228 = vmatpush1.bf16.msra.mxu0 0
    %5229 = vmatprep.subr.bf16.mxu0 0
    %5230 = vmatpush1.bf16.msra.mxu0 0
    %5231 = vmatprep.mubr.bf16.mxu0 0
    %5232 = vmatmul.mubr.bf16.gmra.mrb[0].mxu0 %v4965
    %v5233 = vpop.f32.mrb[0].mxu0
    %v5234 = vadd.f32 0.0, %v5233
    %v5235 = vpop.f32.mrb[0].mxu0
    %v5236 = vadd.f32 0.0, %v5235
    %v5237 = vpop.f32.mrb[0].mxu0
    %v5238 = vpop.f32.mrb[0].mxu0
    %5239 = vdwg.mxu0
    %v5240 = vld [vmem:[#allocation2 + $0xa0] sm:$0xff]
    %v5241 = vld [vmem:[#allocation2 + $0xa8] sm:$0xff]
    %v5242 = vld [vmem:[#allocation2 + $0xb0] sm:$0xff]
    %v5243 = vld [vmem:[#allocation2 + $0xb8] sm:$0xff]
    %v5244 = vld [vmem:[#allocation2 + $0x40] sm:$0xff]
    %v5245 = vld [vmem:[#allocation2 + $0x48] sm:$0xff]
    %v5246 = vld [vmem:[#allocation2 + $0x50] sm:$0xff]
    %v5247 = vld [vmem:[#allocation2 + $0x58] sm:$0xff]
    %v5248 = vsel %vm98, %v5240, %v5244
    %v5249 = vsel %vm99, %v5241, %v5245
    %v5250 = vsel %vm100, %v5242, %v5246
    %v5251 = vsel %vm101, %v5243, %v5247
    %v5252 = vadd.f32 %v5248, %v5193
    %v5253 = vadd.f32 %v5249, %v5195
    %v5254 = vadd.f32 %v5250, %v5234
    %v5255 = vadd.f32 %v5251, %v5236
    %v5256 = vxor.u32 %v5252, 2147483648
    %v5257 = vxor.u32 %v5253, 2147483648
    %v5258 = vxor.u32 %v5254, 2147483648
    %v5259 = vmul.f32 %v5256, 1.442695
    %v5260 = vpow.pop %v5259
    %v5261 = vmul.f32 %v5257, 1.442695
    %v5262 = vpow.pop %v5261
    %v5263 = vmul.f32 %v5258, 1.442695
    %v5264 = vpow.pop %v5263
    %v5265 = vadd.f32 %v5260, 1.0
    %v5266 = vadd.f32 %v5262, 1.0
    %v5267 = vadd.f32 %v5264, 1.0
    %v5268 = vrcp.pop %v5265
    %v5269 = vmul.f32 1.0, %v5268
    %v5270 = vrcp.pop %v5266
    %v5271 = vmul.f32 1.0, %v5270
    %v5272 = vrcp.pop %v5267
    %v5273 = vmul.f32 1.0, %v5272
    %v5274 = vtanh.pop %v5255
    %v5275 = vmul.f32 %v5271, %v4960
    %v5276 = vmul.f32 %v5269, %v5274
    %v5277 = vadd.f32 %v5275, %v5276
    %v5278 = vtanh.pop %v5277
    %v5279 = vmul.f32 %v5273, %v5278
    %5280 = vst.msk [vmem:[#allocation3 + $0x28] sm:$0xff] %vm754, %v5279
    %5281 = vst.msk [vmem:[#allocation3 + $0x10] sm:$0xff] %vm756, %v5279
    %v5282 = vpack.c.bf16 %v5279, %v5279
    %v5283 = vld [vmem:[#allocation10] sm:$0xff]
    %v5284 = vld [vmem:[#allocation10 + $0x8] sm:$0xff]
    %v5285 = vld [vmem:[#allocation10 + $0x10] sm:$0xff]
    %v5286 = vld [vmem:[#allocation10 + $0x18] sm:$0xff]
    %v5287 = vld [vmem:[#allocation10 + $0x20] sm:$0xff]
    %v5288 = vld [vmem:[#allocation10 + $0x28] sm:$0xff]
    %v5289 = vld [vmem:[#allocation10 + $0x30] sm:$0xff]
    %v5290 = vld [vmem:[#allocation10 + $0x38] sm:$0xff]
    %v5291 = vld [vmem:[#allocation10 + $0x40] sm:$0xff]
    %v5292 = vld [vmem:[#allocation10 + $0x48] sm:$0xff]
    %v5293 = vld [vmem:[#allocation10 + $0x50] sm:$0xff]
    %v5294 = vld [vmem:[#allocation10 + $0x58] sm:$0xff]
    %v5295 = vld [vmem:[#allocation10 + $0x60] sm:$0xff]
    %v5296 = vld [vmem:[#allocation10 + $0x68] sm:$0xff]
    %v5297 = vld [vmem:[#allocation10 + $0x70] sm:$0xff]
    %v5298 = vld [vmem:[#allocation10 + $0x78] sm:$0xff]
    %v5299 = vld [vmem:[#allocation10 + $0x80] sm:$0xff]
    %v5300 = vld [vmem:[#allocation10 + $0x88] sm:$0xff]
    %v5301 = vld [vmem:[#allocation10 + $0x90] sm:$0xff]
    %v5302 = vld [vmem:[#allocation10 + $0x98] sm:$0xff]
    %v5303 = vld [vmem:[#allocation10 + $0xa0] sm:$0xff]
    %v5304 = vld [vmem:[#allocation10 + $0xa8] sm:$0xff]
    %v5305 = vld [vmem:[#allocation10 + $0xb0] sm:$0xff]
    %v5306 = vld [vmem:[#allocation10 + $0xb8] sm:$0xff]
    %v5307 = vld [vmem:[#allocation10 + $0xc0] sm:$0xff]
    %v5308 = vld [vmem:[#allocation10 + $0xc8] sm:$0xff]
    %v5309 = vld [vmem:[#allocation10 + $0xd0] sm:$0xff]
    %v5310 = vld [vmem:[#allocation10 + $0xd8] sm:$0xff]
    %v5311 = vld [vmem:[#allocation10 + $0xe0] sm:$0xff]
    %v5312 = vld [vmem:[#allocation10 + $0xe8] sm:$0xff]
    %v5313 = vld [vmem:[#allocation10 + $0xf0] sm:$0xff]
    %v5314 = vld [vmem:[#allocation10 + $0xf8] sm:$0xff]
    %v5347 = vunpack.c.l.b16 %v5283
    %v5348 = vunpack.c.h.b16 %v5283
    %v5349 = vunpack.c.l.b16 %v5284
    %v5350 = vunpack.c.h.b16 %v5284
    %v5351 = vunpack.c.l.b16 %v5285
    %v5352 = vunpack.c.h.b16 %v5285
    %v5353 = vunpack.c.l.b16 %v5286
    %v5354 = vunpack.c.h.b16 %v5286
    %v5355 = vunpack.c.l.b16 %v5287
    %v5356 = vunpack.c.h.b16 %v5287
    %v5357 = vunpack.c.l.b16 %v5288
    %v5358 = vunpack.c.h.b16 %v5288
    %v5359 = vunpack.c.l.b16 %v5289
    %v5360 = vunpack.c.h.b16 %v5289
    %v5361 = vunpack.c.l.b16 %v5290
    %v5362 = vunpack.c.h.b16 %v5290
    %v5363 = vunpack.c.l.b16 %v5291
    %v5364 = vunpack.c.h.b16 %v5291
    %v5365 = vunpack.c.l.b16 %v5292
    %v5366 = vunpack.c.h.b16 %v5292
    %v5367 = vunpack.c.l.b16 %v5293
    %v5368 = vunpack.c.h.b16 %v5293
    %v5369 = vunpack.c.l.b16 %v5294
    %v5370 = vunpack.c.h.b16 %v5294
    %v5371 = vunpack.c.l.b16 %v5295
    %v5372 = vunpack.c.h.b16 %v5295
    %v5373 = vunpack.c.l.b16 %v5296
    %v5374 = vunpack.c.h.b16 %v5296
    %v5375 = vunpack.c.l.b16 %v5297
    %v5376 = vunpack.c.h.b16 %v5297
    %v5377 = vunpack.c.l.b16 %v5298
    %v5378 = vunpack.c.h.b16 %v5298
    %v5379 = vunpack.c.l.b16 %v5299
    %v5380 = vunpack.c.h.b16 %v5299
    %v5381 = vunpack.c.l.b16 %v5300
    %v5382 = vunpack.c.h.b16 %v5300
    %v5383 = vunpack.c.l.b16 %v5301
    %v5384 = vunpack.c.h.b16 %v5301
    %v5385 = vunpack.c.l.b16 %v5302
    %v5386 = vunpack.c.h.b16 %v5302
    %v5387 = vunpack.c.l.b16 %v5303
    %v5388 = vunpack.c.h.b16 %v5303
    %v5389 = vunpack.c.l.b16 %v5304
    %v5390 = vunpack.c.h.b16 %v5304
    %v5391 = vunpack.c.l.b16 %v5305
    %v5392 = vunpack.c.h.b16 %v5305
    %v5393 = vunpack.c.l.b16 %v5306
    %v5394 = vunpack.c.h.b16 %v5306
    %v5395 = vunpack.c.l.b16 %v5307
    %v5396 = vunpack.c.h.b16 %v5307
    %v5397 = vunpack.c.l.b16 %v5308
    %v5398 = vunpack.c.h.b16 %v5308
    %v5399 = vunpack.c.l.b16 %v5309
    %v5400 = vunpack.c.h.b16 %v5309
    %v5401 = vunpack.c.l.b16 %v5310
    %v5402 = vunpack.c.h.b16 %v5310
    %v5403 = vunpack.c.l.b16 %v5311
    %v5404 = vunpack.c.h.b16 %v5311
    %v5405 = vunpack.c.l.b16 %v5312
    %v5406 = vunpack.c.h.b16 %v5312
    %v5407 = vunpack.c.l.b16 %v5313
    %v5408 = vunpack.c.h.b16 %v5313
    %v5409 = vunpack.c.l.b16 %v5314
    %v5410 = vunpack.c.h.b16 %v5314
    %v5411 = vpack.c.b16 %v5351, %v5347
    %v5412 = vpack.c.b16 %v5352, %v5348
    %v5413 = vpack.c.b16 %v5353, %v5349
    %v5414 = vpack.c.b16 %v5354, %v5350
    %v5415 = vpack.c.b16 %v5359, %v5355
    %v5416 = vpack.c.b16 %v5360, %v5356
    %v5417 = vpack.c.b16 %v5361, %v5357
    %v5418 = vpack.c.b16 %v5362, %v5358
    %v5419 = vpack.c.b16 %v5367, %v5363
    %v5420 = vpack.c.b16 %v5368, %v5364
    %v5421 = vpack.c.b16 %v5369, %v5365
    %v5422 = vpack.c.b16 %v5370, %v5366
    %v5423 = vpack.c.b16 %v5375, %v5371
    %v5424 = vpack.c.b16 %v5376, %v5372
    %v5425 = vpack.c.b16 %v5377, %v5373
    %v5426 = vpack.c.b16 %v5378, %v5374
    %v5427 = vpack.c.b16 %v5383, %v5379
    %v5428 = vpack.c.b16 %v5384, %v5380
    %v5429 = vpack.c.b16 %v5385, %v5381
    %v5430 = vpack.c.b16 %v5386, %v5382
    %v5431 = vpack.c.b16 %v5391, %v5387
    %v5432 = vpack.c.b16 %v5392, %v5388
    %v5433 = vpack.c.b16 %v5393, %v5389
    %v5434 = vpack.c.b16 %v5394, %v5390
    %v5435 = vpack.c.b16 %v5399, %v5395
    %v5436 = vpack.c.b16 %v5400, %v5396
    %v5437 = vpack.c.b16 %v5401, %v5397
    %v5438 = vpack.c.b16 %v5402, %v5398
    %v5439 = vpack.c.b16 %v5407, %v5403
    %v5440 = vpack.c.b16 %v5408, %v5404
    %v5441 = vpack.c.b16 %v5409, %v5405
    %v5442 = vpack.c.b16 %v5410, %v5406
    %5475 = vmatprep.subr.bf16.mxu0 %v5412
    %5476 = vmatpush1.bf16.msra.mxu0 %v5411
    %5477 = vmatprep.subr.bf16.mxu0 %v5416
    %5478 = vmatpush1.bf16.msra.mxu0 %v5415
    %5479 = vmatprep.subr.bf16.mxu0 %v5420
    %5480 = vmatpush1.bf16.msra.mxu0 %v5419
    %5481 = vmatprep.subr.bf16.mxu0 %v5424
    %5482 = vmatpush1.bf16.msra.mxu0 %v5423
    %5483 = vmatprep.subr.bf16.mxu0 %v5428
    %5484 = vmatpush1.bf16.msra.mxu0 %v5427
    %5485 = vmatprep.subr.bf16.mxu0 %v5432
    %5486 = vmatpush1.bf16.msra.mxu0 %v5431
    %5487 = vmatprep.subr.bf16.mxu0 %v5436
    %5488 = vmatpush1.bf16.msra.mxu0 %v5435
    %5489 = vmatprep.subr.bf16.mxu0 %v5440
    %5490 = vmatpush1.bf16.msra.mxu0 %v5439
    %5491 = vmatprep.subr.bf16.mxu0 0
    %5492 = vmatpush1.bf16.msra.mxu0 0
    %5493 = vmatprep.subr.bf16.mxu0 0
    %5494 = vmatpush1.bf16.msra.mxu0 0
    %5495 = vmatprep.subr.bf16.mxu0 0
    %5496 = vmatpush1.bf16.msra.mxu0 0
    %5497 = vmatprep.subr.bf16.mxu0 0
    %5498 = vmatpush1.bf16.msra.mxu0 0
    %5499 = vmatprep.subr.bf16.mxu0 0
    %5500 = vmatpush1.bf16.msra.mxu0 0
    %5501 = vmatprep.subr.bf16.mxu0 0
    %5502 = vmatpush1.bf16.msra.mxu0 0
    %5503 = vmatprep.subr.bf16.mxu0 0
    %5504 = vmatpush1.bf16.msra.mxu0 0
    %5505 = vmatprep.subr.bf16.mxu0 0
    %5506 = vmatpush1.bf16.msra.mxu0 0
    %5507 = vmatprep.mubr.bf16.mxu0 0
    %5508 = vmatmul.mubr.bf16.gmra.mrb[0].mxu0 %v5282
    %v5509 = vpop.f32.mrb[0].mxu0
    %v5510 = vadd.f32 0.0, %v5509
    %v5511 = vpop.f32.mrb[0].mxu0
    %v5512 = vadd.f32 0.0, %v5511
    %v5513 = vpop.f32.mrb[0].mxu0
    %v5514 = vpop.f32.mrb[0].mxu0
    %5515 = vdwg.mxu0
    %5516 = vmatprep.subr.bf16.mxu0 %v5414
    %5517 = vmatpush1.bf16.msra.mxu0 %v5413
    %5518 = vmatprep.subr.bf16.mxu0 %v5418
    %5519 = vmatpush1.bf16.msra.mxu0 %v5417
    %5520 = vmatprep.subr.bf16.mxu0 %v5422
    %5521 = vmatpush1.bf16.msra.mxu0 %v5421
    %5522 = vmatprep.subr.bf16.mxu0 %v5426
    %5523 = vmatpush1.bf16.msra.mxu0 %v5425
    %5524 = vmatprep.subr.bf16.mxu0 %v5430
    %5525 = vmatpush1.bf16.msra.mxu0 %v5429
    %5526 = vmatprep.subr.bf16.mxu0 %v5434
    %5527 = vmatpush1.bf16.msra.mxu0 %v5433
    %5528 = vmatprep.subr.bf16.mxu0 %v5438
    %5529 = vmatpush1.bf16.msra.mxu0 %v5437
    %5530 = vmatprep.subr.bf16.mxu0 %v5442
    %5531 = vmatpush1.bf16.msra.mxu0 %v5441
    %5532 = vmatprep.subr.bf16.mxu0 0
    %5533 = vmatpush1.bf16.msra.mxu0 0
    %5534 = vmatprep.subr.bf16.mxu0 0
    %5535 = vmatpush1.bf16.msra.mxu0 0
    %5536 = vmatprep.subr.bf16.mxu0 0
    %5537 = vmatpush1.bf16.msra.mxu0 0
    %5538 = vmatprep.subr.bf16.mxu0 0
    %5539 = vmatpush1.bf16.msra.mxu0 0
    %5540 = vmatprep.subr.bf16.mxu0 0
    %5541 = vmatpush1.bf16.msra.mxu0 0
    %5542 = vmatprep.subr.bf16.mxu0 0
    %5543 = vmatpush1.bf16.msra.mxu0 0
    %5544 = vmatprep.subr.bf16.mxu0 0
    %5545 = vmatpush1.bf16.msra.mxu0 0
    %5546 = vmatprep.subr.bf16.mxu0 0
    %5547 = vmatpush1.bf16.msra.mxu0 0
    %5548 = vmatprep.mubr.bf16.mxu0 0
    %5549 = vmatmul.mubr.bf16.gmra.mrb[0].mxu0 %v5282
    %v5550 = vpop.f32.mrb[0].mxu0
    %v5551 = vadd.f32 0.0, %v5550
    %v5552 = vpop.f32.mrb[0].mxu0
    %v5553 = vadd.f32 0.0, %v5552
    %v5554 = vpop.f32.mrb[0].mxu0
    %v5555 = vpop.f32.mrb[0].mxu0
    %5556 = vdwg.mxu0
    %v5557 = vld [vmem:[#allocation2 + $0xc0] sm:$0xff]
    %v5558 = vld [vmem:[#allocation2 + $0xc8] sm:$0xff]
    %v5559 = vld [vmem:[#allocation2 + $0xd0] sm:$0xff]
    %v5560 = vld [vmem:[#allocation2 + $0xd8] sm:$0xff]
    %v5561 = vld [vmem:[#allocation2 + $0x20] sm:$0xff]
    %v5562 = vld [vmem:[#allocation2 + $0x28] sm:$0xff]
    %v5563 = vld [vmem:[#allocation2 + $0x30] sm:$0xff]
    %v5564 = vld [vmem:[#allocation2 + $0x38] sm:$0xff]
    %v5565 = vsel %vm98, %v5557, %v5561
    %v5566 = vsel %vm99, %v5558, %v5562
    %v5567 = vsel %vm100, %v5559, %v5563
    %v5568 = vsel %vm101, %v5560, %v5564
    %v5569 = vadd.f32 %v5565, %v5510
    %v5570 = vadd.f32 %v5566, %v5512
    %v5571 = vadd.f32 %v5567, %v5551
    %v5572 = vadd.f32 %v5568, %v5553
    %v5573 = vxor.u32 %v5569, 2147483648
    %v5574 = vxor.u32 %v5570, 2147483648
    %v5575 = vxor.u32 %v5571, 2147483648
    %v5576 = vmul.f32 %v5573, 1.442695
    %v5577 = vpow.pop %v5576
    %v5578 = vmul.f32 %v5574, 1.442695
    %v5579 = vpow.pop %v5578
    %v5580 = vmul.f32 %v5575, 1.442695
    %v5581 = vpow.pop %v5580
    %v5582 = vadd.f32 %v5577, 1.0
    %v5583 = vadd.f32 %v5579, 1.0
    %v5584 = vadd.f32 %v5581, 1.0
    %v5585 = vrcp.pop %v5582
    %v5586 = vmul.f32 1.0, %v5585
    %v5587 = vrcp.pop %v5583
    %v5588 = vmul.f32 1.0, %v5587
    %v5589 = vrcp.pop %v5584
    %v5590 = vmul.f32 1.0, %v5589
    %v5591 = vtanh.pop %v5572
    %v5592 = vmul.f32 %v5588, %v5277
    %v5593 = vmul.f32 %v5586, %v5591
    %v5594 = vadd.f32 %v5592, %v5593
    %v5595 = vtanh.pop %v5594
    %v5596 = vmul.f32 %v5590, %v5595
    %5597 = vst.msk [vmem:[#allocation3 + $0x30] sm:$0xff] %vm754, %v5596
    %5598 = vst.msk [vmem:[#allocation3 + $0x8] sm:$0xff] %vm756, %v5596
    %v5599 = vpack.c.bf16 %v5596, %v5596
    %v5600 = vld [vmem:[#allocation10] sm:$0xff]
    %v5601 = vld [vmem:[#allocation10 + $0x8] sm:$0xff]
    %v5602 = vld [vmem:[#allocation10 + $0x10] sm:$0xff]
    %v5603 = vld [vmem:[#allocation10 + $0x18] sm:$0xff]
    %v5604 = vld [vmem:[#allocation10 + $0x20] sm:$0xff]
    %v5605 = vld [vmem:[#allocation10 + $0x28] sm:$0xff]
    %v5606 = vld [vmem:[#allocation10 + $0x30] sm:$0xff]
    %v5607 = vld [vmem:[#allocation10 + $0x38] sm:$0xff]
    %v5608 = vld [vmem:[#allocation10 + $0x40] sm:$0xff]
    %v5609 = vld [vmem:[#allocation10 + $0x48] sm:$0xff]
    %v5610 = vld [vmem:[#allocation10 + $0x50] sm:$0xff]
    %v5611 = vld [vmem:[#allocation10 + $0x58] sm:$0xff]
    %v5612 = vld [vmem:[#allocation10 + $0x60] sm:$0xff]
    %v5613 = vld [vmem:[#allocation10 + $0x68] sm:$0xff]
    %v5614 = vld [vmem:[#allocation10 + $0x70] sm:$0xff]
    %v5615 = vld [vmem:[#allocation10 + $0x78] sm:$0xff]
    %v5616 = vld [vmem:[#allocation10 + $0x80] sm:$0xff]
    %v5617 = vld [vmem:[#allocation10 + $0x88] sm:$0xff]
    %v5618 = vld [vmem:[#allocation10 + $0x90] sm:$0xff]
    %v5619 = vld [vmem:[#allocation10 + $0x98] sm:$0xff]
    %v5620 = vld [vmem:[#allocation10 + $0xa0] sm:$0xff]
    %v5621 = vld [vmem:[#allocation10 + $0xa8] sm:$0xff]
    %v5622 = vld [vmem:[#allocation10 + $0xb0] sm:$0xff]
    %v5623 = vld [vmem:[#allocation10 + $0xb8] sm:$0xff]
    %v5624 = vld [vmem:[#allocation10 + $0xc0] sm:$0xff]
    %v5625 = vld [vmem:[#allocation10 + $0xc8] sm:$0xff]
    %v5626 = vld [vmem:[#allocation10 + $0xd0] sm:$0xff]
    %v5627 = vld [vmem:[#allocation10 + $0xd8] sm:$0xff]
    %v5628 = vld [vmem:[#allocation10 + $0xe0] sm:$0xff]
    %v5629 = vld [vmem:[#allocation10 + $0xe8] sm:$0xff]
    %v5630 = vld [vmem:[#allocation10 + $0xf0] sm:$0xff]
    %v5631 = vld [vmem:[#allocation10 + $0xf8] sm:$0xff]
    %v5664 = vunpack.c.l.b16 %v5600
    %v5665 = vunpack.c.h.b16 %v5600
    %v5666 = vunpack.c.l.b16 %v5601
    %v5667 = vunpack.c.h.b16 %v5601
    %v5668 = vunpack.c.l.b16 %v5602
    %v5669 = vunpack.c.h.b16 %v5602
    %v5670 = vunpack.c.l.b16 %v5603
    %v5671 = vunpack.c.h.b16 %v5603
    %v5672 = vunpack.c.l.b16 %v5604
    %v5673 = vunpack.c.h.b16 %v5604
    %v5674 = vunpack.c.l.b16 %v5605
    %v5675 = vunpack.c.h.b16 %v5605
    %v5676 = vunpack.c.l.b16 %v5606
    %v5677 = vunpack.c.h.b16 %v5606
    %v5678 = vunpack.c.l.b16 %v5607
    %v5679 = vunpack.c.h.b16 %v5607
    %v5680 = vunpack.c.l.b16 %v5608
    %v5681 = vunpack.c.h.b16 %v5608
    %v5682 = vunpack.c.l.b16 %v5609
    %v5683 = vunpack.c.h.b16 %v5609
    %v5684 = vunpack.c.l.b16 %v5610
    %v5685 = vunpack.c.h.b16 %v5610
    %v5686 = vunpack.c.l.b16 %v5611
    %v5687 = vunpack.c.h.b16 %v5611
    %v5688 = vunpack.c.l.b16 %v5612
    %v5689 = vunpack.c.h.b16 %v5612
    %v5690 = vunpack.c.l.b16 %v5613
    %v5691 = vunpack.c.h.b16 %v5613
    %v5692 = vunpack.c.l.b16 %v5614
    %v5693 = vunpack.c.h.b16 %v5614
    %v5694 = vunpack.c.l.b16 %v5615
    %v5695 = vunpack.c.h.b16 %v5615
    %v5696 = vunpack.c.l.b16 %v5616
    %v5697 = vunpack.c.h.b16 %v5616
    %v5698 = vunpack.c.l.b16 %v5617
    %v5699 = vunpack.c.h.b16 %v5617
    %v5700 = vunpack.c.l.b16 %v5618
    %v5701 = vunpack.c.h.b16 %v5618
    %v5702 = vunpack.c.l.b16 %v5619
    %v5703 = vunpack.c.h.b16 %v5619
    %v5704 = vunpack.c.l.b16 %v5620
    %v5705 = vunpack.c.h.b16 %v5620
    %v5706 = vunpack.c.l.b16 %v5621
    %v5707 = vunpack.c.h.b16 %v5621
    %v5708 = vunpack.c.l.b16 %v5622
    %v5709 = vunpack.c.h.b16 %v5622
    %v5710 = vunpack.c.l.b16 %v5623
    %v5711 = vunpack.c.h.b16 %v5623
    %v5712 = vunpack.c.l.b16 %v5624
    %v5713 = vunpack.c.h.b16 %v5624
    %v5714 = vunpack.c.l.b16 %v5625
    %v5715 = vunpack.c.h.b16 %v5625
    %v5716 = vunpack.c.l.b16 %v5626
    %v5717 = vunpack.c.h.b16 %v5626
    %v5718 = vunpack.c.l.b16 %v5627
    %v5719 = vunpack.c.h.b16 %v5627
    %v5720 = vunpack.c.l.b16 %v5628
    %v5721 = vunpack.c.h.b16 %v5628
    %v5722 = vunpack.c.l.b16 %v5629
    %v5723 = vunpack.c.h.b16 %v5629
    %v5724 = vunpack.c.l.b16 %v5630
    %v5725 = vunpack.c.h.b16 %v5630
    %v5726 = vunpack.c.l.b16 %v5631
    %v5727 = vunpack.c.h.b16 %v5631
    %v5728 = vpack.c.b16 %v5668, %v5664
    %v5729 = vpack.c.b16 %v5669, %v5665
    %v5730 = vpack.c.b16 %v5670, %v5666
    %v5731 = vpack.c.b16 %v5671, %v5667
    %v5732 = vpack.c.b16 %v5676, %v5672
    %v5733 = vpack.c.b16 %v5677, %v5673
    %v5734 = vpack.c.b16 %v5678, %v5674
    %v5735 = vpack.c.b16 %v5679, %v5675
    %v5736 = vpack.c.b16 %v5684, %v5680
    %v5737 = vpack.c.b16 %v5685, %v5681
    %v5738 = vpack.c.b16 %v5686, %v5682
    %v5739 = vpack.c.b16 %v5687, %v5683
    %v5740 = vpack.c.b16 %v5692, %v5688
    %v5741 = vpack.c.b16 %v5693, %v5689
    %v5742 = vpack.c.b16 %v5694, %v5690
    %v5743 = vpack.c.b16 %v5695, %v5691
    %v5744 = vpack.c.b16 %v5700, %v5696
    %v5745 = vpack.c.b16 %v5701, %v5697
    %v5746 = vpack.c.b16 %v5702, %v5698
    %v5747 = vpack.c.b16 %v5703, %v5699
    %v5748 = vpack.c.b16 %v5708, %v5704
    %v5749 = vpack.c.b16 %v5709, %v5705
    %v5750 = vpack.c.b16 %v5710, %v5706
    %v5751 = vpack.c.b16 %v5711, %v5707
    %v5752 = vpack.c.b16 %v5716, %v5712
    %v5753 = vpack.c.b16 %v5717, %v5713
    %v5754 = vpack.c.b16 %v5718, %v5714
    %v5755 = vpack.c.b16 %v5719, %v5715
    %v5756 = vpack.c.b16 %v5724, %v5720
    %v5757 = vpack.c.b16 %v5725, %v5721
    %v5758 = vpack.c.b16 %v5726, %v5722
    %v5759 = vpack.c.b16 %v5727, %v5723
    %5792 = vmatprep.subr.bf16.mxu0 %v5729
    %5793 = vmatpush1.bf16.msra.mxu0 %v5728
    %5794 = vmatprep.subr.bf16.mxu0 %v5733
    %5795 = vmatpush1.bf16.msra.mxu0 %v5732
    %5796 = vmatprep.subr.bf16.mxu0 %v5737
    %5797 = vmatpush1.bf16.msra.mxu0 %v5736
    %5798 = vmatprep.subr.bf16.mxu0 %v5741
    %5799 = vmatpush1.bf16.msra.mxu0 %v5740
    %5800 = vmatprep.subr.bf16.mxu0 %v5745
    %5801 = vmatpush1.bf16.msra.mxu0 %v5744
    %5802 = vmatprep.subr.bf16.mxu0 %v5749
    %5803 = vmatpush1.bf16.msra.mxu0 %v5748
    %5804 = vmatprep.subr.bf16.mxu0 %v5753
    %5805 = vmatpush1.bf16.msra.mxu0 %v5752
    %5806 = vmatprep.subr.bf16.mxu0 %v5757
    %5807 = vmatpush1.bf16.msra.mxu0 %v5756
    %5808 = vmatprep.subr.bf16.mxu0 0
    %5809 = vmatpush1.bf16.msra.mxu0 0
    %5810 = vmatprep.subr.bf16.mxu0 0
    %5811 = vmatpush1.bf16.msra.mxu0 0
    %5812 = vmatprep.subr.bf16.mxu0 0
    %5813 = vmatpush1.bf16.msra.mxu0 0
    %5814 = vmatprep.subr.bf16.mxu0 0
    %5815 = vmatpush1.bf16.msra.mxu0 0
    %5816 = vmatprep.subr.bf16.mxu0 0
    %5817 = vmatpush1.bf16.msra.mxu0 0
    %5818 = vmatprep.subr.bf16.mxu0 0
    %5819 = vmatpush1.bf16.msra.mxu0 0
    %5820 = vmatprep.subr.bf16.mxu0 0
    %5821 = vmatpush1.bf16.msra.mxu0 0
    %5822 = vmatprep.subr.bf16.mxu0 0
    %5823 = vmatpush1.bf16.msra.mxu0 0
    %5824 = vmatprep.mubr.bf16.mxu0 0
    %5825 = vmatmul.mubr.bf16.gmra.mrb[0].mxu0 %v5599
    %v5826 = vpop.f32.mrb[0].mxu0
    %v5827 = vadd.f32 0.0, %v5826
    %v5828 = vpop.f32.mrb[0].mxu0
    %v5829 = vadd.f32 0.0, %v5828
    %v5830 = vpop.f32.mrb[0].mxu0
    %v5831 = vpop.f32.mrb[0].mxu0
    %5832 = vdwg.mxu0
    %5833 = vmatprep.subr.bf16.mxu0 %v5731
    %5834 = vmatpush1.bf16.msra.mxu0 %v5730
    %5835 = vmatprep.subr.bf16.mxu0 %v5735
    %5836 = vmatpush1.bf16.msra.mxu0 %v5734
    %5837 = vmatprep.subr.bf16.mxu0 %v5739
    %5838 = vmatpush1.bf16.msra.mxu0 %v5738
    %5839 = vmatprep.subr.bf16.mxu0 %v5743
    %5840 = vmatpush1.bf16.msra.mxu0 %v5742
    %5841 = vmatprep.subr.bf16.mxu0 %v5747
    %5842 = vmatpush1.bf16.msra.mxu0 %v5746
    %5843 = vmatprep.subr.bf16.mxu0 %v5751
    %5844 = vmatpush1.bf16.msra.mxu0 %v5750
    %5845 = vmatprep.subr.bf16.mxu0 %v5755
    %5846 = vmatpush1.bf16.msra.mxu0 %v5754
    %5847 = vmatprep.subr.bf16.mxu0 %v5759
    %5848 = vmatpush1.bf16.msra.mxu0 %v5758
    %5849 = vmatprep.subr.bf16.mxu0 0
    %5850 = vmatpush1.bf16.msra.mxu0 0
    %5851 = vmatprep.subr.bf16.mxu0 0
    %5852 = vmatpush1.bf16.msra.mxu0 0
    %5853 = vmatprep.subr.bf16.mxu0 0
    %5854 = vmatpush1.bf16.msra.mxu0 0
    %5855 = vmatprep.subr.bf16.mxu0 0
    %5856 = vmatpush1.bf16.msra.mxu0 0
    %5857 = vmatprep.subr.bf16.mxu0 0
    %5858 = vmatpush1.bf16.msra.mxu0 0
    %5859 = vmatprep.subr.bf16.mxu0 0
    %5860 = vmatpush1.bf16.msra.mxu0 0
    %5861 = vmatprep.subr.bf16.mxu0 0
    %5862 = vmatpush1.bf16.msra.mxu0 0
    %5863 = vmatprep.subr.bf16.mxu0 0
    %5864 = vmatpush1.bf16.msra.mxu0 0
    %5865 = vmatprep.mubr.bf16.mxu0 0
    %5866 = vmatmul.mubr.bf16.gmra.mrb[0].mxu0 %v5599
    %v5867 = vpop.f32.mrb[0].mxu0
    %v5868 = vadd.f32 0.0, %v5867
    %v5869 = vpop.f32.mrb[0].mxu0
    %v5870 = vadd.f32 0.0, %v5869
    %v5871 = vpop.f32.mrb[0].mxu0
    %v5872 = vpop.f32.mrb[0].mxu0
    %5873 = vdwg.mxu0
    %v5874 = vld [vmem:[#allocation2 + $0xe0] sm:$0xff]
    %v5875 = vld [vmem:[#allocation2 + $0xe8] sm:$0xff]
    %v5876 = vld [vmem:[#allocation2 + $0xf0] sm:$0xff]
    %v5877 = vld [vmem:[#allocation2 + $0xf8] sm:$0xff]
    %v5878 = vld [vmem:[#allocation2] sm:$0xff]
    %v5879 = vld [vmem:[#allocation2 + $0x8] sm:$0xff]
    %v5880 = vld [vmem:[#allocation2 + $0x10] sm:$0xff]
    %v5881 = vld [vmem:[#allocation2 + $0x18] sm:$0xff]
    %v5882 = vsel %vm98, %v5874, %v5878
    %v5883 = vsel %vm99, %v5875, %v5879
    %v5884 = vsel %vm100, %v5876, %v5880
    %v5885 = vsel %vm101, %v5877, %v5881
    %v5886 = vadd.f32 %v5882, %v5827
    %v5887 = vadd.f32 %v5883, %v5829
    %v5888 = vadd.f32 %v5884, %v5868
    %v5889 = vadd.f32 %v5885, %v5870
    %v5890 = vxor.u32 %v5886, 2147483648
    %v5891 = vxor.u32 %v5887, 2147483648
    %v5892 = vxor.u32 %v5888, 2147483648
    %v5893 = vmul.f32 %v5890, 1.442695
    %v5894 = vpow.pop %v5893
    %v5895 = vmul.f32 %v5891, 1.442695
    %v5896 = vpow.pop %v5895
    %v5897 = vmul.f32 %v5892, 1.442695
    %v5898 = vpow.pop %v5897
    %v5899 = vadd.f32 %v5894, 1.0
    %v5900 = vadd.f32 %v5896, 1.0
    %v5901 = vadd.f32 %v5898, 1.0
    %v5902 = vrcp.pop %v5899
    %v5903 = vmul.f32 1.0, %v5902
    %v5904 = vrcp.pop %v5900
    %v5905 = vmul.f32 1.0, %v5904
    %v5906 = vrcp.pop %v5901
    %v5907 = vmul.f32 1.0, %v5906
    %v5908 = vtanh.pop %v5889
    %v5909 = vmul.f32 %v5905, %v5594
    %v5910 = vmul.f32 %v5903, %v5908
    %v5911 = vadd.f32 %v5909, %v5910
    %v5912 = vtanh.pop %v5911
    %v5913 = vmul.f32 %v5907, %v5912
    %5914 = vst.msk [vmem:[#allocation3 + $0x38] sm:$0xff] %vm754, %v5913
    %5915 = vst.msk [vmem:[#allocation3] sm:$0xff] %vm756, %v5913
    %v5916 = vld [vmem:[#allocation3] sm:$0xff]
    %v5917 = vld [vmem:[#allocation3 + $0x8] sm:$0xff]
    %v5918 = vld [vmem:[#allocation3 + $0x10] sm:$0xff]
    %v5919 = vld [vmem:[#allocation3 + $0x18] sm:$0xff]
    %v5920 = vld [vmem:[#allocation3 + $0x20] sm:$0xff]
    %v5921 = vld [vmem:[#allocation3 + $0x28] sm:$0xff]
    %v5922 = vld [vmem:[#allocation3 + $0x30] sm:$0xff]
    %v5923 = vld [vmem:[#allocation3 + $0x38] sm:$0xff]
    %v5924 = vpack.c.bf16 %v5917, %v5916
    %v5925 = vpack.c.bf16 %v5919, %v5918
    %v5926 = vpack.c.bf16 %v5921, %v5920
    %v5927 = vpack.c.bf16 %v5923, %v5922
    %v5928 = vld [vmem:[%s7] sm:$0xf]
    %v5929 = vld [vmem:[%s7 + $0x4] sm:$0xf]
    %v5930 = vld [vmem:[%s7 + $0x8] sm:$0xf]
    %v5931 = vld [vmem:[%s7 + $0xc] sm:$0xf]
    %v5932 = vld [vmem:[%s7 + $0x10] sm:$0xf]
    %v5933 = vld [vmem:[%s7 + $0x14] sm:$0xf]
    %v5934 = vld [vmem:[%s7 + $0x18] sm:$0xf]
    %v5935 = vld [vmem:[%s7 + $0x1c] sm:$0xf]
    %v5936 = vld [vmem:[%s7 + $0x20] sm:$0xf]
    %v5937 = vld [vmem:[%s7 + $0x24] sm:$0xf]
    %v5938 = vld [vmem:[%s7 + $0x28] sm:$0xf]
    %v5939 = vld [vmem:[%s7 + $0x2c] sm:$0xf]
    %v5940 = vld [vmem:[%s7 + $0x30] sm:$0xf]
    %v5941 = vld [vmem:[%s7 + $0x34] sm:$0xf]
    %v5942 = vld [vmem:[%s7 + $0x38] sm:$0xf]
    %v5943 = vld [vmem:[%s7 + $0x3c] sm:$0xf]
    %v5944 = vld [vmem:[%s8] sm:$0x1]
    %v5946 = vlaneseq
    %v5947 = vshrl.u32 %v5946, 7
    %v5948 = vsub.s32 0, %v5947
    %v5949 = vrot.slane %v5944, %v5948
    %v5967 = vunpack.c.l.b16 %v5928
    %v5968 = vunpack.c.l.b16 %v5929
    %v5969 = vunpack.c.l.b16 %v5930
    %v5970 = vunpack.c.l.b16 %v5931
    %v5971 = vunpack.c.l.b16 %v5932
    %v5972 = vunpack.c.l.b16 %v5933
    %v5973 = vunpack.c.l.b16 %v5934
    %v5974 = vunpack.c.l.b16 %v5935
    %v5975 = vunpack.c.l.b16 %v5936
    %v5976 = vunpack.c.l.b16 %v5937
    %v5977 = vunpack.c.l.b16 %v5938
    %v5978 = vunpack.c.l.b16 %v5939
    %v5979 = vunpack.c.l.b16 %v5940
    %v5980 = vunpack.c.l.b16 %v5941
    %v5981 = vunpack.c.l.b16 %v5942
    %v5982 = vunpack.c.l.b16 %v5943
    %v5983 = vpack.c.b16 %v5968, %v5967
    %v5984 = vpack.c.b16 %v5970, %v5969
    %v5985 = vpack.c.b16 %v5972, %v5971
    %v5986 = vpack.c.b16 %v5974, %v5973
    %v5987 = vpack.c.b16 %v5976, %v5975
    %v5988 = vpack.c.b16 %v5978, %v5977
    %v5989 = vpack.c.b16 %v5980, %v5979
    %v5990 = vpack.c.b16 %v5982, %v5981
    %5999 = vmatprep.subr.bf16.mxu0 0
    %6000 = vmatpush1.bf16.msra.mxu0 %v5983
    %6001 = vmatprep.subr.bf16.mxu0 0
    %6002 = vmatpush1.bf16.msra.mxu0 %v5984
    %6003 = vmatprep.subr.bf16.mxu0 0
    %6004 = vmatpush1.bf16.msra.mxu0 %v5985
    %6005 = vmatprep.subr.bf16.mxu0 0
    %6006 = vmatpush1.bf16.msra.mxu0 %v5986
    %6007 = vmatprep.subr.bf16.mxu0 0
    %6008 = vmatpush1.bf16.msra.mxu0 %v5987
    %6009 = vmatprep.subr.bf16.mxu0 0
    %6010 = vmatpush1.bf16.msra.mxu0 %v5988
    %6011 = vmatprep.subr.bf16.mxu0 0
    %6012 = vmatpush1.bf16.msra.mxu0 %v5989
    %6013 = vmatprep.subr.bf16.mxu0 0
    %6014 = vmatpush1.bf16.msra.mxu0 %v5990
    %6015 = vmatprep.subr.bf16.mxu0 0
    %6016 = vmatpush1.bf16.msra.mxu0 0
    %6017 = vmatprep.subr.bf16.mxu0 0
    %6018 = vmatpush1.bf16.msra.mxu0 0
    %6019 = vmatprep.subr.bf16.mxu0 0
    %6020 = vmatpush1.bf16.msra.mxu0 0
    %6021 = vmatprep.subr.bf16.mxu0 0
    %6022 = vmatpush1.bf16.msra.mxu0 0
    %6023 = vmatprep.subr.bf16.mxu0 0
    %6024 = vmatpush1.bf16.msra.mxu0 0
    %6025 = vmatprep.subr.bf16.mxu0 0
    %6026 = vmatpush1.bf16.msra.mxu0 0
    %6027 = vmatprep.subr.bf16.mxu0 0
    %6028 = vmatpush1.bf16.msra.mxu0 0
    %6029 = vmatprep.subr.bf16.mxu0 0
    %6030 = vmatpush1.bf16.msra.mxu0 0
    %6031 = vmatprep.mubr.bf16.mxu0 0
    %6032 = vmatmul.mubr.bf16.gmra.mrb[0].mxu0 %v5924
    %v6033 = vpop.f32.mrb[0].mxu0
    %v6034 = vadd.f32 %v5949, %v6033
    %v6035 = vpop.f32.mrb[0].mxu0
    %v6036 = vpop.f32.mrb[0].mxu0
    %v6037 = vadd.f32 %v5949, %v6036
    %v6038 = vpop.f32.mrb[0].mxu0
    %6039 = vmatprep.mubr.bf16.mxu0 0
    %6040 = vmatmul.mubr.bf16.gmra.mrb[0].mxu0 %v5925
    %v6041 = vpop.f32.mrb[0].mxu0
    %v6042 = vadd.f32 %v5949, %v6041
    %v6043 = vpop.f32.mrb[0].mxu0
    %v6044 = vpop.f32.mrb[0].mxu0
    %v6045 = vadd.f32 %v5949, %v6044
    %v6046 = vpop.f32.mrb[0].mxu0
    %6047 = vmatprep.mubr.bf16.mxu0 0
    %6048 = vmatmul.mubr.bf16.gmra.mrb[0].mxu0 %v5926
    %v6049 = vpop.f32.mrb[0].mxu0
    %v6050 = vadd.f32 %v5949, %v6049
    %v6051 = vpop.f32.mrb[0].mxu0
    %v6052 = vpop.f32.mrb[0].mxu0
    %v6053 = vadd.f32 %v5949, %v6052
    %v6054 = vpop.f32.mrb[0].mxu0
    %6055 = vmatprep.mubr.bf16.mxu0 0
    %6056 = vmatmul.mubr.bf16.gmra.mrb[0].mxu0 %v5927
    %v6057 = vpop.f32.mrb[0].mxu0
    %v6058 = vadd.f32 %v5949, %v6057
    %v6059 = vpop.f32.mrb[0].mxu0
    %v6060 = vpop.f32.mrb[0].mxu0
    %v6061 = vadd.f32 %v5949, %v6060
    %v6062 = vpop.f32.mrb[0].mxu0
    %6063 = vdwg.mxu0
    %6064 = vst [vmem:[#allocation12] sm:$0xff] %v6034
    %6065 = vst [vmem:[#allocation12 + $0x8] sm:$0xff] %v6037
    %6066 = vst [vmem:[#allocation12 + $0x10] sm:$0xff] %v6042
    %6067 = vst [vmem:[#allocation12 + $0x18] sm:$0xff] %v6045
    %6068 = vst [vmem:[#allocation12 + $0x20] sm:$0xff] %v6050
    %6069 = vst [vmem:[#allocation12 + $0x28] sm:$0xff] %v6053
    %6070 = vst [vmem:[#allocation12 + $0x30] sm:$0xff] %v6058
    %6071 = vst [vmem:[#allocation12 + $0x38] sm:$0xff] %v6061
    // Predicated region
    $region54: #{tpu_custom_call.1} parent=1 // pred_check
      _
    $region55: #{tpu_custom_call.1} parent=1 // pred_check_branch
      %6073 = sbr.rel (0) target = $region57
    $region56: #{tpu_custom_call.1} parent=1 // pred_region
      %s6075 = ssub.s32 1024, 1024
      %6076 = vsyncadd [#allocation6], %s6075
      %s6077 = sshll.u32 [#allocation12], 4
      %s6078 = int_to_ptr.vmem [resolvable:$true] %s6077
      %6083 = dma.vmem_to_hbm [thread:$0]  %s6078, 1024, %s9, [#allocation6], 128, 128, 8
    $region57: #{tpu_custom_call.1} parent=1 // pred_fallthru
      _
    // Predicated region
    $region58: #{tpu_custom_call.1} parent=1 // pred_check
      _
    $region59: #{tpu_custom_call.1} parent=1 // pred_check_branch
      %6085 = sbr.rel (0) target = $region61
    $region60: #{tpu_custom_call.1} parent=1 // pred_region
      %6086 = dma.done [#allocation6], 1024
    $region61: #{tpu_custom_call.1} parent=1 // pred_fallthru
      _
    %6087 = vsyncpa [#allocation5], 1
    %6088 = vsyncpa [#allocation8], 1
    %6089 = vsyncpa [#allocation11], 1
    %6090 = vsyncpa [#allocation6], 1

</llo_original>
